<compile_context>
chip_gen: v7x
topology: tpu7x:2x2x1
jax: 0.10.0
libtpu: 0.0.40
codegen_flags: <defaults>
</compile_context>

<pallas_src>
from functools import partial

import jax
import jax.numpy as jnp
from jax.experimental import pallas as pl
from jax.experimental.pallas import tpu as pltpu


# Contraction dims up to this size skip the MXU (such dots are pure fill/drain
# latency at these shapes) and run as unrolled VPU broadcast-MACs instead.
_MAX_VPU_PW = 16


# ----------------------------------------------------------------------------
# Fully fused SepConv kernel, layout (T, B, C, H*W).
# Grid = (B, T//tt).  The T axis MUST stay the innermost, sequentially-iterated
# ("arbitrary") axis: the LIF membrane potentials are carried across grid steps
# in VMEM scratch and reset at tb == 0.  B is the only "parallel" axis.
# ----------------------------------------------------------------------------
def _sepconv_kernel(x_ref, w1_ref, sh1_ref, wdw_ref, w2_ref, sh2_ref, o_ref,
                    v1_ref, v2_ref, vbuf_ref, *, tau, vth, K, pad, H, W, tt):
    tb = pl.program_id(1)
    inv_tau = 1.0 / tau                       # multiply, not divide (exact for tau=2)
    HW = H * W
    off = pad + pad * W                       # interior offset inside the halo buffer
    med = wdw_ref.shape[0]
    C = w1_ref.shape[1]

    @pl.when(tb == 0)
    def _():
        v1_ref[...] = jnp.zeros_like(v1_ref)      # LIF1 membrane potential
        v2_ref[...] = jnp.zeros_like(v2_ref)      # LIF2 membrane potential
        vbuf_ref[...] = jnp.zeros_like(vbuf_ref)  # pad/guard regions stay zero forever

    # ---- hoisted weights / constants (outside the unrolled timestep loop) ----
    w1 = w1_ref[...]                          # (med, C), bn1 scale folded in
    sh1 = sh1_ref[...]                        # (med, 1)
    wdw = wdw_ref[...]                        # (med, K*K)
    w2 = w2_ref[...]                          # (C, med), bn2 scale folded in
    sh2 = sh2_ref[...]                        # (C, 1)

    # Per-tap depthwise weight columns, hoisted out of the timestep loop.
    wcol = [[wdw[:, kh * K + kw:kh * K + kw + 1] for kh in range(K)]
            for kw in range(K)]

    use_vpu1 = C <= _MAX_VPU_PW
    use_vpu2 = med <= _MAX_VPU_PW
    w1cols = [w1[:, c:c + 1] for c in range(C)] if use_vpu1 else None
    w2cols = [w2[:, m:m + 1] for m in range(med)] if use_vpu2 else None

    # One (1, HW) float mask per horizontal tap offset; broadcasts over sublanes.
    col = jax.lax.broadcasted_iota(jnp.int32, (1, HW), 1) % W
    colf = [jnp.logical_and(col + (kw - pad) >= 0,
                            col + (kw - pad) < W).astype(jnp.float32)
            for kw in range(K)]

    def pointwise(cols, w, x):
        if cols is not None:                  # tiny contraction: VPU broadcast-MACs
            out = cols[0] * x[0:1, :]
            for c in range(1, len(cols)):
                out = out + cols[c] * x[c:c + 1, :]
            return out
        return jnp.dot(w, x, preferred_element_type=jnp.float32)

    for t in range(tt):                       # short, fully unrolled timestep block
        # ---- LIF 1 (decay_input=True, hard reset to v_reset=0) ----
        xt = x_ref[t].astype(jnp.float32)     # (C, HW)
        v1 = v1_ref[...]
        v1 = v1 + (xt - v1) * inv_tau
        spk1 = v1 >= vth
        v1_ref[...] = jnp.where(spk1, 0.0, v1)
        s1 = spk1.astype(jnp.float32)

        # ---- pwconv1 (1x1) with bn1 scale folded ----
        y = pointwise(w1cols, w1, s1) + sh1   # (med, HW)

        # ---- LIF 2 ----
        v2 = v2_ref[...]
        v2 = v2 + (y - v2) * inv_tau
        spk2 = v2 >= vth
        v2_ref[...] = jnp.where(spk2, 0.0, v2)
        s2 = spk2.astype(jnp.float32)

        # ---- depthwise KxK conv via the vertically padded halo buffer ----
        vbuf_ref[:, off:off + HW] = s2
        acc = None
        for kw in range(K):
            part = None
            for kh in range(K):
                start = kh * W + kw           # contiguous slice of the padded image
                term = vbuf_ref[:, start:start + HW] * wcol[kw][kh]
                part = term if part is None else part + term
            if kw != pad:                     # one mask-multiply per kw (not per tap)
                part = part * colf[kw]
            acc = part if acc is None else acc + part

        # ---- pwconv2 (1x1) with bn2 scale folded ----
        z = pointwise(w2cols, w2, acc) + sh2  # (C, HW)
        o_ref[t] = z.astype(o_ref.dtype)


def _pick_vmem_limit():
    # Leave headroom per generation: v5e/v6e have 128 MiB physical VMEM per core,
    # v7x only 64 MiB.  Fallback is conservative and fits every generation.
    try:
        cap = pltpu.get_tpu_info().vmem_capacity_bytes
        return int(min(96 * 1024 * 1024, cap * 3 // 4))
    except Exception:
        return 32 * 1024 * 1024


# ----------------------------------------------------------------------------
# Full SepConv forward.  Only free reshapes at the boundaries; the only HBM
# traffic is the input and the final output.
# ----------------------------------------------------------------------------
def sepconv_forward(x, p, *, K=7, pad=3, tau=2.0, vth=1.0):
    T, B, C, H, W = x.shape
    med = p["w1"].shape[0]
    HW = H * W

    # Fold eval-mode BN scales into the pointwise weights (free host-side prep).
    w1f = p["w1"] * p["bn1_scale"]            # (med, C)
    w2f = p["w2"] * p["bn2_scale"]            # (C, med)

    # Timestep coarsening: tt timesteps per grid step.  T stays innermost and
    # "arbitrary" (sequential) because the membrane scratch carries across it.
    tt = 1
    for cand in (4, 2, 1):
        if T % cand == 0:
            tt = cand
            break

    buflen = 2 * pad + (H + 2 * pad) * W      # vertically padded image + corner guard
    x4 = x.reshape(T, B, C, HW)

    out = pl.pallas_call(
        partial(_sepconv_kernel, tau=tau, vth=vth, K=K, pad=pad, H=H, W=W, tt=tt),
        out_shape=jax.ShapeDtypeStruct((T, B, C, HW), jnp.float32),
        grid=(B, T // tt),
        in_specs=[
            pl.BlockSpec((tt, None, C, HW), lambda b, tb: (tb, b, 0, 0)),
            pl.BlockSpec((med, C), lambda b, tb: (0, 0)),
            pl.BlockSpec((med, 1), lambda b, tb: (0, 0)),
            pl.BlockSpec((med, K * K), lambda b, tb: (0, 0)),
            pl.BlockSpec((C, med), lambda b, tb: (0, 0)),
            pl.BlockSpec((C, 1), lambda b, tb: (0, 0)),
        ],
        out_specs=pl.BlockSpec((tt, None, C, HW), lambda b, tb: (tb, b, 0, 0)),
        scratch_shapes=[
            pltpu.VMEM((C, HW), jnp.float32),        # LIF1 membrane (carried over T)
            pltpu.VMEM((med, HW), jnp.float32),      # LIF2 membrane (carried over T)
            pltpu.VMEM((med, buflen), jnp.float32),  # depthwise halo buffer
        ],
        compiler_params=pltpu.CompilerParams(
            dimension_semantics=("parallel", "arbitrary"),
            vmem_limit_bytes=_pick_vmem_limit()),
    )(x4, w1f, p["bn1_shift"], p["wdw"], w2f, p["bn2_shift"])

    return out.reshape(T, B, C, H, W)


# ----------------------------------------------------------------------------
# Pure-JAX reference (same math, NCHW) for the correctness check.
# ----------------------------------------------------------------------------
def _lif_ref(x, tau=2.0, vth=1.0):
    def step(v, xt):
        v = v + (xt - v) / tau
        s = (v >= vth).astype(x.dtype)
        v = jnp.where(s > 0, 0.0, v)
        return v, s

    _, s = jax.lax.scan(step, jnp.zeros(x.shape[1:], x.dtype), x)
    return s


def sepconv_ref(x, p, K=7, pad=3):
    T, B, C, H, W = x.shape
    med = p["w1"].shape[0]
    s1 = _lif_ref(x)
    y = jnp.einsum("mc,tbchw->tbmhw", p["w1"], s1)
    y = (y * p["bn1_scale"][:, 0][None, None, :, None, None]
         + p["bn1_shift"][:, 0][None, None, :, None, None])
    s2 = _lif_ref(y)
    xi = s2.reshape(T * B, med, H, W)
    xp = jnp.pad(xi, ((0, 0), (0, 0), (pad, pad), (pad, pad)))
    acc = jnp.zeros_like(xi)
    for kh in range(K):
        for kw in range(K):
            acc = acc + xp[:, :, kh:kh + H, kw:kw + W] * p["wdw"][:, kh * K + kw][None, :, None, None]
    z = jnp.einsum("cm,nmhw->nchw", p["w2"], acc)
    z = (z * p["bn2_scale"][:, 0][None, :, None, None]
         + p["bn2_shift"][:, 0][None, :, None, None])
    return z.reshape(T, B, C, H, W)


def make_params(dim, expansion_ratio=2, kernel_size=7, eps=1e-5):
    med = int(expansion_ratio * dim)
    k1, k2, k3 = jax.random.split(jax.random.PRNGKey(0), 3)
    # pwconv1: Conv2d(dim, med, 1) weight (med, dim, 1, 1) -> stored (med, dim)
    w1 = jax.random.normal(k1, (med, dim), jnp.float32) * 0.3
    # dwconv: Conv2d(med, med, K, groups=med) weight (med, 1, K, K) -> (med, K*K)
    wdw = jax.random.normal(k2, (med, kernel_size * kernel_size), jnp.float32) * 0.1
    # pwconv2: Conv2d(med, dim, 1) weight (dim, med, 1, 1) -> stored (dim, med)
    w2 = jax.random.normal(k3, (dim, med), jnp.float32) * 0.3

    def bn_fold(n):
        gamma = 1.0 + 0.1 * jnp.arange(n, dtype=jnp.float32)
        beta = 0.02 * jnp.arange(n, dtype=jnp.float32)
        rmean = 0.01 * jnp.arange(n, dtype=jnp.float32)
        rvar = 1.0 + 0.05 * jnp.arange(n, dtype=jnp.float32)
        scale = gamma / jnp.sqrt(rvar + eps)
        shift = beta - rmean * scale
        return scale[:, None], shift[:, None]    # (n, 1): broadcasts over the H*W lane axis

    bn1_scale, bn1_shift = bn_fold(med)
    bn2_scale, bn2_shift = bn_fold(dim)
    return dict(w1=w1, wdw=wdw, w2=w2,
                bn1_scale=bn1_scale, bn1_shift=bn1_shift,
                bn2_scale=bn2_scale, bn2_shift=bn2_shift)


if __name__ == "__main__":
    T, B, C, H, W = 8, 2, 4, 16, 16
    params = make_params(dim=C)

    key = jax.random.PRNGKey(0)
    x = jax.random.uniform(key, (T, B, C, H, W), jnp.float32, minval=0.0, maxval=3.0)

    out = jax.block_until_ready(sepconv_forward(x, params))
    ref = jax.block_until_ready(sepconv_ref(x, params))

    assert out.shape == (T, B, C, H, W)
    err = float(jnp.max(jnp.abs(out - ref)))
    assert jnp.allclose(out, ref, atol=1e-4, rtol=1e-4), err

    print("KERNEL_OK")
</pallas_src>

<mosaic_0001>
module attributes {stable_mosaic.version = 11 : i64} {
  func.func @_sepconv_kernel(%arg0: i32, %arg1: i32, %arg2: memref<4x1x4x256xf32, #tpu.memory_space<vmem>>, %arg3: memref<8x4xf32, #tpu.memory_space<vmem>>, %arg4: memref<8x1xf32, #tpu.memory_space<vmem>>, %arg5: memref<8x49xf32, #tpu.memory_space<vmem>>, %arg6: memref<4x8xf32, #tpu.memory_space<vmem>>, %arg7: memref<4x1xf32, #tpu.memory_space<vmem>>, %arg8: memref<4x1x4x256xf32, #tpu.memory_space<vmem>>, %arg9: memref<4x256xf32, #tpu.memory_space<vmem>>, %arg10: memref<8x256xf32, #tpu.memory_space<vmem>>, %arg11: memref<8x358xf32, #tpu.memory_space<vmem>>) attributes {dimension_semantics = [#tpu.dimension_semantics<parallel>, #tpu.dimension_semantics<arbitrary>], iteration_bounds = array<i64: 2, 2>, scalar_prefetch = 0 : i64, scratch_operands = 3 : i64, tpu.core_type = #tpu.core_type<tc>, window_params = [{transform_indices = @transform_0, window_bounds = array<i64: 4, 1, 4, 256>}, {pipeline_mode = #tpu.pipeline_mode<synchronous>, transform_indices = @transform_1, window_bounds = array<i64: 8, 4>}, {pipeline_mode = #tpu.pipeline_mode<synchronous>, transform_indices = @transform_2, window_bounds = array<i64: 8, 1>}, {pipeline_mode = #tpu.pipeline_mode<synchronous>, transform_indices = @transform_3, window_bounds = array<i64: 8, 49>}, {pipeline_mode = #tpu.pipeline_mode<synchronous>, transform_indices = @transform_4, window_bounds = array<i64: 4, 8>}, {pipeline_mode = #tpu.pipeline_mode<synchronous>, transform_indices = @transform_5, window_bounds = array<i64: 4, 1>}, {transform_indices = @transform_6, window_bounds = array<i64: 4, 1, 4, 256>}]} {
    %c0_i32 = arith.constant 0 : i32
    %0 = arith.cmpi eq, %arg1, %c0_i32 : i32
    %1 = arith.extui %0 : i1 to i32
    %c0_i32_0 = arith.constant 0 : i32
    %2 = arith.cmpi ne, %1, %c0_i32_0 : i32
    scf.if %2 {
      %cst_472 = arith.constant 0.000000e+00 : f32
      %1348 = vector.broadcast %cst_472 : f32 to vector<4x256xf32>
      %c0_473 = arith.constant 0 : index
      %c0_474 = arith.constant 0 : index
      %1349 = vector.load %arg9[%c0_473, %c0_474] : memref<4x256xf32, #tpu.memory_space<vmem>>, vector<4x256xf32>
      tpu.vector_store %arg9[%c0_473, %c0_474], %1348 {strides = array<i32>} : memref<4x256xf32, #tpu.memory_space<vmem>>, vector<4x256xf32>,
      %cst_475 = arith.constant 0.000000e+00 : f32
      %1350 = vector.broadcast %cst_475 : f32 to vector<8x256xf32>
      %c0_476 = arith.constant 0 : index
      %c0_477 = arith.constant 0 : index
      %1351 = vector.load %arg10[%c0_476, %c0_477] : memref<8x256xf32, #tpu.memory_space<vmem>>, vector<8x256xf32>
      tpu.vector_store %arg10[%c0_476, %c0_477], %1350 {strides = array<i32>} : memref<8x256xf32, #tpu.memory_space<vmem>>, vector<8x256xf32>,
      %cst_478 = arith.constant 0.000000e+00 : f32
      %1352 = vector.broadcast %cst_478 : f32 to vector<8x358xf32>
      %c0_479 = arith.constant 0 : index
      %c0_480 = arith.constant 0 : index
      %1353 = vector.load %arg11[%c0_479, %c0_480] : memref<8x358xf32, #tpu.memory_space<vmem>>, vector<8x358xf32>
      tpu.vector_store %arg11[%c0_479, %c0_480], %1352 {strides = array<i32>} : memref<8x358xf32, #tpu.memory_space<vmem>>, vector<8x358xf32>,
    } else {
    }
    %c0 = arith.constant 0 : index
    %c0_1 = arith.constant 0 : index
    %3 = vector.load %arg3[%c0, %c0_1] : memref<8x4xf32, #tpu.memory_space<vmem>>, vector<8x4xf32>
    %c0_2 = arith.constant 0 : index
    %c0_3 = arith.constant 0 : index
    %4 = vector.load %arg4[%c0_2, %c0_3] : memref<8x1xf32, #tpu.memory_space<vmem>>, vector<8x1xf32>
    %c0_4 = arith.constant 0 : index
    %c0_5 = arith.constant 0 : index
    %5 = vector.load %arg5[%c0_4, %c0_5] : memref<8x49xf32, #tpu.memory_space<vmem>>, vector<8x49xf32>
    %c0_6 = arith.constant 0 : index
    %c0_7 = arith.constant 0 : index
    %6 = vector.load %arg6[%c0_6, %c0_7] : memref<4x8xf32, #tpu.memory_space<vmem>>, vector<4x8xf32>
    %c0_8 = arith.constant 0 : index
    %c0_9 = arith.constant 0 : index
    %7 = vector.load %arg7[%c0_8, %c0_9] : memref<4x1xf32, #tpu.memory_space<vmem>>, vector<4x1xf32>
    %8 = vector.extract_strided_slice %5 {offsets = [0, 0], sizes = [8, 1], strides = [1, 1]} : vector<8x49xf32> to vector<8x1xf32>
    %9 = vector.extract_strided_slice %5 {offsets = [0, 7], sizes = [8, 1], strides = [1, 1]} : vector<8x49xf32> to vector<8x1xf32>
    %10 = vector.extract_strided_slice %5 {offsets = [0, 14], sizes = [8, 1], strides = [1, 1]} : vector<8x49xf32> to vector<8x1xf32>
    %11 = vector.extract_strided_slice %5 {offsets = [0, 21], sizes = [8, 1], strides = [1, 1]} : vector<8x49xf32> to vector<8x1xf32>
    %12 = vector.extract_strided_slice %5 {offsets = [0, 28], sizes = [8, 1], strides = [1, 1]} : vector<8x49xf32> to vector<8x1xf32>
    %13 = vector.extract_strided_slice %5 {offsets = [0, 35], sizes = [8, 1], strides = [1, 1]} : vector<8x49xf32> to vector<8x1xf32>
    %14 = vector.extract_strided_slice %5 {offsets = [0, 42], sizes = [8, 1], strides = [1, 1]} : vector<8x49xf32> to vector<8x1xf32>
    %15 = vector.extract_strided_slice %5 {offsets = [0, 1], sizes = [8, 1], strides = [1, 1]} : vector<8x49xf32> to vector<8x1xf32>
    %16 = vector.extract_strided_slice %5 {offsets = [0, 8], sizes = [8, 1], strides = [1, 1]} : vector<8x49xf32> to vector<8x1xf32>
    %17 = vector.extract_strided_slice %5 {offsets = [0, 15], sizes = [8, 1], strides = [1, 1]} : vector<8x49xf32> to vector<8x1xf32>
    %18 = vector.extract_strided_slice %5 {offsets = [0, 22], sizes = [8, 1], strides = [1, 1]} : vector<8x49xf32> to vector<8x1xf32>
    %19 = vector.extract_strided_slice %5 {offsets = [0, 29], sizes = [8, 1], strides = [1, 1]} : vector<8x49xf32> to vector<8x1xf32>
    %20 = vector.extract_strided_slice %5 {offsets = [0, 36], sizes = [8, 1], strides = [1, 1]} : vector<8x49xf32> to vector<8x1xf32>
    %21 = vector.extract_strided_slice %5 {offsets = [0, 43], sizes = [8, 1], strides = [1, 1]} : vector<8x49xf32> to vector<8x1xf32>
    %22 = vector.extract_strided_slice %5 {offsets = [0, 2], sizes = [8, 1], strides = [1, 1]} : vector<8x49xf32> to vector<8x1xf32>
    %23 = vector.extract_strided_slice %5 {offsets = [0, 9], sizes = [8, 1], strides = [1, 1]} : vector<8x49xf32> to vector<8x1xf32>
    %24 = vector.extract_strided_slice %5 {offsets = [0, 16], sizes = [8, 1], strides = [1, 1]} : vector<8x49xf32> to vector<8x1xf32>
    %25 = vector.extract_strided_slice %5 {offsets = [0, 23], sizes = [8, 1], strides = [1, 1]} : vector<8x49xf32> to vector<8x1xf32>
    %26 = vector.extract_strided_slice %5 {offsets = [0, 30], sizes = [8, 1], strides = [1, 1]} : vector<8x49xf32> to vector<8x1xf32>
    %27 = vector.extract_strided_slice %5 {offsets = [0, 37], sizes = [8, 1], strides = [1, 1]} : vector<8x49xf32> to vector<8x1xf32>
    %28 = vector.extract_strided_slice %5 {offsets = [0, 44], sizes = [8, 1], strides = [1, 1]} : vector<8x49xf32> to vector<8x1xf32>
    %29 = vector.extract_strided_slice %5 {offsets = [0, 3], sizes = [8, 1], strides = [1, 1]} : vector<8x49xf32> to vector<8x1xf32>
    %30 = vector.extract_strided_slice %5 {offsets = [0, 10], sizes = [8, 1], strides = [1, 1]} : vector<8x49xf32> to vector<8x1xf32>
    %31 = vector.extract_strided_slice %5 {offsets = [0, 17], sizes = [8, 1], strides = [1, 1]} : vector<8x49xf32> to vector<8x1xf32>
    %32 = vector.extract_strided_slice %5 {offsets = [0, 24], sizes = [8, 1], strides = [1, 1]} : vector<8x49xf32> to vector<8x1xf32>
    %33 = vector.extract_strided_slice %5 {offsets = [0, 31], sizes = [8, 1], strides = [1, 1]} : vector<8x49xf32> to vector<8x1xf32>
    %34 = vector.extract_strided_slice %5 {offsets = [0, 38], sizes = [8, 1], strides = [1, 1]} : vector<8x49xf32> to vector<8x1xf32>
    %35 = vector.extract_strided_slice %5 {offsets = [0, 45], sizes = [8, 1], strides = [1, 1]} : vector<8x49xf32> to vector<8x1xf32>
    %36 = vector.extract_strided_slice %5 {offsets = [0, 4], sizes = [8, 1], strides = [1, 1]} : vector<8x49xf32> to vector<8x1xf32>
    %37 = vector.extract_strided_slice %5 {offsets = [0, 11], sizes = [8, 1], strides = [1, 1]} : vector<8x49xf32> to vector<8x1xf32>
    %38 = vector.extract_strided_slice %5 {offsets = [0, 18], sizes = [8, 1], strides = [1, 1]} : vector<8x49xf32> to vector<8x1xf32>
    %39 = vector.extract_strided_slice %5 {offsets = [0, 25], sizes = [8, 1], strides = [1, 1]} : vector<8x49xf32> to vector<8x1xf32>
    %40 = vector.extract_strided_slice %5 {offsets = [0, 32], sizes = [8, 1], strides = [1, 1]} : vector<8x49xf32> to vector<8x1xf32>
    %41 = vector.extract_strided_slice %5 {offsets = [0, 39], sizes = [8, 1], strides = [1, 1]} : vector<8x49xf32> to vector<8x1xf32>
    %42 = vector.extract_strided_slice %5 {offsets = [0, 46], sizes = [8, 1], strides = [1, 1]} : vector<8x49xf32> to vector<8x1xf32>
    %43 = vector.extract_strided_slice %5 {offsets = [0, 5], sizes = [8, 1], strides = [1, 1]} : vector<8x49xf32> to vector<8x1xf32>
    %44 = vector.extract_strided_slice %5 {offsets = [0, 12], sizes = [8, 1], strides = [1, 1]} : vector<8x49xf32> to vector<8x1xf32>
    %45 = vector.extract_strided_slice %5 {offsets = [0, 19], sizes = [8, 1], strides = [1, 1]} : vector<8x49xf32> to vector<8x1xf32>
    %46 = vector.extract_strided_slice %5 {offsets = [0, 26], sizes = [8, 1], strides = [1, 1]} : vector<8x49xf32> to vector<8x1xf32>
    %47 = vector.extract_strided_slice %5 {offsets = [0, 33], sizes = [8, 1], strides = [1, 1]} : vector<8x49xf32> to vector<8x1xf32>
    %48 = vector.extract_strided_slice %5 {offsets = [0, 40], sizes = [8, 1], strides = [1, 1]} : vector<8x49xf32> to vector<8x1xf32>
    %49 = vector.extract_strided_slice %5 {offsets = [0, 47], sizes = [8, 1], strides = [1, 1]} : vector<8x49xf32> to vector<8x1xf32>
    %50 = vector.extract_strided_slice %5 {offsets = [0, 6], sizes = [8, 1], strides = [1, 1]} : vector<8x49xf32> to vector<8x1xf32>
    %51 = vector.extract_strided_slice %5 {offsets = [0, 13], sizes = [8, 1], strides = [1, 1]} : vector<8x49xf32> to vector<8x1xf32>
    %52 = vector.extract_strided_slice %5 {offsets = [0, 20], sizes = [8, 1], strides = [1, 1]} : vector<8x49xf32> to vector<8x1xf32>
    %53 = vector.extract_strided_slice %5 {offsets = [0, 27], sizes = [8, 1], strides = [1, 1]} : vector<8x49xf32> to vector<8x1xf32>
    %54 = vector.extract_strided_slice %5 {offsets = [0, 34], sizes = [8, 1], strides = [1, 1]} : vector<8x49xf32> to vector<8x1xf32>
    %55 = vector.extract_strided_slice %5 {offsets = [0, 41], sizes = [8, 1], strides = [1, 1]} : vector<8x49xf32> to vector<8x1xf32>
    %56 = vector.extract_strided_slice %5 {offsets = [0, 48], sizes = [8, 1], strides = [1, 1]} : vector<8x49xf32> to vector<8x1xf32>
    %57 = vector.extract_strided_slice %3 {offsets = [0, 0], sizes = [8, 1], strides = [1, 1]} : vector<8x4xf32> to vector<8x1xf32>
    %58 = vector.extract_strided_slice %3 {offsets = [0, 1], sizes = [8, 1], strides = [1, 1]} : vector<8x4xf32> to vector<8x1xf32>
    %59 = vector.extract_strided_slice %3 {offsets = [0, 2], sizes = [8, 1], strides = [1, 1]} : vector<8x4xf32> to vector<8x1xf32>
    %60 = vector.extract_strided_slice %3 {offsets = [0, 3], sizes = [8, 1], strides = [1, 1]} : vector<8x4xf32> to vector<8x1xf32>
    %61 = vector.extract_strided_slice %6 {offsets = [0, 0], sizes = [4, 1], strides = [1, 1]} : vector<4x8xf32> to vector<4x1xf32>
    %62 = vector.extract_strided_slice %6 {offsets = [0, 1], sizes = [4, 1], strides = [1, 1]} : vector<4x8xf32> to vector<4x1xf32>
    %63 = vector.extract_strided_slice %6 {offsets = [0, 2], sizes = [4, 1], strides = [1, 1]} : vector<4x8xf32> to vector<4x1xf32>
    %64 = vector.extract_strided_slice %6 {offsets = [0, 3], sizes = [4, 1], strides = [1, 1]} : vector<4x8xf32> to vector<4x1xf32>
    %65 = vector.extract_strided_slice %6 {offsets = [0, 4], sizes = [4, 1], strides = [1, 1]} : vector<4x8xf32> to vector<4x1xf32>
    %66 = vector.extract_strided_slice %6 {offsets = [0, 5], sizes = [4, 1], strides = [1, 1]} : vector<4x8xf32> to vector<4x1xf32>
    %67 = vector.extract_strided_slice %6 {offsets = [0, 6], sizes = [4, 1], strides = [1, 1]} : vector<4x8xf32> to vector<4x1xf32>
    %68 = vector.extract_strided_slice %6 {offsets = [0, 7], sizes = [4, 1], strides = [1, 1]} : vector<4x8xf32> to vector<4x1xf32>
    %69 = tpu.iota {dimensions = array<i32: 1>} : vector<1x256xi32>
    %c16_i32 = arith.constant 16 : i32
    %c0_i32_10 = arith.constant 0 : i32
    %70 = arith.cmpi eq, %c16_i32, %c0_i32_10 : i32
    %c1_i32 = arith.constant 1 : i32
    %71 = arith.select %70, %c1_i32, %c16_i32 : i32
    %72 = vector.broadcast %71 : i32 to vector<1x256xi32>
    %73 = arith.remsi %69, %72 : vector<1x256xi32>
    %c0_i32_11 = arith.constant 0 : i32
    %74 = vector.broadcast %c0_i32_11 : i32 to vector<1x256xi32>
    %75 = arith.cmpi ne, %73, %74 : vector<1x256xi32>
    %c0_i32_12 = arith.constant 0 : i32
    %76 = vector.broadcast %c0_i32_12 : i32 to vector<1x256xi32>
    %77 = arith.cmpi slt, %73, %76 : vector<1x256xi32>
    %c0_i32_13 = arith.constant 0 : i32
    %78 = arith.cmpi slt, %71, %c0_i32_13 : i32
    %79 = vector.broadcast %78 : i1 to vector<1x256xi1>
    %80 = vector.broadcast %79 : vector<1x256xi1> to vector<1x256xi1>
    %81 = arith.xori %77, %80 : vector<1x256xi1>
    %82 = arith.andi %81, %75 : vector<1x256xi1>
    %83 = vector.broadcast %71 : i32 to vector<1x256xi32>
    %84 = arith.addi %73, %83 : vector<1x256xi32>
    %85 = arith.select %82, %84, %73 : vector<1x256xi1>, vector<1x256xi32>
    %c-3_i32 = arith.constant -3 : i32
    %86 = vector.broadcast %c-3_i32 : i32 to vector<1x256xi32>
    %87 = arith.addi %85, %86 : vector<1x256xi32>
    %c0_i32_14 = arith.constant 0 : i32
    %88 = vector.broadcast %c0_i32_14 : i32 to vector<1x256xi32>
    %89 = arith.cmpi sge, %87, %88 : vector<1x256xi32>
    %c-3_i32_15 = arith.constant -3 : i32
    %90 = vector.broadcast %c-3_i32_15 : i32 to vector<1x256xi32>
    %91 = arith.addi %85, %90 : vector<1x256xi32>
    %c16_i32_16 = arith.constant 16 : i32
    %92 = vector.broadcast %c16_i32_16 : i32 to vector<1x256xi32>
    %93 = arith.cmpi slt, %91, %92 : vector<1x256xi32>
    %94 = arith.andi %89, %93 : vector<1x256xi1>
    %95 = arith.extui %94 : vector<1x256xi1> to vector<1x256xi32>
    %96 = arith.sitofp %95 : vector<1x256xi32> to vector<1x256xf32>
    %c-2_i32 = arith.constant -2 : i32
    %97 = vector.broadcast %c-2_i32 : i32 to vector<1x256xi32>
    %98 = arith.addi %85, %97 : vector<1x256xi32>
    %c0_i32_17 = arith.constant 0 : i32
    %99 = vector.broadcast %c0_i32_17 : i32 to vector<1x256xi32>
    %100 = arith.cmpi sge, %98, %99 : vector<1x256xi32>
    %c-2_i32_18 = arith.constant -2 : i32
    %101 = vector.broadcast %c-2_i32_18 : i32 to vector<1x256xi32>
    %102 = arith.addi %85, %101 : vector<1x256xi32>
    %c16_i32_19 = arith.constant 16 : i32
    %103 = vector.broadcast %c16_i32_19 : i32 to vector<1x256xi32>
    %104 = arith.cmpi slt, %102, %103 : vector<1x256xi32>
    %105 = arith.andi %100, %104 : vector<1x256xi1>
    %106 = arith.extui %105 : vector<1x256xi1> to vector<1x256xi32>
    %107 = arith.sitofp %106 : vector<1x256xi32> to vector<1x256xf32>
    %c-1_i32 = arith.constant -1 : i32
    %108 = vector.broadcast %c-1_i32 : i32 to vector<1x256xi32>
    %109 = arith.addi %85, %108 : vector<1x256xi32>
    %c0_i32_20 = arith.constant 0 : i32
    %110 = vector.broadcast %c0_i32_20 : i32 to vector<1x256xi32>
    %111 = arith.cmpi sge, %109, %110 : vector<1x256xi32>
    %c-1_i32_21 = arith.constant -1 : i32
    %112 = vector.broadcast %c-1_i32_21 : i32 to vector<1x256xi32>
    %113 = arith.addi %85, %112 : vector<1x256xi32>
    %c16_i32_22 = arith.constant 16 : i32
    %114 = vector.broadcast %c16_i32_22 : i32 to vector<1x256xi32>
    %115 = arith.cmpi slt, %113, %114 : vector<1x256xi32>
    %116 = arith.andi %111, %115 : vector<1x256xi1>
    %117 = arith.extui %116 : vector<1x256xi1> to vector<1x256xi32>
    %118 = arith.sitofp %117 : vector<1x256xi32> to vector<1x256xf32>
    %c1_i32_23 = arith.constant 1 : i32
    %119 = vector.broadcast %c1_i32_23 : i32 to vector<1x256xi32>
    %120 = arith.addi %85, %119 : vector<1x256xi32>
    %c0_i32_24 = arith.constant 0 : i32
    %121 = vector.broadcast %c0_i32_24 : i32 to vector<1x256xi32>
    %122 = arith.cmpi sge, %120, %121 : vector<1x256xi32>
    %c1_i32_25 = arith.constant 1 : i32
    %123 = vector.broadcast %c1_i32_25 : i32 to vector<1x256xi32>
    %124 = arith.addi %85, %123 : vector<1x256xi32>
    %c16_i32_26 = arith.constant 16 : i32
    %125 = vector.broadcast %c16_i32_26 : i32 to vector<1x256xi32>
    %126 = arith.cmpi slt, %124, %125 : vector<1x256xi32>
    %127 = arith.andi %122, %126 : vector<1x256xi1>
    %128 = arith.extui %127 : vector<1x256xi1> to vector<1x256xi32>
    %129 = arith.sitofp %128 : vector<1x256xi32> to vector<1x256xf32>
    %c2_i32 = arith.constant 2 : i32
    %130 = vector.broadcast %c2_i32 : i32 to vector<1x256xi32>
    %131 = arith.addi %85, %130 : vector<1x256xi32>
    %c0_i32_27 = arith.constant 0 : i32
    %132 = vector.broadcast %c0_i32_27 : i32 to vector<1x256xi32>
    %133 = arith.cmpi sge, %131, %132 : vector<1x256xi32>
    %c2_i32_28 = arith.constant 2 : i32
    %134 = vector.broadcast %c2_i32_28 : i32 to vector<1x256xi32>
    %135 = arith.addi %85, %134 : vector<1x256xi32>
    %c16_i32_29 = arith.constant 16 : i32
    %136 = vector.broadcast %c16_i32_29 : i32 to vector<1x256xi32>
    %137 = arith.cmpi slt, %135, %136 : vector<1x256xi32>
    %138 = arith.andi %133, %137 : vector<1x256xi1>
    %139 = arith.extui %138 : vector<1x256xi1> to vector<1x256xi32>
    %140 = arith.sitofp %139 : vector<1x256xi32> to vector<1x256xf32>
    %c3_i32 = arith.constant 3 : i32
    %141 = vector.broadcast %c3_i32 : i32 to vector<1x256xi32>
    %142 = arith.addi %85, %141 : vector<1x256xi32>
    %c0_i32_30 = arith.constant 0 : i32
    %143 = vector.broadcast %c0_i32_30 : i32 to vector<1x256xi32>
    %144 = arith.cmpi sge, %142, %143 : vector<1x256xi32>
    %c3_i32_31 = arith.constant 3 : i32
    %145 = vector.broadcast %c3_i32_31 : i32 to vector<1x256xi32>
    %146 = arith.addi %85, %145 : vector<1x256xi32>
    %c16_i32_32 = arith.constant 16 : i32
    %147 = vector.broadcast %c16_i32_32 : i32 to vector<1x256xi32>
    %148 = arith.cmpi slt, %146, %147 : vector<1x256xi32>
    %149 = arith.andi %144, %148 : vector<1x256xi1>
    %150 = arith.extui %149 : vector<1x256xi1> to vector<1x256xi32>
    %151 = arith.sitofp %150 : vector<1x256xi32> to vector<1x256xf32>
    %c0_33 = arith.constant 0 : index
    %c0_34 = arith.constant 0 : index
    %c0_35 = arith.constant 0 : index
    %c0_36 = arith.constant 0 : index
    %152 = vector.load %arg2[%c0_33, %c0_34, %c0_35, %c0_36] : memref<4x1x4x256xf32, #tpu.memory_space<vmem>>, vector<1x1x4x256xf32>
    %153 = vector.shape_cast %152 : vector<1x1x4x256xf32> to vector<4x256xf32>
    %c0_37 = arith.constant 0 : index
    %c0_38 = arith.constant 0 : index
    %154 = vector.load %arg9[%c0_37, %c0_38] : memref<4x256xf32, #tpu.memory_space<vmem>>, vector<4x256xf32>
    %155 = arith.subf %153, %154 : vector<4x256xf32>
    %cst = arith.constant 5.000000e-01 : f32
    %156 = vector.broadcast %cst : f32 to vector<4x256xf32>
    %157 = arith.mulf %155, %156 : vector<4x256xf32>
    %158 = arith.addf %154, %157 : vector<4x256xf32>
    %cst_39 = arith.constant 1.000000e+00 : f32
    %159 = vector.broadcast %cst_39 : f32 to vector<4x256xf32>
    %160 = arith.cmpf oge, %158, %159 : vector<4x256xf32>
    %cst_40 = arith.constant 0.000000e+00 : f32
    %161 = vector.broadcast %cst_40 : f32 to vector<4x256xf32>
    %162 = arith.select %160, %161, %158 : vector<4x256xi1>, vector<4x256xf32>
    %c0_41 = arith.constant 0 : index
    %c0_42 = arith.constant 0 : index
    %163 = vector.load %arg9[%c0_41, %c0_42] : memref<4x256xf32, #tpu.memory_space<vmem>>, vector<4x256xf32>
    tpu.vector_store %arg9[%c0_41, %c0_42], %162 {strides = array<i32>} : memref<4x256xf32, #tpu.memory_space<vmem>>, vector<4x256xf32>,
    %164 = arith.extui %160 : vector<4x256xi1> to vector<4x256xi32>
    %165 = arith.sitofp %164 : vector<4x256xi32> to vector<4x256xf32>
    %166 = vector.extract_strided_slice %165 {offsets = [0, 0], sizes = [1, 256], strides = [1, 1]} : vector<4x256xf32> to vector<1x256xf32>
    %167 = vector.broadcast %57 : vector<8x1xf32> to vector<8x256xf32>
    %168 = vector.broadcast %166 : vector<1x256xf32> to vector<8x256xf32>
    %169 = arith.mulf %167, %168 : vector<8x256xf32>
    %170 = vector.extract_strided_slice %165 {offsets = [1, 0], sizes = [1, 256], strides = [1, 1]} : vector<4x256xf32> to vector<1x256xf32>
    %171 = vector.broadcast %58 : vector<8x1xf32> to vector<8x256xf32>
    %172 = vector.broadcast %170 : vector<1x256xf32> to vector<8x256xf32>
    %173 = arith.mulf %171, %172 : vector<8x256xf32>
    %174 = arith.addf %169, %173 : vector<8x256xf32>
    %175 = vector.extract_strided_slice %165 {offsets = [2, 0], sizes = [1, 256], strides = [1, 1]} : vector<4x256xf32> to vector<1x256xf32>
    %176 = vector.broadcast %59 : vector<8x1xf32> to vector<8x256xf32>
    %177 = vector.broadcast %175 : vector<1x256xf32> to vector<8x256xf32>
    %178 = arith.mulf %176, %177 : vector<8x256xf32>
    %179 = arith.addf %174, %178 : vector<8x256xf32>
    %180 = vector.extract_strided_slice %165 {offsets = [3, 0], sizes = [1, 256], strides = [1, 1]} : vector<4x256xf32> to vector<1x256xf32>
    %181 = vector.broadcast %60 : vector<8x1xf32> to vector<8x256xf32>
    %182 = vector.broadcast %180 : vector<1x256xf32> to vector<8x256xf32>
    %183 = arith.mulf %181, %182 : vector<8x256xf32>
    %184 = arith.addf %179, %183 : vector<8x256xf32>
    %185 = vector.broadcast %4 : vector<8x1xf32> to vector<8x256xf32>
    %186 = arith.addf %184, %185 : vector<8x256xf32>
    %c0_43 = arith.constant 0 : index
    %c0_44 = arith.constant 0 : index
    %187 = vector.load %arg10[%c0_43, %c0_44] : memref<8x256xf32, #tpu.memory_space<vmem>>, vector<8x256xf32>
    %188 = arith.subf %186, %187 : vector<8x256xf32>
    %cst_45 = arith.constant 5.000000e-01 : f32
    %189 = vector.broadcast %cst_45 : f32 to vector<8x256xf32>
    %190 = arith.mulf %188, %189 : vector<8x256xf32>
    %191 = arith.addf %187, %190 : vector<8x256xf32>
    %cst_46 = arith.constant 1.000000e+00 : f32
    %192 = vector.broadcast %cst_46 : f32 to vector<8x256xf32>
    %193 = arith.cmpf oge, %191, %192 : vector<8x256xf32>
    %cst_47 = arith.constant 0.000000e+00 : f32
    %194 = vector.broadcast %cst_47 : f32 to vector<8x256xf32>
    %195 = arith.select %193, %194, %191 : vector<8x256xi1>, vector<8x256xf32>
    %c0_48 = arith.constant 0 : index
    %c0_49 = arith.constant 0 : index
    %196 = vector.load %arg10[%c0_48, %c0_49] : memref<8x256xf32, #tpu.memory_space<vmem>>, vector<8x256xf32>
    tpu.vector_store %arg10[%c0_48, %c0_49], %195 {strides = array<i32>} : memref<8x256xf32, #tpu.memory_space<vmem>>, vector<8x256xf32>,
    %197 = arith.extui %193 : vector<8x256xi1> to vector<8x256xi32>
    %198 = arith.sitofp %197 : vector<8x256xi32> to vector<8x256xf32>
    %c0_50 = arith.constant 0 : index
    %c51 = arith.constant 51 : index
    %199 = vector.load %arg11[%c0_50, %c51] : memref<8x358xf32, #tpu.memory_space<vmem>>, vector<8x256xf32>
    tpu.vector_store %arg11[%c0_50, %c51], %198 {strides = array<i32>} : memref<8x358xf32, #tpu.memory_space<vmem>>, vector<8x256xf32>,
    %c0_51 = arith.constant 0 : index
    %c0_52 = arith.constant 0 : index
    %200 = vector.load %arg11[%c0_51, %c0_52] : memref<8x358xf32, #tpu.memory_space<vmem>>, vector<8x256xf32>
    %201 = vector.broadcast %8 : vector<8x1xf32> to vector<8x256xf32>
    %202 = arith.mulf %200, %201 : vector<8x256xf32>
    %c0_53 = arith.constant 0 : index
    %c16 = arith.constant 16 : index
    %203 = vector.load %arg11[%c0_53, %c16] : memref<8x358xf32, #tpu.memory_space<vmem>>, vector<8x256xf32>
    %204 = vector.broadcast %9 : vector<8x1xf32> to vector<8x256xf32>
    %205 = arith.mulf %203, %204 : vector<8x256xf32>
    %206 = arith.addf %202, %205 : vector<8x256xf32>
    %c0_54 = arith.constant 0 : index
    %c32 = arith.constant 32 : index
    %207 = vector.load %arg11[%c0_54, %c32] : memref<8x358xf32, #tpu.memory_space<vmem>>, vector<8x256xf32>
    %208 = vector.broadcast %10 : vector<8x1xf32> to vector<8x256xf32>
    %209 = arith.mulf %207, %208 : vector<8x256xf32>
    %210 = arith.addf %206, %209 : vector<8x256xf32>
    %c0_55 = arith.constant 0 : index
    %c48 = arith.constant 48 : index
    %211 = vector.load %arg11[%c0_55, %c48] : memref<8x358xf32, #tpu.memory_space<vmem>>, vector<8x256xf32>
    %212 = vector.broadcast %11 : vector<8x1xf32> to vector<8x256xf32>
    %213 = arith.mulf %211, %212 : vector<8x256xf32>
    %214 = arith.addf %210, %213 : vector<8x256xf32>
    %c0_56 = arith.constant 0 : index
    %c64 = arith.constant 64 : index
    %215 = vector.load %arg11[%c0_56, %c64] : memref<8x358xf32, #tpu.memory_space<vmem>>, vector<8x256xf32>
    %216 = vector.broadcast %12 : vector<8x1xf32> to vector<8x256xf32>
    %217 = arith.mulf %215, %216 : vector<8x256xf32>
    %218 = arith.addf %214, %217 : vector<8x256xf32>
    %c0_57 = arith.constant 0 : index
    %c80 = arith.constant 80 : index
    %219 = vector.load %arg11[%c0_57, %c80] : memref<8x358xf32, #tpu.memory_space<vmem>>, vector<8x256xf32>
    %220 = vector.broadcast %13 : vector<8x1xf32> to vector<8x256xf32>
    %221 = arith.mulf %219, %220 : vector<8x256xf32>
    %222 = arith.addf %218, %221 : vector<8x256xf32>
    %c0_58 = arith.constant 0 : index
    %c96 = arith.constant 96 : index
    %223 = vector.load %arg11[%c0_58, %c96] : memref<8x358xf32, #tpu.memory_space<vmem>>, vector<8x256xf32>
    %224 = vector.broadcast %14 : vector<8x1xf32> to vector<8x256xf32>
    %225 = arith.mulf %223, %224 : vector<8x256xf32>
    %226 = arith.addf %222, %225 : vector<8x256xf32>
    %227 = vector.broadcast %96 : vector<1x256xf32> to vector<8x256xf32>
    %228 = arith.mulf %226, %227 : vector<8x256xf32>
    %c0_59 = arith.constant 0 : index
    %c1 = arith.constant 1 : index
    %229 = vector.load %arg11[%c0_59, %c1] : memref<8x358xf32, #tpu.memory_space<vmem>>, vector<8x256xf32>
    %230 = vector.broadcast %15 : vector<8x1xf32> to vector<8x256xf32>
    %231 = arith.mulf %229, %230 : vector<8x256xf32>
    %c0_60 = arith.constant 0 : index
    %c17 = arith.constant 17 : index
    %232 = vector.load %arg11[%c0_60, %c17] : memref<8x358xf32, #tpu.memory_space<vmem>>, vector<8x256xf32>
    %233 = vector.broadcast %16 : vector<8x1xf32> to vector<8x256xf32>
    %234 = arith.mulf %232, %233 : vector<8x256xf32>
    %235 = arith.addf %231, %234 : vector<8x256xf32>
    %c0_61 = arith.constant 0 : index
    %c33 = arith.constant 33 : index
    %236 = vector.load %arg11[%c0_61, %c33] : memref<8x358xf32, #tpu.memory_space<vmem>>, vector<8x256xf32>
    %237 = vector.broadcast %17 : vector<8x1xf32> to vector<8x256xf32>
    %238 = arith.mulf %236, %237 : vector<8x256xf32>
    %239 = arith.addf %235, %238 : vector<8x256xf32>
    %c0_62 = arith.constant 0 : index
    %c49 = arith.constant 49 : index
    %240 = vector.load %arg11[%c0_62, %c49] : memref<8x358xf32, #tpu.memory_space<vmem>>, vector<8x256xf32>
    %241 = vector.broadcast %18 : vector<8x1xf32> to vector<8x256xf32>
    %242 = arith.mulf %240, %241 : vector<8x256xf32>
    %243 = arith.addf %239, %242 : vector<8x256xf32>
    %c0_63 = arith.constant 0 : index
    %c65 = arith.constant 65 : index
    %244 = vector.load %arg11[%c0_63, %c65] : memref<8x358xf32, #tpu.memory_space<vmem>>, vector<8x256xf32>
    %245 = vector.broadcast %19 : vector<8x1xf32> to vector<8x256xf32>
    %246 = arith.mulf %244, %245 : vector<8x256xf32>
    %247 = arith.addf %243, %246 : vector<8x256xf32>
    %c0_64 = arith.constant 0 : index
    %c81 = arith.constant 81 : index
    %248 = vector.load %arg11[%c0_64, %c81] : memref<8x358xf32, #tpu.memory_space<vmem>>, vector<8x256xf32>
    %249 = vector.broadcast %20 : vector<8x1xf32> to vector<8x256xf32>
    %250 = arith.mulf %248, %249 : vector<8x256xf32>
    %251 = arith.addf %247, %250 : vector<8x256xf32>
    %c0_65 = arith.constant 0 : index
    %c97 = arith.constant 97 : index
    %252 = vector.load %arg11[%c0_65, %c97] : memref<8x358xf32, #tpu.memory_space<vmem>>, vector<8x256xf32>
    %253 = vector.broadcast %21 : vector<8x1xf32> to vector<8x256xf32>
    %254 = arith.mulf %252, %253 : vector<8x256xf32>
    %255 = arith.addf %251, %254 : vector<8x256xf32>
    %256 = vector.broadcast %107 : vector<1x256xf32> to vector<8x256xf32>
    %257 = arith.mulf %255, %256 : vector<8x256xf32>
    %258 = arith.addf %228, %257 : vector<8x256xf32>
    %c0_66 = arith.constant 0 : index
    %c2 = arith.constant 2 : index
    %259 = vector.load %arg11[%c0_66, %c2] : memref<8x358xf32, #tpu.memory_space<vmem>>, vector<8x256xf32>
    %260 = vector.broadcast %22 : vector<8x1xf32> to vector<8x256xf32>
    %261 = arith.mulf %259, %260 : vector<8x256xf32>
    %c0_67 = arith.constant 0 : index
    %c18 = arith.constant 18 : index
    %262 = vector.load %arg11[%c0_67, %c18] : memref<8x358xf32, #tpu.memory_space<vmem>>, vector<8x256xf32>
    %263 = vector.broadcast %23 : vector<8x1xf32> to vector<8x256xf32>
    %264 = arith.mulf %262, %263 : vector<8x256xf32>
    %265 = arith.addf %261, %264 : vector<8x256xf32>
    %c0_68 = arith.constant 0 : index
    %c34 = arith.constant 34 : index
    %266 = vector.load %arg11[%c0_68, %c34] : memref<8x358xf32, #tpu.memory_space<vmem>>, vector<8x256xf32>
    %267 = vector.broadcast %24 : vector<8x1xf32> to vector<8x256xf32>
    %268 = arith.mulf %266, %267 : vector<8x256xf32>
    %269 = arith.addf %265, %268 : vector<8x256xf32>
    %c0_69 = arith.constant 0 : index
    %c50 = arith.constant 50 : index
    %270 = vector.load %arg11[%c0_69, %c50] : memref<8x358xf32, #tpu.memory_space<vmem>>, vector<8x256xf32>
    %271 = vector.broadcast %25 : vector<8x1xf32> to vector<8x256xf32>
    %272 = arith.mulf %270, %271 : vector<8x256xf32>
    %273 = arith.addf %269, %272 : vector<8x256xf32>
    %c0_70 = arith.constant 0 : index
    %c66 = arith.constant 66 : index
    %274 = vector.load %arg11[%c0_70, %c66] : memref<8x358xf32, #tpu.memory_space<vmem>>, vector<8x256xf32>
    %275 = vector.broadcast %26 : vector<8x1xf32> to vector<8x256xf32>
    %276 = arith.mulf %274, %275 : vector<8x256xf32>
    %277 = arith.addf %273, %276 : vector<8x256xf32>
    %c0_71 = arith.constant 0 : index
    %c82 = arith.constant 82 : index
    %278 = vector.load %arg11[%c0_71, %c82] : memref<8x358xf32, #tpu.memory_space<vmem>>, vector<8x256xf32>
    %279 = vector.broadcast %27 : vector<8x1xf32> to vector<8x256xf32>
    %280 = arith.mulf %278, %279 : vector<8x256xf32>
    %281 = arith.addf %277, %280 : vector<8x256xf32>
    %c0_72 = arith.constant 0 : index
    %c98 = arith.constant 98 : index
    %282 = vector.load %arg11[%c0_72, %c98] : memref<8x358xf32, #tpu.memory_space<vmem>>, vector<8x256xf32>
    %283 = vector.broadcast %28 : vector<8x1xf32> to vector<8x256xf32>
    %284 = arith.mulf %282, %283 : vector<8x256xf32>
    %285 = arith.addf %281, %284 : vector<8x256xf32>
    %286 = vector.broadcast %118 : vector<1x256xf32> to vector<8x256xf32>
    %287 = arith.mulf %285, %286 : vector<8x256xf32>
    %288 = arith.addf %258, %287 : vector<8x256xf32>
    %c0_73 = arith.constant 0 : index
    %c3 = arith.constant 3 : index
    %289 = vector.load %arg11[%c0_73, %c3] : memref<8x358xf32, #tpu.memory_space<vmem>>, vector<8x256xf32>
    %290 = vector.broadcast %29 : vector<8x1xf32> to vector<8x256xf32>
    %291 = arith.mulf %289, %290 : vector<8x256xf32>
    %c0_74 = arith.constant 0 : index
    %c19 = arith.constant 19 : index
    %292 = vector.load %arg11[%c0_74, %c19] : memref<8x358xf32, #tpu.memory_space<vmem>>, vector<8x256xf32>
    %293 = vector.broadcast %30 : vector<8x1xf32> to vector<8x256xf32>
    %294 = arith.mulf %292, %293 : vector<8x256xf32>
    %295 = arith.addf %291, %294 : vector<8x256xf32>
    %c0_75 = arith.constant 0 : index
    %c35 = arith.constant 35 : index
    %296 = vector.load %arg11[%c0_75, %c35] : memref<8x358xf32, #tpu.memory_space<vmem>>, vector<8x256xf32>
    %297 = vector.broadcast %31 : vector<8x1xf32> to vector<8x256xf32>
    %298 = arith.mulf %296, %297 : vector<8x256xf32>
    %299 = arith.addf %295, %298 : vector<8x256xf32>
    %c0_76 = arith.constant 0 : index
    %c51_77 = arith.constant 51 : index
    %300 = vector.load %arg11[%c0_76, %c51_77] : memref<8x358xf32, #tpu.memory_space<vmem>>, vector<8x256xf32>
    %301 = vector.broadcast %32 : vector<8x1xf32> to vector<8x256xf32>
    %302 = arith.mulf %300, %301 : vector<8x256xf32>
    %303 = arith.addf %299, %302 : vector<8x256xf32>
    %c0_78 = arith.constant 0 : index
    %c67 = arith.constant 67 : index
    %304 = vector.load %arg11[%c0_78, %c67] : memref<8x358xf32, #tpu.memory_space<vmem>>, vector<8x256xf32>
    %305 = vector.broadcast %33 : vector<8x1xf32> to vector<8x256xf32>
    %306 = arith.mulf %304, %305 : vector<8x256xf32>
    %307 = arith.addf %303, %306 : vector<8x256xf32>
    %c0_79 = arith.constant 0 : index
    %c83 = arith.constant 83 : index
    %308 = vector.load %arg11[%c0_79, %c83] : memref<8x358xf32, #tpu.memory_space<vmem>>, vector<8x256xf32>
    %309 = vector.broadcast %34 : vector<8x1xf32> to vector<8x256xf32>
    %310 = arith.mulf %308, %309 : vector<8x256xf32>
    %311 = arith.addf %307, %310 : vector<8x256xf32>
    %c0_80 = arith.constant 0 : index
    %c99 = arith.constant 99 : index
    %312 = vector.load %arg11[%c0_80, %c99] : memref<8x358xf32, #tpu.memory_space<vmem>>, vector<8x256xf32>
    %313 = vector.broadcast %35 : vector<8x1xf32> to vector<8x256xf32>
    %314 = arith.mulf %312, %313 : vector<8x256xf32>
    %315 = arith.addf %311, %314 : vector<8x256xf32>
    %316 = arith.addf %288, %315 : vector<8x256xf32>
    %c0_81 = arith.constant 0 : index
    %c4 = arith.constant 4 : index
    %317 = vector.load %arg11[%c0_81, %c4] : memref<8x358xf32, #tpu.memory_space<vmem>>, vector<8x256xf32>
    %318 = vector.broadcast %36 : vector<8x1xf32> to vector<8x256xf32>
    %319 = arith.mulf %317, %318 : vector<8x256xf32>
    %c0_82 = arith.constant 0 : index
    %c20 = arith.constant 20 : index
    %320 = vector.load %arg11[%c0_82, %c20] : memref<8x358xf32, #tpu.memory_space<vmem>>, vector<8x256xf32>
    %321 = vector.broadcast %37 : vector<8x1xf32> to vector<8x256xf32>
    %322 = arith.mulf %320, %321 : vector<8x256xf32>
    %323 = arith.addf %319, %322 : vector<8x256xf32>
    %c0_83 = arith.constant 0 : index
    %c36 = arith.constant 36 : index
    %324 = vector.load %arg11[%c0_83, %c36] : memref<8x358xf32, #tpu.memory_space<vmem>>, vector<8x256xf32>
    %325 = vector.broadcast %38 : vector<8x1xf32> to vector<8x256xf32>
    %326 = arith.mulf %324, %325 : vector<8x256xf32>
    %327 = arith.addf %323, %326 : vector<8x256xf32>
    %c0_84 = arith.constant 0 : index
    %c52 = arith.constant 52 : index
    %328 = vector.load %arg11[%c0_84, %c52] : memref<8x358xf32, #tpu.memory_space<vmem>>, vector<8x256xf32>
    %329 = vector.broadcast %39 : vector<8x1xf32> to vector<8x256xf32>
    %330 = arith.mulf %328, %329 : vector<8x256xf32>
    %331 = arith.addf %327, %330 : vector<8x256xf32>
    %c0_85 = arith.constant 0 : index
    %c68 = arith.constant 68 : index
    %332 = vector.load %arg11[%c0_85, %c68] : memref<8x358xf32, #tpu.memory_space<vmem>>, vector<8x256xf32>
    %333 = vector.broadcast %40 : vector<8x1xf32> to vector<8x256xf32>
    %334 = arith.mulf %332, %333 : vector<8x256xf32>
    %335 = arith.addf %331, %334 : vector<8x256xf32>
    %c0_86 = arith.constant 0 : index
    %c84 = arith.constant 84 : index
    %336 = vector.load %arg11[%c0_86, %c84] : memref<8x358xf32, #tpu.memory_space<vmem>>, vector<8x256xf32>
    %337 = vector.broadcast %41 : vector<8x1xf32> to vector<8x256xf32>
    %338 = arith.mulf %336, %337 : vector<8x256xf32>
    %339 = arith.addf %335, %338 : vector<8x256xf32>
    %c0_87 = arith.constant 0 : index
    %c100 = arith.constant 100 : index
    %340 = vector.load %arg11[%c0_87, %c100] : memref<8x358xf32, #tpu.memory_space<vmem>>, vector<8x256xf32>
    %341 = vector.broadcast %42 : vector<8x1xf32> to vector<8x256xf32>
    %342 = arith.mulf %340, %341 : vector<8x256xf32>
    %343 = arith.addf %339, %342 : vector<8x256xf32>
    %344 = vector.broadcast %129 : vector<1x256xf32> to vector<8x256xf32>
    %345 = arith.mulf %343, %344 : vector<8x256xf32>
    %346 = arith.addf %316, %345 : vector<8x256xf32>
    %c0_88 = arith.constant 0 : index
    %c5 = arith.constant 5 : index
    %347 = vector.load %arg11[%c0_88, %c5] : memref<8x358xf32, #tpu.memory_space<vmem>>, vector<8x256xf32>
    %348 = vector.broadcast %43 : vector<8x1xf32> to vector<8x256xf32>
    %349 = arith.mulf %347, %348 : vector<8x256xf32>
    %c0_89 = arith.constant 0 : index
    %c21 = arith.constant 21 : index
    %350 = vector.load %arg11[%c0_89, %c21] : memref<8x358xf32, #tpu.memory_space<vmem>>, vector<8x256xf32>
    %351 = vector.broadcast %44 : vector<8x1xf32> to vector<8x256xf32>
    %352 = arith.mulf %350, %351 : vector<8x256xf32>
    %353 = arith.addf %349, %352 : vector<8x256xf32>
    %c0_90 = arith.constant 0 : index
    %c37 = arith.constant 37 : index
    %354 = vector.load %arg11[%c0_90, %c37] : memref<8x358xf32, #tpu.memory_space<vmem>>, vector<8x256xf32>
    %355 = vector.broadcast %45 : vector<8x1xf32> to vector<8x256xf32>
    %356 = arith.mulf %354, %355 : vector<8x256xf32>
    %357 = arith.addf %353, %356 : vector<8x256xf32>
    %c0_91 = arith.constant 0 : index
    %c53 = arith.constant 53 : index
    %358 = vector.load %arg11[%c0_91, %c53] : memref<8x358xf32, #tpu.memory_space<vmem>>, vector<8x256xf32>
    %359 = vector.broadcast %46 : vector<8x1xf32> to vector<8x256xf32>
    %360 = arith.mulf %358, %359 : vector<8x256xf32>
    %361 = arith.addf %357, %360 : vector<8x256xf32>
    %c0_92 = arith.constant 0 : index
    %c69 = arith.constant 69 : index
    %362 = vector.load %arg11[%c0_92, %c69] : memref<8x358xf32, #tpu.memory_space<vmem>>, vector<8x256xf32>
    %363 = vector.broadcast %47 : vector<8x1xf32> to vector<8x256xf32>
    %364 = arith.mulf %362, %363 : vector<8x256xf32>
    %365 = arith.addf %361, %364 : vector<8x256xf32>
    %c0_93 = arith.constant 0 : index
    %c85 = arith.constant 85 : index
    %366 = vector.load %arg11[%c0_93, %c85] : memref<8x358xf32, #tpu.memory_space<vmem>>, vector<8x256xf32>
    %367 = vector.broadcast %48 : vector<8x1xf32> to vector<8x256xf32>
    %368 = arith.mulf %366, %367 : vector<8x256xf32>
    %369 = arith.addf %365, %368 : vector<8x256xf32>
    %c0_94 = arith.constant 0 : index
    %c101 = arith.constant 101 : index
    %370 = vector.load %arg11[%c0_94, %c101] : memref<8x358xf32, #tpu.memory_space<vmem>>, vector<8x256xf32>
    %371 = vector.broadcast %49 : vector<8x1xf32> to vector<8x256xf32>
    %372 = arith.mulf %370, %371 : vector<8x256xf32>
    %373 = arith.addf %369, %372 : vector<8x256xf32>
    %374 = vector.broadcast %140 : vector<1x256xf32> to vector<8x256xf32>
    %375 = arith.mulf %373, %374 : vector<8x256xf32>
    %376 = arith.addf %346, %375 : vector<8x256xf32>
    %c0_95 = arith.constant 0 : index
    %c6 = arith.constant 6 : index
    %377 = vector.load %arg11[%c0_95, %c6] : memref<8x358xf32, #tpu.memory_space<vmem>>, vector<8x256xf32>
    %378 = vector.broadcast %50 : vector<8x1xf32> to vector<8x256xf32>
    %379 = arith.mulf %377, %378 : vector<8x256xf32>
    %c0_96 = arith.constant 0 : index
    %c22 = arith.constant 22 : index
    %380 = vector.load %arg11[%c0_96, %c22] : memref<8x358xf32, #tpu.memory_space<vmem>>, vector<8x256xf32>
    %381 = vector.broadcast %51 : vector<8x1xf32> to vector<8x256xf32>
    %382 = arith.mulf %380, %381 : vector<8x256xf32>
    %383 = arith.addf %379, %382 : vector<8x256xf32>
    %c0_97 = arith.constant 0 : index
    %c38 = arith.constant 38 : index
    %384 = vector.load %arg11[%c0_97, %c38] : memref<8x358xf32, #tpu.memory_space<vmem>>, vector<8x256xf32>
    %385 = vector.broadcast %52 : vector<8x1xf32> to vector<8x256xf32>
    %386 = arith.mulf %384, %385 : vector<8x256xf32>
    %387 = arith.addf %383, %386 : vector<8x256xf32>
    %c0_98 = arith.constant 0 : index
    %c54 = arith.constant 54 : index
    %388 = vector.load %arg11[%c0_98, %c54] : memref<8x358xf32, #tpu.memory_space<vmem>>, vector<8x256xf32>
    %389 = vector.broadcast %53 : vector<8x1xf32> to vector<8x256xf32>
    %390 = arith.mulf %388, %389 : vector<8x256xf32>
    %391 = arith.addf %387, %390 : vector<8x256xf32>
    %c0_99 = arith.constant 0 : index
    %c70 = arith.constant 70 : index
    %392 = vector.load %arg11[%c0_99, %c70] : memref<8x358xf32, #tpu.memory_space<vmem>>, vector<8x256xf32>
    %393 = vector.broadcast %54 : vector<8x1xf32> to vector<8x256xf32>
    %394 = arith.mulf %392, %393 : vector<8x256xf32>
    %395 = arith.addf %391, %394 : vector<8x256xf32>
    %c0_100 = arith.constant 0 : index
    %c86 = arith.constant 86 : index
    %396 = vector.load %arg11[%c0_100, %c86] : memref<8x358xf32, #tpu.memory_space<vmem>>, vector<8x256xf32>
    %397 = vector.broadcast %55 : vector<8x1xf32> to vector<8x256xf32>
    %398 = arith.mulf %396, %397 : vector<8x256xf32>
    %399 = arith.addf %395, %398 : vector<8x256xf32>
    %c0_101 = arith.constant 0 : index
    %c102 = arith.constant 102 : index
    %400 = vector.load %arg11[%c0_101, %c102] : memref<8x358xf32, #tpu.memory_space<vmem>>, vector<8x256xf32>
    %401 = vector.broadcast %56 : vector<8x1xf32> to vector<8x256xf32>
    %402 = arith.mulf %400, %401 : vector<8x256xf32>
    %403 = arith.addf %399, %402 : vector<8x256xf32>
    %404 = vector.broadcast %151 : vector<1x256xf32> to vector<8x256xf32>
    %405 = arith.mulf %403, %404 : vector<8x256xf32>
    %406 = arith.addf %376, %405 : vector<8x256xf32>
    %407 = vector.extract_strided_slice %406 {offsets = [0, 0], sizes = [1, 256], strides = [1, 1]} : vector<8x256xf32> to vector<1x256xf32>
    %408 = vector.broadcast %61 : vector<4x1xf32> to vector<4x256xf32>
    %409 = vector.broadcast %407 : vector<1x256xf32> to vector<4x256xf32>
    %410 = arith.mulf %408, %409 : vector<4x256xf32>
    %411 = vector.extract_strided_slice %406 {offsets = [1, 0], sizes = [1, 256], strides = [1, 1]} : vector<8x256xf32> to vector<1x256xf32>
    %412 = vector.broadcast %62 : vector<4x1xf32> to vector<4x256xf32>
    %413 = vector.broadcast %411 : vector<1x256xf32> to vector<4x256xf32>
    %414 = arith.mulf %412, %413 : vector<4x256xf32>
    %415 = arith.addf %410, %414 : vector<4x256xf32>
    %416 = vector.extract_strided_slice %406 {offsets = [2, 0], sizes = [1, 256], strides = [1, 1]} : vector<8x256xf32> to vector<1x256xf32>
    %417 = vector.broadcast %63 : vector<4x1xf32> to vector<4x256xf32>
    %418 = vector.broadcast %416 : vector<1x256xf32> to vector<4x256xf32>
    %419 = arith.mulf %417, %418 : vector<4x256xf32>
    %420 = arith.addf %415, %419 : vector<4x256xf32>
    %421 = vector.extract_strided_slice %406 {offsets = [3, 0], sizes = [1, 256], strides = [1, 1]} : vector<8x256xf32> to vector<1x256xf32>
    %422 = vector.broadcast %64 : vector<4x1xf32> to vector<4x256xf32>
    %423 = vector.broadcast %421 : vector<1x256xf32> to vector<4x256xf32>
    %424 = arith.mulf %422, %423 : vector<4x256xf32>
    %425 = arith.addf %420, %424 : vector<4x256xf32>
    %426 = vector.extract_strided_slice %406 {offsets = [4, 0], sizes = [1, 256], strides = [1, 1]} : vector<8x256xf32> to vector<1x256xf32>
    %427 = vector.broadcast %65 : vector<4x1xf32> to vector<4x256xf32>
    %428 = vector.broadcast %426 : vector<1x256xf32> to vector<4x256xf32>
    %429 = arith.mulf %427, %428 : vector<4x256xf32>
    %430 = arith.addf %425, %429 : vector<4x256xf32>
    %431 = vector.extract_strided_slice %406 {offsets = [5, 0], sizes = [1, 256], strides = [1, 1]} : vector<8x256xf32> to vector<1x256xf32>
    %432 = vector.broadcast %66 : vector<4x1xf32> to vector<4x256xf32>
    %433 = vector.broadcast %431 : vector<1x256xf32> to vector<4x256xf32>
    %434 = arith.mulf %432, %433 : vector<4x256xf32>
    %435 = arith.addf %430, %434 : vector<4x256xf32>
    %436 = vector.extract_strided_slice %406 {offsets = [6, 0], sizes = [1, 256], strides = [1, 1]} : vector<8x256xf32> to vector<1x256xf32>
    %437 = vector.broadcast %67 : vector<4x1xf32> to vector<4x256xf32>
    %438 = vector.broadcast %436 : vector<1x256xf32> to vector<4x256xf32>
    %439 = arith.mulf %437, %438 : vector<4x256xf32>
    %440 = arith.addf %435, %439 : vector<4x256xf32>
    %441 = vector.extract_strided_slice %406 {offsets = [7, 0], sizes = [1, 256], strides = [1, 1]} : vector<8x256xf32> to vector<1x256xf32>
    %442 = vector.broadcast %68 : vector<4x1xf32> to vector<4x256xf32>
    %443 = vector.broadcast %441 : vector<1x256xf32> to vector<4x256xf32>
    %444 = arith.mulf %442, %443 : vector<4x256xf32>
    %445 = arith.addf %440, %444 : vector<4x256xf32>
    %446 = vector.broadcast %7 : vector<4x1xf32> to vector<4x256xf32>
    %447 = arith.addf %445, %446 : vector<4x256xf32>
    %c0_102 = arith.constant 0 : index
    %c0_103 = arith.constant 0 : index
    %c0_104 = arith.constant 0 : index
    %c0_105 = arith.constant 0 : index
    %448 = vector.load %arg8[%c0_102, %c0_103, %c0_104, %c0_105] : memref<4x1x4x256xf32, #tpu.memory_space<vmem>>, vector<1x1x4x256xf32>
    %449 = vector.shape_cast %448 : vector<1x1x4x256xf32> to vector<4x256xf32>
    %450 = vector.shape_cast %447 : vector<4x256xf32> to vector<1x1x4x256xf32>
    tpu.vector_store %arg8[%c0_102, %c0_103, %c0_104, %c0_105], %450 {strides = array<i32>} : memref<4x1x4x256xf32, #tpu.memory_space<vmem>>, vector<1x1x4x256xf32>,
    %c1_106 = arith.constant 1 : index
    %c0_107 = arith.constant 0 : index
    %c0_108 = arith.constant 0 : index
    %c0_109 = arith.constant 0 : index
    %451 = vector.load %arg2[%c1_106, %c0_107, %c0_108, %c0_109] : memref<4x1x4x256xf32, #tpu.memory_space<vmem>>, vector<1x1x4x256xf32>
    %452 = vector.shape_cast %451 : vector<1x1x4x256xf32> to vector<4x256xf32>
    %c0_110 = arith.constant 0 : index
    %c0_111 = arith.constant 0 : index
    %453 = vector.load %arg9[%c0_110, %c0_111] : memref<4x256xf32, #tpu.memory_space<vmem>>, vector<4x256xf32>
    %454 = arith.subf %452, %453 : vector<4x256xf32>
    %cst_112 = arith.constant 5.000000e-01 : f32
    %455 = vector.broadcast %cst_112 : f32 to vector<4x256xf32>
    %456 = arith.mulf %454, %455 : vector<4x256xf32>
    %457 = arith.addf %453, %456 : vector<4x256xf32>
    %cst_113 = arith.constant 1.000000e+00 : f32
    %458 = vector.broadcast %cst_113 : f32 to vector<4x256xf32>
    %459 = arith.cmpf oge, %457, %458 : vector<4x256xf32>
    %cst_114 = arith.constant 0.000000e+00 : f32
    %460 = vector.broadcast %cst_114 : f32 to vector<4x256xf32>
    %461 = arith.select %459, %460, %457 : vector<4x256xi1>, vector<4x256xf32>
    %c0_115 = arith.constant 0 : index
    %c0_116 = arith.constant 0 : index
    %462 = vector.load %arg9[%c0_115, %c0_116] : memref<4x256xf32, #tpu.memory_space<vmem>>, vector<4x256xf32>
    tpu.vector_store %arg9[%c0_115, %c0_116], %461 {strides = array<i32>} : memref<4x256xf32, #tpu.memory_space<vmem>>, vector<4x256xf32>,
    %463 = arith.extui %459 : vector<4x256xi1> to vector<4x256xi32>
    %464 = arith.sitofp %463 : vector<4x256xi32> to vector<4x256xf32>
    %465 = vector.extract_strided_slice %464 {offsets = [0, 0], sizes = [1, 256], strides = [1, 1]} : vector<4x256xf32> to vector<1x256xf32>
    %466 = vector.broadcast %57 : vector<8x1xf32> to vector<8x256xf32>
    %467 = vector.broadcast %465 : vector<1x256xf32> to vector<8x256xf32>
    %468 = arith.mulf %466, %467 : vector<8x256xf32>
    %469 = vector.extract_strided_slice %464 {offsets = [1, 0], sizes = [1, 256], strides = [1, 1]} : vector<4x256xf32> to vector<1x256xf32>
    %470 = vector.broadcast %58 : vector<8x1xf32> to vector<8x256xf32>
    %471 = vector.broadcast %469 : vector<1x256xf32> to vector<8x256xf32>
    %472 = arith.mulf %470, %471 : vector<8x256xf32>
    %473 = arith.addf %468, %472 : vector<8x256xf32>
    %474 = vector.extract_strided_slice %464 {offsets = [2, 0], sizes = [1, 256], strides = [1, 1]} : vector<4x256xf32> to vector<1x256xf32>
    %475 = vector.broadcast %59 : vector<8x1xf32> to vector<8x256xf32>
    %476 = vector.broadcast %474 : vector<1x256xf32> to vector<8x256xf32>
    %477 = arith.mulf %475, %476 : vector<8x256xf32>
    %478 = arith.addf %473, %477 : vector<8x256xf32>
    %479 = vector.extract_strided_slice %464 {offsets = [3, 0], sizes = [1, 256], strides = [1, 1]} : vector<4x256xf32> to vector<1x256xf32>
    %480 = vector.broadcast %60 : vector<8x1xf32> to vector<8x256xf32>
    %481 = vector.broadcast %479 : vector<1x256xf32> to vector<8x256xf32>
    %482 = arith.mulf %480, %481 : vector<8x256xf32>
    %483 = arith.addf %478, %482 : vector<8x256xf32>
    %484 = vector.broadcast %4 : vector<8x1xf32> to vector<8x256xf32>
    %485 = arith.addf %483, %484 : vector<8x256xf32>
    %c0_117 = arith.constant 0 : index
    %c0_118 = arith.constant 0 : index
    %486 = vector.load %arg10[%c0_117, %c0_118] : memref<8x256xf32, #tpu.memory_space<vmem>>, vector<8x256xf32>
    %487 = arith.subf %485, %486 : vector<8x256xf32>
    %cst_119 = arith.constant 5.000000e-01 : f32
    %488 = vector.broadcast %cst_119 : f32 to vector<8x256xf32>
    %489 = arith.mulf %487, %488 : vector<8x256xf32>
    %490 = arith.addf %486, %489 : vector<8x256xf32>
    %cst_120 = arith.constant 1.000000e+00 : f32
    %491 = vector.broadcast %cst_120 : f32 to vector<8x256xf32>
    %492 = arith.cmpf oge, %490, %491 : vector<8x256xf32>
    %cst_121 = arith.constant 0.000000e+00 : f32
    %493 = vector.broadcast %cst_121 : f32 to vector<8x256xf32>
    %494 = arith.select %492, %493, %490 : vector<8x256xi1>, vector<8x256xf32>
    %c0_122 = arith.constant 0 : index
    %c0_123 = arith.constant 0 : index
    %495 = vector.load %arg10[%c0_122, %c0_123] : memref<8x256xf32, #tpu.memory_space<vmem>>, vector<8x256xf32>
    tpu.vector_store %arg10[%c0_122, %c0_123], %494 {strides = array<i32>} : memref<8x256xf32, #tpu.memory_space<vmem>>, vector<8x256xf32>,
    %496 = arith.extui %492 : vector<8x256xi1> to vector<8x256xi32>
    %497 = arith.sitofp %496 : vector<8x256xi32> to vector<8x256xf32>
    %c0_124 = arith.constant 0 : index
    %c51_125 = arith.constant 51 : index
    %498 = vector.load %arg11[%c0_124, %c51_125] : memref<8x358xf32, #tpu.memory_space<vmem>>, vector<8x256xf32>
    tpu.vector_store %arg11[%c0_124, %c51_125], %497 {strides = array<i32>} : memref<8x358xf32, #tpu.memory_space<vmem>>, vector<8x256xf32>,
    %c0_126 = arith.constant 0 : index
    %c0_127 = arith.constant 0 : index
    %499 = vector.load %arg11[%c0_126, %c0_127] : memref<8x358xf32, #tpu.memory_space<vmem>>, vector<8x256xf32>
    %500 = vector.broadcast %8 : vector<8x1xf32> to vector<8x256xf32>
    %501 = arith.mulf %499, %500 : vector<8x256xf32>
    %c0_128 = arith.constant 0 : index
    %c16_129 = arith.constant 16 : index
    %502 = vector.load %arg11[%c0_128, %c16_129] : memref<8x358xf32, #tpu.memory_space<vmem>>, vector<8x256xf32>
    %503 = vector.broadcast %9 : vector<8x1xf32> to vector<8x256xf32>
    %504 = arith.mulf %502, %503 : vector<8x256xf32>
    %505 = arith.addf %501, %504 : vector<8x256xf32>
    %c0_130 = arith.constant 0 : index
    %c32_131 = arith.constant 32 : index
    %506 = vector.load %arg11[%c0_130, %c32_131] : memref<8x358xf32, #tpu.memory_space<vmem>>, vector<8x256xf32>
    %507 = vector.broadcast %10 : vector<8x1xf32> to vector<8x256xf32>
    %508 = arith.mulf %506, %507 : vector<8x256xf32>
    %509 = arith.addf %505, %508 : vector<8x256xf32>
    %c0_132 = arith.constant 0 : index
    %c48_133 = arith.constant 48 : index
    %510 = vector.load %arg11[%c0_132, %c48_133] : memref<8x358xf32, #tpu.memory_space<vmem>>, vector<8x256xf32>
    %511 = vector.broadcast %11 : vector<8x1xf32> to vector<8x256xf32>
    %512 = arith.mulf %510, %511 : vector<8x256xf32>
    %513 = arith.addf %509, %512 : vector<8x256xf32>
    %c0_134 = arith.constant 0 : index
    %c64_135 = arith.constant 64 : index
    %514 = vector.load %arg11[%c0_134, %c64_135] : memref<8x358xf32, #tpu.memory_space<vmem>>, vector<8x256xf32>
    %515 = vector.broadcast %12 : vector<8x1xf32> to vector<8x256xf32>
    %516 = arith.mulf %514, %515 : vector<8x256xf32>
    %517 = arith.addf %513, %516 : vector<8x256xf32>
    %c0_136 = arith.constant 0 : index
    %c80_137 = arith.constant 80 : index
    %518 = vector.load %arg11[%c0_136, %c80_137] : memref<8x358xf32, #tpu.memory_space<vmem>>, vector<8x256xf32>
    %519 = vector.broadcast %13 : vector<8x1xf32> to vector<8x256xf32>
    %520 = arith.mulf %518, %519 : vector<8x256xf32>
    %521 = arith.addf %517, %520 : vector<8x256xf32>
    %c0_138 = arith.constant 0 : index
    %c96_139 = arith.constant 96 : index
    %522 = vector.load %arg11[%c0_138, %c96_139] : memref<8x358xf32, #tpu.memory_space<vmem>>, vector<8x256xf32>
    %523 = vector.broadcast %14 : vector<8x1xf32> to vector<8x256xf32>
    %524 = arith.mulf %522, %523 : vector<8x256xf32>
    %525 = arith.addf %521, %524 : vector<8x256xf32>
    %526 = vector.broadcast %96 : vector<1x256xf32> to vector<8x256xf32>
    %527 = arith.mulf %525, %526 : vector<8x256xf32>
    %c0_140 = arith.constant 0 : index
    %c1_141 = arith.constant 1 : index
    %528 = vector.load %arg11[%c0_140, %c1_141] : memref<8x358xf32, #tpu.memory_space<vmem>>, vector<8x256xf32>
    %529 = vector.broadcast %15 : vector<8x1xf32> to vector<8x256xf32>
    %530 = arith.mulf %528, %529 : vector<8x256xf32>
    %c0_142 = arith.constant 0 : index
    %c17_143 = arith.constant 17 : index
    %531 = vector.load %arg11[%c0_142, %c17_143] : memref<8x358xf32, #tpu.memory_space<vmem>>, vector<8x256xf32>
    %532 = vector.broadcast %16 : vector<8x1xf32> to vector<8x256xf32>
    %533 = arith.mulf %531, %532 : vector<8x256xf32>
    %534 = arith.addf %530, %533 : vector<8x256xf32>
    %c0_144 = arith.constant 0 : index
    %c33_145 = arith.constant 33 : index
    %535 = vector.load %arg11[%c0_144, %c33_145] : memref<8x358xf32, #tpu.memory_space<vmem>>, vector<8x256xf32>
    %536 = vector.broadcast %17 : vector<8x1xf32> to vector<8x256xf32>
    %537 = arith.mulf %535, %536 : vector<8x256xf32>
    %538 = arith.addf %534, %537 : vector<8x256xf32>
    %c0_146 = arith.constant 0 : index
    %c49_147 = arith.constant 49 : index
    %539 = vector.load %arg11[%c0_146, %c49_147] : memref<8x358xf32, #tpu.memory_space<vmem>>, vector<8x256xf32>
    %540 = vector.broadcast %18 : vector<8x1xf32> to vector<8x256xf32>
    %541 = arith.mulf %539, %540 : vector<8x256xf32>
    %542 = arith.addf %538, %541 : vector<8x256xf32>
    %c0_148 = arith.constant 0 : index
    %c65_149 = arith.constant 65 : index
    %543 = vector.load %arg11[%c0_148, %c65_149] : memref<8x358xf32, #tpu.memory_space<vmem>>, vector<8x256xf32>
    %544 = vector.broadcast %19 : vector<8x1xf32> to vector<8x256xf32>
    %545 = arith.mulf %543, %544 : vector<8x256xf32>
    %546 = arith.addf %542, %545 : vector<8x256xf32>
    %c0_150 = arith.constant 0 : index
    %c81_151 = arith.constant 81 : index
    %547 = vector.load %arg11[%c0_150, %c81_151] : memref<8x358xf32, #tpu.memory_space<vmem>>, vector<8x256xf32>
    %548 = vector.broadcast %20 : vector<8x1xf32> to vector<8x256xf32>
    %549 = arith.mulf %547, %548 : vector<8x256xf32>
    %550 = arith.addf %546, %549 : vector<8x256xf32>
    %c0_152 = arith.constant 0 : index
    %c97_153 = arith.constant 97 : index
    %551 = vector.load %arg11[%c0_152, %c97_153] : memref<8x358xf32, #tpu.memory_space<vmem>>, vector<8x256xf32>
    %552 = vector.broadcast %21 : vector<8x1xf32> to vector<8x256xf32>
    %553 = arith.mulf %551, %552 : vector<8x256xf32>
    %554 = arith.addf %550, %553 : vector<8x256xf32>
    %555 = vector.broadcast %107 : vector<1x256xf32> to vector<8x256xf32>
    %556 = arith.mulf %554, %555 : vector<8x256xf32>
    %557 = arith.addf %527, %556 : vector<8x256xf32>
    %c0_154 = arith.constant 0 : index
    %c2_155 = arith.constant 2 : index
    %558 = vector.load %arg11[%c0_154, %c2_155] : memref<8x358xf32, #tpu.memory_space<vmem>>, vector<8x256xf32>
    %559 = vector.broadcast %22 : vector<8x1xf32> to vector<8x256xf32>
    %560 = arith.mulf %558, %559 : vector<8x256xf32>
    %c0_156 = arith.constant 0 : index
    %c18_157 = arith.constant 18 : index
    %561 = vector.load %arg11[%c0_156, %c18_157] : memref<8x358xf32, #tpu.memory_space<vmem>>, vector<8x256xf32>
    %562 = vector.broadcast %23 : vector<8x1xf32> to vector<8x256xf32>
    %563 = arith.mulf %561, %562 : vector<8x256xf32>
    %564 = arith.addf %560, %563 : vector<8x256xf32>
    %c0_158 = arith.constant 0 : index
    %c34_159 = arith.constant 34 : index
    %565 = vector.load %arg11[%c0_158, %c34_159] : memref<8x358xf32, #tpu.memory_space<vmem>>, vector<8x256xf32>
    %566 = vector.broadcast %24 : vector<8x1xf32> to vector<8x256xf32>
    %567 = arith.mulf %565, %566 : vector<8x256xf32>
    %568 = arith.addf %564, %567 : vector<8x256xf32>
    %c0_160 = arith.constant 0 : index
    %c50_161 = arith.constant 50 : index
    %569 = vector.load %arg11[%c0_160, %c50_161] : memref<8x358xf32, #tpu.memory_space<vmem>>, vector<8x256xf32>
    %570 = vector.broadcast %25 : vector<8x1xf32> to vector<8x256xf32>
    %571 = arith.mulf %569, %570 : vector<8x256xf32>
    %572 = arith.addf %568, %571 : vector<8x256xf32>
    %c0_162 = arith.constant 0 : index
    %c66_163 = arith.constant 66 : index
    %573 = vector.load %arg11[%c0_162, %c66_163] : memref<8x358xf32, #tpu.memory_space<vmem>>, vector<8x256xf32>
    %574 = vector.broadcast %26 : vector<8x1xf32> to vector<8x256xf32>
    %575 = arith.mulf %573, %574 : vector<8x256xf32>
    %576 = arith.addf %572, %575 : vector<8x256xf32>
    %c0_164 = arith.constant 0 : index
    %c82_165 = arith.constant 82 : index
    %577 = vector.load %arg11[%c0_164, %c82_165] : memref<8x358xf32, #tpu.memory_space<vmem>>, vector<8x256xf32>
    %578 = vector.broadcast %27 : vector<8x1xf32> to vector<8x256xf32>
    %579 = arith.mulf %577, %578 : vector<8x256xf32>
    %580 = arith.addf %576, %579 : vector<8x256xf32>
    %c0_166 = arith.constant 0 : index
    %c98_167 = arith.constant 98 : index
    %581 = vector.load %arg11[%c0_166, %c98_167] : memref<8x358xf32, #tpu.memory_space<vmem>>, vector<8x256xf32>
    %582 = vector.broadcast %28 : vector<8x1xf32> to vector<8x256xf32>
    %583 = arith.mulf %581, %582 : vector<8x256xf32>
    %584 = arith.addf %580, %583 : vector<8x256xf32>
    %585 = vector.broadcast %118 : vector<1x256xf32> to vector<8x256xf32>
    %586 = arith.mulf %584, %585 : vector<8x256xf32>
    %587 = arith.addf %557, %586 : vector<8x256xf32>
    %c0_168 = arith.constant 0 : index
    %c3_169 = arith.constant 3 : index
    %588 = vector.load %arg11[%c0_168, %c3_169] : memref<8x358xf32, #tpu.memory_space<vmem>>, vector<8x256xf32>
    %589 = vector.broadcast %29 : vector<8x1xf32> to vector<8x256xf32>
    %590 = arith.mulf %588, %589 : vector<8x256xf32>
    %c0_170 = arith.constant 0 : index
    %c19_171 = arith.constant 19 : index
    %591 = vector.load %arg11[%c0_170, %c19_171] : memref<8x358xf32, #tpu.memory_space<vmem>>, vector<8x256xf32>
    %592 = vector.broadcast %30 : vector<8x1xf32> to vector<8x256xf32>
    %593 = arith.mulf %591, %592 : vector<8x256xf32>
    %594 = arith.addf %590, %593 : vector<8x256xf32>
    %c0_172 = arith.constant 0 : index
    %c35_173 = arith.constant 35 : index
    %595 = vector.load %arg11[%c0_172, %c35_173] : memref<8x358xf32, #tpu.memory_space<vmem>>, vector<8x256xf32>
    %596 = vector.broadcast %31 : vector<8x1xf32> to vector<8x256xf32>
    %597 = arith.mulf %595, %596 : vector<8x256xf32>
    %598 = arith.addf %594, %597 : vector<8x256xf32>
    %c0_174 = arith.constant 0 : index
    %c51_175 = arith.constant 51 : index
    %599 = vector.load %arg11[%c0_174, %c51_175] : memref<8x358xf32, #tpu.memory_space<vmem>>, vector<8x256xf32>
    %600 = vector.broadcast %32 : vector<8x1xf32> to vector<8x256xf32>
    %601 = arith.mulf %599, %600 : vector<8x256xf32>
    %602 = arith.addf %598, %601 : vector<8x256xf32>
    %c0_176 = arith.constant 0 : index
    %c67_177 = arith.constant 67 : index
    %603 = vector.load %arg11[%c0_176, %c67_177] : memref<8x358xf32, #tpu.memory_space<vmem>>, vector<8x256xf32>
    %604 = vector.broadcast %33 : vector<8x1xf32> to vector<8x256xf32>
    %605 = arith.mulf %603, %604 : vector<8x256xf32>
    %606 = arith.addf %602, %605 : vector<8x256xf32>
    %c0_178 = arith.constant 0 : index
    %c83_179 = arith.constant 83 : index
    %607 = vector.load %arg11[%c0_178, %c83_179] : memref<8x358xf32, #tpu.memory_space<vmem>>, vector<8x256xf32>
    %608 = vector.broadcast %34 : vector<8x1xf32> to vector<8x256xf32>
    %609 = arith.mulf %607, %608 : vector<8x256xf32>
    %610 = arith.addf %606, %609 : vector<8x256xf32>
    %c0_180 = arith.constant 0 : index
    %c99_181 = arith.constant 99 : index
    %611 = vector.load %arg11[%c0_180, %c99_181] : memref<8x358xf32, #tpu.memory_space<vmem>>, vector<8x256xf32>
    %612 = vector.broadcast %35 : vector<8x1xf32> to vector<8x256xf32>
    %613 = arith.mulf %611, %612 : vector<8x256xf32>
    %614 = arith.addf %610, %613 : vector<8x256xf32>
    %615 = arith.addf %587, %614 : vector<8x256xf32>
    %c0_182 = arith.constant 0 : index
    %c4_183 = arith.constant 4 : index
    %616 = vector.load %arg11[%c0_182, %c4_183] : memref<8x358xf32, #tpu.memory_space<vmem>>, vector<8x256xf32>
    %617 = vector.broadcast %36 : vector<8x1xf32> to vector<8x256xf32>
    %618 = arith.mulf %616, %617 : vector<8x256xf32>
    %c0_184 = arith.constant 0 : index
    %c20_185 = arith.constant 20 : index
    %619 = vector.load %arg11[%c0_184, %c20_185] : memref<8x358xf32, #tpu.memory_space<vmem>>, vector<8x256xf32>
    %620 = vector.broadcast %37 : vector<8x1xf32> to vector<8x256xf32>
    %621 = arith.mulf %619, %620 : vector<8x256xf32>
    %622 = arith.addf %618, %621 : vector<8x256xf32>
    %c0_186 = arith.constant 0 : index
    %c36_187 = arith.constant 36 : index
    %623 = vector.load %arg11[%c0_186, %c36_187] : memref<8x358xf32, #tpu.memory_space<vmem>>, vector<8x256xf32>
    %624 = vector.broadcast %38 : vector<8x1xf32> to vector<8x256xf32>
    %625 = arith.mulf %623, %624 : vector<8x256xf32>
    %626 = arith.addf %622, %625 : vector<8x256xf32>
    %c0_188 = arith.constant 0 : index
    %c52_189 = arith.constant 52 : index
    %627 = vector.load %arg11[%c0_188, %c52_189] : memref<8x358xf32, #tpu.memory_space<vmem>>, vector<8x256xf32>
    %628 = vector.broadcast %39 : vector<8x1xf32> to vector<8x256xf32>
    %629 = arith.mulf %627, %628 : vector<8x256xf32>
    %630 = arith.addf %626, %629 : vector<8x256xf32>
    %c0_190 = arith.constant 0 : index
    %c68_191 = arith.constant 68 : index
    %631 = vector.load %arg11[%c0_190, %c68_191] : memref<8x358xf32, #tpu.memory_space<vmem>>, vector<8x256xf32>
    %632 = vector.broadcast %40 : vector<8x1xf32> to vector<8x256xf32>
    %633 = arith.mulf %631, %632 : vector<8x256xf32>
    %634 = arith.addf %630, %633 : vector<8x256xf32>
    %c0_192 = arith.constant 0 : index
    %c84_193 = arith.constant 84 : index
    %635 = vector.load %arg11[%c0_192, %c84_193] : memref<8x358xf32, #tpu.memory_space<vmem>>, vector<8x256xf32>
    %636 = vector.broadcast %41 : vector<8x1xf32> to vector<8x256xf32>
    %637 = arith.mulf %635, %636 : vector<8x256xf32>
    %638 = arith.addf %634, %637 : vector<8x256xf32>
    %c0_194 = arith.constant 0 : index
    %c100_195 = arith.constant 100 : index
    %639 = vector.load %arg11[%c0_194, %c100_195] : memref<8x358xf32, #tpu.memory_space<vmem>>, vector<8x256xf32>
    %640 = vector.broadcast %42 : vector<8x1xf32> to vector<8x256xf32>
    %641 = arith.mulf %639, %640 : vector<8x256xf32>
    %642 = arith.addf %638, %641 : vector<8x256xf32>
    %643 = vector.broadcast %129 : vector<1x256xf32> to vector<8x256xf32>
    %644 = arith.mulf %642, %643 : vector<8x256xf32>
    %645 = arith.addf %615, %644 : vector<8x256xf32>
    %c0_196 = arith.constant 0 : index
    %c5_197 = arith.constant 5 : index
    %646 = vector.load %arg11[%c0_196, %c5_197] : memref<8x358xf32, #tpu.memory_space<vmem>>, vector<8x256xf32>
    %647 = vector.broadcast %43 : vector<8x1xf32> to vector<8x256xf32>
    %648 = arith.mulf %646, %647 : vector<8x256xf32>
    %c0_198 = arith.constant 0 : index
    %c21_199 = arith.constant 21 : index
    %649 = vector.load %arg11[%c0_198, %c21_199] : memref<8x358xf32, #tpu.memory_space<vmem>>, vector<8x256xf32>
    %650 = vector.broadcast %44 : vector<8x1xf32> to vector<8x256xf32>
    %651 = arith.mulf %649, %650 : vector<8x256xf32>
    %652 = arith.addf %648, %651 : vector<8x256xf32>
    %c0_200 = arith.constant 0 : index
    %c37_201 = arith.constant 37 : index
    %653 = vector.load %arg11[%c0_200, %c37_201] : memref<8x358xf32, #tpu.memory_space<vmem>>, vector<8x256xf32>
    %654 = vector.broadcast %45 : vector<8x1xf32> to vector<8x256xf32>
    %655 = arith.mulf %653, %654 : vector<8x256xf32>
    %656 = arith.addf %652, %655 : vector<8x256xf32>
    %c0_202 = arith.constant 0 : index
    %c53_203 = arith.constant 53 : index
    %657 = vector.load %arg11[%c0_202, %c53_203] : memref<8x358xf32, #tpu.memory_space<vmem>>, vector<8x256xf32>
    %658 = vector.broadcast %46 : vector<8x1xf32> to vector<8x256xf32>
    %659 = arith.mulf %657, %658 : vector<8x256xf32>
    %660 = arith.addf %656, %659 : vector<8x256xf32>
    %c0_204 = arith.constant 0 : index
    %c69_205 = arith.constant 69 : index
    %661 = vector.load %arg11[%c0_204, %c69_205] : memref<8x358xf32, #tpu.memory_space<vmem>>, vector<8x256xf32>
    %662 = vector.broadcast %47 : vector<8x1xf32> to vector<8x256xf32>
    %663 = arith.mulf %661, %662 : vector<8x256xf32>
    %664 = arith.addf %660, %663 : vector<8x256xf32>
    %c0_206 = arith.constant 0 : index
    %c85_207 = arith.constant 85 : index
    %665 = vector.load %arg11[%c0_206, %c85_207] : memref<8x358xf32, #tpu.memory_space<vmem>>, vector<8x256xf32>
    %666 = vector.broadcast %48 : vector<8x1xf32> to vector<8x256xf32>
    %667 = arith.mulf %665, %666 : vector<8x256xf32>
    %668 = arith.addf %664, %667 : vector<8x256xf32>
    %c0_208 = arith.constant 0 : index
    %c101_209 = arith.constant 101 : index
    %669 = vector.load %arg11[%c0_208, %c101_209] : memref<8x358xf32, #tpu.memory_space<vmem>>, vector<8x256xf32>
    %670 = vector.broadcast %49 : vector<8x1xf32> to vector<8x256xf32>
    %671 = arith.mulf %669, %670 : vector<8x256xf32>
    %672 = arith.addf %668, %671 : vector<8x256xf32>
    %673 = vector.broadcast %140 : vector<1x256xf32> to vector<8x256xf32>
    %674 = arith.mulf %672, %673 : vector<8x256xf32>
    %675 = arith.addf %645, %674 : vector<8x256xf32>
    %c0_210 = arith.constant 0 : index
    %c6_211 = arith.constant 6 : index
    %676 = vector.load %arg11[%c0_210, %c6_211] : memref<8x358xf32, #tpu.memory_space<vmem>>, vector<8x256xf32>
    %677 = vector.broadcast %50 : vector<8x1xf32> to vector<8x256xf32>
    %678 = arith.mulf %676, %677 : vector<8x256xf32>
    %c0_212 = arith.constant 0 : index
    %c22_213 = arith.constant 22 : index
    %679 = vector.load %arg11[%c0_212, %c22_213] : memref<8x358xf32, #tpu.memory_space<vmem>>, vector<8x256xf32>
    %680 = vector.broadcast %51 : vector<8x1xf32> to vector<8x256xf32>
    %681 = arith.mulf %679, %680 : vector<8x256xf32>
    %682 = arith.addf %678, %681 : vector<8x256xf32>
    %c0_214 = arith.constant 0 : index
    %c38_215 = arith.constant 38 : index
    %683 = vector.load %arg11[%c0_214, %c38_215] : memref<8x358xf32, #tpu.memory_space<vmem>>, vector<8x256xf32>
    %684 = vector.broadcast %52 : vector<8x1xf32> to vector<8x256xf32>
    %685 = arith.mulf %683, %684 : vector<8x256xf32>
    %686 = arith.addf %682, %685 : vector<8x256xf32>
    %c0_216 = arith.constant 0 : index
    %c54_217 = arith.constant 54 : index
    %687 = vector.load %arg11[%c0_216, %c54_217] : memref<8x358xf32, #tpu.memory_space<vmem>>, vector<8x256xf32>
    %688 = vector.broadcast %53 : vector<8x1xf32> to vector<8x256xf32>
    %689 = arith.mulf %687, %688 : vector<8x256xf32>
    %690 = arith.addf %686, %689 : vector<8x256xf32>
    %c0_218 = arith.constant 0 : index
    %c70_219 = arith.constant 70 : index
    %691 = vector.load %arg11[%c0_218, %c70_219] : memref<8x358xf32, #tpu.memory_space<vmem>>, vector<8x256xf32>
    %692 = vector.broadcast %54 : vector<8x1xf32> to vector<8x256xf32>
    %693 = arith.mulf %691, %692 : vector<8x256xf32>
    %694 = arith.addf %690, %693 : vector<8x256xf32>
    %c0_220 = arith.constant 0 : index
    %c86_221 = arith.constant 86 : index
    %695 = vector.load %arg11[%c0_220, %c86_221] : memref<8x358xf32, #tpu.memory_space<vmem>>, vector<8x256xf32>
    %696 = vector.broadcast %55 : vector<8x1xf32> to vector<8x256xf32>
    %697 = arith.mulf %695, %696 : vector<8x256xf32>
    %698 = arith.addf %694, %697 : vector<8x256xf32>
    %c0_222 = arith.constant 0 : index
    %c102_223 = arith.constant 102 : index
    %699 = vector.load %arg11[%c0_222, %c102_223] : memref<8x358xf32, #tpu.memory_space<vmem>>, vector<8x256xf32>
    %700 = vector.broadcast %56 : vector<8x1xf32> to vector<8x256xf32>
    %701 = arith.mulf %699, %700 : vector<8x256xf32>
    %702 = arith.addf %698, %701 : vector<8x256xf32>
    %703 = vector.broadcast %151 : vector<1x256xf32> to vector<8x256xf32>
    %704 = arith.mulf %702, %703 : vector<8x256xf32>
    %705 = arith.addf %675, %704 : vector<8x256xf32>
    %706 = vector.extract_strided_slice %705 {offsets = [0, 0], sizes = [1, 256], strides = [1, 1]} : vector<8x256xf32> to vector<1x256xf32>
    %707 = vector.broadcast %61 : vector<4x1xf32> to vector<4x256xf32>
    %708 = vector.broadcast %706 : vector<1x256xf32> to vector<4x256xf32>
    %709 = arith.mulf %707, %708 : vector<4x256xf32>
    %710 = vector.extract_strided_slice %705 {offsets = [1, 0], sizes = [1, 256], strides = [1, 1]} : vector<8x256xf32> to vector<1x256xf32>
    %711 = vector.broadcast %62 : vector<4x1xf32> to vector<4x256xf32>
    %712 = vector.broadcast %710 : vector<1x256xf32> to vector<4x256xf32>
    %713 = arith.mulf %711, %712 : vector<4x256xf32>
    %714 = arith.addf %709, %713 : vector<4x256xf32>
    %715 = vector.extract_strided_slice %705 {offsets = [2, 0], sizes = [1, 256], strides = [1, 1]} : vector<8x256xf32> to vector<1x256xf32>
    %716 = vector.broadcast %63 : vector<4x1xf32> to vector<4x256xf32>
    %717 = vector.broadcast %715 : vector<1x256xf32> to vector<4x256xf32>
    %718 = arith.mulf %716, %717 : vector<4x256xf32>
    %719 = arith.addf %714, %718 : vector<4x256xf32>
    %720 = vector.extract_strided_slice %705 {offsets = [3, 0], sizes = [1, 256], strides = [1, 1]} : vector<8x256xf32> to vector<1x256xf32>
    %721 = vector.broadcast %64 : vector<4x1xf32> to vector<4x256xf32>
    %722 = vector.broadcast %720 : vector<1x256xf32> to vector<4x256xf32>
    %723 = arith.mulf %721, %722 : vector<4x256xf32>
    %724 = arith.addf %719, %723 : vector<4x256xf32>
    %725 = vector.extract_strided_slice %705 {offsets = [4, 0], sizes = [1, 256], strides = [1, 1]} : vector<8x256xf32> to vector<1x256xf32>
    %726 = vector.broadcast %65 : vector<4x1xf32> to vector<4x256xf32>
    %727 = vector.broadcast %725 : vector<1x256xf32> to vector<4x256xf32>
    %728 = arith.mulf %726, %727 : vector<4x256xf32>
    %729 = arith.addf %724, %728 : vector<4x256xf32>
    %730 = vector.extract_strided_slice %705 {offsets = [5, 0], sizes = [1, 256], strides = [1, 1]} : vector<8x256xf32> to vector<1x256xf32>
    %731 = vector.broadcast %66 : vector<4x1xf32> to vector<4x256xf32>
    %732 = vector.broadcast %730 : vector<1x256xf32> to vector<4x256xf32>
    %733 = arith.mulf %731, %732 : vector<4x256xf32>
    %734 = arith.addf %729, %733 : vector<4x256xf32>
    %735 = vector.extract_strided_slice %705 {offsets = [6, 0], sizes = [1, 256], strides = [1, 1]} : vector<8x256xf32> to vector<1x256xf32>
    %736 = vector.broadcast %67 : vector<4x1xf32> to vector<4x256xf32>
    %737 = vector.broadcast %735 : vector<1x256xf32> to vector<4x256xf32>
    %738 = arith.mulf %736, %737 : vector<4x256xf32>
    %739 = arith.addf %734, %738 : vector<4x256xf32>
    %740 = vector.extract_strided_slice %705 {offsets = [7, 0], sizes = [1, 256], strides = [1, 1]} : vector<8x256xf32> to vector<1x256xf32>
    %741 = vector.broadcast %68 : vector<4x1xf32> to vector<4x256xf32>
    %742 = vector.broadcast %740 : vector<1x256xf32> to vector<4x256xf32>
    %743 = arith.mulf %741, %742 : vector<4x256xf32>
    %744 = arith.addf %739, %743 : vector<4x256xf32>
    %745 = vector.broadcast %7 : vector<4x1xf32> to vector<4x256xf32>
    %746 = arith.addf %744, %745 : vector<4x256xf32>
    %c1_224 = arith.constant 1 : index
    %c0_225 = arith.constant 0 : index
    %c0_226 = arith.constant 0 : index
    %c0_227 = arith.constant 0 : index
    %747 = vector.load %arg8[%c1_224, %c0_225, %c0_226, %c0_227] : memref<4x1x4x256xf32, #tpu.memory_space<vmem>>, vector<1x1x4x256xf32>
    %748 = vector.shape_cast %747 : vector<1x1x4x256xf32> to vector<4x256xf32>
    %749 = vector.shape_cast %746 : vector<4x256xf32> to vector<1x1x4x256xf32>
    tpu.vector_store %arg8[%c1_224, %c0_225, %c0_226, %c0_227], %749 {strides = array<i32>} : memref<4x1x4x256xf32, #tpu.memory_space<vmem>>, vector<1x1x4x256xf32>,
    %c2_228 = arith.constant 2 : index
    %c0_229 = arith.constant 0 : index
    %c0_230 = arith.constant 0 : index
    %c0_231 = arith.constant 0 : index
    %750 = vector.load %arg2[%c2_228, %c0_229, %c0_230, %c0_231] : memref<4x1x4x256xf32, #tpu.memory_space<vmem>>, vector<1x1x4x256xf32>
    %751 = vector.shape_cast %750 : vector<1x1x4x256xf32> to vector<4x256xf32>
    %c0_232 = arith.constant 0 : index
    %c0_233 = arith.constant 0 : index
    %752 = vector.load %arg9[%c0_232, %c0_233] : memref<4x256xf32, #tpu.memory_space<vmem>>, vector<4x256xf32>
    %753 = arith.subf %751, %752 : vector<4x256xf32>
    %cst_234 = arith.constant 5.000000e-01 : f32
    %754 = vector.broadcast %cst_234 : f32 to vector<4x256xf32>
    %755 = arith.mulf %753, %754 : vector<4x256xf32>
    %756 = arith.addf %752, %755 : vector<4x256xf32>
    %cst_235 = arith.constant 1.000000e+00 : f32
    %757 = vector.broadcast %cst_235 : f32 to vector<4x256xf32>
    %758 = arith.cmpf oge, %756, %757 : vector<4x256xf32>
    %cst_236 = arith.constant 0.000000e+00 : f32
    %759 = vector.broadcast %cst_236 : f32 to vector<4x256xf32>
    %760 = arith.select %758, %759, %756 : vector<4x256xi1>, vector<4x256xf32>
    %c0_237 = arith.constant 0 : index
    %c0_238 = arith.constant 0 : index
    %761 = vector.load %arg9[%c0_237, %c0_238] : memref<4x256xf32, #tpu.memory_space<vmem>>, vector<4x256xf32>
    tpu.vector_store %arg9[%c0_237, %c0_238], %760 {strides = array<i32>} : memref<4x256xf32, #tpu.memory_space<vmem>>, vector<4x256xf32>,
    %762 = arith.extui %758 : vector<4x256xi1> to vector<4x256xi32>
    %763 = arith.sitofp %762 : vector<4x256xi32> to vector<4x256xf32>
    %764 = vector.extract_strided_slice %763 {offsets = [0, 0], sizes = [1, 256], strides = [1, 1]} : vector<4x256xf32> to vector<1x256xf32>
    %765 = vector.broadcast %57 : vector<8x1xf32> to vector<8x256xf32>
    %766 = vector.broadcast %764 : vector<1x256xf32> to vector<8x256xf32>
    %767 = arith.mulf %765, %766 : vector<8x256xf32>
    %768 = vector.extract_strided_slice %763 {offsets = [1, 0], sizes = [1, 256], strides = [1, 1]} : vector<4x256xf32> to vector<1x256xf32>
    %769 = vector.broadcast %58 : vector<8x1xf32> to vector<8x256xf32>
    %770 = vector.broadcast %768 : vector<1x256xf32> to vector<8x256xf32>
    %771 = arith.mulf %769, %770 : vector<8x256xf32>
    %772 = arith.addf %767, %771 : vector<8x256xf32>
    %773 = vector.extract_strided_slice %763 {offsets = [2, 0], sizes = [1, 256], strides = [1, 1]} : vector<4x256xf32> to vector<1x256xf32>
    %774 = vector.broadcast %59 : vector<8x1xf32> to vector<8x256xf32>
    %775 = vector.broadcast %773 : vector<1x256xf32> to vector<8x256xf32>
    %776 = arith.mulf %774, %775 : vector<8x256xf32>
    %777 = arith.addf %772, %776 : vector<8x256xf32>
    %778 = vector.extract_strided_slice %763 {offsets = [3, 0], sizes = [1, 256], strides = [1, 1]} : vector<4x256xf32> to vector<1x256xf32>
    %779 = vector.broadcast %60 : vector<8x1xf32> to vector<8x256xf32>
    %780 = vector.broadcast %778 : vector<1x256xf32> to vector<8x256xf32>
    %781 = arith.mulf %779, %780 : vector<8x256xf32>
    %782 = arith.addf %777, %781 : vector<8x256xf32>
    %783 = vector.broadcast %4 : vector<8x1xf32> to vector<8x256xf32>
    %784 = arith.addf %782, %783 : vector<8x256xf32>
    %c0_239 = arith.constant 0 : index
    %c0_240 = arith.constant 0 : index
    %785 = vector.load %arg10[%c0_239, %c0_240] : memref<8x256xf32, #tpu.memory_space<vmem>>, vector<8x256xf32>
    %786 = arith.subf %784, %785 : vector<8x256xf32>
    %cst_241 = arith.constant 5.000000e-01 : f32
    %787 = vector.broadcast %cst_241 : f32 to vector<8x256xf32>
    %788 = arith.mulf %786, %787 : vector<8x256xf32>
    %789 = arith.addf %785, %788 : vector<8x256xf32>
    %cst_242 = arith.constant 1.000000e+00 : f32
    %790 = vector.broadcast %cst_242 : f32 to vector<8x256xf32>
    %791 = arith.cmpf oge, %789, %790 : vector<8x256xf32>
    %cst_243 = arith.constant 0.000000e+00 : f32
    %792 = vector.broadcast %cst_243 : f32 to vector<8x256xf32>
    %793 = arith.select %791, %792, %789 : vector<8x256xi1>, vector<8x256xf32>
    %c0_244 = arith.constant 0 : index
    %c0_245 = arith.constant 0 : index
    %794 = vector.load %arg10[%c0_244, %c0_245] : memref<8x256xf32, #tpu.memory_space<vmem>>, vector<8x256xf32>
    tpu.vector_store %arg10[%c0_244, %c0_245], %793 {strides = array<i32>} : memref<8x256xf32, #tpu.memory_space<vmem>>, vector<8x256xf32>,
    %795 = arith.extui %791 : vector<8x256xi1> to vector<8x256xi32>
    %796 = arith.sitofp %795 : vector<8x256xi32> to vector<8x256xf32>
    %c0_246 = arith.constant 0 : index
    %c51_247 = arith.constant 51 : index
    %797 = vector.load %arg11[%c0_246, %c51_247] : memref<8x358xf32, #tpu.memory_space<vmem>>, vector<8x256xf32>
    tpu.vector_store %arg11[%c0_246, %c51_247], %796 {strides = array<i32>} : memref<8x358xf32, #tpu.memory_space<vmem>>, vector<8x256xf32>,
    %c0_248 = arith.constant 0 : index
    %c0_249 = arith.constant 0 : index
    %798 = vector.load %arg11[%c0_248, %c0_249] : memref<8x358xf32, #tpu.memory_space<vmem>>, vector<8x256xf32>
    %799 = vector.broadcast %8 : vector<8x1xf32> to vector<8x256xf32>
    %800 = arith.mulf %798, %799 : vector<8x256xf32>
    %c0_250 = arith.constant 0 : index
    %c16_251 = arith.constant 16 : index
    %801 = vector.load %arg11[%c0_250, %c16_251] : memref<8x358xf32, #tpu.memory_space<vmem>>, vector<8x256xf32>
    %802 = vector.broadcast %9 : vector<8x1xf32> to vector<8x256xf32>
    %803 = arith.mulf %801, %802 : vector<8x256xf32>
    %804 = arith.addf %800, %803 : vector<8x256xf32>
    %c0_252 = arith.constant 0 : index
    %c32_253 = arith.constant 32 : index
    %805 = vector.load %arg11[%c0_252, %c32_253] : memref<8x358xf32, #tpu.memory_space<vmem>>, vector<8x256xf32>
    %806 = vector.broadcast %10 : vector<8x1xf32> to vector<8x256xf32>
    %807 = arith.mulf %805, %806 : vector<8x256xf32>
    %808 = arith.addf %804, %807 : vector<8x256xf32>
    %c0_254 = arith.constant 0 : index
    %c48_255 = arith.constant 48 : index
    %809 = vector.load %arg11[%c0_254, %c48_255] : memref<8x358xf32, #tpu.memory_space<vmem>>, vector<8x256xf32>
    %810 = vector.broadcast %11 : vector<8x1xf32> to vector<8x256xf32>
    %811 = arith.mulf %809, %810 : vector<8x256xf32>
    %812 = arith.addf %808, %811 : vector<8x256xf32>
    %c0_256 = arith.constant 0 : index
    %c64_257 = arith.constant 64 : index
    %813 = vector.load %arg11[%c0_256, %c64_257] : memref<8x358xf32, #tpu.memory_space<vmem>>, vector<8x256xf32>
    %814 = vector.broadcast %12 : vector<8x1xf32> to vector<8x256xf32>
    %815 = arith.mulf %813, %814 : vector<8x256xf32>
    %816 = arith.addf %812, %815 : vector<8x256xf32>
    %c0_258 = arith.constant 0 : index
    %c80_259 = arith.constant 80 : index
    %817 = vector.load %arg11[%c0_258, %c80_259] : memref<8x358xf32, #tpu.memory_space<vmem>>, vector<8x256xf32>
    %818 = vector.broadcast %13 : vector<8x1xf32> to vector<8x256xf32>
    %819 = arith.mulf %817, %818 : vector<8x256xf32>
    %820 = arith.addf %816, %819 : vector<8x256xf32>
    %c0_260 = arith.constant 0 : index
    %c96_261 = arith.constant 96 : index
    %821 = vector.load %arg11[%c0_260, %c96_261] : memref<8x358xf32, #tpu.memory_space<vmem>>, vector<8x256xf32>
    %822 = vector.broadcast %14 : vector<8x1xf32> to vector<8x256xf32>
    %823 = arith.mulf %821, %822 : vector<8x256xf32>
    %824 = arith.addf %820, %823 : vector<8x256xf32>
    %825 = vector.broadcast %96 : vector<1x256xf32> to vector<8x256xf32>
    %826 = arith.mulf %824, %825 : vector<8x256xf32>
    %c0_262 = arith.constant 0 : index
    %c1_263 = arith.constant 1 : index
    %827 = vector.load %arg11[%c0_262, %c1_263] : memref<8x358xf32, #tpu.memory_space<vmem>>, vector<8x256xf32>
    %828 = vector.broadcast %15 : vector<8x1xf32> to vector<8x256xf32>
    %829 = arith.mulf %827, %828 : vector<8x256xf32>
    %c0_264 = arith.constant 0 : index
    %c17_265 = arith.constant 17 : index
    %830 = vector.load %arg11[%c0_264, %c17_265] : memref<8x358xf32, #tpu.memory_space<vmem>>, vector<8x256xf32>
    %831 = vector.broadcast %16 : vector<8x1xf32> to vector<8x256xf32>
    %832 = arith.mulf %830, %831 : vector<8x256xf32>
    %833 = arith.addf %829, %832 : vector<8x256xf32>
    %c0_266 = arith.constant 0 : index
    %c33_267 = arith.constant 33 : index
    %834 = vector.load %arg11[%c0_266, %c33_267] : memref<8x358xf32, #tpu.memory_space<vmem>>, vector<8x256xf32>
    %835 = vector.broadcast %17 : vector<8x1xf32> to vector<8x256xf32>
    %836 = arith.mulf %834, %835 : vector<8x256xf32>
    %837 = arith.addf %833, %836 : vector<8x256xf32>
    %c0_268 = arith.constant 0 : index
    %c49_269 = arith.constant 49 : index
    %838 = vector.load %arg11[%c0_268, %c49_269] : memref<8x358xf32, #tpu.memory_space<vmem>>, vector<8x256xf32>
    %839 = vector.broadcast %18 : vector<8x1xf32> to vector<8x256xf32>
    %840 = arith.mulf %838, %839 : vector<8x256xf32>
    %841 = arith.addf %837, %840 : vector<8x256xf32>
    %c0_270 = arith.constant 0 : index
    %c65_271 = arith.constant 65 : index
    %842 = vector.load %arg11[%c0_270, %c65_271] : memref<8x358xf32, #tpu.memory_space<vmem>>, vector<8x256xf32>
    %843 = vector.broadcast %19 : vector<8x1xf32> to vector<8x256xf32>
    %844 = arith.mulf %842, %843 : vector<8x256xf32>
    %845 = arith.addf %841, %844 : vector<8x256xf32>
    %c0_272 = arith.constant 0 : index
    %c81_273 = arith.constant 81 : index
    %846 = vector.load %arg11[%c0_272, %c81_273] : memref<8x358xf32, #tpu.memory_space<vmem>>, vector<8x256xf32>
    %847 = vector.broadcast %20 : vector<8x1xf32> to vector<8x256xf32>
    %848 = arith.mulf %846, %847 : vector<8x256xf32>
    %849 = arith.addf %845, %848 : vector<8x256xf32>
    %c0_274 = arith.constant 0 : index
    %c97_275 = arith.constant 97 : index
    %850 = vector.load %arg11[%c0_274, %c97_275] : memref<8x358xf32, #tpu.memory_space<vmem>>, vector<8x256xf32>
    %851 = vector.broadcast %21 : vector<8x1xf32> to vector<8x256xf32>
    %852 = arith.mulf %850, %851 : vector<8x256xf32>
    %853 = arith.addf %849, %852 : vector<8x256xf32>
    %854 = vector.broadcast %107 : vector<1x256xf32> to vector<8x256xf32>
    %855 = arith.mulf %853, %854 : vector<8x256xf32>
    %856 = arith.addf %826, %855 : vector<8x256xf32>
    %c0_276 = arith.constant 0 : index
    %c2_277 = arith.constant 2 : index
    %857 = vector.load %arg11[%c0_276, %c2_277] : memref<8x358xf32, #tpu.memory_space<vmem>>, vector<8x256xf32>
    %858 = vector.broadcast %22 : vector<8x1xf32> to vector<8x256xf32>
    %859 = arith.mulf %857, %858 : vector<8x256xf32>
    %c0_278 = arith.constant 0 : index
    %c18_279 = arith.constant 18 : index
    %860 = vector.load %arg11[%c0_278, %c18_279] : memref<8x358xf32, #tpu.memory_space<vmem>>, vector<8x256xf32>
    %861 = vector.broadcast %23 : vector<8x1xf32> to vector<8x256xf32>
    %862 = arith.mulf %860, %861 : vector<8x256xf32>
    %863 = arith.addf %859, %862 : vector<8x256xf32>
    %c0_280 = arith.constant 0 : index
    %c34_281 = arith.constant 34 : index
    %864 = vector.load %arg11[%c0_280, %c34_281] : memref<8x358xf32, #tpu.memory_space<vmem>>, vector<8x256xf32>
    %865 = vector.broadcast %24 : vector<8x1xf32> to vector<8x256xf32>
    %866 = arith.mulf %864, %865 : vector<8x256xf32>
    %867 = arith.addf %863, %866 : vector<8x256xf32>
    %c0_282 = arith.constant 0 : index
    %c50_283 = arith.constant 50 : index
    %868 = vector.load %arg11[%c0_282, %c50_283] : memref<8x358xf32, #tpu.memory_space<vmem>>, vector<8x256xf32>
    %869 = vector.broadcast %25 : vector<8x1xf32> to vector<8x256xf32>
    %870 = arith.mulf %868, %869 : vector<8x256xf32>
    %871 = arith.addf %867, %870 : vector<8x256xf32>
    %c0_284 = arith.constant 0 : index
    %c66_285 = arith.constant 66 : index
    %872 = vector.load %arg11[%c0_284, %c66_285] : memref<8x358xf32, #tpu.memory_space<vmem>>, vector<8x256xf32>
    %873 = vector.broadcast %26 : vector<8x1xf32> to vector<8x256xf32>
    %874 = arith.mulf %872, %873 : vector<8x256xf32>
    %875 = arith.addf %871, %874 : vector<8x256xf32>
    %c0_286 = arith.constant 0 : index
    %c82_287 = arith.constant 82 : index
    %876 = vector.load %arg11[%c0_286, %c82_287] : memref<8x358xf32, #tpu.memory_space<vmem>>, vector<8x256xf32>
    %877 = vector.broadcast %27 : vector<8x1xf32> to vector<8x256xf32>
    %878 = arith.mulf %876, %877 : vector<8x256xf32>
    %879 = arith.addf %875, %878 : vector<8x256xf32>
    %c0_288 = arith.constant 0 : index
    %c98_289 = arith.constant 98 : index
    %880 = vector.load %arg11[%c0_288, %c98_289] : memref<8x358xf32, #tpu.memory_space<vmem>>, vector<8x256xf32>
    %881 = vector.broadcast %28 : vector<8x1xf32> to vector<8x256xf32>
    %882 = arith.mulf %880, %881 : vector<8x256xf32>
    %883 = arith.addf %879, %882 : vector<8x256xf32>
    %884 = vector.broadcast %118 : vector<1x256xf32> to vector<8x256xf32>
    %885 = arith.mulf %883, %884 : vector<8x256xf32>
    %886 = arith.addf %856, %885 : vector<8x256xf32>
    %c0_290 = arith.constant 0 : index
    %c3_291 = arith.constant 3 : index
    %887 = vector.load %arg11[%c0_290, %c3_291] : memref<8x358xf32, #tpu.memory_space<vmem>>, vector<8x256xf32>
    %888 = vector.broadcast %29 : vector<8x1xf32> to vector<8x256xf32>
    %889 = arith.mulf %887, %888 : vector<8x256xf32>
    %c0_292 = arith.constant 0 : index
    %c19_293 = arith.constant 19 : index
    %890 = vector.load %arg11[%c0_292, %c19_293] : memref<8x358xf32, #tpu.memory_space<vmem>>, vector<8x256xf32>
    %891 = vector.broadcast %30 : vector<8x1xf32> to vector<8x256xf32>
    %892 = arith.mulf %890, %891 : vector<8x256xf32>
    %893 = arith.addf %889, %892 : vector<8x256xf32>
    %c0_294 = arith.constant 0 : index
    %c35_295 = arith.constant 35 : index
    %894 = vector.load %arg11[%c0_294, %c35_295] : memref<8x358xf32, #tpu.memory_space<vmem>>, vector<8x256xf32>
    %895 = vector.broadcast %31 : vector<8x1xf32> to vector<8x256xf32>
    %896 = arith.mulf %894, %895 : vector<8x256xf32>
    %897 = arith.addf %893, %896 : vector<8x256xf32>
    %c0_296 = arith.constant 0 : index
    %c51_297 = arith.constant 51 : index
    %898 = vector.load %arg11[%c0_296, %c51_297] : memref<8x358xf32, #tpu.memory_space<vmem>>, vector<8x256xf32>
    %899 = vector.broadcast %32 : vector<8x1xf32> to vector<8x256xf32>
    %900 = arith.mulf %898, %899 : vector<8x256xf32>
    %901 = arith.addf %897, %900 : vector<8x256xf32>
    %c0_298 = arith.constant 0 : index
    %c67_299 = arith.constant 67 : index
    %902 = vector.load %arg11[%c0_298, %c67_299] : memref<8x358xf32, #tpu.memory_space<vmem>>, vector<8x256xf32>
    %903 = vector.broadcast %33 : vector<8x1xf32> to vector<8x256xf32>
    %904 = arith.mulf %902, %903 : vector<8x256xf32>
    %905 = arith.addf %901, %904 : vector<8x256xf32>
    %c0_300 = arith.constant 0 : index
    %c83_301 = arith.constant 83 : index
    %906 = vector.load %arg11[%c0_300, %c83_301] : memref<8x358xf32, #tpu.memory_space<vmem>>, vector<8x256xf32>
    %907 = vector.broadcast %34 : vector<8x1xf32> to vector<8x256xf32>
    %908 = arith.mulf %906, %907 : vector<8x256xf32>
    %909 = arith.addf %905, %908 : vector<8x256xf32>
    %c0_302 = arith.constant 0 : index
    %c99_303 = arith.constant 99 : index
    %910 = vector.load %arg11[%c0_302, %c99_303] : memref<8x358xf32, #tpu.memory_space<vmem>>, vector<8x256xf32>
    %911 = vector.broadcast %35 : vector<8x1xf32> to vector<8x256xf32>
    %912 = arith.mulf %910, %911 : vector<8x256xf32>
    %913 = arith.addf %909, %912 : vector<8x256xf32>
    %914 = arith.addf %886, %913 : vector<8x256xf32>
    %c0_304 = arith.constant 0 : index
    %c4_305 = arith.constant 4 : index
    %915 = vector.load %arg11[%c0_304, %c4_305] : memref<8x358xf32, #tpu.memory_space<vmem>>, vector<8x256xf32>
    %916 = vector.broadcast %36 : vector<8x1xf32> to vector<8x256xf32>
    %917 = arith.mulf %915, %916 : vector<8x256xf32>
    %c0_306 = arith.constant 0 : index
    %c20_307 = arith.constant 20 : index
    %918 = vector.load %arg11[%c0_306, %c20_307] : memref<8x358xf32, #tpu.memory_space<vmem>>, vector<8x256xf32>
    %919 = vector.broadcast %37 : vector<8x1xf32> to vector<8x256xf32>
    %920 = arith.mulf %918, %919 : vector<8x256xf32>
    %921 = arith.addf %917, %920 : vector<8x256xf32>
    %c0_308 = arith.constant 0 : index
    %c36_309 = arith.constant 36 : index
    %922 = vector.load %arg11[%c0_308, %c36_309] : memref<8x358xf32, #tpu.memory_space<vmem>>, vector<8x256xf32>
    %923 = vector.broadcast %38 : vector<8x1xf32> to vector<8x256xf32>
    %924 = arith.mulf %922, %923 : vector<8x256xf32>
    %925 = arith.addf %921, %924 : vector<8x256xf32>
    %c0_310 = arith.constant 0 : index
    %c52_311 = arith.constant 52 : index
    %926 = vector.load %arg11[%c0_310, %c52_311] : memref<8x358xf32, #tpu.memory_space<vmem>>, vector<8x256xf32>
    %927 = vector.broadcast %39 : vector<8x1xf32> to vector<8x256xf32>
    %928 = arith.mulf %926, %927 : vector<8x256xf32>
    %929 = arith.addf %925, %928 : vector<8x256xf32>
    %c0_312 = arith.constant 0 : index
    %c68_313 = arith.constant 68 : index
    %930 = vector.load %arg11[%c0_312, %c68_313] : memref<8x358xf32, #tpu.memory_space<vmem>>, vector<8x256xf32>
    %931 = vector.broadcast %40 : vector<8x1xf32> to vector<8x256xf32>
    %932 = arith.mulf %930, %931 : vector<8x256xf32>
    %933 = arith.addf %929, %932 : vector<8x256xf32>
    %c0_314 = arith.constant 0 : index
    %c84_315 = arith.constant 84 : index
    %934 = vector.load %arg11[%c0_314, %c84_315] : memref<8x358xf32, #tpu.memory_space<vmem>>, vector<8x256xf32>
    %935 = vector.broadcast %41 : vector<8x1xf32> to vector<8x256xf32>
    %936 = arith.mulf %934, %935 : vector<8x256xf32>
    %937 = arith.addf %933, %936 : vector<8x256xf32>
    %c0_316 = arith.constant 0 : index
    %c100_317 = arith.constant 100 : index
    %938 = vector.load %arg11[%c0_316, %c100_317] : memref<8x358xf32, #tpu.memory_space<vmem>>, vector<8x256xf32>
    %939 = vector.broadcast %42 : vector<8x1xf32> to vector<8x256xf32>
    %940 = arith.mulf %938, %939 : vector<8x256xf32>
    %941 = arith.addf %937, %940 : vector<8x256xf32>
    %942 = vector.broadcast %129 : vector<1x256xf32> to vector<8x256xf32>
    %943 = arith.mulf %941, %942 : vector<8x256xf32>
    %944 = arith.addf %914, %943 : vector<8x256xf32>
    %c0_318 = arith.constant 0 : index
    %c5_319 = arith.constant 5 : index
    %945 = vector.load %arg11[%c0_318, %c5_319] : memref<8x358xf32, #tpu.memory_space<vmem>>, vector<8x256xf32>
    %946 = vector.broadcast %43 : vector<8x1xf32> to vector<8x256xf32>
    %947 = arith.mulf %945, %946 : vector<8x256xf32>
    %c0_320 = arith.constant 0 : index
    %c21_321 = arith.constant 21 : index
    %948 = vector.load %arg11[%c0_320, %c21_321] : memref<8x358xf32, #tpu.memory_space<vmem>>, vector<8x256xf32>
    %949 = vector.broadcast %44 : vector<8x1xf32> to vector<8x256xf32>
    %950 = arith.mulf %948, %949 : vector<8x256xf32>
    %951 = arith.addf %947, %950 : vector<8x256xf32>
    %c0_322 = arith.constant 0 : index
    %c37_323 = arith.constant 37 : index
    %952 = vector.load %arg11[%c0_322, %c37_323] : memref<8x358xf32, #tpu.memory_space<vmem>>, vector<8x256xf32>
    %953 = vector.broadcast %45 : vector<8x1xf32> to vector<8x256xf32>
    %954 = arith.mulf %952, %953 : vector<8x256xf32>
    %955 = arith.addf %951, %954 : vector<8x256xf32>
    %c0_324 = arith.constant 0 : index
    %c53_325 = arith.constant 53 : index
    %956 = vector.load %arg11[%c0_324, %c53_325] : memref<8x358xf32, #tpu.memory_space<vmem>>, vector<8x256xf32>
    %957 = vector.broadcast %46 : vector<8x1xf32> to vector<8x256xf32>
    %958 = arith.mulf %956, %957 : vector<8x256xf32>
    %959 = arith.addf %955, %958 : vector<8x256xf32>
    %c0_326 = arith.constant 0 : index
    %c69_327 = arith.constant 69 : index
    %960 = vector.load %arg11[%c0_326, %c69_327] : memref<8x358xf32, #tpu.memory_space<vmem>>, vector<8x256xf32>
    %961 = vector.broadcast %47 : vector<8x1xf32> to vector<8x256xf32>
    %962 = arith.mulf %960, %961 : vector<8x256xf32>
    %963 = arith.addf %959, %962 : vector<8x256xf32>
    %c0_328 = arith.constant 0 : index
    %c85_329 = arith.constant 85 : index
    %964 = vector.load %arg11[%c0_328, %c85_329] : memref<8x358xf32, #tpu.memory_space<vmem>>, vector<8x256xf32>
    %965 = vector.broadcast %48 : vector<8x1xf32> to vector<8x256xf32>
    %966 = arith.mulf %964, %965 : vector<8x256xf32>
    %967 = arith.addf %963, %966 : vector<8x256xf32>
    %c0_330 = arith.constant 0 : index
    %c101_331 = arith.constant 101 : index
    %968 = vector.load %arg11[%c0_330, %c101_331] : memref<8x358xf32, #tpu.memory_space<vmem>>, vector<8x256xf32>
    %969 = vector.broadcast %49 : vector<8x1xf32> to vector<8x256xf32>
    %970 = arith.mulf %968, %969 : vector<8x256xf32>
    %971 = arith.addf %967, %970 : vector<8x256xf32>
    %972 = vector.broadcast %140 : vector<1x256xf32> to vector<8x256xf32>
    %973 = arith.mulf %971, %972 : vector<8x256xf32>
    %974 = arith.addf %944, %973 : vector<8x256xf32>
    %c0_332 = arith.constant 0 : index
    %c6_333 = arith.constant 6 : index
    %975 = vector.load %arg11[%c0_332, %c6_333] : memref<8x358xf32, #tpu.memory_space<vmem>>, vector<8x256xf32>
    %976 = vector.broadcast %50 : vector<8x1xf32> to vector<8x256xf32>
    %977 = arith.mulf %975, %976 : vector<8x256xf32>
    %c0_334 = arith.constant 0 : index
    %c22_335 = arith.constant 22 : index
    %978 = vector.load %arg11[%c0_334, %c22_335] : memref<8x358xf32, #tpu.memory_space<vmem>>, vector<8x256xf32>
    %979 = vector.broadcast %51 : vector<8x1xf32> to vector<8x256xf32>
    %980 = arith.mulf %978, %979 : vector<8x256xf32>
    %981 = arith.addf %977, %980 : vector<8x256xf32>
    %c0_336 = arith.constant 0 : index
    %c38_337 = arith.constant 38 : index
    %982 = vector.load %arg11[%c0_336, %c38_337] : memref<8x358xf32, #tpu.memory_space<vmem>>, vector<8x256xf32>
    %983 = vector.broadcast %52 : vector<8x1xf32> to vector<8x256xf32>
    %984 = arith.mulf %982, %983 : vector<8x256xf32>
    %985 = arith.addf %981, %984 : vector<8x256xf32>
    %c0_338 = arith.constant 0 : index
    %c54_339 = arith.constant 54 : index
    %986 = vector.load %arg11[%c0_338, %c54_339] : memref<8x358xf32, #tpu.memory_space<vmem>>, vector<8x256xf32>
    %987 = vector.broadcast %53 : vector<8x1xf32> to vector<8x256xf32>
    %988 = arith.mulf %986, %987 : vector<8x256xf32>
    %989 = arith.addf %985, %988 : vector<8x256xf32>
    %c0_340 = arith.constant 0 : index
    %c70_341 = arith.constant 70 : index
    %990 = vector.load %arg11[%c0_340, %c70_341] : memref<8x358xf32, #tpu.memory_space<vmem>>, vector<8x256xf32>
    %991 = vector.broadcast %54 : vector<8x1xf32> to vector<8x256xf32>
    %992 = arith.mulf %990, %991 : vector<8x256xf32>
    %993 = arith.addf %989, %992 : vector<8x256xf32>
    %c0_342 = arith.constant 0 : index
    %c86_343 = arith.constant 86 : index
    %994 = vector.load %arg11[%c0_342, %c86_343] : memref<8x358xf32, #tpu.memory_space<vmem>>, vector<8x256xf32>
    %995 = vector.broadcast %55 : vector<8x1xf32> to vector<8x256xf32>
    %996 = arith.mulf %994, %995 : vector<8x256xf32>
    %997 = arith.addf %993, %996 : vector<8x256xf32>
    %c0_344 = arith.constant 0 : index
    %c102_345 = arith.constant 102 : index
    %998 = vector.load %arg11[%c0_344, %c102_345] : memref<8x358xf32, #tpu.memory_space<vmem>>, vector<8x256xf32>
    %999 = vector.broadcast %56 : vector<8x1xf32> to vector<8x256xf32>
    %1000 = arith.mulf %998, %999 : vector<8x256xf32>
    %1001 = arith.addf %997, %1000 : vector<8x256xf32>
    %1002 = vector.broadcast %151 : vector<1x256xf32> to vector<8x256xf32>
    %1003 = arith.mulf %1001, %1002 : vector<8x256xf32>
    %1004 = arith.addf %974, %1003 : vector<8x256xf32>
    %1005 = vector.extract_strided_slice %1004 {offsets = [0, 0], sizes = [1, 256], strides = [1, 1]} : vector<8x256xf32> to vector<1x256xf32>
    %1006 = vector.broadcast %61 : vector<4x1xf32> to vector<4x256xf32>
    %1007 = vector.broadcast %1005 : vector<1x256xf32> to vector<4x256xf32>
    %1008 = arith.mulf %1006, %1007 : vector<4x256xf32>
    %1009 = vector.extract_strided_slice %1004 {offsets = [1, 0], sizes = [1, 256], strides = [1, 1]} : vector<8x256xf32> to vector<1x256xf32>
    %1010 = vector.broadcast %62 : vector<4x1xf32> to vector<4x256xf32>
    %1011 = vector.broadcast %1009 : vector<1x256xf32> to vector<4x256xf32>
    %1012 = arith.mulf %1010, %1011 : vector<4x256xf32>
    %1013 = arith.addf %1008, %1012 : vector<4x256xf32>
    %1014 = vector.extract_strided_slice %1004 {offsets = [2, 0], sizes = [1, 256], strides = [1, 1]} : vector<8x256xf32> to vector<1x256xf32>
    %1015 = vector.broadcast %63 : vector<4x1xf32> to vector<4x256xf32>
    %1016 = vector.broadcast %1014 : vector<1x256xf32> to vector<4x256xf32>
    %1017 = arith.mulf %1015, %1016 : vector<4x256xf32>
    %1018 = arith.addf %1013, %1017 : vector<4x256xf32>
    %1019 = vector.extract_strided_slice %1004 {offsets = [3, 0], sizes = [1, 256], strides = [1, 1]} : vector<8x256xf32> to vector<1x256xf32>
    %1020 = vector.broadcast %64 : vector<4x1xf32> to vector<4x256xf32>
    %1021 = vector.broadcast %1019 : vector<1x256xf32> to vector<4x256xf32>
    %1022 = arith.mulf %1020, %1021 : vector<4x256xf32>
    %1023 = arith.addf %1018, %1022 : vector<4x256xf32>
    %1024 = vector.extract_strided_slice %1004 {offsets = [4, 0], sizes = [1, 256], strides = [1, 1]} : vector<8x256xf32> to vector<1x256xf32>
    %1025 = vector.broadcast %65 : vector<4x1xf32> to vector<4x256xf32>
    %1026 = vector.broadcast %1024 : vector<1x256xf32> to vector<4x256xf32>
    %1027 = arith.mulf %1025, %1026 : vector<4x256xf32>
    %1028 = arith.addf %1023, %1027 : vector<4x256xf32>
    %1029 = vector.extract_strided_slice %1004 {offsets = [5, 0], sizes = [1, 256], strides = [1, 1]} : vector<8x256xf32> to vector<1x256xf32>
    %1030 = vector.broadcast %66 : vector<4x1xf32> to vector<4x256xf32>
    %1031 = vector.broadcast %1029 : vector<1x256xf32> to vector<4x256xf32>
    %1032 = arith.mulf %1030, %1031 : vector<4x256xf32>
    %1033 = arith.addf %1028, %1032 : vector<4x256xf32>
    %1034 = vector.extract_strided_slice %1004 {offsets = [6, 0], sizes = [1, 256], strides = [1, 1]} : vector<8x256xf32> to vector<1x256xf32>
    %1035 = vector.broadcast %67 : vector<4x1xf32> to vector<4x256xf32>
    %1036 = vector.broadcast %1034 : vector<1x256xf32> to vector<4x256xf32>
    %1037 = arith.mulf %1035, %1036 : vector<4x256xf32>
    %1038 = arith.addf %1033, %1037 : vector<4x256xf32>
    %1039 = vector.extract_strided_slice %1004 {offsets = [7, 0], sizes = [1, 256], strides = [1, 1]} : vector<8x256xf32> to vector<1x256xf32>
    %1040 = vector.broadcast %68 : vector<4x1xf32> to vector<4x256xf32>
    %1041 = vector.broadcast %1039 : vector<1x256xf32> to vector<4x256xf32>
    %1042 = arith.mulf %1040, %1041 : vector<4x256xf32>
    %1043 = arith.addf %1038, %1042 : vector<4x256xf32>
    %1044 = vector.broadcast %7 : vector<4x1xf32> to vector<4x256xf32>
    %1045 = arith.addf %1043, %1044 : vector<4x256xf32>
    %c2_346 = arith.constant 2 : index
    %c0_347 = arith.constant 0 : index
    %c0_348 = arith.constant 0 : index
    %c0_349 = arith.constant 0 : index
    %1046 = vector.load %arg8[%c2_346, %c0_347, %c0_348, %c0_349] : memref<4x1x4x256xf32, #tpu.memory_space<vmem>>, vector<1x1x4x256xf32>
    %1047 = vector.shape_cast %1046 : vector<1x1x4x256xf32> to vector<4x256xf32>
    %1048 = vector.shape_cast %1045 : vector<4x256xf32> to vector<1x1x4x256xf32>
    tpu.vector_store %arg8[%c2_346, %c0_347, %c0_348, %c0_349], %1048 {strides = array<i32>} : memref<4x1x4x256xf32, #tpu.memory_space<vmem>>, vector<1x1x4x256xf32>,
    %c3_350 = arith.constant 3 : index
    %c0_351 = arith.constant 0 : index
    %c0_352 = arith.constant 0 : index
    %c0_353 = arith.constant 0 : index
    %1049 = vector.load %arg2[%c3_350, %c0_351, %c0_352, %c0_353] : memref<4x1x4x256xf32, #tpu.memory_space<vmem>>, vector<1x1x4x256xf32>
    %1050 = vector.shape_cast %1049 : vector<1x1x4x256xf32> to vector<4x256xf32>
    %c0_354 = arith.constant 0 : index
    %c0_355 = arith.constant 0 : index
    %1051 = vector.load %arg9[%c0_354, %c0_355] : memref<4x256xf32, #tpu.memory_space<vmem>>, vector<4x256xf32>
    %1052 = arith.subf %1050, %1051 : vector<4x256xf32>
    %cst_356 = arith.constant 5.000000e-01 : f32
    %1053 = vector.broadcast %cst_356 : f32 to vector<4x256xf32>
    %1054 = arith.mulf %1052, %1053 : vector<4x256xf32>
    %1055 = arith.addf %1051, %1054 : vector<4x256xf32>
    %cst_357 = arith.constant 1.000000e+00 : f32
    %1056 = vector.broadcast %cst_357 : f32 to vector<4x256xf32>
    %1057 = arith.cmpf oge, %1055, %1056 : vector<4x256xf32>
    %cst_358 = arith.constant 0.000000e+00 : f32
    %1058 = vector.broadcast %cst_358 : f32 to vector<4x256xf32>
    %1059 = arith.select %1057, %1058, %1055 : vector<4x256xi1>, vector<4x256xf32>
    %c0_359 = arith.constant 0 : index
    %c0_360 = arith.constant 0 : index
    %1060 = vector.load %arg9[%c0_359, %c0_360] : memref<4x256xf32, #tpu.memory_space<vmem>>, vector<4x256xf32>
    tpu.vector_store %arg9[%c0_359, %c0_360], %1059 {strides = array<i32>} : memref<4x256xf32, #tpu.memory_space<vmem>>, vector<4x256xf32>,
    %1061 = arith.extui %1057 : vector<4x256xi1> to vector<4x256xi32>
    %1062 = arith.sitofp %1061 : vector<4x256xi32> to vector<4x256xf32>
    %1063 = vector.extract_strided_slice %1062 {offsets = [0, 0], sizes = [1, 256], strides = [1, 1]} : vector<4x256xf32> to vector<1x256xf32>
    %1064 = vector.broadcast %57 : vector<8x1xf32> to vector<8x256xf32>
    %1065 = vector.broadcast %1063 : vector<1x256xf32> to vector<8x256xf32>
    %1066 = arith.mulf %1064, %1065 : vector<8x256xf32>
    %1067 = vector.extract_strided_slice %1062 {offsets = [1, 0], sizes = [1, 256], strides = [1, 1]} : vector<4x256xf32> to vector<1x256xf32>
    %1068 = vector.broadcast %58 : vector<8x1xf32> to vector<8x256xf32>
    %1069 = vector.broadcast %1067 : vector<1x256xf32> to vector<8x256xf32>
    %1070 = arith.mulf %1068, %1069 : vector<8x256xf32>
    %1071 = arith.addf %1066, %1070 : vector<8x256xf32>
    %1072 = vector.extract_strided_slice %1062 {offsets = [2, 0], sizes = [1, 256], strides = [1, 1]} : vector<4x256xf32> to vector<1x256xf32>
    %1073 = vector.broadcast %59 : vector<8x1xf32> to vector<8x256xf32>
    %1074 = vector.broadcast %1072 : vector<1x256xf32> to vector<8x256xf32>
    %1075 = arith.mulf %1073, %1074 : vector<8x256xf32>
    %1076 = arith.addf %1071, %1075 : vector<8x256xf32>
    %1077 = vector.extract_strided_slice %1062 {offsets = [3, 0], sizes = [1, 256], strides = [1, 1]} : vector<4x256xf32> to vector<1x256xf32>
    %1078 = vector.broadcast %60 : vector<8x1xf32> to vector<8x256xf32>
    %1079 = vector.broadcast %1077 : vector<1x256xf32> to vector<8x256xf32>
    %1080 = arith.mulf %1078, %1079 : vector<8x256xf32>
    %1081 = arith.addf %1076, %1080 : vector<8x256xf32>
    %1082 = vector.broadcast %4 : vector<8x1xf32> to vector<8x256xf32>
    %1083 = arith.addf %1081, %1082 : vector<8x256xf32>
    %c0_361 = arith.constant 0 : index
    %c0_362 = arith.constant 0 : index
    %1084 = vector.load %arg10[%c0_361, %c0_362] : memref<8x256xf32, #tpu.memory_space<vmem>>, vector<8x256xf32>
    %1085 = arith.subf %1083, %1084 : vector<8x256xf32>
    %cst_363 = arith.constant 5.000000e-01 : f32
    %1086 = vector.broadcast %cst_363 : f32 to vector<8x256xf32>
    %1087 = arith.mulf %1085, %1086 : vector<8x256xf32>
    %1088 = arith.addf %1084, %1087 : vector<8x256xf32>
    %cst_364 = arith.constant 1.000000e+00 : f32
    %1089 = vector.broadcast %cst_364 : f32 to vector<8x256xf32>
    %1090 = arith.cmpf oge, %1088, %1089 : vector<8x256xf32>
    %cst_365 = arith.constant 0.000000e+00 : f32
    %1091 = vector.broadcast %cst_365 : f32 to vector<8x256xf32>
    %1092 = arith.select %1090, %1091, %1088 : vector<8x256xi1>, vector<8x256xf32>
    %c0_366 = arith.constant 0 : index
    %c0_367 = arith.constant 0 : index
    %1093 = vector.load %arg10[%c0_366, %c0_367] : memref<8x256xf32, #tpu.memory_space<vmem>>, vector<8x256xf32>
    tpu.vector_store %arg10[%c0_366, %c0_367], %1092 {strides = array<i32>} : memref<8x256xf32, #tpu.memory_space<vmem>>, vector<8x256xf32>,
    %1094 = arith.extui %1090 : vector<8x256xi1> to vector<8x256xi32>
    %1095 = arith.sitofp %1094 : vector<8x256xi32> to vector<8x256xf32>
    %c0_368 = arith.constant 0 : index
    %c51_369 = arith.constant 51 : index
    %1096 = vector.load %arg11[%c0_368, %c51_369] : memref<8x358xf32, #tpu.memory_space<vmem>>, vector<8x256xf32>
    tpu.vector_store %arg11[%c0_368, %c51_369], %1095 {strides = array<i32>} : memref<8x358xf32, #tpu.memory_space<vmem>>, vector<8x256xf32>,
    %c0_370 = arith.constant 0 : index
    %c0_371 = arith.constant 0 : index
    %1097 = vector.load %arg11[%c0_370, %c0_371] : memref<8x358xf32, #tpu.memory_space<vmem>>, vector<8x256xf32>
    %1098 = vector.broadcast %8 : vector<8x1xf32> to vector<8x256xf32>
    %1099 = arith.mulf %1097, %1098 : vector<8x256xf32>
    %c0_372 = arith.constant 0 : index
    %c16_373 = arith.constant 16 : index
    %1100 = vector.load %arg11[%c0_372, %c16_373] : memref<8x358xf32, #tpu.memory_space<vmem>>, vector<8x256xf32>
    %1101 = vector.broadcast %9 : vector<8x1xf32> to vector<8x256xf32>
    %1102 = arith.mulf %1100, %1101 : vector<8x256xf32>
    %1103 = arith.addf %1099, %1102 : vector<8x256xf32>
    %c0_374 = arith.constant 0 : index
    %c32_375 = arith.constant 32 : index
    %1104 = vector.load %arg11[%c0_374, %c32_375] : memref<8x358xf32, #tpu.memory_space<vmem>>, vector<8x256xf32>
    %1105 = vector.broadcast %10 : vector<8x1xf32> to vector<8x256xf32>
    %1106 = arith.mulf %1104, %1105 : vector<8x256xf32>
    %1107 = arith.addf %1103, %1106 : vector<8x256xf32>
    %c0_376 = arith.constant 0 : index
    %c48_377 = arith.constant 48 : index
    %1108 = vector.load %arg11[%c0_376, %c48_377] : memref<8x358xf32, #tpu.memory_space<vmem>>, vector<8x256xf32>
    %1109 = vector.broadcast %11 : vector<8x1xf32> to vector<8x256xf32>
    %1110 = arith.mulf %1108, %1109 : vector<8x256xf32>
    %1111 = arith.addf %1107, %1110 : vector<8x256xf32>
    %c0_378 = arith.constant 0 : index
    %c64_379 = arith.constant 64 : index
    %1112 = vector.load %arg11[%c0_378, %c64_379] : memref<8x358xf32, #tpu.memory_space<vmem>>, vector<8x256xf32>
    %1113 = vector.broadcast %12 : vector<8x1xf32> to vector<8x256xf32>
    %1114 = arith.mulf %1112, %1113 : vector<8x256xf32>
    %1115 = arith.addf %1111, %1114 : vector<8x256xf32>
    %c0_380 = arith.constant 0 : index
    %c80_381 = arith.constant 80 : index
    %1116 = vector.load %arg11[%c0_380, %c80_381] : memref<8x358xf32, #tpu.memory_space<vmem>>, vector<8x256xf32>
    %1117 = vector.broadcast %13 : vector<8x1xf32> to vector<8x256xf32>
    %1118 = arith.mulf %1116, %1117 : vector<8x256xf32>
    %1119 = arith.addf %1115, %1118 : vector<8x256xf32>
    %c0_382 = arith.constant 0 : index
    %c96_383 = arith.constant 96 : index
    %1120 = vector.load %arg11[%c0_382, %c96_383] : memref<8x358xf32, #tpu.memory_space<vmem>>, vector<8x256xf32>
    %1121 = vector.broadcast %14 : vector<8x1xf32> to vector<8x256xf32>
    %1122 = arith.mulf %1120, %1121 : vector<8x256xf32>
    %1123 = arith.addf %1119, %1122 : vector<8x256xf32>
    %1124 = vector.broadcast %96 : vector<1x256xf32> to vector<8x256xf32>
    %1125 = arith.mulf %1123, %1124 : vector<8x256xf32>
    %c0_384 = arith.constant 0 : index
    %c1_385 = arith.constant 1 : index
    %1126 = vector.load %arg11[%c0_384, %c1_385] : memref<8x358xf32, #tpu.memory_space<vmem>>, vector<8x256xf32>
    %1127 = vector.broadcast %15 : vector<8x1xf32> to vector<8x256xf32>
    %1128 = arith.mulf %1126, %1127 : vector<8x256xf32>
    %c0_386 = arith.constant 0 : index
    %c17_387 = arith.constant 17 : index
    %1129 = vector.load %arg11[%c0_386, %c17_387] : memref<8x358xf32, #tpu.memory_space<vmem>>, vector<8x256xf32>
    %1130 = vector.broadcast %16 : vector<8x1xf32> to vector<8x256xf32>
    %1131 = arith.mulf %1129, %1130 : vector<8x256xf32>
    %1132 = arith.addf %1128, %1131 : vector<8x256xf32>
    %c0_388 = arith.constant 0 : index
    %c33_389 = arith.constant 33 : index
    %1133 = vector.load %arg11[%c0_388, %c33_389] : memref<8x358xf32, #tpu.memory_space<vmem>>, vector<8x256xf32>
    %1134 = vector.broadcast %17 : vector<8x1xf32> to vector<8x256xf32>
    %1135 = arith.mulf %1133, %1134 : vector<8x256xf32>
    %1136 = arith.addf %1132, %1135 : vector<8x256xf32>
    %c0_390 = arith.constant 0 : index
    %c49_391 = arith.constant 49 : index
    %1137 = vector.load %arg11[%c0_390, %c49_391] : memref<8x358xf32, #tpu.memory_space<vmem>>, vector<8x256xf32>
    %1138 = vector.broadcast %18 : vector<8x1xf32> to vector<8x256xf32>
    %1139 = arith.mulf %1137, %1138 : vector<8x256xf32>
    %1140 = arith.addf %1136, %1139 : vector<8x256xf32>
    %c0_392 = arith.constant 0 : index
    %c65_393 = arith.constant 65 : index
    %1141 = vector.load %arg11[%c0_392, %c65_393] : memref<8x358xf32, #tpu.memory_space<vmem>>, vector<8x256xf32>
    %1142 = vector.broadcast %19 : vector<8x1xf32> to vector<8x256xf32>
    %1143 = arith.mulf %1141, %1142 : vector<8x256xf32>
    %1144 = arith.addf %1140, %1143 : vector<8x256xf32>
    %c0_394 = arith.constant 0 : index
    %c81_395 = arith.constant 81 : index
    %1145 = vector.load %arg11[%c0_394, %c81_395] : memref<8x358xf32, #tpu.memory_space<vmem>>, vector<8x256xf32>
    %1146 = vector.broadcast %20 : vector<8x1xf32> to vector<8x256xf32>
    %1147 = arith.mulf %1145, %1146 : vector<8x256xf32>
    %1148 = arith.addf %1144, %1147 : vector<8x256xf32>
    %c0_396 = arith.constant 0 : index
    %c97_397 = arith.constant 97 : index
    %1149 = vector.load %arg11[%c0_396, %c97_397] : memref<8x358xf32, #tpu.memory_space<vmem>>, vector<8x256xf32>
    %1150 = vector.broadcast %21 : vector<8x1xf32> to vector<8x256xf32>
    %1151 = arith.mulf %1149, %1150 : vector<8x256xf32>
    %1152 = arith.addf %1148, %1151 : vector<8x256xf32>
    %1153 = vector.broadcast %107 : vector<1x256xf32> to vector<8x256xf32>
    %1154 = arith.mulf %1152, %1153 : vector<8x256xf32>
    %1155 = arith.addf %1125, %1154 : vector<8x256xf32>
    %c0_398 = arith.constant 0 : index
    %c2_399 = arith.constant 2 : index
    %1156 = vector.load %arg11[%c0_398, %c2_399] : memref<8x358xf32, #tpu.memory_space<vmem>>, vector<8x256xf32>
    %1157 = vector.broadcast %22 : vector<8x1xf32> to vector<8x256xf32>
    %1158 = arith.mulf %1156, %1157 : vector<8x256xf32>
    %c0_400 = arith.constant 0 : index
    %c18_401 = arith.constant 18 : index
    %1159 = vector.load %arg11[%c0_400, %c18_401] : memref<8x358xf32, #tpu.memory_space<vmem>>, vector<8x256xf32>
    %1160 = vector.broadcast %23 : vector<8x1xf32> to vector<8x256xf32>
    %1161 = arith.mulf %1159, %1160 : vector<8x256xf32>
    %1162 = arith.addf %1158, %1161 : vector<8x256xf32>
    %c0_402 = arith.constant 0 : index
    %c34_403 = arith.constant 34 : index
    %1163 = vector.load %arg11[%c0_402, %c34_403] : memref<8x358xf32, #tpu.memory_space<vmem>>, vector<8x256xf32>
    %1164 = vector.broadcast %24 : vector<8x1xf32> to vector<8x256xf32>
    %1165 = arith.mulf %1163, %1164 : vector<8x256xf32>
    %1166 = arith.addf %1162, %1165 : vector<8x256xf32>
    %c0_404 = arith.constant 0 : index
    %c50_405 = arith.constant 50 : index
    %1167 = vector.load %arg11[%c0_404, %c50_405] : memref<8x358xf32, #tpu.memory_space<vmem>>, vector<8x256xf32>
    %1168 = vector.broadcast %25 : vector<8x1xf32> to vector<8x256xf32>
    %1169 = arith.mulf %1167, %1168 : vector<8x256xf32>
    %1170 = arith.addf %1166, %1169 : vector<8x256xf32>
    %c0_406 = arith.constant 0 : index
    %c66_407 = arith.constant 66 : index
    %1171 = vector.load %arg11[%c0_406, %c66_407] : memref<8x358xf32, #tpu.memory_space<vmem>>, vector<8x256xf32>
    %1172 = vector.broadcast %26 : vector<8x1xf32> to vector<8x256xf32>
    %1173 = arith.mulf %1171, %1172 : vector<8x256xf32>
    %1174 = arith.addf %1170, %1173 : vector<8x256xf32>
    %c0_408 = arith.constant 0 : index
    %c82_409 = arith.constant 82 : index
    %1175 = vector.load %arg11[%c0_408, %c82_409] : memref<8x358xf32, #tpu.memory_space<vmem>>, vector<8x256xf32>
    %1176 = vector.broadcast %27 : vector<8x1xf32> to vector<8x256xf32>
    %1177 = arith.mulf %1175, %1176 : vector<8x256xf32>
    %1178 = arith.addf %1174, %1177 : vector<8x256xf32>
    %c0_410 = arith.constant 0 : index
    %c98_411 = arith.constant 98 : index
    %1179 = vector.load %arg11[%c0_410, %c98_411] : memref<8x358xf32, #tpu.memory_space<vmem>>, vector<8x256xf32>
    %1180 = vector.broadcast %28 : vector<8x1xf32> to vector<8x256xf32>
    %1181 = arith.mulf %1179, %1180 : vector<8x256xf32>
    %1182 = arith.addf %1178, %1181 : vector<8x256xf32>
    %1183 = vector.broadcast %118 : vector<1x256xf32> to vector<8x256xf32>
    %1184 = arith.mulf %1182, %1183 : vector<8x256xf32>
    %1185 = arith.addf %1155, %1184 : vector<8x256xf32>
    %c0_412 = arith.constant 0 : index
    %c3_413 = arith.constant 3 : index
    %1186 = vector.load %arg11[%c0_412, %c3_413] : memref<8x358xf32, #tpu.memory_space<vmem>>, vector<8x256xf32>
    %1187 = vector.broadcast %29 : vector<8x1xf32> to vector<8x256xf32>
    %1188 = arith.mulf %1186, %1187 : vector<8x256xf32>
    %c0_414 = arith.constant 0 : index
    %c19_415 = arith.constant 19 : index
    %1189 = vector.load %arg11[%c0_414, %c19_415] : memref<8x358xf32, #tpu.memory_space<vmem>>, vector<8x256xf32>
    %1190 = vector.broadcast %30 : vector<8x1xf32> to vector<8x256xf32>
    %1191 = arith.mulf %1189, %1190 : vector<8x256xf32>
    %1192 = arith.addf %1188, %1191 : vector<8x256xf32>
    %c0_416 = arith.constant 0 : index
    %c35_417 = arith.constant 35 : index
    %1193 = vector.load %arg11[%c0_416, %c35_417] : memref<8x358xf32, #tpu.memory_space<vmem>>, vector<8x256xf32>
    %1194 = vector.broadcast %31 : vector<8x1xf32> to vector<8x256xf32>
    %1195 = arith.mulf %1193, %1194 : vector<8x256xf32>
    %1196 = arith.addf %1192, %1195 : vector<8x256xf32>
    %c0_418 = arith.constant 0 : index
    %c51_419 = arith.constant 51 : index
    %1197 = vector.load %arg11[%c0_418, %c51_419] : memref<8x358xf32, #tpu.memory_space<vmem>>, vector<8x256xf32>
    %1198 = vector.broadcast %32 : vector<8x1xf32> to vector<8x256xf32>
    %1199 = arith.mulf %1197, %1198 : vector<8x256xf32>
    %1200 = arith.addf %1196, %1199 : vector<8x256xf32>
    %c0_420 = arith.constant 0 : index
    %c67_421 = arith.constant 67 : index
    %1201 = vector.load %arg11[%c0_420, %c67_421] : memref<8x358xf32, #tpu.memory_space<vmem>>, vector<8x256xf32>
    %1202 = vector.broadcast %33 : vector<8x1xf32> to vector<8x256xf32>
    %1203 = arith.mulf %1201, %1202 : vector<8x256xf32>
    %1204 = arith.addf %1200, %1203 : vector<8x256xf32>
    %c0_422 = arith.constant 0 : index
    %c83_423 = arith.constant 83 : index
    %1205 = vector.load %arg11[%c0_422, %c83_423] : memref<8x358xf32, #tpu.memory_space<vmem>>, vector<8x256xf32>
    %1206 = vector.broadcast %34 : vector<8x1xf32> to vector<8x256xf32>
    %1207 = arith.mulf %1205, %1206 : vector<8x256xf32>
    %1208 = arith.addf %1204, %1207 : vector<8x256xf32>
    %c0_424 = arith.constant 0 : index
    %c99_425 = arith.constant 99 : index
    %1209 = vector.load %arg11[%c0_424, %c99_425] : memref<8x358xf32, #tpu.memory_space<vmem>>, vector<8x256xf32>
    %1210 = vector.broadcast %35 : vector<8x1xf32> to vector<8x256xf32>
    %1211 = arith.mulf %1209, %1210 : vector<8x256xf32>
    %1212 = arith.addf %1208, %1211 : vector<8x256xf32>
    %1213 = arith.addf %1185, %1212 : vector<8x256xf32>
    %c0_426 = arith.constant 0 : index
    %c4_427 = arith.constant 4 : index
    %1214 = vector.load %arg11[%c0_426, %c4_427] : memref<8x358xf32, #tpu.memory_space<vmem>>, vector<8x256xf32>
    %1215 = vector.broadcast %36 : vector<8x1xf32> to vector<8x256xf32>
    %1216 = arith.mulf %1214, %1215 : vector<8x256xf32>
    %c0_428 = arith.constant 0 : index
    %c20_429 = arith.constant 20 : index
    %1217 = vector.load %arg11[%c0_428, %c20_429] : memref<8x358xf32, #tpu.memory_space<vmem>>, vector<8x256xf32>
    %1218 = vector.broadcast %37 : vector<8x1xf32> to vector<8x256xf32>
    %1219 = arith.mulf %1217, %1218 : vector<8x256xf32>
    %1220 = arith.addf %1216, %1219 : vector<8x256xf32>
    %c0_430 = arith.constant 0 : index
    %c36_431 = arith.constant 36 : index
    %1221 = vector.load %arg11[%c0_430, %c36_431] : memref<8x358xf32, #tpu.memory_space<vmem>>, vector<8x256xf32>
    %1222 = vector.broadcast %38 : vector<8x1xf32> to vector<8x256xf32>
    %1223 = arith.mulf %1221, %1222 : vector<8x256xf32>
    %1224 = arith.addf %1220, %1223 : vector<8x256xf32>
    %c0_432 = arith.constant 0 : index
    %c52_433 = arith.constant 52 : index
    %1225 = vector.load %arg11[%c0_432, %c52_433] : memref<8x358xf32, #tpu.memory_space<vmem>>, vector<8x256xf32>
    %1226 = vector.broadcast %39 : vector<8x1xf32> to vector<8x256xf32>
    %1227 = arith.mulf %1225, %1226 : vector<8x256xf32>
    %1228 = arith.addf %1224, %1227 : vector<8x256xf32>
    %c0_434 = arith.constant 0 : index
    %c68_435 = arith.constant 68 : index
    %1229 = vector.load %arg11[%c0_434, %c68_435] : memref<8x358xf32, #tpu.memory_space<vmem>>, vector<8x256xf32>
    %1230 = vector.broadcast %40 : vector<8x1xf32> to vector<8x256xf32>
    %1231 = arith.mulf %1229, %1230 : vector<8x256xf32>
    %1232 = arith.addf %1228, %1231 : vector<8x256xf32>
    %c0_436 = arith.constant 0 : index
    %c84_437 = arith.constant 84 : index
    %1233 = vector.load %arg11[%c0_436, %c84_437] : memref<8x358xf32, #tpu.memory_space<vmem>>, vector<8x256xf32>
    %1234 = vector.broadcast %41 : vector<8x1xf32> to vector<8x256xf32>
    %1235 = arith.mulf %1233, %1234 : vector<8x256xf32>
    %1236 = arith.addf %1232, %1235 : vector<8x256xf32>
    %c0_438 = arith.constant 0 : index
    %c100_439 = arith.constant 100 : index
    %1237 = vector.load %arg11[%c0_438, %c100_439] : memref<8x358xf32, #tpu.memory_space<vmem>>, vector<8x256xf32>
    %1238 = vector.broadcast %42 : vector<8x1xf32> to vector<8x256xf32>
    %1239 = arith.mulf %1237, %1238 : vector<8x256xf32>
    %1240 = arith.addf %1236, %1239 : vector<8x256xf32>
    %1241 = vector.broadcast %129 : vector<1x256xf32> to vector<8x256xf32>
    %1242 = arith.mulf %1240, %1241 : vector<8x256xf32>
    %1243 = arith.addf %1213, %1242 : vector<8x256xf32>
    %c0_440 = arith.constant 0 : index
    %c5_441 = arith.constant 5 : index
    %1244 = vector.load %arg11[%c0_440, %c5_441] : memref<8x358xf32, #tpu.memory_space<vmem>>, vector<8x256xf32>
    %1245 = vector.broadcast %43 : vector<8x1xf32> to vector<8x256xf32>
    %1246 = arith.mulf %1244, %1245 : vector<8x256xf32>
    %c0_442 = arith.constant 0 : index
    %c21_443 = arith.constant 21 : index
    %1247 = vector.load %arg11[%c0_442, %c21_443] : memref<8x358xf32, #tpu.memory_space<vmem>>, vector<8x256xf32>
    %1248 = vector.broadcast %44 : vector<8x1xf32> to vector<8x256xf32>
    %1249 = arith.mulf %1247, %1248 : vector<8x256xf32>
    %1250 = arith.addf %1246, %1249 : vector<8x256xf32>
    %c0_444 = arith.constant 0 : index
    %c37_445 = arith.constant 37 : index
    %1251 = vector.load %arg11[%c0_444, %c37_445] : memref<8x358xf32, #tpu.memory_space<vmem>>, vector<8x256xf32>
    %1252 = vector.broadcast %45 : vector<8x1xf32> to vector<8x256xf32>
    %1253 = arith.mulf %1251, %1252 : vector<8x256xf32>
    %1254 = arith.addf %1250, %1253 : vector<8x256xf32>
    %c0_446 = arith.constant 0 : index
    %c53_447 = arith.constant 53 : index
    %1255 = vector.load %arg11[%c0_446, %c53_447] : memref<8x358xf32, #tpu.memory_space<vmem>>, vector<8x256xf32>
    %1256 = vector.broadcast %46 : vector<8x1xf32> to vector<8x256xf32>
    %1257 = arith.mulf %1255, %1256 : vector<8x256xf32>
    %1258 = arith.addf %1254, %1257 : vector<8x256xf32>
    %c0_448 = arith.constant 0 : index
    %c69_449 = arith.constant 69 : index
    %1259 = vector.load %arg11[%c0_448, %c69_449] : memref<8x358xf32, #tpu.memory_space<vmem>>, vector<8x256xf32>
    %1260 = vector.broadcast %47 : vector<8x1xf32> to vector<8x256xf32>
    %1261 = arith.mulf %1259, %1260 : vector<8x256xf32>
    %1262 = arith.addf %1258, %1261 : vector<8x256xf32>
    %c0_450 = arith.constant 0 : index
    %c85_451 = arith.constant 85 : index
    %1263 = vector.load %arg11[%c0_450, %c85_451] : memref<8x358xf32, #tpu.memory_space<vmem>>, vector<8x256xf32>
    %1264 = vector.broadcast %48 : vector<8x1xf32> to vector<8x256xf32>
    %1265 = arith.mulf %1263, %1264 : vector<8x256xf32>
    %1266 = arith.addf %1262, %1265 : vector<8x256xf32>
    %c0_452 = arith.constant 0 : index
    %c101_453 = arith.constant 101 : index
    %1267 = vector.load %arg11[%c0_452, %c101_453] : memref<8x358xf32, #tpu.memory_space<vmem>>, vector<8x256xf32>
    %1268 = vector.broadcast %49 : vector<8x1xf32> to vector<8x256xf32>
    %1269 = arith.mulf %1267, %1268 : vector<8x256xf32>
    %1270 = arith.addf %1266, %1269 : vector<8x256xf32>
    %1271 = vector.broadcast %140 : vector<1x256xf32> to vector<8x256xf32>
    %1272 = arith.mulf %1270, %1271 : vector<8x256xf32>
    %1273 = arith.addf %1243, %1272 : vector<8x256xf32>
    %c0_454 = arith.constant 0 : index
    %c6_455 = arith.constant 6 : index
    %1274 = vector.load %arg11[%c0_454, %c6_455] : memref<8x358xf32, #tpu.memory_space<vmem>>, vector<8x256xf32>
    %1275 = vector.broadcast %50 : vector<8x1xf32> to vector<8x256xf32>
    %1276 = arith.mulf %1274, %1275 : vector<8x256xf32>
    %c0_456 = arith.constant 0 : index
    %c22_457 = arith.constant 22 : index
    %1277 = vector.load %arg11[%c0_456, %c22_457] : memref<8x358xf32, #tpu.memory_space<vmem>>, vector<8x256xf32>
    %1278 = vector.broadcast %51 : vector<8x1xf32> to vector<8x256xf32>
    %1279 = arith.mulf %1277, %1278 : vector<8x256xf32>
    %1280 = arith.addf %1276, %1279 : vector<8x256xf32>
    %c0_458 = arith.constant 0 : index
    %c38_459 = arith.constant 38 : index
    %1281 = vector.load %arg11[%c0_458, %c38_459] : memref<8x358xf32, #tpu.memory_space<vmem>>, vector<8x256xf32>
    %1282 = vector.broadcast %52 : vector<8x1xf32> to vector<8x256xf32>
    %1283 = arith.mulf %1281, %1282 : vector<8x256xf32>
    %1284 = arith.addf %1280, %1283 : vector<8x256xf32>
    %c0_460 = arith.constant 0 : index
    %c54_461 = arith.constant 54 : index
    %1285 = vector.load %arg11[%c0_460, %c54_461] : memref<8x358xf32, #tpu.memory_space<vmem>>, vector<8x256xf32>
    %1286 = vector.broadcast %53 : vector<8x1xf32> to vector<8x256xf32>
    %1287 = arith.mulf %1285, %1286 : vector<8x256xf32>
    %1288 = arith.addf %1284, %1287 : vector<8x256xf32>
    %c0_462 = arith.constant 0 : index
    %c70_463 = arith.constant 70 : index
    %1289 = vector.load %arg11[%c0_462, %c70_463] : memref<8x358xf32, #tpu.memory_space<vmem>>, vector<8x256xf32>
    %1290 = vector.broadcast %54 : vector<8x1xf32> to vector<8x256xf32>
    %1291 = arith.mulf %1289, %1290 : vector<8x256xf32>
    %1292 = arith.addf %1288, %1291 : vector<8x256xf32>
    %c0_464 = arith.constant 0 : index
    %c86_465 = arith.constant 86 : index
    %1293 = vector.load %arg11[%c0_464, %c86_465] : memref<8x358xf32, #tpu.memory_space<vmem>>, vector<8x256xf32>
    %1294 = vector.broadcast %55 : vector<8x1xf32> to vector<8x256xf32>
    %1295 = arith.mulf %1293, %1294 : vector<8x256xf32>
    %1296 = arith.addf %1292, %1295 : vector<8x256xf32>
    %c0_466 = arith.constant 0 : index
    %c102_467 = arith.constant 102 : index
    %1297 = vector.load %arg11[%c0_466, %c102_467] : memref<8x358xf32, #tpu.memory_space<vmem>>, vector<8x256xf32>
    %1298 = vector.broadcast %56 : vector<8x1xf32> to vector<8x256xf32>
    %1299 = arith.mulf %1297, %1298 : vector<8x256xf32>
    %1300 = arith.addf %1296, %1299 : vector<8x256xf32>
    %1301 = vector.broadcast %151 : vector<1x256xf32> to vector<8x256xf32>
    %1302 = arith.mulf %1300, %1301 : vector<8x256xf32>
    %1303 = arith.addf %1273, %1302 : vector<8x256xf32>
    %1304 = vector.extract_strided_slice %1303 {offsets = [0, 0], sizes = [1, 256], strides = [1, 1]} : vector<8x256xf32> to vector<1x256xf32>
    %1305 = vector.broadcast %61 : vector<4x1xf32> to vector<4x256xf32>
    %1306 = vector.broadcast %1304 : vector<1x256xf32> to vector<4x256xf32>
    %1307 = arith.mulf %1305, %1306 : vector<4x256xf32>
    %1308 = vector.extract_strided_slice %1303 {offsets = [1, 0], sizes = [1, 256], strides = [1, 1]} : vector<8x256xf32> to vector<1x256xf32>
    %1309 = vector.broadcast %62 : vector<4x1xf32> to vector<4x256xf32>
    %1310 = vector.broadcast %1308 : vector<1x256xf32> to vector<4x256xf32>
    %1311 = arith.mulf %1309, %1310 : vector<4x256xf32>
    %1312 = arith.addf %1307, %1311 : vector<4x256xf32>
    %1313 = vector.extract_strided_slice %1303 {offsets = [2, 0], sizes = [1, 256], strides = [1, 1]} : vector<8x256xf32> to vector<1x256xf32>
    %1314 = vector.broadcast %63 : vector<4x1xf32> to vector<4x256xf32>
    %1315 = vector.broadcast %1313 : vector<1x256xf32> to vector<4x256xf32>
    %1316 = arith.mulf %1314, %1315 : vector<4x256xf32>
    %1317 = arith.addf %1312, %1316 : vector<4x256xf32>
    %1318 = vector.extract_strided_slice %1303 {offsets = [3, 0], sizes = [1, 256], strides = [1, 1]} : vector<8x256xf32> to vector<1x256xf32>
    %1319 = vector.broadcast %64 : vector<4x1xf32> to vector<4x256xf32>
    %1320 = vector.broadcast %1318 : vector<1x256xf32> to vector<4x256xf32>
    %1321 = arith.mulf %1319, %1320 : vector<4x256xf32>
    %1322 = arith.addf %1317, %1321 : vector<4x256xf32>
    %1323 = vector.extract_strided_slice %1303 {offsets = [4, 0], sizes = [1, 256], strides = [1, 1]} : vector<8x256xf32> to vector<1x256xf32>
    %1324 = vector.broadcast %65 : vector<4x1xf32> to vector<4x256xf32>
    %1325 = vector.broadcast %1323 : vector<1x256xf32> to vector<4x256xf32>
    %1326 = arith.mulf %1324, %1325 : vector<4x256xf32>
    %1327 = arith.addf %1322, %1326 : vector<4x256xf32>
    %1328 = vector.extract_strided_slice %1303 {offsets = [5, 0], sizes = [1, 256], strides = [1, 1]} : vector<8x256xf32> to vector<1x256xf32>
    %1329 = vector.broadcast %66 : vector<4x1xf32> to vector<4x256xf32>
    %1330 = vector.broadcast %1328 : vector<1x256xf32> to vector<4x256xf32>
    %1331 = arith.mulf %1329, %1330 : vector<4x256xf32>
    %1332 = arith.addf %1327, %1331 : vector<4x256xf32>
    %1333 = vector.extract_strided_slice %1303 {offsets = [6, 0], sizes = [1, 256], strides = [1, 1]} : vector<8x256xf32> to vector<1x256xf32>
    %1334 = vector.broadcast %67 : vector<4x1xf32> to vector<4x256xf32>
    %1335 = vector.broadcast %1333 : vector<1x256xf32> to vector<4x256xf32>
    %1336 = arith.mulf %1334, %1335 : vector<4x256xf32>
    %1337 = arith.addf %1332, %1336 : vector<4x256xf32>
    %1338 = vector.extract_strided_slice %1303 {offsets = [7, 0], sizes = [1, 256], strides = [1, 1]} : vector<8x256xf32> to vector<1x256xf32>
    %1339 = vector.broadcast %68 : vector<4x1xf32> to vector<4x256xf32>
    %1340 = vector.broadcast %1338 : vector<1x256xf32> to vector<4x256xf32>
    %1341 = arith.mulf %1339, %1340 : vector<4x256xf32>
    %1342 = arith.addf %1337, %1341 : vector<4x256xf32>
    %1343 = vector.broadcast %7 : vector<4x1xf32> to vector<4x256xf32>
    %1344 = arith.addf %1342, %1343 : vector<4x256xf32>
    %c3_468 = arith.constant 3 : index
    %c0_469 = arith.constant 0 : index
    %c0_470 = arith.constant 0 : index
    %c0_471 = arith.constant 0 : index
    %1345 = vector.load %arg8[%c3_468, %c0_469, %c0_470, %c0_471] : memref<4x1x4x256xf32, #tpu.memory_space<vmem>>, vector<1x1x4x256xf32>
    %1346 = vector.shape_cast %1345 : vector<1x1x4x256xf32> to vector<4x256xf32>
    %1347 = vector.shape_cast %1344 : vector<4x256xf32> to vector<1x1x4x256xf32>
    tpu.vector_store %arg8[%c3_468, %c0_469, %c0_470, %c0_471], %1347 {strides = array<i32>} : memref<4x1x4x256xf32, #tpu.memory_space<vmem>>, vector<1x1x4x256xf32>,
    return
  }
  func.func @transform_0(%arg0: i32, %arg1: i32) -> (i32, i32, i32, i32) {
    %c0_i32 = arith.constant 0 : i32
    %c0_i32_0 = arith.constant 0 : i32
    %c0_i32_1 = arith.constant 0 : i32
    return %arg1, %arg0, %c0_i32, %c0_i32_0 : i32, i32, i32, i32
  }
  func.func @transform_1(%arg0: i32, %arg1: i32) -> (i32, i32) {
    %c0_i32 = arith.constant 0 : i32
    %c0_i32_0 = arith.constant 0 : i32
    %c0_i32_1 = arith.constant 0 : i32
    return %c0_i32, %c0_i32_0 : i32, i32
  }
  func.func @transform_2(%arg0: i32, %arg1: i32) -> (i32, i32) {
    %c0_i32 = arith.constant 0 : i32
    %c0_i32_0 = arith.constant 0 : i32
    %c0_i32_1 = arith.constant 0 : i32
    return %c0_i32, %c0_i32_0 : i32, i32
  }
  func.func @transform_3(%arg0: i32, %arg1: i32) -> (i32, i32) {
    %c0_i32 = arith.constant 0 : i32
    %c0_i32_0 = arith.constant 0 : i32
    %c0_i32_1 = arith.constant 0 : i32
    return %c0_i32, %c0_i32_0 : i32, i32
  }
  func.func @transform_4(%arg0: i32, %arg1: i32) -> (i32, i32) {
    %c0_i32 = arith.constant 0 : i32
    %c0_i32_0 = arith.constant 0 : i32
    %c0_i32_1 = arith.constant 0 : i32
    return %c0_i32, %c0_i32_0 : i32, i32
  }
  func.func @transform_5(%arg0: i32, %arg1: i32) -> (i32, i32) {
    %c0_i32 = arith.constant 0 : i32
    %c0_i32_0 = arith.constant 0 : i32
    %c0_i32_1 = arith.constant 0 : i32
    return %c0_i32, %c0_i32_0 : i32, i32
  }
  func.func @transform_6(%arg0: i32, %arg1: i32) -> (i32, i32, i32, i32) {
    %c0_i32 = arith.constant 0 : i32
    %c0_i32_0 = arith.constant 0 : i32
    %c0_i32_1 = arith.constant 0 : i32
    return %arg1, %arg0, %c0_i32, %c0_i32_0 : i32, i32, i32, i32
  }
}

</mosaic_0001>

<llo_original>
// kernel: tpu_custom_call.1
$region0: #{tpu_custom_call.1}
  #allocation0 [shape = 'u32[]', space=smem, size = 0x4, offset = 0x4, fixed_abs, tag = 'smem constant byte address 0x4 - core index']
  #allocation1 [shape = 'u32[144,128]{1,0:T(1,128)}', space=vmem, size = 0x12000, scoped, tag = 'internal scratch']
  #allocation2 [shape = 'f32[4,256]{1,0:T(4,128)}', space=vmem, size = 0x1000, scoped, tag = 'scratch operand']
  #allocation3 [shape = 'f32[8,256]{1,0:T(8,128)}', space=vmem, size = 0x2000, scoped, tag = 'scratch operand']
  #allocation4 [shape = 'f32[8,358]{1,0:T(8,128)}', space=vmem, size = 0x3000, scoped, tag = 'scratch operand']
  %s0 = inlined_call_operand.hbm [shape: f32[8,2,4,256], index: 0, kind: input, shape index: {}]
  %s1 = inlined_call_operand.vmem [shape: f32[8,4], index: 1, kind: input, shape index: {}]
  %s2 = inlined_call_operand.vmem [shape: f32[8,1], index: 2, kind: input, shape index: {}]
  %s3 = inlined_call_operand.vmem [shape: f32[8,49], index: 3, kind: input, shape index: {}]
  %s4 = inlined_call_operand.vmem [shape: f32[4,8], index: 4, kind: input, shape index: {}]
  %s5 = inlined_call_operand.vmem [shape: f32[4,1], index: 5, kind: input, shape index: {}]
  %s6 = inlined_call_operand.hbm [shape: f32[8,2,4,256], index: 6, kind: output, shape index: {}]
  %s7 = sld [smem:[#allocation0]]
  $region65: #{tpu_custom_call.1} parent=0
    _
  %s9 = ssub.s32 1, %s7
  %s10 = scalar_select 0, %s9, %s7
  $region1: #{tpu_custom_call.1} parent=0
    #allocation5 [shape = 'u8[32768]{0}', space=vmem, size = 0x8000, scoped, tag = 'input window, operand 0']
    #allocation6 [shape = 's32[2]{0}', space=sflag, size = 0x8, scoped, tag = 'scoped memory for tpu_custom_call.1']
    #allocation7 [shape = 's32[2]{0}', space=sflag, size = 0x8, scoped, tag = 'scoped memory for tpu_custom_call.1']
    #allocation8 [shape = 'u8[32768]{0}', space=vmem, size = 0x8000, scoped, tag = 'output window, operand 0']
    %11 = vsyncpa [#allocation6], 0
    %s12 = scalar_lea.sflag [#allocation6], 1
    %13 = vsyncpa %s12, 0
    %14 = vsyncpa [#allocation7], 0
    %s15 = scalar_lea.sflag [#allocation7], 1
    %16 = vsyncpa %s15, 0
    loop: start=0, step=1, limit=6
    $region2: #{tpu_custom_call.1} parent=1 // loop_pre_header
      _
    $region3: #{tpu_custom_call.1} parent=1 // loop_header
      %s18 = sphi 0, %s22
      %p19 = scmp.ge.s32.totalorder %s18, 6
      %s25 = sphi 0, %s37
      %s26 = sphi 0, %s33
      %s27 = sphi 0, %s25
      %s28 = sphi 0, %s26
      %s29 = sphi 0, %s27
      %s30 = sphi 0, %s28
      %s42 = sphi 0, %s44
      %s45 = sphi 0, %s42
      %s46 = sphi 0, %s45
      %s62 = sphi 0, %s46
      %s66 = sphi 0, %s66
      %s68 = sphi 0, %s66
      %s69 = sphi 0, %s68
      %s83 = sphi 0, %s69
      %s87 = sphi 0, %s87
      %s89 = sphi 0, %s87
      %s90 = sphi 0, %s89
      %s104 = sphi 0, %s90
      %s108 = sphi 0, %s108
      %s110 = sphi 0, %s108
      %s111 = sphi 0, %s110
      %s125 = sphi 0, %s111
      %s129 = sphi 0, %s129
      %s131 = sphi 0, %s129
      %s132 = sphi 0, %s131
      %s146 = sphi 0, %s132
      %s150 = sphi 0, %s150
      %s152 = sphi 0, %s150
      %s153 = sphi 0, %s152
      %s167 = sphi 0, %s153
      %s175 = sphi 0, %s177
      %s178 = sphi 0, %s175
      %s179 = sphi 0, %s178
      %s195 = sphi 0, %s179
    $region4: #{tpu_custom_call.1} parent=1 // loop_header_branch
      %21 = sbr.rel (%p19) target = $region8
    $region5: #{tpu_custom_call.1} parent=1 // loop_body
      %s23 = ssub.s32 %s18, 1
      %s24 = ssub.s32 %s18, 2
      %s31 = sadd.s32 1, %s26
      %p32 = scmp.ge.s32.totalorder %s31, 2
      %s33 = scalar_select %p32, 0, %s31
      %s34 = sadd.s32 1, %s25
      %s35 = scalar_select %p32, %s34, %s25
      %p36 = scmp.ge.s32.totalorder %s35, 2
      %s37 = scalar_select %p36, 0, %s35
      %s38 = ssub.s32 %s26, %s33
      %s39 = ssub.s32 %s25, %s37
      %s40 = sor.u32 %s38, %s39
      %p41 = scmp.eq.s32.totalorder %s40, 0
      %s43 = sadd.s32 %s42, 1
      %s44 = scalar_select %p41, %s42, %s43
      %p47 = pneg %p41
      %p48 = scmp.eq.s32.totalorder %s18, 3
      %p49 = por %p47, %p48
      %p50 = scmp.ne.s32.totalorder %s42, %s45
      %p51 = scmp.eq.s32.totalorder %s18, 0
      %p52 = por %p50, %p51
      %p53 = scmp.ne.s32.totalorder %s42, %s45
      %p54 = scmp.eq.s32.totalorder %s23, 3
      %p55 = por %p53, %p54
      %p56 = scmp.ne.s32.totalorder %s45, %s46
      %p57 = scmp.eq.s32.totalorder %s23, 0
      %p58 = por %p56, %p57
      %p59 = scmp.ne.s32.totalorder %s45, %s46
      %p60 = scmp.eq.s32.totalorder %s24, 3
      %p61 = por %p59, %p60
      %p63 = scmp.ne.s32.totalorder %s46, %s62
      %p64 = scmp.eq.s32.totalorder %s24, 0
      %p65 = por %p63, %p64
      %s67 = sadd.s32 %s66, 1
      %p70 = scmp.eq.s32.totalorder %s18, 3
      %p71 = scmp.ne.s32.totalorder %s66, %s68
      %p72 = scmp.eq.s32.totalorder %s18, 0
      %p73 = por %p71, %p72
      %p74 = scmp.ne.s32.totalorder %s66, %s68
      %p75 = scmp.eq.s32.totalorder %s23, 3
      %p76 = por %p74, %p75
      %p77 = scmp.ne.s32.totalorder %s68, %s69
      %p78 = scmp.eq.s32.totalorder %s23, 0
      %p79 = por %p77, %p78
      %p80 = scmp.ne.s32.totalorder %s68, %s69
      %p81 = scmp.eq.s32.totalorder %s24, 3
      %p82 = por %p80, %p81
      %p84 = scmp.ne.s32.totalorder %s69, %s83
      %p85 = scmp.eq.s32.totalorder %s24, 0
      %p86 = por %p84, %p85
      %s88 = sadd.s32 %s87, 1
      %p91 = scmp.eq.s32.totalorder %s18, 3
      %p92 = scmp.ne.s32.totalorder %s87, %s89
      %p93 = scmp.eq.s32.totalorder %s18, 0
      %p94 = por %p92, %p93
      %p95 = scmp.ne.s32.totalorder %s87, %s89
      %p96 = scmp.eq.s32.totalorder %s23, 3
      %p97 = por %p95, %p96
      %p98 = scmp.ne.s32.totalorder %s89, %s90
      %p99 = scmp.eq.s32.totalorder %s23, 0
      %p100 = por %p98, %p99
      %p101 = scmp.ne.s32.totalorder %s89, %s90
      %p102 = scmp.eq.s32.totalorder %s24, 3
      %p103 = por %p101, %p102
      %p105 = scmp.ne.s32.totalorder %s90, %s104
      %p106 = scmp.eq.s32.totalorder %s24, 0
      %p107 = por %p105, %p106
      %s109 = sadd.s32 %s108, 1
      %p112 = scmp.eq.s32.totalorder %s18, 3
      %p113 = scmp.ne.s32.totalorder %s108, %s110
      %p114 = scmp.eq.s32.totalorder %s18, 0
      %p115 = por %p113, %p114
      %p116 = scmp.ne.s32.totalorder %s108, %s110
      %p117 = scmp.eq.s32.totalorder %s23, 3
      %p118 = por %p116, %p117
      %p119 = scmp.ne.s32.totalorder %s110, %s111
      %p120 = scmp.eq.s32.totalorder %s23, 0
      %p121 = por %p119, %p120
      %p122 = scmp.ne.s32.totalorder %s110, %s111
      %p123 = scmp.eq.s32.totalorder %s24, 3
      %p124 = por %p122, %p123
      %p126 = scmp.ne.s32.totalorder %s111, %s125
      %p127 = scmp.eq.s32.totalorder %s24, 0
      %p128 = por %p126, %p127
      %s130 = sadd.s32 %s129, 1
      %p133 = scmp.eq.s32.totalorder %s18, 3
      %p134 = scmp.ne.s32.totalorder %s129, %s131
      %p135 = scmp.eq.s32.totalorder %s18, 0
      %p136 = por %p134, %p135
      %p137 = scmp.ne.s32.totalorder %s129, %s131
      %p138 = scmp.eq.s32.totalorder %s23, 3
      %p139 = por %p137, %p138
      %p140 = scmp.ne.s32.totalorder %s131, %s132
      %p141 = scmp.eq.s32.totalorder %s23, 0
      %p142 = por %p140, %p141
      %p143 = scmp.ne.s32.totalorder %s131, %s132
      %p144 = scmp.eq.s32.totalorder %s24, 3
      %p145 = por %p143, %p144
      %p147 = scmp.ne.s32.totalorder %s132, %s146
      %p148 = scmp.eq.s32.totalorder %s24, 0
      %p149 = por %p147, %p148
      %s151 = sadd.s32 %s150, 1
      %p154 = scmp.eq.s32.totalorder %s18, 3
      %p155 = scmp.ne.s32.totalorder %s150, %s152
      %p156 = scmp.eq.s32.totalorder %s18, 0
      %p157 = por %p155, %p156
      %p158 = scmp.ne.s32.totalorder %s150, %s152
      %p159 = scmp.eq.s32.totalorder %s23, 3
      %p160 = por %p158, %p159
      %p161 = scmp.ne.s32.totalorder %s152, %s153
      %p162 = scmp.eq.s32.totalorder %s23, 0
      %p163 = por %p161, %p162
      %p164 = scmp.ne.s32.totalorder %s152, %s153
      %p165 = scmp.eq.s32.totalorder %s24, 3
      %p166 = por %p164, %p165
      %p168 = scmp.ne.s32.totalorder %s153, %s167
      %p169 = scmp.eq.s32.totalorder %s24, 0
      %p170 = por %p168, %p169
      %s171 = ssub.s32 %s26, %s33
      %s172 = ssub.s32 %s25, %s37
      %s173 = sor.u32 %s171, %s172
      %p174 = scmp.eq.s32.totalorder %s173, 0
      %s176 = sadd.s32 %s175, 1
      %s177 = scalar_select %p174, %s175, %s176
      %p180 = pneg %p174
      %p181 = scmp.eq.s32.totalorder %s18, 3
      %p182 = por %p180, %p181
      %p183 = scmp.ne.s32.totalorder %s175, %s178
      %p184 = scmp.eq.s32.totalorder %s18, 0
      %p185 = por %p183, %p184
      %p186 = scmp.ne.s32.totalorder %s175, %s178
      %p187 = scmp.eq.s32.totalorder %s23, 3
      %p188 = por %p186, %p187
      %p189 = scmp.ne.s32.totalorder %s178, %s179
      %p190 = scmp.eq.s32.totalorder %s23, 0
      %p191 = por %p189, %p190
      %p192 = scmp.ne.s32.totalorder %s178, %s179
      %p193 = scmp.eq.s32.totalorder %s24, 3
      %p194 = por %p192, %p193
      %p196 = scmp.ne.s32.totalorder %s179, %s195
      %p197 = scmp.eq.s32.totalorder %s24, 0
      %p198 = por %p196, %p197
      %p199 = scmp.le.s32.totalorder 1, %s18
      %p200 = scmp.lt.s32.totalorder %s18, 5
      %p201 = pnand %p199, %p200
      %p202 = pneg %p201
      // Predicated region
      $region9: #{tpu_custom_call.1} parent=5 // pred_check
        _
      $region10: #{tpu_custom_call.1} parent=5 // pred_check_branch
        %204 = sbr.rel (%p201) target = $region12
      $region11: #{tpu_custom_call.1} parent=5 // pred_region
        %s205 = ssub.s32 %s18, 1
        // Predicated region
        $region13: #{tpu_custom_call.1} parent=11 // pred_check
          %p206 = pneg %p79
        $region14: #{tpu_custom_call.1} parent=11 // pred_check_branch
          %208 = sbr.rel (%p206) target = $region16
        $region15: #{tpu_custom_call.1} parent=11 // pred_region
          _
        $region16: #{tpu_custom_call.1} parent=11 // pred_fallthru
          _
        // Predicated region
        $region17: #{tpu_custom_call.1} parent=11 // pred_check
          %p209 = pneg %p100
        $region18: #{tpu_custom_call.1} parent=11 // pred_check_branch
          %211 = sbr.rel (%p209) target = $region20
        $region19: #{tpu_custom_call.1} parent=11 // pred_region
          _
        $region20: #{tpu_custom_call.1} parent=11 // pred_fallthru
          _
        // Predicated region
        $region21: #{tpu_custom_call.1} parent=11 // pred_check
          %p212 = pneg %p121
        $region22: #{tpu_custom_call.1} parent=11 // pred_check_branch
          %214 = sbr.rel (%p212) target = $region24
        $region23: #{tpu_custom_call.1} parent=11 // pred_region
          _
        $region24: #{tpu_custom_call.1} parent=11 // pred_fallthru
          _
        // Predicated region
        $region25: #{tpu_custom_call.1} parent=11 // pred_check
          %p215 = pneg %p142
        $region26: #{tpu_custom_call.1} parent=11 // pred_check_branch
          %217 = sbr.rel (%p215) target = $region28
        $region27: #{tpu_custom_call.1} parent=11 // pred_region
          _
        $region28: #{tpu_custom_call.1} parent=11 // pred_fallthru
          _
        // Predicated region
        $region29: #{tpu_custom_call.1} parent=11 // pred_check
          %p218 = pneg %p163
        $region30: #{tpu_custom_call.1} parent=11 // pred_check_branch
          %220 = sbr.rel (%p218) target = $region32
        $region31: #{tpu_custom_call.1} parent=11 // pred_region
          _
        $region32: #{tpu_custom_call.1} parent=11 // pred_fallthru
          _
      $region12: #{tpu_custom_call.1} parent=5 // pred_fallthru
        _
      %p221 = scmp.lt.s32.totalorder %s18, 4
      // Predicated region
      $region33: #{tpu_custom_call.1} parent=5 // pred_check
        %p222 = pneg %p221
      $region34: #{tpu_custom_call.1} parent=5 // pred_check_branch
        %224 = sbr.rel (%p222) target = $region36
      $region35: #{tpu_custom_call.1} parent=5 // pred_region
        // Predicated region
        $region37: #{tpu_custom_call.1} parent=35 // pred_check
          %p225 = pneg %p52
        $region38: #{tpu_custom_call.1} parent=35 // pred_check_branch
          %227 = sbr.rel (%p225) target = $region40
        $region39: #{tpu_custom_call.1} parent=35 // pred_region
          %s228 = sand.u32 %s42, 1
          %s229 = scalar_lea.sflag [#allocation6], %s228
          %s230 = sand.u32 %s42, 1
          %s231 = smul.addr %s230, 32
          %s232 = scalar_lea.vmem [#allocation5], %s231
          %s233 = smul.u32 4, %s26
          %s235 = ssub.s32 512, 512
          %236 = vsyncadd %s229, %s235
          %s237 = smul.addr %s25, 2
          %s238 = smul.addr %s233, 4
          %s239 = sadd.s32 %s237, %s238
          %s240 = smul.addr %s239, 64
          %s241 = scalar_lea.hbm %s0, %s240
          %s242 = sshll.u32 %s232, 4
          %s243 = int_to_ptr.vmem [resolvable:$true] %s242
          %248 = dma.hbm_to_vmem [thread:$0]  %s241, 512, %s243, %s229, 256, 128, 8
        $region40: #{tpu_custom_call.1} parent=35 // pred_fallthru
          _
      $region36: #{tpu_custom_call.1} parent=5 // pred_fallthru
        _
      %p249 = scmp.le.s32.totalorder 1, %s18
      %p250 = scmp.lt.s32.totalorder %s18, 5
      %p251 = pnand %p249, %p250
      %p252 = pneg %p251
      // Predicated region
      $region41: #{tpu_custom_call.1} parent=5 // pred_check
        _
      $region42: #{tpu_custom_call.1} parent=5 // pred_check_branch
        %254 = sbr.rel (%p251) target = $region44
      $region43: #{tpu_custom_call.1} parent=5 // pred_region
        %s255 = ssub.s32 %s18, 1
        %s256 = sand.u32 %s45, 1
        %s257 = scalar_lea.sflag [#allocation6], %s256
        %s258 = sand.u32 %s45, 1
        %s259 = smul.addr %s258, 32
        %s260 = scalar_lea.vmem [#allocation5], %s259
        // Predicated region
        $region45: #{tpu_custom_call.1} parent=43 // pred_check
          %p261 = pneg %p58
        $region46: #{tpu_custom_call.1} parent=43 // pred_check_branch
          %263 = sbr.rel (%p261) target = $region48
        $region47: #{tpu_custom_call.1} parent=43 // pred_region
          %264 = dma.done %s257, 512
        $region48: #{tpu_custom_call.1} parent=43 // pred_fallthru
          _
        %s265 = sand.u32 %s45, 1
        %s266 = scalar_lea.sflag [#allocation6], %s265
        %s267 = sand.u32 %s45, 1
        %s268 = smul.addr %s267, 32
        %s269 = scalar_lea.vmem [#allocation5], %s268
        %p270 = pneg %p58
        %p271 = pneg %p55
        %p272 = pneg %p79
        %p273 = pneg %p76
        %p274 = pneg %p100
        %p275 = pneg %p97
        %p276 = pneg %p121
        %p277 = pneg %p118
        %p278 = pneg %p142
        %p279 = pneg %p139
        %p280 = pneg %p163
        %p281 = pneg %p160
        %p282 = pneg %p191
        %p283 = pneg %p188
        %s284 = sand.u32 %s178, 1
        %s285 = scalar_lea.sflag [#allocation7], %s284
        %s286 = sand.u32 %s178, 1
        %s287 = smul.addr %s286, 32
        %s288 = scalar_lea.vmem [#allocation8], %s287
        %s289 = smul.u32 4, %s28
        %s290 = smul.u32 4, %s28
        %p291 = scmp.eq.s32.totalorder %s28, 0
        // Predicated region
        $region49: #{tpu_custom_call.1} parent=43 // pred_check
          %p292 = pneg %p291
        $region50: #{tpu_custom_call.1} parent=43 // pred_check_branch
          %294 = sbr.rel (%p292) target = $region52
        $region51: #{tpu_custom_call.1} parent=43 // pred_region
          %295 = vst [vmem:[#allocation2] sm:$0xff] 0.0
          %296 = vst [vmem:[#allocation3] sm:$0xff] 0.0
          %297 = vst [vmem:[#allocation3 + $0x8] sm:$0xff] 0.0
          %298 = vst [vmem:[#allocation4] sm:$0xff] 0.0
          %299 = vst [vmem:[#allocation4 + $0x8] sm:$0xff] 0.0
          %vm300 = vcmask 834560
          %301 = vst.msk [vmem:[#allocation4 + $0x10] sm:$0xff] %vm300, 0.0
        $region52: #{tpu_custom_call.1} parent=43 // pred_fallthru
          _
        %v302 = vld [vmem:[%s1] sm:$0xff]
        %v303 = vld [vmem:[%s2] sm:$0xff]
        %v304 = vld [vmem:[%s3] sm:$0xff]
        %v305 = vld [vmem:[%s4] sm:$0xf]
        %v306 = vld [vmem:[%s5] sm:$0xf]
        %v307 = vlaneseq
        %v308 = vand.u32 %v307, 127
        %v309 = vadd.s32 %v308, 128
        %vm310 = vcmp.lt.s32.totalorder %v308, 0
        %v311 = vsub.s32 0, %v308
        %v312 = vsel %vm310, %v311, %v308
        %v313 = vshrl.u32 %v312, 4
        %v314 = vand.u32 %v312, 15
        %v315 = vsub.s32 0, %v314
        %v316 = vsel %vm310, %v315, %v314
        %vm317 = vcmp.lt.s32.totalorder %v309, 0
        %v318 = vsub.s32 0, %v309
        %v319 = vsel %vm317, %v318, %v309
        %v320 = vshrl.u32 %v319, 4
        %v321 = vand.u32 %v319, 15
        %v322 = vsub.s32 0, %v321
        %v323 = vsel %vm317, %v322, %v321
        %vm324 = vcmp.ne.s32.totalorder %v316, 0
        %vm325 = vcmp.ne.s32.totalorder %v323, 0
        %vm326 = vcmp.lt.s32.totalorder %v316, 0
        %vm327 = vcmp.lt.s32.totalorder %v323, 0
        %vm328 = vmand %vm326, %vm324
        %vm329 = vmand %vm327, %vm325
        %v330 = vadd.s32 %v316, 16
        %v331 = vadd.s32 %v323, 16
        %v332 = vsel %vm328, %v330, %v316
        %v333 = vsel %vm329, %v331, %v323
        %v334 = vadd.s32 %v332, 4294967293
        %v335 = vadd.s32 %v333, 4294967293
        %vm336 = vcmp.ge.s32.totalorder %v334, 0
        %vm337 = vcmp.ge.s32.totalorder %v335, 0
        %vm338 = vcmp.lt.s32.totalorder %v334, 16
        %vm339 = vcmp.lt.s32.totalorder %v335, 16
        %vm340 = vmand %vm336, %vm338
        %vm341 = vmand %vm337, %vm339
        %v342 = vsel %vm340, 1, 0
        %v343 = vsel %vm341, 1, 0
        %v344 = vcvt.s32.f32 %v342
        %v345 = vcvt.s32.f32 %v343
        %v346 = vadd.s32 %v332, 4294967294
        %v347 = vadd.s32 %v333, 4294967294
        %vm348 = vcmp.ge.s32.totalorder %v346, 0
        %vm349 = vcmp.ge.s32.totalorder %v347, 0
        %vm350 = vcmp.lt.s32.totalorder %v346, 16
        %vm351 = vcmp.lt.s32.totalorder %v347, 16
        %vm352 = vmand %vm348, %vm350
        %vm353 = vmand %vm349, %vm351
        %v354 = vsel %vm352, 1, 0
        %v355 = vsel %vm353, 1, 0
        %v356 = vcvt.s32.f32 %v354
        %v357 = vcvt.s32.f32 %v355
        %v358 = vadd.s32 %v332, 4294967295
        %v359 = vadd.s32 %v333, 4294967295
        %vm360 = vcmp.ge.s32.totalorder %v358, 0
        %vm361 = vcmp.ge.s32.totalorder %v359, 0
        %vm362 = vcmp.lt.s32.totalorder %v358, 16
        %vm363 = vcmp.lt.s32.totalorder %v359, 16
        %vm364 = vmand %vm360, %vm362
        %vm365 = vmand %vm361, %vm363
        %v366 = vsel %vm364, 1, 0
        %v367 = vsel %vm365, 1, 0
        %v368 = vcvt.s32.f32 %v366
        %v369 = vcvt.s32.f32 %v367
        %v370 = vadd.s32 %v332, 1
        %v371 = vadd.s32 %v333, 1
        %vm372 = vcmp.ge.s32.totalorder %v370, 0
        %vm373 = vcmp.ge.s32.totalorder %v371, 0
        %vm374 = vcmp.lt.s32.totalorder %v370, 16
        %vm375 = vcmp.lt.s32.totalorder %v371, 16
        %vm376 = vmand %vm372, %vm374
        %vm377 = vmand %vm373, %vm375
        %v378 = vsel %vm376, 1, 0
        %v379 = vsel %vm377, 1, 0
        %v380 = vcvt.s32.f32 %v378
        %v381 = vcvt.s32.f32 %v379
        %v382 = vadd.s32 %v332, 2
        %v383 = vadd.s32 %v333, 2
        %vm384 = vcmp.ge.s32.totalorder %v382, 0
        %vm385 = vcmp.ge.s32.totalorder %v383, 0
        %vm386 = vcmp.lt.s32.totalorder %v382, 16
        %vm387 = vcmp.lt.s32.totalorder %v383, 16
        %vm388 = vmand %vm384, %vm386
        %vm389 = vmand %vm385, %vm387
        %v390 = vsel %vm388, 1, 0
        %v391 = vsel %vm389, 1, 0
        %v392 = vcvt.s32.f32 %v390
        %v393 = vcvt.s32.f32 %v391
        %v394 = vadd.s32 %v332, 3
        %v395 = vadd.s32 %v333, 3
        %vm396 = vcmp.ge.s32.totalorder %v394, 0
        %vm397 = vcmp.ge.s32.totalorder %v395, 0
        %vm398 = vcmp.lt.s32.totalorder %v394, 16
        %vm399 = vcmp.lt.s32.totalorder %v395, 16
        %vm400 = vmand %vm396, %vm398
        %vm401 = vmand %vm397, %vm399
        %v402 = vsel %vm400, 1, 0
        %v403 = vsel %vm401, 1, 0
        %v404 = vcvt.s32.f32 %v402
        %v405 = vcvt.s32.f32 %v403
        %v406 = vld [vmem:[%s260] sm:$0xff]
        %v407 = vld [vmem:[#allocation2] sm:$0xff]
        %v408 = vsub.f32 %v406, %v407
        %v409 = vmul.f32 %v408, 0.5
        %v410 = vadd.f32 %v407, %v409
        %vm411 = vcmp.ge.f32.partialorder %v410, 1.0
        %v412 = vsel %vm411, 0.0, %v410
        %413 = vst [vmem:[#allocation2] sm:$0xff] %v412
        %v414 = vsel %vm411, 1, 0
        %v415 = vcvt.s32.f32 %v414
        %417 = vset.pattern.permute.xlu0 0
        %418 = vperm.xlu0 %417, %v302
        %v419 = vpop.permute.xlu0 %418
        %v422 = vlaneseq
        %v423 = vshrl.u32 %v422, 7
        %v424 = vsub.s32 0, %v423
        %v425 = vrot.slane %v415, %v424
        %v426 = vlaneseq
        %v427 = vshrl.u32 %v426, 7
        %v428 = vsub.s32 4, %v427
        %v429 = vrot.slane %v415, %v428
        %v432 = vlaneseq
        %v433 = vshrl.u32 %v432, 7
        %v434 = vsub.s32 0, %v433
        %v435 = vrot.slane %v425, %v434
        %v436 = vlaneseq
        %v437 = vshrl.u32 %v436, 7
        %v438 = vsub.s32 0, %v437
        %v439 = vrot.slane %v429, %v438
        %v440 = vmul.f32 %v419, %v435
        %v441 = vmul.f32 %v419, %v439
        %442 = vset.pattern.permute.xlu0 1
        %443 = vperm.xlu0 %442, %v302
        %v444 = vpop.permute.xlu0 %443
        %v446 = vlaneseq
        %v447 = vshrl.u32 %v446, 7
        %v448 = vsub.s32 1, %v447
        %v449 = vrot.slane %v415, %v448
        %v450 = vlaneseq
        %v451 = vshrl.u32 %v450, 7
        %v452 = vsub.s32 5, %v451
        %v453 = vrot.slane %v415, %v452
        %v456 = vlaneseq
        %v457 = vshrl.u32 %v456, 7
        %v458 = vsub.s32 1, %v457
        %v459 = vrot.slane %v449, %v458
        %v460 = vlaneseq
        %v461 = vshrl.u32 %v460, 7
        %v462 = vsub.s32 1, %v461
        %v463 = vrot.slane %v453, %v462
        %v464 = vmul.f32 %v444, %v459
        %v465 = vmul.f32 %v444, %v463
        %v466 = vadd.f32 %v440, %v464
        %v467 = vadd.f32 %v441, %v465
        %468 = vset.pattern.permute.xlu0 2
        %469 = vperm.xlu0 %468, %v302
        %v470 = vpop.permute.xlu0 %469
        %v472 = vlaneseq
        %v473 = vshrl.u32 %v472, 7
        %v474 = vsub.s32 2, %v473
        %v475 = vrot.slane %v415, %v474
        %v476 = vlaneseq
        %v477 = vshrl.u32 %v476, 7
        %v478 = vsub.s32 6, %v477
        %v479 = vrot.slane %v415, %v478
        %v482 = vlaneseq
        %v483 = vshrl.u32 %v482, 7
        %v484 = vsub.s32 2, %v483
        %v485 = vrot.slane %v475, %v484
        %v486 = vlaneseq
        %v487 = vshrl.u32 %v486, 7
        %v488 = vsub.s32 2, %v487
        %v489 = vrot.slane %v479, %v488
        %v490 = vmul.f32 %v470, %v485
        %v491 = vmul.f32 %v470, %v489
        %v492 = vadd.f32 %v466, %v490
        %v493 = vadd.f32 %v467, %v491
        %494 = vset.pattern.permute.xlu0 3
        %495 = vperm.xlu0 %494, %v302
        %v496 = vpop.permute.xlu0 %495
        %v498 = vlaneseq
        %v499 = vshrl.u32 %v498, 7
        %v500 = vsub.s32 3, %v499
        %v501 = vrot.slane %v415, %v500
        %v502 = vlaneseq
        %v503 = vshrl.u32 %v502, 7
        %v504 = vsub.s32 7, %v503
        %v505 = vrot.slane %v415, %v504
        %v508 = vlaneseq
        %v509 = vshrl.u32 %v508, 7
        %v510 = vsub.s32 3, %v509
        %v511 = vrot.slane %v501, %v510
        %v512 = vlaneseq
        %v513 = vshrl.u32 %v512, 7
        %v514 = vsub.s32 3, %v513
        %v515 = vrot.slane %v505, %v514
        %v516 = vmul.f32 %v496, %v511
        %v517 = vmul.f32 %v496, %v515
        %v518 = vadd.f32 %v492, %v516
        %v519 = vadd.f32 %v493, %v517
        %521 = vset.pattern.permute.xlu0 0
        %522 = vperm.xlu0 %521, %v303
        %v523 = vpop.permute.xlu0 %522
        %v525 = vadd.f32 %v518, %v523
        %v526 = vadd.f32 %v519, %v523
        %v527 = vld [vmem:[#allocation3] sm:$0xff]
        %v528 = vld [vmem:[#allocation3 + $0x8] sm:$0xff]
        %v529 = vsub.f32 %v525, %v527
        %v530 = vsub.f32 %v526, %v528
        %v531 = vmul.f32 %v529, 0.5
        %v532 = vmul.f32 %v530, 0.5
        %v533 = vadd.f32 %v527, %v531
        %v534 = vadd.f32 %v528, %v532
        %vm535 = vcmp.ge.f32.partialorder %v533, 1.0
        %vm536 = vcmp.ge.f32.partialorder %v534, 1.0
        %v537 = vsel %vm535, 0.0, %v533
        %v538 = vsel %vm536, 0.0, %v534
        %539 = vst [vmem:[#allocation3] sm:$0xff] %v537
        %540 = vst [vmem:[#allocation3 + $0x8] sm:$0xff] %v538
        %v541 = vsel %vm535, 1, 0
        %v542 = vsel %vm536, 1, 0
        %v543 = vcvt.s32.f32 %v541
        %v544 = vcvt.s32.f32 %v542
        %547 = vrot.lane.b32.xlu0 %v543, 51
        %v548 = vpop.permute.xlu0 %547
        %549 = vrot.lane.b32.xlu0 %v544, 51
        %v550 = vpop.permute.xlu0 %549
        %vm551 = vcmask 416768
        %v552 = vsel %vm551, %v548, %v550
        %vm556 = vcmask 1047960
        %557 = vst.msk [vmem:[#allocation4] sm:$0xff] %vm556, %v548
        %558 = vst [vmem:[#allocation4 + $0x8] sm:$0xff] %v552
        %559 = vst.msk [vmem:[#allocation4 + $0x10] sm:$0xff] %vm551, %v550
        %v560 = vld [vmem:[#allocation4] sm:$0xff]
        %v561 = vld [vmem:[#allocation4 + $0x8] sm:$0xff]
        %563 = vset.pattern.permute.xlu0 0
        %564 = vperm.xlu0 %563, %v304
        %v565 = vpop.permute.xlu0 %564
        %v567 = vmul.f32 %v560, %v565
        %v568 = vmul.f32 %v561, %v565
        %v569 = vld [vmem:[#allocation4] sm:$0xff]
        %v570 = vld [vmem:[#allocation4 + $0x8] sm:$0xff]
        %v571 = vld [vmem:[#allocation4 + $0x10] sm:$0xff]
        %572 = vset.pattern.permute.xlu0 7
        %573 = vperm.xlu0 %572, %v304
        %v574 = vpop.permute.xlu0 %573
        %v576 = vmul.f32 %v569, %v574
        %v577 = vmul.f32 %v570, %v574
        %v578 = vmul.f32 %v571, %v574
        %582 = vrot.lane.b32.xlu0 %v576, 112
        %v583 = vpop.permute.xlu0 %582
        %584 = vrot.lane.b32.xlu0 %v577, 112
        %v585 = vpop.permute.xlu0 %584
        %586 = vrot.lane.b32.xlu0 %v578, 112
        %v587 = vpop.permute.xlu0 %586
        %vm588 = vcmask 916480
        %v589 = vsel %vm588, %v583, %v585
        %v590 = vsel %vm588, %v585, %v587
        %v593 = vadd.f32 %v567, %v589
        %v594 = vadd.f32 %v568, %v590
        %595 = vset.pattern.permute.xlu0 14
        %596 = vperm.xlu0 %595, %v304
        %v597 = vpop.permute.xlu0 %596
        %v599 = vmul.f32 %v569, %v597
        %v600 = vmul.f32 %v570, %v597
        %v601 = vmul.f32 %v571, %v597
        %605 = vrot.lane.b32.xlu0 %v599, 96
        %v606 = vpop.permute.xlu0 %605
        %607 = vrot.lane.b32.xlu0 %v600, 96
        %v608 = vpop.permute.xlu0 %607
        %609 = vrot.lane.b32.xlu0 %v601, 96
        %v610 = vpop.permute.xlu0 %609
        %vm611 = vcmask 785408
        %v612 = vsel %vm611, %v606, %v608
        %v613 = vsel %vm611, %v608, %v610
        %v616 = vadd.f32 %v593, %v612
        %v617 = vadd.f32 %v594, %v613
        %618 = vset.pattern.permute.xlu0 21
        %619 = vperm.xlu0 %618, %v304
        %v620 = vpop.permute.xlu0 %619
        %v622 = vmul.f32 %v569, %v620
        %v623 = vmul.f32 %v570, %v620
        %v624 = vmul.f32 %v571, %v620
        %628 = vrot.lane.b32.xlu0 %v622, 80
        %v629 = vpop.permute.xlu0 %628
        %630 = vrot.lane.b32.xlu0 %v623, 80
        %v631 = vpop.permute.xlu0 %630
        %632 = vrot.lane.b32.xlu0 %v624, 80
        %v633 = vpop.permute.xlu0 %632
        %vm634 = vcmask 654336
        %v635 = vsel %vm634, %v629, %v631
        %v636 = vsel %vm634, %v631, %v633
        %v639 = vadd.f32 %v616, %v635
        %v640 = vadd.f32 %v617, %v636
        %641 = vset.pattern.permute.xlu0 28
        %642 = vperm.xlu0 %641, %v304
        %v643 = vpop.permute.xlu0 %642
        %v645 = vmul.f32 %v569, %v643
        %v646 = vmul.f32 %v570, %v643
        %v647 = vmul.f32 %v571, %v643
        %651 = vrot.lane.b32.xlu0 %v645, 64
        %v652 = vpop.permute.xlu0 %651
        %653 = vrot.lane.b32.xlu0 %v646, 64
        %v654 = vpop.permute.xlu0 %653
        %655 = vrot.lane.b32.xlu0 %v647, 64
        %v656 = vpop.permute.xlu0 %655
        %vm657 = vcmask 523264
        %v658 = vsel %vm657, %v652, %v654
        %v659 = vsel %vm657, %v654, %v656
        %v662 = vadd.f32 %v639, %v658
        %v663 = vadd.f32 %v640, %v659
        %664 = vset.pattern.permute.xlu0 35
        %665 = vperm.xlu0 %664, %v304
        %v666 = vpop.permute.xlu0 %665
        %v668 = vmul.f32 %v569, %v666
        %v669 = vmul.f32 %v570, %v666
        %v670 = vmul.f32 %v571, %v666
        %674 = vrot.lane.b32.xlu0 %v668, 48
        %v675 = vpop.permute.xlu0 %674
        %676 = vrot.lane.b32.xlu0 %v669, 48
        %v677 = vpop.permute.xlu0 %676
        %678 = vrot.lane.b32.xlu0 %v670, 48
        %v679 = vpop.permute.xlu0 %678
        %vm680 = vcmask 392192
        %v681 = vsel %vm680, %v675, %v677
        %v682 = vsel %vm680, %v677, %v679
        %v685 = vadd.f32 %v662, %v681
        %v686 = vadd.f32 %v663, %v682
        %687 = vset.pattern.permute.xlu0 42
        %688 = vperm.xlu0 %687, %v304
        %v689 = vpop.permute.xlu0 %688
        %v691 = vmul.f32 %v569, %v689
        %v692 = vmul.f32 %v570, %v689
        %v693 = vmul.f32 %v571, %v689
        %697 = vrot.lane.b32.xlu0 %v691, 32
        %v698 = vpop.permute.xlu0 %697
        %699 = vrot.lane.b32.xlu0 %v692, 32
        %v700 = vpop.permute.xlu0 %699
        %701 = vrot.lane.b32.xlu0 %v693, 32
        %v702 = vpop.permute.xlu0 %701
        %vm703 = vcmask 261120
        %v704 = vsel %vm703, %v698, %v700
        %v705 = vsel %vm703, %v700, %v702
        %v708 = vadd.f32 %v685, %v704
        %v709 = vadd.f32 %v686, %v705
        %v710 = vmul.f32 %v708, %v344
        %v711 = vmul.f32 %v709, %v345
        %712 = vset.pattern.permute.xlu0 1
        %713 = vperm.xlu0 %712, %v304
        %v714 = vpop.permute.xlu0 %713
        %v716 = vmul.f32 %v569, %v714
        %v717 = vmul.f32 %v570, %v714
        %v718 = vmul.f32 %v571, %v714
        %719 = vset.pattern.permute.xlu0 8
        %720 = vperm.xlu0 %719, %v304
        %v721 = vpop.permute.xlu0 %720
        %v723 = vmul.f32 %v569, %v721
        %v724 = vmul.f32 %v570, %v721
        %v725 = vmul.f32 %v571, %v721
        %729 = vrot.lane.b32.xlu0 %v723, 112
        %v730 = vpop.permute.xlu0 %729
        %731 = vrot.lane.b32.xlu0 %v724, 112
        %v732 = vpop.permute.xlu0 %731
        %733 = vrot.lane.b32.xlu0 %v725, 112
        %v734 = vpop.permute.xlu0 %733
        %v735 = vsel %vm588, %v730, %v732
        %v736 = vsel %vm588, %v732, %v734
        %v740 = vadd.f32 %v716, %v735
        %v741 = vadd.f32 %v717, %v736
        %v742 = vadd.f32 %v718, %v734
        %743 = vset.pattern.permute.xlu0 15
        %744 = vperm.xlu0 %743, %v304
        %v745 = vpop.permute.xlu0 %744
        %v747 = vmul.f32 %v569, %v745
        %v748 = vmul.f32 %v570, %v745
        %v749 = vmul.f32 %v571, %v745
        %753 = vrot.lane.b32.xlu0 %v747, 96
        %v754 = vpop.permute.xlu0 %753
        %755 = vrot.lane.b32.xlu0 %v748, 96
        %v756 = vpop.permute.xlu0 %755
        %757 = vrot.lane.b32.xlu0 %v749, 96
        %v758 = vpop.permute.xlu0 %757
        %v759 = vsel %vm611, %v754, %v756
        %v760 = vsel %vm611, %v756, %v758
        %v764 = vadd.f32 %v740, %v759
        %v765 = vadd.f32 %v741, %v760
        %v766 = vadd.f32 %v742, %v758
        %767 = vset.pattern.permute.xlu0 22
        %768 = vperm.xlu0 %767, %v304
        %v769 = vpop.permute.xlu0 %768
        %v771 = vmul.f32 %v569, %v769
        %v772 = vmul.f32 %v570, %v769
        %v773 = vmul.f32 %v571, %v769
        %777 = vrot.lane.b32.xlu0 %v771, 80
        %v778 = vpop.permute.xlu0 %777
        %779 = vrot.lane.b32.xlu0 %v772, 80
        %v780 = vpop.permute.xlu0 %779
        %781 = vrot.lane.b32.xlu0 %v773, 80
        %v782 = vpop.permute.xlu0 %781
        %v783 = vsel %vm634, %v778, %v780
        %v784 = vsel %vm634, %v780, %v782
        %v788 = vadd.f32 %v764, %v783
        %v789 = vadd.f32 %v765, %v784
        %v790 = vadd.f32 %v766, %v782
        %791 = vset.pattern.permute.xlu0 29
        %792 = vperm.xlu0 %791, %v304
        %v793 = vpop.permute.xlu0 %792
        %v795 = vmul.f32 %v569, %v793
        %v796 = vmul.f32 %v570, %v793
        %v797 = vmul.f32 %v571, %v793
        %801 = vrot.lane.b32.xlu0 %v795, 64
        %v802 = vpop.permute.xlu0 %801
        %803 = vrot.lane.b32.xlu0 %v796, 64
        %v804 = vpop.permute.xlu0 %803
        %805 = vrot.lane.b32.xlu0 %v797, 64
        %v806 = vpop.permute.xlu0 %805
        %v807 = vsel %vm657, %v802, %v804
        %v808 = vsel %vm657, %v804, %v806
        %v812 = vadd.f32 %v788, %v807
        %v813 = vadd.f32 %v789, %v808
        %v814 = vadd.f32 %v790, %v806
        %815 = vset.pattern.permute.xlu0 36
        %816 = vperm.xlu0 %815, %v304
        %v817 = vpop.permute.xlu0 %816
        %v819 = vmul.f32 %v569, %v817
        %v820 = vmul.f32 %v570, %v817
        %v821 = vmul.f32 %v571, %v817
        %825 = vrot.lane.b32.xlu0 %v819, 48
        %v826 = vpop.permute.xlu0 %825
        %827 = vrot.lane.b32.xlu0 %v820, 48
        %v828 = vpop.permute.xlu0 %827
        %829 = vrot.lane.b32.xlu0 %v821, 48
        %v830 = vpop.permute.xlu0 %829
        %v831 = vsel %vm680, %v826, %v828
        %v832 = vsel %vm680, %v828, %v830
        %v836 = vadd.f32 %v812, %v831
        %v837 = vadd.f32 %v813, %v832
        %v838 = vadd.f32 %v814, %v830
        %839 = vset.pattern.permute.xlu0 43
        %840 = vperm.xlu0 %839, %v304
        %v841 = vpop.permute.xlu0 %840
        %v843 = vmul.f32 %v569, %v841
        %v844 = vmul.f32 %v570, %v841
        %v845 = vmul.f32 %v571, %v841
        %849 = vrot.lane.b32.xlu0 %v843, 32
        %v850 = vpop.permute.xlu0 %849
        %851 = vrot.lane.b32.xlu0 %v844, 32
        %v852 = vpop.permute.xlu0 %851
        %853 = vrot.lane.b32.xlu0 %v845, 32
        %v854 = vpop.permute.xlu0 %853
        %v855 = vsel %vm703, %v850, %v852
        %v856 = vsel %vm703, %v852, %v854
        %v860 = vadd.f32 %v836, %v855
        %v861 = vadd.f32 %v837, %v856
        %v862 = vadd.f32 %v838, %v854
        %865 = vrot.lane.b32.xlu0 %v356, 1
        %v866 = vpop.permute.xlu0 %865
        %867 = vrot.lane.b32.xlu0 %v357, 1
        %v868 = vpop.permute.xlu0 %867
        %vm869 = vcmask 7168
        %v870 = vsel %vm869, %v866, %v868
        %v874 = vmul.f32 %v860, %v866
        %v875 = vmul.f32 %v861, %v870
        %v876 = vmul.f32 %v862, %v868
        %880 = vrot.lane.b32.xlu0 %v874, 127
        %v881 = vpop.permute.xlu0 %880
        %882 = vrot.lane.b32.xlu0 %v875, 127
        %v883 = vpop.permute.xlu0 %882
        %884 = vrot.lane.b32.xlu0 %v876, 127
        %v885 = vpop.permute.xlu0 %884
        %vm886 = vcmask 1039360
        %v887 = vsel %vm886, %v881, %v883
        %v888 = vsel %vm886, %v883, %v885
        %v891 = vadd.f32 %v710, %v887
        %v892 = vadd.f32 %v711, %v888
        %893 = vset.pattern.permute.xlu0 2
        %894 = vperm.xlu0 %893, %v304
        %v895 = vpop.permute.xlu0 %894
        %v897 = vmul.f32 %v569, %v895
        %v898 = vmul.f32 %v570, %v895
        %v899 = vmul.f32 %v571, %v895
        %900 = vset.pattern.permute.xlu0 9
        %901 = vperm.xlu0 %900, %v304
        %v902 = vpop.permute.xlu0 %901
        %v904 = vmul.f32 %v569, %v902
        %v905 = vmul.f32 %v570, %v902
        %v906 = vmul.f32 %v571, %v902
        %910 = vrot.lane.b32.xlu0 %v904, 112
        %v911 = vpop.permute.xlu0 %910
        %912 = vrot.lane.b32.xlu0 %v905, 112
        %v913 = vpop.permute.xlu0 %912
        %914 = vrot.lane.b32.xlu0 %v906, 112
        %v915 = vpop.permute.xlu0 %914
        %v916 = vsel %vm588, %v911, %v913
        %v917 = vsel %vm588, %v913, %v915
        %v921 = vadd.f32 %v897, %v916
        %v922 = vadd.f32 %v898, %v917
        %v923 = vadd.f32 %v899, %v915
        %924 = vset.pattern.permute.xlu0 16
        %925 = vperm.xlu0 %924, %v304
        %v926 = vpop.permute.xlu0 %925
        %v928 = vmul.f32 %v569, %v926
        %v929 = vmul.f32 %v570, %v926
        %v930 = vmul.f32 %v571, %v926
        %934 = vrot.lane.b32.xlu0 %v928, 96
        %v935 = vpop.permute.xlu0 %934
        %936 = vrot.lane.b32.xlu0 %v929, 96
        %v937 = vpop.permute.xlu0 %936
        %938 = vrot.lane.b32.xlu0 %v930, 96
        %v939 = vpop.permute.xlu0 %938
        %v940 = vsel %vm611, %v935, %v937
        %v941 = vsel %vm611, %v937, %v939
        %v945 = vadd.f32 %v921, %v940
        %v946 = vadd.f32 %v922, %v941
        %v947 = vadd.f32 %v923, %v939
        %948 = vset.pattern.permute.xlu0 23
        %949 = vperm.xlu0 %948, %v304
        %v950 = vpop.permute.xlu0 %949
        %v952 = vmul.f32 %v569, %v950
        %v953 = vmul.f32 %v570, %v950
        %v954 = vmul.f32 %v571, %v950
        %958 = vrot.lane.b32.xlu0 %v952, 80
        %v959 = vpop.permute.xlu0 %958
        %960 = vrot.lane.b32.xlu0 %v953, 80
        %v961 = vpop.permute.xlu0 %960
        %962 = vrot.lane.b32.xlu0 %v954, 80
        %v963 = vpop.permute.xlu0 %962
        %v964 = vsel %vm634, %v959, %v961
        %v965 = vsel %vm634, %v961, %v963
        %v969 = vadd.f32 %v945, %v964
        %v970 = vadd.f32 %v946, %v965
        %v971 = vadd.f32 %v947, %v963
        %972 = vset.pattern.permute.xlu0 30
        %973 = vperm.xlu0 %972, %v304
        %v974 = vpop.permute.xlu0 %973
        %v976 = vmul.f32 %v569, %v974
        %v977 = vmul.f32 %v570, %v974
        %v978 = vmul.f32 %v571, %v974
        %982 = vrot.lane.b32.xlu0 %v976, 64
        %v983 = vpop.permute.xlu0 %982
        %984 = vrot.lane.b32.xlu0 %v977, 64
        %v985 = vpop.permute.xlu0 %984
        %986 = vrot.lane.b32.xlu0 %v978, 64
        %v987 = vpop.permute.xlu0 %986
        %v988 = vsel %vm657, %v983, %v985
        %v989 = vsel %vm657, %v985, %v987
        %v993 = vadd.f32 %v969, %v988
        %v994 = vadd.f32 %v970, %v989
        %v995 = vadd.f32 %v971, %v987
        %996 = vset.pattern.permute.xlu0 37
        %997 = vperm.xlu0 %996, %v304
        %v998 = vpop.permute.xlu0 %997
        %v1000 = vmul.f32 %v569, %v998
        %v1001 = vmul.f32 %v570, %v998
        %v1002 = vmul.f32 %v571, %v998
        %1006 = vrot.lane.b32.xlu0 %v1000, 48
        %v1007 = vpop.permute.xlu0 %1006
        %1008 = vrot.lane.b32.xlu0 %v1001, 48
        %v1009 = vpop.permute.xlu0 %1008
        %1010 = vrot.lane.b32.xlu0 %v1002, 48
        %v1011 = vpop.permute.xlu0 %1010
        %v1012 = vsel %vm680, %v1007, %v1009
        %v1013 = vsel %vm680, %v1009, %v1011
        %v1017 = vadd.f32 %v993, %v1012
        %v1018 = vadd.f32 %v994, %v1013
        %v1019 = vadd.f32 %v995, %v1011
        %1020 = vset.pattern.permute.xlu0 44
        %1021 = vperm.xlu0 %1020, %v304
        %v1022 = vpop.permute.xlu0 %1021
        %v1024 = vmul.f32 %v569, %v1022
        %v1025 = vmul.f32 %v570, %v1022
        %v1026 = vmul.f32 %v571, %v1022
        %1030 = vrot.lane.b32.xlu0 %v1024, 32
        %v1031 = vpop.permute.xlu0 %1030
        %1032 = vrot.lane.b32.xlu0 %v1025, 32
        %v1033 = vpop.permute.xlu0 %1032
        %1034 = vrot.lane.b32.xlu0 %v1026, 32
        %v1035 = vpop.permute.xlu0 %1034
        %v1036 = vsel %vm703, %v1031, %v1033
        %v1037 = vsel %vm703, %v1033, %v1035
        %v1041 = vadd.f32 %v1017, %v1036
        %v1042 = vadd.f32 %v1018, %v1037
        %v1043 = vadd.f32 %v1019, %v1035
        %1046 = vrot.lane.b32.xlu0 %v368, 2
        %v1047 = vpop.permute.xlu0 %1046
        %1048 = vrot.lane.b32.xlu0 %v369, 2
        %v1049 = vpop.permute.xlu0 %1048
        %vm1050 = vcmask 15360
        %v1051 = vsel %vm1050, %v1047, %v1049
        %v1055 = vmul.f32 %v1041, %v1047
        %v1056 = vmul.f32 %v1042, %v1051
        %v1057 = vmul.f32 %v1043, %v1049
        %1061 = vrot.lane.b32.xlu0 %v1055, 126
        %v1062 = vpop.permute.xlu0 %1061
        %1063 = vrot.lane.b32.xlu0 %v1056, 126
        %v1064 = vpop.permute.xlu0 %1063
        %1065 = vrot.lane.b32.xlu0 %v1057, 126
        %v1066 = vpop.permute.xlu0 %1065
        %vm1067 = vcmask 1031168
        %v1068 = vsel %vm1067, %v1062, %v1064
        %v1069 = vsel %vm1067, %v1064, %v1066
        %v1072 = vadd.f32 %v891, %v1068
        %v1073 = vadd.f32 %v892, %v1069
        %1074 = vset.pattern.permute.xlu0 3
        %1075 = vperm.xlu0 %1074, %v304
        %v1076 = vpop.permute.xlu0 %1075
        %v1078 = vmul.f32 %v569, %v1076
        %v1079 = vmul.f32 %v570, %v1076
        %v1080 = vmul.f32 %v571, %v1076
        %1081 = vset.pattern.permute.xlu0 10
        %1082 = vperm.xlu0 %1081, %v304
        %v1083 = vpop.permute.xlu0 %1082
        %v1085 = vmul.f32 %v569, %v1083
        %v1086 = vmul.f32 %v570, %v1083
        %v1087 = vmul.f32 %v571, %v1083
        %1091 = vrot.lane.b32.xlu0 %v1085, 112
        %v1092 = vpop.permute.xlu0 %1091
        %1093 = vrot.lane.b32.xlu0 %v1086, 112
        %v1094 = vpop.permute.xlu0 %1093
        %1095 = vrot.lane.b32.xlu0 %v1087, 112
        %v1096 = vpop.permute.xlu0 %1095
        %v1097 = vsel %vm588, %v1092, %v1094
        %v1098 = vsel %vm588, %v1094, %v1096
        %v1102 = vadd.f32 %v1078, %v1097
        %v1103 = vadd.f32 %v1079, %v1098
        %v1104 = vadd.f32 %v1080, %v1096
        %1105 = vset.pattern.permute.xlu0 17
        %1106 = vperm.xlu0 %1105, %v304
        %v1107 = vpop.permute.xlu0 %1106
        %v1109 = vmul.f32 %v569, %v1107
        %v1110 = vmul.f32 %v570, %v1107
        %v1111 = vmul.f32 %v571, %v1107
        %1115 = vrot.lane.b32.xlu0 %v1109, 96
        %v1116 = vpop.permute.xlu0 %1115
        %1117 = vrot.lane.b32.xlu0 %v1110, 96
        %v1118 = vpop.permute.xlu0 %1117
        %1119 = vrot.lane.b32.xlu0 %v1111, 96
        %v1120 = vpop.permute.xlu0 %1119
        %v1121 = vsel %vm611, %v1116, %v1118
        %v1122 = vsel %vm611, %v1118, %v1120
        %v1126 = vadd.f32 %v1102, %v1121
        %v1127 = vadd.f32 %v1103, %v1122
        %v1128 = vadd.f32 %v1104, %v1120
        %1129 = vset.pattern.permute.xlu0 24
        %1130 = vperm.xlu0 %1129, %v304
        %v1131 = vpop.permute.xlu0 %1130
        %v1133 = vmul.f32 %v569, %v1131
        %v1134 = vmul.f32 %v570, %v1131
        %v1135 = vmul.f32 %v571, %v1131
        %1139 = vrot.lane.b32.xlu0 %v1133, 80
        %v1140 = vpop.permute.xlu0 %1139
        %1141 = vrot.lane.b32.xlu0 %v1134, 80
        %v1142 = vpop.permute.xlu0 %1141
        %1143 = vrot.lane.b32.xlu0 %v1135, 80
        %v1144 = vpop.permute.xlu0 %1143
        %v1145 = vsel %vm634, %v1140, %v1142
        %v1146 = vsel %vm634, %v1142, %v1144
        %v1150 = vadd.f32 %v1126, %v1145
        %v1151 = vadd.f32 %v1127, %v1146
        %v1152 = vadd.f32 %v1128, %v1144
        %1153 = vset.pattern.permute.xlu0 31
        %1154 = vperm.xlu0 %1153, %v304
        %v1155 = vpop.permute.xlu0 %1154
        %v1157 = vmul.f32 %v569, %v1155
        %v1158 = vmul.f32 %v570, %v1155
        %v1159 = vmul.f32 %v571, %v1155
        %1163 = vrot.lane.b32.xlu0 %v1157, 64
        %v1164 = vpop.permute.xlu0 %1163
        %1165 = vrot.lane.b32.xlu0 %v1158, 64
        %v1166 = vpop.permute.xlu0 %1165
        %1167 = vrot.lane.b32.xlu0 %v1159, 64
        %v1168 = vpop.permute.xlu0 %1167
        %v1169 = vsel %vm657, %v1164, %v1166
        %v1170 = vsel %vm657, %v1166, %v1168
        %v1174 = vadd.f32 %v1150, %v1169
        %v1175 = vadd.f32 %v1151, %v1170
        %v1176 = vadd.f32 %v1152, %v1168
        %1177 = vset.pattern.permute.xlu0 38
        %1178 = vperm.xlu0 %1177, %v304
        %v1179 = vpop.permute.xlu0 %1178
        %v1181 = vmul.f32 %v569, %v1179
        %v1182 = vmul.f32 %v570, %v1179
        %v1183 = vmul.f32 %v571, %v1179
        %1187 = vrot.lane.b32.xlu0 %v1181, 48
        %v1188 = vpop.permute.xlu0 %1187
        %1189 = vrot.lane.b32.xlu0 %v1182, 48
        %v1190 = vpop.permute.xlu0 %1189
        %1191 = vrot.lane.b32.xlu0 %v1183, 48
        %v1192 = vpop.permute.xlu0 %1191
        %v1193 = vsel %vm680, %v1188, %v1190
        %v1194 = vsel %vm680, %v1190, %v1192
        %v1198 = vadd.f32 %v1174, %v1193
        %v1199 = vadd.f32 %v1175, %v1194
        %v1200 = vadd.f32 %v1176, %v1192
        %1201 = vset.pattern.permute.xlu0 45
        %1202 = vperm.xlu0 %1201, %v304
        %v1203 = vpop.permute.xlu0 %1202
        %v1205 = vmul.f32 %v569, %v1203
        %v1206 = vmul.f32 %v570, %v1203
        %v1207 = vmul.f32 %v571, %v1203
        %1211 = vrot.lane.b32.xlu0 %v1205, 32
        %v1212 = vpop.permute.xlu0 %1211
        %1213 = vrot.lane.b32.xlu0 %v1206, 32
        %v1214 = vpop.permute.xlu0 %1213
        %1215 = vrot.lane.b32.xlu0 %v1207, 32
        %v1216 = vpop.permute.xlu0 %1215
        %v1217 = vsel %vm703, %v1212, %v1214
        %v1218 = vsel %vm703, %v1214, %v1216
        %v1222 = vadd.f32 %v1198, %v1217
        %v1223 = vadd.f32 %v1199, %v1218
        %v1224 = vadd.f32 %v1200, %v1216
        %1228 = vrot.lane.b32.xlu0 %v1222, 125
        %v1229 = vpop.permute.xlu0 %1228
        %1230 = vrot.lane.b32.xlu0 %v1223, 125
        %v1231 = vpop.permute.xlu0 %1230
        %1232 = vrot.lane.b32.xlu0 %v1224, 125
        %v1233 = vpop.permute.xlu0 %1232
        %vm1234 = vcmask 1022976
        %v1235 = vsel %vm1234, %v1229, %v1231
        %v1236 = vsel %vm1234, %v1231, %v1233
        %v1239 = vadd.f32 %v1072, %v1235
        %v1240 = vadd.f32 %v1073, %v1236
        %1241 = vset.pattern.permute.xlu0 4
        %1242 = vperm.xlu0 %1241, %v304
        %v1243 = vpop.permute.xlu0 %1242
        %v1245 = vmul.f32 %v569, %v1243
        %v1246 = vmul.f32 %v570, %v1243
        %v1247 = vmul.f32 %v571, %v1243
        %1248 = vset.pattern.permute.xlu0 11
        %1249 = vperm.xlu0 %1248, %v304
        %v1250 = vpop.permute.xlu0 %1249
        %v1252 = vmul.f32 %v569, %v1250
        %v1253 = vmul.f32 %v570, %v1250
        %v1254 = vmul.f32 %v571, %v1250
        %1258 = vrot.lane.b32.xlu0 %v1252, 112
        %v1259 = vpop.permute.xlu0 %1258
        %1260 = vrot.lane.b32.xlu0 %v1253, 112
        %v1261 = vpop.permute.xlu0 %1260
        %1262 = vrot.lane.b32.xlu0 %v1254, 112
        %v1263 = vpop.permute.xlu0 %1262
        %v1264 = vsel %vm588, %v1259, %v1261
        %v1265 = vsel %vm588, %v1261, %v1263
        %v1269 = vadd.f32 %v1245, %v1264
        %v1270 = vadd.f32 %v1246, %v1265
        %v1271 = vadd.f32 %v1247, %v1263
        %1272 = vset.pattern.permute.xlu0 18
        %1273 = vperm.xlu0 %1272, %v304
        %v1274 = vpop.permute.xlu0 %1273
        %v1276 = vmul.f32 %v569, %v1274
        %v1277 = vmul.f32 %v570, %v1274
        %v1278 = vmul.f32 %v571, %v1274
        %1282 = vrot.lane.b32.xlu0 %v1276, 96
        %v1283 = vpop.permute.xlu0 %1282
        %1284 = vrot.lane.b32.xlu0 %v1277, 96
        %v1285 = vpop.permute.xlu0 %1284
        %1286 = vrot.lane.b32.xlu0 %v1278, 96
        %v1287 = vpop.permute.xlu0 %1286
        %v1288 = vsel %vm611, %v1283, %v1285
        %v1289 = vsel %vm611, %v1285, %v1287
        %v1293 = vadd.f32 %v1269, %v1288
        %v1294 = vadd.f32 %v1270, %v1289
        %v1295 = vadd.f32 %v1271, %v1287
        %1296 = vset.pattern.permute.xlu0 25
        %1297 = vperm.xlu0 %1296, %v304
        %v1298 = vpop.permute.xlu0 %1297
        %v1300 = vmul.f32 %v569, %v1298
        %v1301 = vmul.f32 %v570, %v1298
        %v1302 = vmul.f32 %v571, %v1298
        %1306 = vrot.lane.b32.xlu0 %v1300, 80
        %v1307 = vpop.permute.xlu0 %1306
        %1308 = vrot.lane.b32.xlu0 %v1301, 80
        %v1309 = vpop.permute.xlu0 %1308
        %1310 = vrot.lane.b32.xlu0 %v1302, 80
        %v1311 = vpop.permute.xlu0 %1310
        %v1312 = vsel %vm634, %v1307, %v1309
        %v1313 = vsel %vm634, %v1309, %v1311
        %v1317 = vadd.f32 %v1293, %v1312
        %v1318 = vadd.f32 %v1294, %v1313
        %v1319 = vadd.f32 %v1295, %v1311
        %1320 = vset.pattern.permute.xlu0 32
        %1321 = vperm.xlu0 %1320, %v304
        %v1322 = vpop.permute.xlu0 %1321
        %v1324 = vmul.f32 %v569, %v1322
        %v1325 = vmul.f32 %v570, %v1322
        %v1326 = vmul.f32 %v571, %v1322
        %1330 = vrot.lane.b32.xlu0 %v1324, 64
        %v1331 = vpop.permute.xlu0 %1330
        %1332 = vrot.lane.b32.xlu0 %v1325, 64
        %v1333 = vpop.permute.xlu0 %1332
        %1334 = vrot.lane.b32.xlu0 %v1326, 64
        %v1335 = vpop.permute.xlu0 %1334
        %v1336 = vsel %vm657, %v1331, %v1333
        %v1337 = vsel %vm657, %v1333, %v1335
        %v1341 = vadd.f32 %v1317, %v1336
        %v1342 = vadd.f32 %v1318, %v1337
        %v1343 = vadd.f32 %v1319, %v1335
        %1344 = vset.pattern.permute.xlu0 39
        %1345 = vperm.xlu0 %1344, %v304
        %v1346 = vpop.permute.xlu0 %1345
        %v1348 = vmul.f32 %v569, %v1346
        %v1349 = vmul.f32 %v570, %v1346
        %v1350 = vmul.f32 %v571, %v1346
        %1354 = vrot.lane.b32.xlu0 %v1348, 48
        %v1355 = vpop.permute.xlu0 %1354
        %1356 = vrot.lane.b32.xlu0 %v1349, 48
        %v1357 = vpop.permute.xlu0 %1356
        %1358 = vrot.lane.b32.xlu0 %v1350, 48
        %v1359 = vpop.permute.xlu0 %1358
        %v1360 = vsel %vm680, %v1355, %v1357
        %v1361 = vsel %vm680, %v1357, %v1359
        %v1365 = vadd.f32 %v1341, %v1360
        %v1366 = vadd.f32 %v1342, %v1361
        %v1367 = vadd.f32 %v1343, %v1359
        %1368 = vset.pattern.permute.xlu0 46
        %1369 = vperm.xlu0 %1368, %v304
        %v1370 = vpop.permute.xlu0 %1369
        %v1372 = vmul.f32 %v569, %v1370
        %v1373 = vmul.f32 %v570, %v1370
        %v1374 = vmul.f32 %v571, %v1370
        %1378 = vrot.lane.b32.xlu0 %v1372, 32
        %v1379 = vpop.permute.xlu0 %1378
        %1380 = vrot.lane.b32.xlu0 %v1373, 32
        %v1381 = vpop.permute.xlu0 %1380
        %1382 = vrot.lane.b32.xlu0 %v1374, 32
        %v1383 = vpop.permute.xlu0 %1382
        %v1384 = vsel %vm703, %v1379, %v1381
        %v1385 = vsel %vm703, %v1381, %v1383
        %v1389 = vadd.f32 %v1365, %v1384
        %v1390 = vadd.f32 %v1366, %v1385
        %v1391 = vadd.f32 %v1367, %v1383
        %1394 = vrot.lane.b32.xlu0 %v380, 4
        %v1395 = vpop.permute.xlu0 %1394
        %1396 = vrot.lane.b32.xlu0 %v381, 4
        %v1397 = vpop.permute.xlu0 %1396
        %vm1398 = vcmask 31744
        %v1399 = vsel %vm1398, %v1395, %v1397
        %v1403 = vmul.f32 %v1389, %v1395
        %v1404 = vmul.f32 %v1390, %v1399
        %v1405 = vmul.f32 %v1391, %v1397
        %1409 = vrot.lane.b32.xlu0 %v1403, 124
        %v1410 = vpop.permute.xlu0 %1409
        %1411 = vrot.lane.b32.xlu0 %v1404, 124
        %v1412 = vpop.permute.xlu0 %1411
        %1413 = vrot.lane.b32.xlu0 %v1405, 124
        %v1414 = vpop.permute.xlu0 %1413
        %vm1415 = vcmask 1014784
        %v1416 = vsel %vm1415, %v1410, %v1412
        %v1417 = vsel %vm1415, %v1412, %v1414
        %v1420 = vadd.f32 %v1239, %v1416
        %v1421 = vadd.f32 %v1240, %v1417
        %1422 = vset.pattern.permute.xlu0 5
        %1423 = vperm.xlu0 %1422, %v304
        %v1424 = vpop.permute.xlu0 %1423
        %v1426 = vmul.f32 %v569, %v1424
        %v1427 = vmul.f32 %v570, %v1424
        %v1428 = vmul.f32 %v571, %v1424
        %1429 = vset.pattern.permute.xlu0 12
        %1430 = vperm.xlu0 %1429, %v304
        %v1431 = vpop.permute.xlu0 %1430
        %v1433 = vmul.f32 %v569, %v1431
        %v1434 = vmul.f32 %v570, %v1431
        %v1435 = vmul.f32 %v571, %v1431
        %1439 = vrot.lane.b32.xlu0 %v1433, 112
        %v1440 = vpop.permute.xlu0 %1439
        %1441 = vrot.lane.b32.xlu0 %v1434, 112
        %v1442 = vpop.permute.xlu0 %1441
        %1443 = vrot.lane.b32.xlu0 %v1435, 112
        %v1444 = vpop.permute.xlu0 %1443
        %v1445 = vsel %vm588, %v1440, %v1442
        %v1446 = vsel %vm588, %v1442, %v1444
        %v1450 = vadd.f32 %v1426, %v1445
        %v1451 = vadd.f32 %v1427, %v1446
        %v1452 = vadd.f32 %v1428, %v1444
        %1453 = vset.pattern.permute.xlu0 19
        %1454 = vperm.xlu0 %1453, %v304
        %v1455 = vpop.permute.xlu0 %1454
        %v1457 = vmul.f32 %v569, %v1455
        %v1458 = vmul.f32 %v570, %v1455
        %v1459 = vmul.f32 %v571, %v1455
        %1463 = vrot.lane.b32.xlu0 %v1457, 96
        %v1464 = vpop.permute.xlu0 %1463
        %1465 = vrot.lane.b32.xlu0 %v1458, 96
        %v1466 = vpop.permute.xlu0 %1465
        %1467 = vrot.lane.b32.xlu0 %v1459, 96
        %v1468 = vpop.permute.xlu0 %1467
        %v1469 = vsel %vm611, %v1464, %v1466
        %v1470 = vsel %vm611, %v1466, %v1468
        %v1474 = vadd.f32 %v1450, %v1469
        %v1475 = vadd.f32 %v1451, %v1470
        %v1476 = vadd.f32 %v1452, %v1468
        %1477 = vset.pattern.permute.xlu0 26
        %1478 = vperm.xlu0 %1477, %v304
        %v1479 = vpop.permute.xlu0 %1478
        %v1481 = vmul.f32 %v569, %v1479
        %v1482 = vmul.f32 %v570, %v1479
        %v1483 = vmul.f32 %v571, %v1479
        %1487 = vrot.lane.b32.xlu0 %v1481, 80
        %v1488 = vpop.permute.xlu0 %1487
        %1489 = vrot.lane.b32.xlu0 %v1482, 80
        %v1490 = vpop.permute.xlu0 %1489
        %1491 = vrot.lane.b32.xlu0 %v1483, 80
        %v1492 = vpop.permute.xlu0 %1491
        %v1493 = vsel %vm634, %v1488, %v1490
        %v1494 = vsel %vm634, %v1490, %v1492
        %v1498 = vadd.f32 %v1474, %v1493
        %v1499 = vadd.f32 %v1475, %v1494
        %v1500 = vadd.f32 %v1476, %v1492
        %1501 = vset.pattern.permute.xlu0 33
        %1502 = vperm.xlu0 %1501, %v304
        %v1503 = vpop.permute.xlu0 %1502
        %v1505 = vmul.f32 %v569, %v1503
        %v1506 = vmul.f32 %v570, %v1503
        %v1507 = vmul.f32 %v571, %v1503
        %1511 = vrot.lane.b32.xlu0 %v1505, 64
        %v1512 = vpop.permute.xlu0 %1511
        %1513 = vrot.lane.b32.xlu0 %v1506, 64
        %v1514 = vpop.permute.xlu0 %1513
        %1515 = vrot.lane.b32.xlu0 %v1507, 64
        %v1516 = vpop.permute.xlu0 %1515
        %v1517 = vsel %vm657, %v1512, %v1514
        %v1518 = vsel %vm657, %v1514, %v1516
        %v1522 = vadd.f32 %v1498, %v1517
        %v1523 = vadd.f32 %v1499, %v1518
        %v1524 = vadd.f32 %v1500, %v1516
        %1525 = vset.pattern.permute.xlu0 40
        %1526 = vperm.xlu0 %1525, %v304
        %v1527 = vpop.permute.xlu0 %1526
        %v1529 = vmul.f32 %v569, %v1527
        %v1530 = vmul.f32 %v570, %v1527
        %v1531 = vmul.f32 %v571, %v1527
        %1535 = vrot.lane.b32.xlu0 %v1529, 48
        %v1536 = vpop.permute.xlu0 %1535
        %1537 = vrot.lane.b32.xlu0 %v1530, 48
        %v1538 = vpop.permute.xlu0 %1537
        %1539 = vrot.lane.b32.xlu0 %v1531, 48
        %v1540 = vpop.permute.xlu0 %1539
        %v1541 = vsel %vm680, %v1536, %v1538
        %v1542 = vsel %vm680, %v1538, %v1540
        %v1546 = vadd.f32 %v1522, %v1541
        %v1547 = vadd.f32 %v1523, %v1542
        %v1548 = vadd.f32 %v1524, %v1540
        %1549 = vset.pattern.permute.xlu0 47
        %1550 = vperm.xlu0 %1549, %v304
        %v1551 = vpop.permute.xlu0 %1550
        %v1553 = vmul.f32 %v569, %v1551
        %v1554 = vmul.f32 %v570, %v1551
        %v1555 = vmul.f32 %v571, %v1551
        %1559 = vrot.lane.b32.xlu0 %v1553, 32
        %v1560 = vpop.permute.xlu0 %1559
        %1561 = vrot.lane.b32.xlu0 %v1554, 32
        %v1562 = vpop.permute.xlu0 %1561
        %1563 = vrot.lane.b32.xlu0 %v1555, 32
        %v1564 = vpop.permute.xlu0 %1563
        %v1565 = vsel %vm703, %v1560, %v1562
        %v1566 = vsel %vm703, %v1562, %v1564
        %v1570 = vadd.f32 %v1546, %v1565
        %v1571 = vadd.f32 %v1547, %v1566
        %v1572 = vadd.f32 %v1548, %v1564
        %1575 = vrot.lane.b32.xlu0 %v392, 5
        %v1576 = vpop.permute.xlu0 %1575
        %1577 = vrot.lane.b32.xlu0 %v393, 5
        %v1578 = vpop.permute.xlu0 %1577
        %vm1579 = vcmask 39936
        %v1580 = vsel %vm1579, %v1576, %v1578
        %v1584 = vmul.f32 %v1570, %v1576
        %v1585 = vmul.f32 %v1571, %v1580
        %v1586 = vmul.f32 %v1572, %v1578
        %1590 = vrot.lane.b32.xlu0 %v1584, 123
        %v1591 = vpop.permute.xlu0 %1590
        %1592 = vrot.lane.b32.xlu0 %v1585, 123
        %v1593 = vpop.permute.xlu0 %1592
        %1594 = vrot.lane.b32.xlu0 %v1586, 123
        %v1595 = vpop.permute.xlu0 %1594
        %vm1596 = vcmask 1006592
        %v1597 = vsel %vm1596, %v1591, %v1593
        %v1598 = vsel %vm1596, %v1593, %v1595
        %v1601 = vadd.f32 %v1420, %v1597
        %v1602 = vadd.f32 %v1421, %v1598
        %1603 = vset.pattern.permute.xlu0 6
        %1604 = vperm.xlu0 %1603, %v304
        %v1605 = vpop.permute.xlu0 %1604
        %v1607 = vmul.f32 %v569, %v1605
        %v1608 = vmul.f32 %v570, %v1605
        %v1609 = vmul.f32 %v571, %v1605
        %1610 = vset.pattern.permute.xlu0 13
        %1611 = vperm.xlu0 %1610, %v304
        %v1612 = vpop.permute.xlu0 %1611
        %v1614 = vmul.f32 %v569, %v1612
        %v1615 = vmul.f32 %v570, %v1612
        %v1616 = vmul.f32 %v571, %v1612
        %1620 = vrot.lane.b32.xlu0 %v1614, 112
        %v1621 = vpop.permute.xlu0 %1620
        %1622 = vrot.lane.b32.xlu0 %v1615, 112
        %v1623 = vpop.permute.xlu0 %1622
        %1624 = vrot.lane.b32.xlu0 %v1616, 112
        %v1625 = vpop.permute.xlu0 %1624
        %v1626 = vsel %vm588, %v1621, %v1623
        %v1627 = vsel %vm588, %v1623, %v1625
        %v1631 = vadd.f32 %v1607, %v1626
        %v1632 = vadd.f32 %v1608, %v1627
        %v1633 = vadd.f32 %v1609, %v1625
        %1634 = vset.pattern.permute.xlu0 20
        %1635 = vperm.xlu0 %1634, %v304
        %v1636 = vpop.permute.xlu0 %1635
        %v1638 = vmul.f32 %v569, %v1636
        %v1639 = vmul.f32 %v570, %v1636
        %v1640 = vmul.f32 %v571, %v1636
        %1644 = vrot.lane.b32.xlu0 %v1638, 96
        %v1645 = vpop.permute.xlu0 %1644
        %1646 = vrot.lane.b32.xlu0 %v1639, 96
        %v1647 = vpop.permute.xlu0 %1646
        %1648 = vrot.lane.b32.xlu0 %v1640, 96
        %v1649 = vpop.permute.xlu0 %1648
        %v1650 = vsel %vm611, %v1645, %v1647
        %v1651 = vsel %vm611, %v1647, %v1649
        %v1655 = vadd.f32 %v1631, %v1650
        %v1656 = vadd.f32 %v1632, %v1651
        %v1657 = vadd.f32 %v1633, %v1649
        %1658 = vset.pattern.permute.xlu0 27
        %1659 = vperm.xlu0 %1658, %v304
        %v1660 = vpop.permute.xlu0 %1659
        %v1662 = vmul.f32 %v569, %v1660
        %v1663 = vmul.f32 %v570, %v1660
        %v1664 = vmul.f32 %v571, %v1660
        %1668 = vrot.lane.b32.xlu0 %v1662, 80
        %v1669 = vpop.permute.xlu0 %1668
        %1670 = vrot.lane.b32.xlu0 %v1663, 80
        %v1671 = vpop.permute.xlu0 %1670
        %1672 = vrot.lane.b32.xlu0 %v1664, 80
        %v1673 = vpop.permute.xlu0 %1672
        %v1674 = vsel %vm634, %v1669, %v1671
        %v1675 = vsel %vm634, %v1671, %v1673
        %v1679 = vadd.f32 %v1655, %v1674
        %v1680 = vadd.f32 %v1656, %v1675
        %v1681 = vadd.f32 %v1657, %v1673
        %1682 = vset.pattern.permute.xlu0 34
        %1683 = vperm.xlu0 %1682, %v304
        %v1684 = vpop.permute.xlu0 %1683
        %v1686 = vmul.f32 %v569, %v1684
        %v1687 = vmul.f32 %v570, %v1684
        %v1688 = vmul.f32 %v571, %v1684
        %1692 = vrot.lane.b32.xlu0 %v1686, 64
        %v1693 = vpop.permute.xlu0 %1692
        %1694 = vrot.lane.b32.xlu0 %v1687, 64
        %v1695 = vpop.permute.xlu0 %1694
        %1696 = vrot.lane.b32.xlu0 %v1688, 64
        %v1697 = vpop.permute.xlu0 %1696
        %v1698 = vsel %vm657, %v1693, %v1695
        %v1699 = vsel %vm657, %v1695, %v1697
        %v1703 = vadd.f32 %v1679, %v1698
        %v1704 = vadd.f32 %v1680, %v1699
        %v1705 = vadd.f32 %v1681, %v1697
        %1706 = vset.pattern.permute.xlu0 41
        %1707 = vperm.xlu0 %1706, %v304
        %v1708 = vpop.permute.xlu0 %1707
        %v1710 = vmul.f32 %v569, %v1708
        %v1711 = vmul.f32 %v570, %v1708
        %v1712 = vmul.f32 %v571, %v1708
        %1716 = vrot.lane.b32.xlu0 %v1710, 48
        %v1717 = vpop.permute.xlu0 %1716
        %1718 = vrot.lane.b32.xlu0 %v1711, 48
        %v1719 = vpop.permute.xlu0 %1718
        %1720 = vrot.lane.b32.xlu0 %v1712, 48
        %v1721 = vpop.permute.xlu0 %1720
        %v1722 = vsel %vm680, %v1717, %v1719
        %v1723 = vsel %vm680, %v1719, %v1721
        %v1727 = vadd.f32 %v1703, %v1722
        %v1728 = vadd.f32 %v1704, %v1723
        %v1729 = vadd.f32 %v1705, %v1721
        %1730 = vset.pattern.permute.xlu0 48
        %1731 = vperm.xlu0 %1730, %v304
        %v1732 = vpop.permute.xlu0 %1731
        %v1734 = vmul.f32 %v569, %v1732
        %v1735 = vmul.f32 %v570, %v1732
        %v1736 = vmul.f32 %v571, %v1732
        %1740 = vrot.lane.b32.xlu0 %v1734, 32
        %v1741 = vpop.permute.xlu0 %1740
        %1742 = vrot.lane.b32.xlu0 %v1735, 32
        %v1743 = vpop.permute.xlu0 %1742
        %1744 = vrot.lane.b32.xlu0 %v1736, 32
        %v1745 = vpop.permute.xlu0 %1744
        %v1746 = vsel %vm703, %v1741, %v1743
        %v1747 = vsel %vm703, %v1743, %v1745
        %v1751 = vadd.f32 %v1727, %v1746
        %v1752 = vadd.f32 %v1728, %v1747
        %v1753 = vadd.f32 %v1729, %v1745
        %1756 = vrot.lane.b32.xlu0 %v404, 6
        %v1757 = vpop.permute.xlu0 %1756
        %1758 = vrot.lane.b32.xlu0 %v405, 6
        %v1759 = vpop.permute.xlu0 %1758
        %vm1760 = vcmask 48128
        %v1761 = vsel %vm1760, %v1757, %v1759
        %v1765 = vmul.f32 %v1751, %v1757
        %v1766 = vmul.f32 %v1752, %v1761
        %v1767 = vmul.f32 %v1753, %v1759
        %1771 = vrot.lane.b32.xlu0 %v1765, 122
        %v1772 = vpop.permute.xlu0 %1771
        %1773 = vrot.lane.b32.xlu0 %v1766, 122
        %v1774 = vpop.permute.xlu0 %1773
        %1775 = vrot.lane.b32.xlu0 %v1767, 122
        %v1776 = vpop.permute.xlu0 %1775
        %vm1777 = vcmask 998400
        %v1778 = vsel %vm1777, %v1772, %v1774
        %v1779 = vsel %vm1777, %v1774, %v1776
        %v1782 = vadd.f32 %v1601, %v1778
        %v1783 = vadd.f32 %v1602, %v1779
        %1785 = vset.pattern.permute.xlu0 0
        %1786 = vperm.xlu0 %1785, %v305
        %v1787 = vpop.permute.xlu0 %1786
        %v1789 = vlaneseq
        %v1790 = vshrl.u32 %v1789, 7
        %v1791 = vsub.s32 0, %v1790
        %v1792 = vrot.slane %v1782, %v1791
        %v1793 = vlaneseq
        %v1794 = vshrl.u32 %v1793, 7
        %v1795 = vsub.s32 0, %v1794
        %v1796 = vrot.slane %v1783, %v1795
        %v1797 = vmul.f32 %v1787, %v1792
        %v1798 = vmul.f32 %v1787, %v1796
        %1799 = vset.pattern.permute.xlu0 1
        %1800 = vperm.xlu0 %1799, %v305
        %v1801 = vpop.permute.xlu0 %1800
        %v1803 = vlaneseq
        %v1804 = vshrl.u32 %v1803, 7
        %v1805 = vsub.s32 1, %v1804
        %v1806 = vrot.slane %v1782, %v1805
        %v1807 = vlaneseq
        %v1808 = vshrl.u32 %v1807, 7
        %v1809 = vsub.s32 1, %v1808
        %v1810 = vrot.slane %v1783, %v1809
        %v1811 = vmul.f32 %v1801, %v1806
        %v1812 = vmul.f32 %v1801, %v1810
        %v1813 = vadd.f32 %v1797, %v1811
        %v1814 = vadd.f32 %v1798, %v1812
        %1815 = vset.pattern.permute.xlu0 2
        %1816 = vperm.xlu0 %1815, %v305
        %v1817 = vpop.permute.xlu0 %1816
        %v1819 = vlaneseq
        %v1820 = vshrl.u32 %v1819, 7
        %v1821 = vsub.s32 2, %v1820
        %v1822 = vrot.slane %v1782, %v1821
        %v1823 = vlaneseq
        %v1824 = vshrl.u32 %v1823, 7
        %v1825 = vsub.s32 2, %v1824
        %v1826 = vrot.slane %v1783, %v1825
        %v1827 = vmul.f32 %v1817, %v1822
        %v1828 = vmul.f32 %v1817, %v1826
        %v1829 = vadd.f32 %v1813, %v1827
        %v1830 = vadd.f32 %v1814, %v1828
        %1831 = vset.pattern.permute.xlu0 3
        %1832 = vperm.xlu0 %1831, %v305
        %v1833 = vpop.permute.xlu0 %1832
        %v1835 = vlaneseq
        %v1836 = vshrl.u32 %v1835, 7
        %v1837 = vsub.s32 3, %v1836
        %v1838 = vrot.slane %v1782, %v1837
        %v1839 = vlaneseq
        %v1840 = vshrl.u32 %v1839, 7
        %v1841 = vsub.s32 3, %v1840
        %v1842 = vrot.slane %v1783, %v1841
        %v1843 = vmul.f32 %v1833, %v1838
        %v1844 = vmul.f32 %v1833, %v1842
        %v1845 = vadd.f32 %v1829, %v1843
        %v1846 = vadd.f32 %v1830, %v1844
        %1847 = vset.pattern.permute.xlu0 4
        %1848 = vperm.xlu0 %1847, %v305
        %v1849 = vpop.permute.xlu0 %1848
        %v1851 = vlaneseq
        %v1852 = vshrl.u32 %v1851, 7
        %v1853 = vsub.s32 4, %v1852
        %v1854 = vrot.slane %v1782, %v1853
        %v1855 = vlaneseq
        %v1856 = vshrl.u32 %v1855, 7
        %v1857 = vsub.s32 4, %v1856
        %v1858 = vrot.slane %v1783, %v1857
        %v1859 = vmul.f32 %v1849, %v1854
        %v1860 = vmul.f32 %v1849, %v1858
        %v1861 = vadd.f32 %v1845, %v1859
        %v1862 = vadd.f32 %v1846, %v1860
        %1863 = vset.pattern.permute.xlu0 5
        %1864 = vperm.xlu0 %1863, %v305
        %v1865 = vpop.permute.xlu0 %1864
        %v1867 = vlaneseq
        %v1868 = vshrl.u32 %v1867, 7
        %v1869 = vsub.s32 5, %v1868
        %v1870 = vrot.slane %v1782, %v1869
        %v1871 = vlaneseq
        %v1872 = vshrl.u32 %v1871, 7
        %v1873 = vsub.s32 5, %v1872
        %v1874 = vrot.slane %v1783, %v1873
        %v1875 = vmul.f32 %v1865, %v1870
        %v1876 = vmul.f32 %v1865, %v1874
        %v1877 = vadd.f32 %v1861, %v1875
        %v1878 = vadd.f32 %v1862, %v1876
        %1879 = vset.pattern.permute.xlu0 6
        %1880 = vperm.xlu0 %1879, %v305
        %v1881 = vpop.permute.xlu0 %1880
        %v1883 = vlaneseq
        %v1884 = vshrl.u32 %v1883, 7
        %v1885 = vsub.s32 6, %v1884
        %v1886 = vrot.slane %v1782, %v1885
        %v1887 = vlaneseq
        %v1888 = vshrl.u32 %v1887, 7
        %v1889 = vsub.s32 6, %v1888
        %v1890 = vrot.slane %v1783, %v1889
        %v1891 = vmul.f32 %v1881, %v1886
        %v1892 = vmul.f32 %v1881, %v1890
        %v1893 = vadd.f32 %v1877, %v1891
        %v1894 = vadd.f32 %v1878, %v1892
        %1895 = vset.pattern.permute.xlu0 7
        %1896 = vperm.xlu0 %1895, %v305
        %v1897 = vpop.permute.xlu0 %1896
        %v1899 = vlaneseq
        %v1900 = vshrl.u32 %v1899, 7
        %v1901 = vsub.s32 7, %v1900
        %v1902 = vrot.slane %v1782, %v1901
        %v1903 = vlaneseq
        %v1904 = vshrl.u32 %v1903, 7
        %v1905 = vsub.s32 7, %v1904
        %v1906 = vrot.slane %v1783, %v1905
        %v1907 = vmul.f32 %v1897, %v1902
        %v1908 = vmul.f32 %v1897, %v1906
        %v1909 = vadd.f32 %v1893, %v1907
        %v1910 = vadd.f32 %v1894, %v1908
        %1912 = vset.pattern.permute.xlu0 0
        %1913 = vperm.xlu0 %1912, %v306
        %v1914 = vpop.permute.xlu0 %1913
        %v1916 = vadd.f32 %v1909, %v1914
        %v1917 = vadd.f32 %v1910, %v1914
        %v1920 = vcombine.low %v1916, %v1917
        %1922 = vst [vmem:[%s288] sm:$0xff] %v1920
        %s1923 = scalar_lea.vmem %s260, 8 [#allocation5]
        %v1924 = vld [vmem:[%s1923] sm:$0xff]
        %v1925 = vld [vmem:[#allocation2] sm:$0xff]
        %v1926 = vsub.f32 %v1924, %v1925
        %v1927 = vmul.f32 %v1926, 0.5
        %v1928 = vadd.f32 %v1925, %v1927
        %vm1929 = vcmp.ge.f32.partialorder %v1928, 1.0
        %v1930 = vsel %vm1929, 0.0, %v1928
        %1931 = vst [vmem:[#allocation2] sm:$0xff] %v1930
        %v1932 = vsel %vm1929, 1, 0
        %v1933 = vcvt.s32.f32 %v1932
        %v1935 = vlaneseq
        %v1936 = vshrl.u32 %v1935, 7
        %v1937 = vsub.s32 0, %v1936
        %v1938 = vrot.slane %v1933, %v1937
        %v1939 = vlaneseq
        %v1940 = vshrl.u32 %v1939, 7
        %v1941 = vsub.s32 4, %v1940
        %v1942 = vrot.slane %v1933, %v1941
        %v1945 = vlaneseq
        %v1946 = vshrl.u32 %v1945, 7
        %v1947 = vsub.s32 0, %v1946
        %v1948 = vrot.slane %v1938, %v1947
        %v1949 = vlaneseq
        %v1950 = vshrl.u32 %v1949, 7
        %v1951 = vsub.s32 0, %v1950
        %v1952 = vrot.slane %v1942, %v1951
        %v1953 = vmul.f32 %v419, %v1948
        %v1954 = vmul.f32 %v419, %v1952
        %v1955 = vlaneseq
        %v1956 = vshrl.u32 %v1955, 7
        %v1957 = vsub.s32 1, %v1956
        %v1958 = vrot.slane %v1933, %v1957
        %v1959 = vlaneseq
        %v1960 = vshrl.u32 %v1959, 7
        %v1961 = vsub.s32 5, %v1960
        %v1962 = vrot.slane %v1933, %v1961
        %v1965 = vlaneseq
        %v1966 = vshrl.u32 %v1965, 7
        %v1967 = vsub.s32 1, %v1966
        %v1968 = vrot.slane %v1958, %v1967
        %v1969 = vlaneseq
        %v1970 = vshrl.u32 %v1969, 7
        %v1971 = vsub.s32 1, %v1970
        %v1972 = vrot.slane %v1962, %v1971
        %v1973 = vmul.f32 %v444, %v1968
        %v1974 = vmul.f32 %v444, %v1972
        %v1975 = vadd.f32 %v1953, %v1973
        %v1976 = vadd.f32 %v1954, %v1974
        %v1977 = vlaneseq
        %v1978 = vshrl.u32 %v1977, 7
        %v1979 = vsub.s32 2, %v1978
        %v1980 = vrot.slane %v1933, %v1979
        %v1981 = vlaneseq
        %v1982 = vshrl.u32 %v1981, 7
        %v1983 = vsub.s32 6, %v1982
        %v1984 = vrot.slane %v1933, %v1983
        %v1987 = vlaneseq
        %v1988 = vshrl.u32 %v1987, 7
        %v1989 = vsub.s32 2, %v1988
        %v1990 = vrot.slane %v1980, %v1989
        %v1991 = vlaneseq
        %v1992 = vshrl.u32 %v1991, 7
        %v1993 = vsub.s32 2, %v1992
        %v1994 = vrot.slane %v1984, %v1993
        %v1995 = vmul.f32 %v470, %v1990
        %v1996 = vmul.f32 %v470, %v1994
        %v1997 = vadd.f32 %v1975, %v1995
        %v1998 = vadd.f32 %v1976, %v1996
        %v1999 = vlaneseq
        %v2000 = vshrl.u32 %v1999, 7
        %v2001 = vsub.s32 3, %v2000
        %v2002 = vrot.slane %v1933, %v2001
        %v2003 = vlaneseq
        %v2004 = vshrl.u32 %v2003, 7
        %v2005 = vsub.s32 7, %v2004
        %v2006 = vrot.slane %v1933, %v2005
        %v2009 = vlaneseq
        %v2010 = vshrl.u32 %v2009, 7
        %v2011 = vsub.s32 3, %v2010
        %v2012 = vrot.slane %v2002, %v2011
        %v2013 = vlaneseq
        %v2014 = vshrl.u32 %v2013, 7
        %v2015 = vsub.s32 3, %v2014
        %v2016 = vrot.slane %v2006, %v2015
        %v2017 = vmul.f32 %v496, %v2012
        %v2018 = vmul.f32 %v496, %v2016
        %v2019 = vadd.f32 %v1997, %v2017
        %v2020 = vadd.f32 %v1998, %v2018
        %v2021 = vadd.f32 %v2019, %v523
        %v2022 = vadd.f32 %v2020, %v523
        %v2023 = vld [vmem:[#allocation3] sm:$0xff]
        %v2024 = vld [vmem:[#allocation3 + $0x8] sm:$0xff]
        %v2025 = vsub.f32 %v2021, %v2023
        %v2026 = vsub.f32 %v2022, %v2024
        %v2027 = vmul.f32 %v2025, 0.5
        %v2028 = vmul.f32 %v2026, 0.5
        %v2029 = vadd.f32 %v2023, %v2027
        %v2030 = vadd.f32 %v2024, %v2028
        %vm2031 = vcmp.ge.f32.partialorder %v2029, 1.0
        %vm2032 = vcmp.ge.f32.partialorder %v2030, 1.0
        %v2033 = vsel %vm2031, 0.0, %v2029
        %v2034 = vsel %vm2032, 0.0, %v2030
        %2035 = vst [vmem:[#allocation3] sm:$0xff] %v2033
        %2036 = vst [vmem:[#allocation3 + $0x8] sm:$0xff] %v2034
        %v2037 = vsel %vm2031, 1, 0
        %v2038 = vsel %vm2032, 1, 0
        %v2039 = vcvt.s32.f32 %v2037
        %v2040 = vcvt.s32.f32 %v2038
        %2043 = vrot.lane.b32.xlu0 %v2039, 51
        %v2044 = vpop.permute.xlu0 %2043
        %2045 = vrot.lane.b32.xlu0 %v2040, 51
        %v2046 = vpop.permute.xlu0 %2045
        %v2047 = vsel %vm551, %v2044, %v2046
        %2051 = vst.msk [vmem:[#allocation4] sm:$0xff] %vm556, %v2044
        %2052 = vst [vmem:[#allocation4 + $0x8] sm:$0xff] %v2047
        %2053 = vst.msk [vmem:[#allocation4 + $0x10] sm:$0xff] %vm551, %v2046
        %v2054 = vld [vmem:[#allocation4] sm:$0xff]
        %v2055 = vld [vmem:[#allocation4 + $0x8] sm:$0xff]
        %v2056 = vmul.f32 %v2054, %v565
        %v2057 = vmul.f32 %v2055, %v565
        %v2058 = vld [vmem:[#allocation4 + $0x10] sm:$0xff]
        %v2059 = vmul.f32 %v2054, %v574
        %v2060 = vmul.f32 %v2055, %v574
        %v2061 = vmul.f32 %v2058, %v574
        %2065 = vrot.lane.b32.xlu0 %v2059, 112
        %v2066 = vpop.permute.xlu0 %2065
        %2067 = vrot.lane.b32.xlu0 %v2060, 112
        %v2068 = vpop.permute.xlu0 %2067
        %2069 = vrot.lane.b32.xlu0 %v2061, 112
        %v2070 = vpop.permute.xlu0 %2069
        %v2071 = vsel %vm588, %v2066, %v2068
        %v2072 = vsel %vm588, %v2068, %v2070
        %v2075 = vadd.f32 %v2056, %v2071
        %v2076 = vadd.f32 %v2057, %v2072
        %v2077 = vmul.f32 %v2054, %v597
        %v2078 = vmul.f32 %v2055, %v597
        %v2079 = vmul.f32 %v2058, %v597
        %2083 = vrot.lane.b32.xlu0 %v2077, 96
        %v2084 = vpop.permute.xlu0 %2083
        %2085 = vrot.lane.b32.xlu0 %v2078, 96
        %v2086 = vpop.permute.xlu0 %2085
        %2087 = vrot.lane.b32.xlu0 %v2079, 96
        %v2088 = vpop.permute.xlu0 %2087
        %v2089 = vsel %vm611, %v2084, %v2086
        %v2090 = vsel %vm611, %v2086, %v2088
        %v2093 = vadd.f32 %v2075, %v2089
        %v2094 = vadd.f32 %v2076, %v2090
        %v2095 = vmul.f32 %v2054, %v620
        %v2096 = vmul.f32 %v2055, %v620
        %v2097 = vmul.f32 %v2058, %v620
        %2101 = vrot.lane.b32.xlu0 %v2095, 80
        %v2102 = vpop.permute.xlu0 %2101
        %2103 = vrot.lane.b32.xlu0 %v2096, 80
        %v2104 = vpop.permute.xlu0 %2103
        %2105 = vrot.lane.b32.xlu0 %v2097, 80
        %v2106 = vpop.permute.xlu0 %2105
        %v2107 = vsel %vm634, %v2102, %v2104
        %v2108 = vsel %vm634, %v2104, %v2106
        %v2111 = vadd.f32 %v2093, %v2107
        %v2112 = vadd.f32 %v2094, %v2108
        %v2113 = vmul.f32 %v2054, %v643
        %v2114 = vmul.f32 %v2055, %v643
        %v2115 = vmul.f32 %v2058, %v643
        %2119 = vrot.lane.b32.xlu0 %v2113, 64
        %v2120 = vpop.permute.xlu0 %2119
        %2121 = vrot.lane.b32.xlu0 %v2114, 64
        %v2122 = vpop.permute.xlu0 %2121
        %2123 = vrot.lane.b32.xlu0 %v2115, 64
        %v2124 = vpop.permute.xlu0 %2123
        %v2125 = vsel %vm657, %v2120, %v2122
        %v2126 = vsel %vm657, %v2122, %v2124
        %v2129 = vadd.f32 %v2111, %v2125
        %v2130 = vadd.f32 %v2112, %v2126
        %v2131 = vmul.f32 %v2054, %v666
        %v2132 = vmul.f32 %v2055, %v666
        %v2133 = vmul.f32 %v2058, %v666
        %2137 = vrot.lane.b32.xlu0 %v2131, 48
        %v2138 = vpop.permute.xlu0 %2137
        %2139 = vrot.lane.b32.xlu0 %v2132, 48
        %v2140 = vpop.permute.xlu0 %2139
        %2141 = vrot.lane.b32.xlu0 %v2133, 48
        %v2142 = vpop.permute.xlu0 %2141
        %v2143 = vsel %vm680, %v2138, %v2140
        %v2144 = vsel %vm680, %v2140, %v2142
        %v2147 = vadd.f32 %v2129, %v2143
        %v2148 = vadd.f32 %v2130, %v2144
        %v2149 = vmul.f32 %v2054, %v689
        %v2150 = vmul.f32 %v2055, %v689
        %v2151 = vmul.f32 %v2058, %v689
        %2155 = vrot.lane.b32.xlu0 %v2149, 32
        %v2156 = vpop.permute.xlu0 %2155
        %2157 = vrot.lane.b32.xlu0 %v2150, 32
        %v2158 = vpop.permute.xlu0 %2157
        %2159 = vrot.lane.b32.xlu0 %v2151, 32
        %v2160 = vpop.permute.xlu0 %2159
        %v2161 = vsel %vm703, %v2156, %v2158
        %v2162 = vsel %vm703, %v2158, %v2160
        %v2165 = vadd.f32 %v2147, %v2161
        %v2166 = vadd.f32 %v2148, %v2162
        %v2167 = vmul.f32 %v2165, %v344
        %v2168 = vmul.f32 %v2166, %v345
        %v2169 = vmul.f32 %v2054, %v714
        %v2170 = vmul.f32 %v2055, %v714
        %v2171 = vmul.f32 %v2058, %v714
        %v2172 = vmul.f32 %v2054, %v721
        %v2173 = vmul.f32 %v2055, %v721
        %v2174 = vmul.f32 %v2058, %v721
        %2178 = vrot.lane.b32.xlu0 %v2172, 112
        %v2179 = vpop.permute.xlu0 %2178
        %2180 = vrot.lane.b32.xlu0 %v2173, 112
        %v2181 = vpop.permute.xlu0 %2180
        %2182 = vrot.lane.b32.xlu0 %v2174, 112
        %v2183 = vpop.permute.xlu0 %2182
        %v2184 = vsel %vm588, %v2179, %v2181
        %v2185 = vsel %vm588, %v2181, %v2183
        %v2189 = vadd.f32 %v2169, %v2184
        %v2190 = vadd.f32 %v2170, %v2185
        %v2191 = vadd.f32 %v2171, %v2183
        %v2192 = vmul.f32 %v2054, %v745
        %v2193 = vmul.f32 %v2055, %v745
        %v2194 = vmul.f32 %v2058, %v745
        %2198 = vrot.lane.b32.xlu0 %v2192, 96
        %v2199 = vpop.permute.xlu0 %2198
        %2200 = vrot.lane.b32.xlu0 %v2193, 96
        %v2201 = vpop.permute.xlu0 %2200
        %2202 = vrot.lane.b32.xlu0 %v2194, 96
        %v2203 = vpop.permute.xlu0 %2202
        %v2204 = vsel %vm611, %v2199, %v2201
        %v2205 = vsel %vm611, %v2201, %v2203
        %v2209 = vadd.f32 %v2189, %v2204
        %v2210 = vadd.f32 %v2190, %v2205
        %v2211 = vadd.f32 %v2191, %v2203
        %v2212 = vmul.f32 %v2054, %v769
        %v2213 = vmul.f32 %v2055, %v769
        %v2214 = vmul.f32 %v2058, %v769
        %2218 = vrot.lane.b32.xlu0 %v2212, 80
        %v2219 = vpop.permute.xlu0 %2218
        %2220 = vrot.lane.b32.xlu0 %v2213, 80
        %v2221 = vpop.permute.xlu0 %2220
        %2222 = vrot.lane.b32.xlu0 %v2214, 80
        %v2223 = vpop.permute.xlu0 %2222
        %v2224 = vsel %vm634, %v2219, %v2221
        %v2225 = vsel %vm634, %v2221, %v2223
        %v2229 = vadd.f32 %v2209, %v2224
        %v2230 = vadd.f32 %v2210, %v2225
        %v2231 = vadd.f32 %v2211, %v2223
        %v2232 = vmul.f32 %v2054, %v793
        %v2233 = vmul.f32 %v2055, %v793
        %v2234 = vmul.f32 %v2058, %v793
        %2238 = vrot.lane.b32.xlu0 %v2232, 64
        %v2239 = vpop.permute.xlu0 %2238
        %2240 = vrot.lane.b32.xlu0 %v2233, 64
        %v2241 = vpop.permute.xlu0 %2240
        %2242 = vrot.lane.b32.xlu0 %v2234, 64
        %v2243 = vpop.permute.xlu0 %2242
        %v2244 = vsel %vm657, %v2239, %v2241
        %v2245 = vsel %vm657, %v2241, %v2243
        %v2249 = vadd.f32 %v2229, %v2244
        %v2250 = vadd.f32 %v2230, %v2245
        %v2251 = vadd.f32 %v2231, %v2243
        %v2252 = vmul.f32 %v2054, %v817
        %v2253 = vmul.f32 %v2055, %v817
        %v2254 = vmul.f32 %v2058, %v817
        %2258 = vrot.lane.b32.xlu0 %v2252, 48
        %v2259 = vpop.permute.xlu0 %2258
        %2260 = vrot.lane.b32.xlu0 %v2253, 48
        %v2261 = vpop.permute.xlu0 %2260
        %2262 = vrot.lane.b32.xlu0 %v2254, 48
        %v2263 = vpop.permute.xlu0 %2262
        %v2264 = vsel %vm680, %v2259, %v2261
        %v2265 = vsel %vm680, %v2261, %v2263
        %v2269 = vadd.f32 %v2249, %v2264
        %v2270 = vadd.f32 %v2250, %v2265
        %v2271 = vadd.f32 %v2251, %v2263
        %v2272 = vmul.f32 %v2054, %v841
        %v2273 = vmul.f32 %v2055, %v841
        %v2274 = vmul.f32 %v2058, %v841
        %2278 = vrot.lane.b32.xlu0 %v2272, 32
        %v2279 = vpop.permute.xlu0 %2278
        %2280 = vrot.lane.b32.xlu0 %v2273, 32
        %v2281 = vpop.permute.xlu0 %2280
        %2282 = vrot.lane.b32.xlu0 %v2274, 32
        %v2283 = vpop.permute.xlu0 %2282
        %v2284 = vsel %vm703, %v2279, %v2281
        %v2285 = vsel %vm703, %v2281, %v2283
        %v2289 = vadd.f32 %v2269, %v2284
        %v2290 = vadd.f32 %v2270, %v2285
        %v2291 = vadd.f32 %v2271, %v2283
        %v2292 = vmul.f32 %v2289, %v866
        %v2293 = vmul.f32 %v2290, %v870
        %v2294 = vmul.f32 %v2291, %v868
        %2298 = vrot.lane.b32.xlu0 %v2292, 127
        %v2299 = vpop.permute.xlu0 %2298
        %2300 = vrot.lane.b32.xlu0 %v2293, 127
        %v2301 = vpop.permute.xlu0 %2300
        %2302 = vrot.lane.b32.xlu0 %v2294, 127
        %v2303 = vpop.permute.xlu0 %2302
        %v2304 = vsel %vm886, %v2299, %v2301
        %v2305 = vsel %vm886, %v2301, %v2303
        %v2308 = vadd.f32 %v2167, %v2304
        %v2309 = vadd.f32 %v2168, %v2305
        %v2310 = vmul.f32 %v2054, %v895
        %v2311 = vmul.f32 %v2055, %v895
        %v2312 = vmul.f32 %v2058, %v895
        %v2313 = vmul.f32 %v2054, %v902
        %v2314 = vmul.f32 %v2055, %v902
        %v2315 = vmul.f32 %v2058, %v902
        %2319 = vrot.lane.b32.xlu0 %v2313, 112
        %v2320 = vpop.permute.xlu0 %2319
        %2321 = vrot.lane.b32.xlu0 %v2314, 112
        %v2322 = vpop.permute.xlu0 %2321
        %2323 = vrot.lane.b32.xlu0 %v2315, 112
        %v2324 = vpop.permute.xlu0 %2323
        %v2325 = vsel %vm588, %v2320, %v2322
        %v2326 = vsel %vm588, %v2322, %v2324
        %v2330 = vadd.f32 %v2310, %v2325
        %v2331 = vadd.f32 %v2311, %v2326
        %v2332 = vadd.f32 %v2312, %v2324
        %v2333 = vmul.f32 %v2054, %v926
        %v2334 = vmul.f32 %v2055, %v926
        %v2335 = vmul.f32 %v2058, %v926
        %2339 = vrot.lane.b32.xlu0 %v2333, 96
        %v2340 = vpop.permute.xlu0 %2339
        %2341 = vrot.lane.b32.xlu0 %v2334, 96
        %v2342 = vpop.permute.xlu0 %2341
        %2343 = vrot.lane.b32.xlu0 %v2335, 96
        %v2344 = vpop.permute.xlu0 %2343
        %v2345 = vsel %vm611, %v2340, %v2342
        %v2346 = vsel %vm611, %v2342, %v2344
        %v2350 = vadd.f32 %v2330, %v2345
        %v2351 = vadd.f32 %v2331, %v2346
        %v2352 = vadd.f32 %v2332, %v2344
        %v2353 = vmul.f32 %v2054, %v950
        %v2354 = vmul.f32 %v2055, %v950
        %v2355 = vmul.f32 %v2058, %v950
        %2359 = vrot.lane.b32.xlu0 %v2353, 80
        %v2360 = vpop.permute.xlu0 %2359
        %2361 = vrot.lane.b32.xlu0 %v2354, 80
        %v2362 = vpop.permute.xlu0 %2361
        %2363 = vrot.lane.b32.xlu0 %v2355, 80
        %v2364 = vpop.permute.xlu0 %2363
        %v2365 = vsel %vm634, %v2360, %v2362
        %v2366 = vsel %vm634, %v2362, %v2364
        %v2370 = vadd.f32 %v2350, %v2365
        %v2371 = vadd.f32 %v2351, %v2366
        %v2372 = vadd.f32 %v2352, %v2364
        %v2373 = vmul.f32 %v2054, %v974
        %v2374 = vmul.f32 %v2055, %v974
        %v2375 = vmul.f32 %v2058, %v974
        %2379 = vrot.lane.b32.xlu0 %v2373, 64
        %v2380 = vpop.permute.xlu0 %2379
        %2381 = vrot.lane.b32.xlu0 %v2374, 64
        %v2382 = vpop.permute.xlu0 %2381
        %2383 = vrot.lane.b32.xlu0 %v2375, 64
        %v2384 = vpop.permute.xlu0 %2383
        %v2385 = vsel %vm657, %v2380, %v2382
        %v2386 = vsel %vm657, %v2382, %v2384
        %v2390 = vadd.f32 %v2370, %v2385
        %v2391 = vadd.f32 %v2371, %v2386
        %v2392 = vadd.f32 %v2372, %v2384
        %v2393 = vmul.f32 %v2054, %v998
        %v2394 = vmul.f32 %v2055, %v998
        %v2395 = vmul.f32 %v2058, %v998
        %2399 = vrot.lane.b32.xlu0 %v2393, 48
        %v2400 = vpop.permute.xlu0 %2399
        %2401 = vrot.lane.b32.xlu0 %v2394, 48
        %v2402 = vpop.permute.xlu0 %2401
        %2403 = vrot.lane.b32.xlu0 %v2395, 48
        %v2404 = vpop.permute.xlu0 %2403
        %v2405 = vsel %vm680, %v2400, %v2402
        %v2406 = vsel %vm680, %v2402, %v2404
        %v2410 = vadd.f32 %v2390, %v2405
        %v2411 = vadd.f32 %v2391, %v2406
        %v2412 = vadd.f32 %v2392, %v2404
        %v2413 = vmul.f32 %v2054, %v1022
        %v2414 = vmul.f32 %v2055, %v1022
        %v2415 = vmul.f32 %v2058, %v1022
        %2419 = vrot.lane.b32.xlu0 %v2413, 32
        %v2420 = vpop.permute.xlu0 %2419
        %2421 = vrot.lane.b32.xlu0 %v2414, 32
        %v2422 = vpop.permute.xlu0 %2421
        %2423 = vrot.lane.b32.xlu0 %v2415, 32
        %v2424 = vpop.permute.xlu0 %2423
        %v2425 = vsel %vm703, %v2420, %v2422
        %v2426 = vsel %vm703, %v2422, %v2424
        %v2430 = vadd.f32 %v2410, %v2425
        %v2431 = vadd.f32 %v2411, %v2426
        %v2432 = vadd.f32 %v2412, %v2424
        %v2433 = vmul.f32 %v2430, %v1047
        %v2434 = vmul.f32 %v2431, %v1051
        %v2435 = vmul.f32 %v2432, %v1049
        %2439 = vrot.lane.b32.xlu0 %v2433, 126
        %v2440 = vpop.permute.xlu0 %2439
        %2441 = vrot.lane.b32.xlu0 %v2434, 126
        %v2442 = vpop.permute.xlu0 %2441
        %2443 = vrot.lane.b32.xlu0 %v2435, 126
        %v2444 = vpop.permute.xlu0 %2443
        %v2445 = vsel %vm1067, %v2440, %v2442
        %v2446 = vsel %vm1067, %v2442, %v2444
        %v2449 = vadd.f32 %v2308, %v2445
        %v2450 = vadd.f32 %v2309, %v2446
        %v2451 = vmul.f32 %v2054, %v1076
        %v2452 = vmul.f32 %v2055, %v1076
        %v2453 = vmul.f32 %v2058, %v1076
        %v2454 = vmul.f32 %v2054, %v1083
        %v2455 = vmul.f32 %v2055, %v1083
        %v2456 = vmul.f32 %v2058, %v1083
        %2460 = vrot.lane.b32.xlu0 %v2454, 112
        %v2461 = vpop.permute.xlu0 %2460
        %2462 = vrot.lane.b32.xlu0 %v2455, 112
        %v2463 = vpop.permute.xlu0 %2462
        %2464 = vrot.lane.b32.xlu0 %v2456, 112
        %v2465 = vpop.permute.xlu0 %2464
        %v2466 = vsel %vm588, %v2461, %v2463
        %v2467 = vsel %vm588, %v2463, %v2465
        %v2471 = vadd.f32 %v2451, %v2466
        %v2472 = vadd.f32 %v2452, %v2467
        %v2473 = vadd.f32 %v2453, %v2465
        %v2474 = vmul.f32 %v2054, %v1107
        %v2475 = vmul.f32 %v2055, %v1107
        %v2476 = vmul.f32 %v2058, %v1107
        %2480 = vrot.lane.b32.xlu0 %v2474, 96
        %v2481 = vpop.permute.xlu0 %2480
        %2482 = vrot.lane.b32.xlu0 %v2475, 96
        %v2483 = vpop.permute.xlu0 %2482
        %2484 = vrot.lane.b32.xlu0 %v2476, 96
        %v2485 = vpop.permute.xlu0 %2484
        %v2486 = vsel %vm611, %v2481, %v2483
        %v2487 = vsel %vm611, %v2483, %v2485
        %v2491 = vadd.f32 %v2471, %v2486
        %v2492 = vadd.f32 %v2472, %v2487
        %v2493 = vadd.f32 %v2473, %v2485
        %v2494 = vmul.f32 %v2054, %v1131
        %v2495 = vmul.f32 %v2055, %v1131
        %v2496 = vmul.f32 %v2058, %v1131
        %2500 = vrot.lane.b32.xlu0 %v2494, 80
        %v2501 = vpop.permute.xlu0 %2500
        %2502 = vrot.lane.b32.xlu0 %v2495, 80
        %v2503 = vpop.permute.xlu0 %2502
        %2504 = vrot.lane.b32.xlu0 %v2496, 80
        %v2505 = vpop.permute.xlu0 %2504
        %v2506 = vsel %vm634, %v2501, %v2503
        %v2507 = vsel %vm634, %v2503, %v2505
        %v2511 = vadd.f32 %v2491, %v2506
        %v2512 = vadd.f32 %v2492, %v2507
        %v2513 = vadd.f32 %v2493, %v2505
        %v2514 = vmul.f32 %v2054, %v1155
        %v2515 = vmul.f32 %v2055, %v1155
        %v2516 = vmul.f32 %v2058, %v1155
        %2520 = vrot.lane.b32.xlu0 %v2514, 64
        %v2521 = vpop.permute.xlu0 %2520
        %2522 = vrot.lane.b32.xlu0 %v2515, 64
        %v2523 = vpop.permute.xlu0 %2522
        %2524 = vrot.lane.b32.xlu0 %v2516, 64
        %v2525 = vpop.permute.xlu0 %2524
        %v2526 = vsel %vm657, %v2521, %v2523
        %v2527 = vsel %vm657, %v2523, %v2525
        %v2531 = vadd.f32 %v2511, %v2526
        %v2532 = vadd.f32 %v2512, %v2527
        %v2533 = vadd.f32 %v2513, %v2525
        %v2534 = vmul.f32 %v2054, %v1179
        %v2535 = vmul.f32 %v2055, %v1179
        %v2536 = vmul.f32 %v2058, %v1179
        %2540 = vrot.lane.b32.xlu0 %v2534, 48
        %v2541 = vpop.permute.xlu0 %2540
        %2542 = vrot.lane.b32.xlu0 %v2535, 48
        %v2543 = vpop.permute.xlu0 %2542
        %2544 = vrot.lane.b32.xlu0 %v2536, 48
        %v2545 = vpop.permute.xlu0 %2544
        %v2546 = vsel %vm680, %v2541, %v2543
        %v2547 = vsel %vm680, %v2543, %v2545
        %v2551 = vadd.f32 %v2531, %v2546
        %v2552 = vadd.f32 %v2532, %v2547
        %v2553 = vadd.f32 %v2533, %v2545
        %v2554 = vmul.f32 %v2054, %v1203
        %v2555 = vmul.f32 %v2055, %v1203
        %v2556 = vmul.f32 %v2058, %v1203
        %2560 = vrot.lane.b32.xlu0 %v2554, 32
        %v2561 = vpop.permute.xlu0 %2560
        %2562 = vrot.lane.b32.xlu0 %v2555, 32
        %v2563 = vpop.permute.xlu0 %2562
        %2564 = vrot.lane.b32.xlu0 %v2556, 32
        %v2565 = vpop.permute.xlu0 %2564
        %v2566 = vsel %vm703, %v2561, %v2563
        %v2567 = vsel %vm703, %v2563, %v2565
        %v2571 = vadd.f32 %v2551, %v2566
        %v2572 = vadd.f32 %v2552, %v2567
        %v2573 = vadd.f32 %v2553, %v2565
        %2577 = vrot.lane.b32.xlu0 %v2571, 125
        %v2578 = vpop.permute.xlu0 %2577
        %2579 = vrot.lane.b32.xlu0 %v2572, 125
        %v2580 = vpop.permute.xlu0 %2579
        %2581 = vrot.lane.b32.xlu0 %v2573, 125
        %v2582 = vpop.permute.xlu0 %2581
        %v2583 = vsel %vm1234, %v2578, %v2580
        %v2584 = vsel %vm1234, %v2580, %v2582
        %v2587 = vadd.f32 %v2449, %v2583
        %v2588 = vadd.f32 %v2450, %v2584
        %v2589 = vmul.f32 %v2054, %v1243
        %v2590 = vmul.f32 %v2055, %v1243
        %v2591 = vmul.f32 %v2058, %v1243
        %v2592 = vmul.f32 %v2054, %v1250
        %v2593 = vmul.f32 %v2055, %v1250
        %v2594 = vmul.f32 %v2058, %v1250
        %2598 = vrot.lane.b32.xlu0 %v2592, 112
        %v2599 = vpop.permute.xlu0 %2598
        %2600 = vrot.lane.b32.xlu0 %v2593, 112
        %v2601 = vpop.permute.xlu0 %2600
        %2602 = vrot.lane.b32.xlu0 %v2594, 112
        %v2603 = vpop.permute.xlu0 %2602
        %v2604 = vsel %vm588, %v2599, %v2601
        %v2605 = vsel %vm588, %v2601, %v2603
        %v2609 = vadd.f32 %v2589, %v2604
        %v2610 = vadd.f32 %v2590, %v2605
        %v2611 = vadd.f32 %v2591, %v2603
        %v2612 = vmul.f32 %v2054, %v1274
        %v2613 = vmul.f32 %v2055, %v1274
        %v2614 = vmul.f32 %v2058, %v1274
        %2618 = vrot.lane.b32.xlu0 %v2612, 96
        %v2619 = vpop.permute.xlu0 %2618
        %2620 = vrot.lane.b32.xlu0 %v2613, 96
        %v2621 = vpop.permute.xlu0 %2620
        %2622 = vrot.lane.b32.xlu0 %v2614, 96
        %v2623 = vpop.permute.xlu0 %2622
        %v2624 = vsel %vm611, %v2619, %v2621
        %v2625 = vsel %vm611, %v2621, %v2623
        %v2629 = vadd.f32 %v2609, %v2624
        %v2630 = vadd.f32 %v2610, %v2625
        %v2631 = vadd.f32 %v2611, %v2623
        %v2632 = vmul.f32 %v2054, %v1298
        %v2633 = vmul.f32 %v2055, %v1298
        %v2634 = vmul.f32 %v2058, %v1298
        %2638 = vrot.lane.b32.xlu0 %v2632, 80
        %v2639 = vpop.permute.xlu0 %2638
        %2640 = vrot.lane.b32.xlu0 %v2633, 80
        %v2641 = vpop.permute.xlu0 %2640
        %2642 = vrot.lane.b32.xlu0 %v2634, 80
        %v2643 = vpop.permute.xlu0 %2642
        %v2644 = vsel %vm634, %v2639, %v2641
        %v2645 = vsel %vm634, %v2641, %v2643
        %v2649 = vadd.f32 %v2629, %v2644
        %v2650 = vadd.f32 %v2630, %v2645
        %v2651 = vadd.f32 %v2631, %v2643
        %v2652 = vmul.f32 %v2054, %v1322
        %v2653 = vmul.f32 %v2055, %v1322
        %v2654 = vmul.f32 %v2058, %v1322
        %2658 = vrot.lane.b32.xlu0 %v2652, 64
        %v2659 = vpop.permute.xlu0 %2658
        %2660 = vrot.lane.b32.xlu0 %v2653, 64
        %v2661 = vpop.permute.xlu0 %2660
        %2662 = vrot.lane.b32.xlu0 %v2654, 64
        %v2663 = vpop.permute.xlu0 %2662
        %v2664 = vsel %vm657, %v2659, %v2661
        %v2665 = vsel %vm657, %v2661, %v2663
        %v2669 = vadd.f32 %v2649, %v2664
        %v2670 = vadd.f32 %v2650, %v2665
        %v2671 = vadd.f32 %v2651, %v2663
        %v2672 = vmul.f32 %v2054, %v1346
        %v2673 = vmul.f32 %v2055, %v1346
        %v2674 = vmul.f32 %v2058, %v1346
        %2678 = vrot.lane.b32.xlu0 %v2672, 48
        %v2679 = vpop.permute.xlu0 %2678
        %2680 = vrot.lane.b32.xlu0 %v2673, 48
        %v2681 = vpop.permute.xlu0 %2680
        %2682 = vrot.lane.b32.xlu0 %v2674, 48
        %v2683 = vpop.permute.xlu0 %2682
        %v2684 = vsel %vm680, %v2679, %v2681
        %v2685 = vsel %vm680, %v2681, %v2683
        %v2689 = vadd.f32 %v2669, %v2684
        %v2690 = vadd.f32 %v2670, %v2685
        %v2691 = vadd.f32 %v2671, %v2683
        %v2692 = vmul.f32 %v2054, %v1370
        %v2693 = vmul.f32 %v2055, %v1370
        %v2694 = vmul.f32 %v2058, %v1370
        %2698 = vrot.lane.b32.xlu0 %v2692, 32
        %v2699 = vpop.permute.xlu0 %2698
        %2700 = vrot.lane.b32.xlu0 %v2693, 32
        %v2701 = vpop.permute.xlu0 %2700
        %2702 = vrot.lane.b32.xlu0 %v2694, 32
        %v2703 = vpop.permute.xlu0 %2702
        %v2704 = vsel %vm703, %v2699, %v2701
        %v2705 = vsel %vm703, %v2701, %v2703
        %v2709 = vadd.f32 %v2689, %v2704
        %v2710 = vadd.f32 %v2690, %v2705
        %v2711 = vadd.f32 %v2691, %v2703
        %v2712 = vmul.f32 %v2709, %v1395
        %v2713 = vmul.f32 %v2710, %v1399
        %v2714 = vmul.f32 %v2711, %v1397
        %2718 = vrot.lane.b32.xlu0 %v2712, 124
        %v2719 = vpop.permute.xlu0 %2718
        %2720 = vrot.lane.b32.xlu0 %v2713, 124
        %v2721 = vpop.permute.xlu0 %2720
        %2722 = vrot.lane.b32.xlu0 %v2714, 124
        %v2723 = vpop.permute.xlu0 %2722
        %v2724 = vsel %vm1415, %v2719, %v2721
        %v2725 = vsel %vm1415, %v2721, %v2723
        %v2728 = vadd.f32 %v2587, %v2724
        %v2729 = vadd.f32 %v2588, %v2725
        %v2730 = vmul.f32 %v2054, %v1424
        %v2731 = vmul.f32 %v2055, %v1424
        %v2732 = vmul.f32 %v2058, %v1424
        %v2733 = vmul.f32 %v2054, %v1431
        %v2734 = vmul.f32 %v2055, %v1431
        %v2735 = vmul.f32 %v2058, %v1431
        %2739 = vrot.lane.b32.xlu0 %v2733, 112
        %v2740 = vpop.permute.xlu0 %2739
        %2741 = vrot.lane.b32.xlu0 %v2734, 112
        %v2742 = vpop.permute.xlu0 %2741
        %2743 = vrot.lane.b32.xlu0 %v2735, 112
        %v2744 = vpop.permute.xlu0 %2743
        %v2745 = vsel %vm588, %v2740, %v2742
        %v2746 = vsel %vm588, %v2742, %v2744
        %v2750 = vadd.f32 %v2730, %v2745
        %v2751 = vadd.f32 %v2731, %v2746
        %v2752 = vadd.f32 %v2732, %v2744
        %v2753 = vmul.f32 %v2054, %v1455
        %v2754 = vmul.f32 %v2055, %v1455
        %v2755 = vmul.f32 %v2058, %v1455
        %2759 = vrot.lane.b32.xlu0 %v2753, 96
        %v2760 = vpop.permute.xlu0 %2759
        %2761 = vrot.lane.b32.xlu0 %v2754, 96
        %v2762 = vpop.permute.xlu0 %2761
        %2763 = vrot.lane.b32.xlu0 %v2755, 96
        %v2764 = vpop.permute.xlu0 %2763
        %v2765 = vsel %vm611, %v2760, %v2762
        %v2766 = vsel %vm611, %v2762, %v2764
        %v2770 = vadd.f32 %v2750, %v2765
        %v2771 = vadd.f32 %v2751, %v2766
        %v2772 = vadd.f32 %v2752, %v2764
        %v2773 = vmul.f32 %v2054, %v1479
        %v2774 = vmul.f32 %v2055, %v1479
        %v2775 = vmul.f32 %v2058, %v1479
        %2779 = vrot.lane.b32.xlu0 %v2773, 80
        %v2780 = vpop.permute.xlu0 %2779
        %2781 = vrot.lane.b32.xlu0 %v2774, 80
        %v2782 = vpop.permute.xlu0 %2781
        %2783 = vrot.lane.b32.xlu0 %v2775, 80
        %v2784 = vpop.permute.xlu0 %2783
        %v2785 = vsel %vm634, %v2780, %v2782
        %v2786 = vsel %vm634, %v2782, %v2784
        %v2790 = vadd.f32 %v2770, %v2785
        %v2791 = vadd.f32 %v2771, %v2786
        %v2792 = vadd.f32 %v2772, %v2784
        %v2793 = vmul.f32 %v2054, %v1503
        %v2794 = vmul.f32 %v2055, %v1503
        %v2795 = vmul.f32 %v2058, %v1503
        %2799 = vrot.lane.b32.xlu0 %v2793, 64
        %v2800 = vpop.permute.xlu0 %2799
        %2801 = vrot.lane.b32.xlu0 %v2794, 64
        %v2802 = vpop.permute.xlu0 %2801
        %2803 = vrot.lane.b32.xlu0 %v2795, 64
        %v2804 = vpop.permute.xlu0 %2803
        %v2805 = vsel %vm657, %v2800, %v2802
        %v2806 = vsel %vm657, %v2802, %v2804
        %v2810 = vadd.f32 %v2790, %v2805
        %v2811 = vadd.f32 %v2791, %v2806
        %v2812 = vadd.f32 %v2792, %v2804
        %v2813 = vmul.f32 %v2054, %v1527
        %v2814 = vmul.f32 %v2055, %v1527
        %v2815 = vmul.f32 %v2058, %v1527
        %2819 = vrot.lane.b32.xlu0 %v2813, 48
        %v2820 = vpop.permute.xlu0 %2819
        %2821 = vrot.lane.b32.xlu0 %v2814, 48
        %v2822 = vpop.permute.xlu0 %2821
        %2823 = vrot.lane.b32.xlu0 %v2815, 48
        %v2824 = vpop.permute.xlu0 %2823
        %v2825 = vsel %vm680, %v2820, %v2822
        %v2826 = vsel %vm680, %v2822, %v2824
        %v2830 = vadd.f32 %v2810, %v2825
        %v2831 = vadd.f32 %v2811, %v2826
        %v2832 = vadd.f32 %v2812, %v2824
        %v2833 = vmul.f32 %v2054, %v1551
        %v2834 = vmul.f32 %v2055, %v1551
        %v2835 = vmul.f32 %v2058, %v1551
        %2839 = vrot.lane.b32.xlu0 %v2833, 32
        %v2840 = vpop.permute.xlu0 %2839
        %2841 = vrot.lane.b32.xlu0 %v2834, 32
        %v2842 = vpop.permute.xlu0 %2841
        %2843 = vrot.lane.b32.xlu0 %v2835, 32
        %v2844 = vpop.permute.xlu0 %2843
        %v2845 = vsel %vm703, %v2840, %v2842
        %v2846 = vsel %vm703, %v2842, %v2844
        %v2850 = vadd.f32 %v2830, %v2845
        %v2851 = vadd.f32 %v2831, %v2846
        %v2852 = vadd.f32 %v2832, %v2844
        %v2853 = vmul.f32 %v2850, %v1576
        %v2854 = vmul.f32 %v2851, %v1580
        %v2855 = vmul.f32 %v2852, %v1578
        %2859 = vrot.lane.b32.xlu0 %v2853, 123
        %v2860 = vpop.permute.xlu0 %2859
        %2861 = vrot.lane.b32.xlu0 %v2854, 123
        %v2862 = vpop.permute.xlu0 %2861
        %2863 = vrot.lane.b32.xlu0 %v2855, 123
        %v2864 = vpop.permute.xlu0 %2863
        %v2865 = vsel %vm1596, %v2860, %v2862
        %v2866 = vsel %vm1596, %v2862, %v2864
        %v2869 = vadd.f32 %v2728, %v2865
        %v2870 = vadd.f32 %v2729, %v2866
        %v2871 = vmul.f32 %v2054, %v1605
        %v2872 = vmul.f32 %v2055, %v1605
        %v2873 = vmul.f32 %v2058, %v1605
        %v2874 = vmul.f32 %v2054, %v1612
        %v2875 = vmul.f32 %v2055, %v1612
        %v2876 = vmul.f32 %v2058, %v1612
        %2880 = vrot.lane.b32.xlu0 %v2874, 112
        %v2881 = vpop.permute.xlu0 %2880
        %2882 = vrot.lane.b32.xlu0 %v2875, 112
        %v2883 = vpop.permute.xlu0 %2882
        %2884 = vrot.lane.b32.xlu0 %v2876, 112
        %v2885 = vpop.permute.xlu0 %2884
        %v2886 = vsel %vm588, %v2881, %v2883
        %v2887 = vsel %vm588, %v2883, %v2885
        %v2891 = vadd.f32 %v2871, %v2886
        %v2892 = vadd.f32 %v2872, %v2887
        %v2893 = vadd.f32 %v2873, %v2885
        %v2894 = vmul.f32 %v2054, %v1636
        %v2895 = vmul.f32 %v2055, %v1636
        %v2896 = vmul.f32 %v2058, %v1636
        %2900 = vrot.lane.b32.xlu0 %v2894, 96
        %v2901 = vpop.permute.xlu0 %2900
        %2902 = vrot.lane.b32.xlu0 %v2895, 96
        %v2903 = vpop.permute.xlu0 %2902
        %2904 = vrot.lane.b32.xlu0 %v2896, 96
        %v2905 = vpop.permute.xlu0 %2904
        %v2906 = vsel %vm611, %v2901, %v2903
        %v2907 = vsel %vm611, %v2903, %v2905
        %v2911 = vadd.f32 %v2891, %v2906
        %v2912 = vadd.f32 %v2892, %v2907
        %v2913 = vadd.f32 %v2893, %v2905
        %v2914 = vmul.f32 %v2054, %v1660
        %v2915 = vmul.f32 %v2055, %v1660
        %v2916 = vmul.f32 %v2058, %v1660
        %2920 = vrot.lane.b32.xlu0 %v2914, 80
        %v2921 = vpop.permute.xlu0 %2920
        %2922 = vrot.lane.b32.xlu0 %v2915, 80
        %v2923 = vpop.permute.xlu0 %2922
        %2924 = vrot.lane.b32.xlu0 %v2916, 80
        %v2925 = vpop.permute.xlu0 %2924
        %v2926 = vsel %vm634, %v2921, %v2923
        %v2927 = vsel %vm634, %v2923, %v2925
        %v2931 = vadd.f32 %v2911, %v2926
        %v2932 = vadd.f32 %v2912, %v2927
        %v2933 = vadd.f32 %v2913, %v2925
        %v2934 = vmul.f32 %v2054, %v1684
        %v2935 = vmul.f32 %v2055, %v1684
        %v2936 = vmul.f32 %v2058, %v1684
        %2940 = vrot.lane.b32.xlu0 %v2934, 64
        %v2941 = vpop.permute.xlu0 %2940
        %2942 = vrot.lane.b32.xlu0 %v2935, 64
        %v2943 = vpop.permute.xlu0 %2942
        %2944 = vrot.lane.b32.xlu0 %v2936, 64
        %v2945 = vpop.permute.xlu0 %2944
        %v2946 = vsel %vm657, %v2941, %v2943
        %v2947 = vsel %vm657, %v2943, %v2945
        %v2951 = vadd.f32 %v2931, %v2946
        %v2952 = vadd.f32 %v2932, %v2947
        %v2953 = vadd.f32 %v2933, %v2945
        %v2954 = vmul.f32 %v2054, %v1708
        %v2955 = vmul.f32 %v2055, %v1708
        %v2956 = vmul.f32 %v2058, %v1708
        %2960 = vrot.lane.b32.xlu0 %v2954, 48
        %v2961 = vpop.permute.xlu0 %2960
        %2962 = vrot.lane.b32.xlu0 %v2955, 48
        %v2963 = vpop.permute.xlu0 %2962
        %2964 = vrot.lane.b32.xlu0 %v2956, 48
        %v2965 = vpop.permute.xlu0 %2964
        %v2966 = vsel %vm680, %v2961, %v2963
        %v2967 = vsel %vm680, %v2963, %v2965
        %v2971 = vadd.f32 %v2951, %v2966
        %v2972 = vadd.f32 %v2952, %v2967
        %v2973 = vadd.f32 %v2953, %v2965
        %v2974 = vmul.f32 %v2054, %v1732
        %v2975 = vmul.f32 %v2055, %v1732
        %v2976 = vmul.f32 %v2058, %v1732
        %2980 = vrot.lane.b32.xlu0 %v2974, 32
        %v2981 = vpop.permute.xlu0 %2980
        %2982 = vrot.lane.b32.xlu0 %v2975, 32
        %v2983 = vpop.permute.xlu0 %2982
        %2984 = vrot.lane.b32.xlu0 %v2976, 32
        %v2985 = vpop.permute.xlu0 %2984
        %v2986 = vsel %vm703, %v2981, %v2983
        %v2987 = vsel %vm703, %v2983, %v2985
        %v2991 = vadd.f32 %v2971, %v2986
        %v2992 = vadd.f32 %v2972, %v2987
        %v2993 = vadd.f32 %v2973, %v2985
        %v2994 = vmul.f32 %v2991, %v1757
        %v2995 = vmul.f32 %v2992, %v1761
        %v2996 = vmul.f32 %v2993, %v1759
        %3000 = vrot.lane.b32.xlu0 %v2994, 122
        %v3001 = vpop.permute.xlu0 %3000
        %3002 = vrot.lane.b32.xlu0 %v2995, 122
        %v3003 = vpop.permute.xlu0 %3002
        %3004 = vrot.lane.b32.xlu0 %v2996, 122
        %v3005 = vpop.permute.xlu0 %3004
        %v3006 = vsel %vm1777, %v3001, %v3003
        %v3007 = vsel %vm1777, %v3003, %v3005
        %v3010 = vadd.f32 %v2869, %v3006
        %v3011 = vadd.f32 %v2870, %v3007
        %v3012 = vlaneseq
        %v3013 = vshrl.u32 %v3012, 7
        %v3014 = vsub.s32 0, %v3013
        %v3015 = vrot.slane %v3010, %v3014
        %v3016 = vlaneseq
        %v3017 = vshrl.u32 %v3016, 7
        %v3018 = vsub.s32 0, %v3017
        %v3019 = vrot.slane %v3011, %v3018
        %v3020 = vmul.f32 %v1787, %v3015
        %v3021 = vmul.f32 %v1787, %v3019
        %v3022 = vlaneseq
        %v3023 = vshrl.u32 %v3022, 7
        %v3024 = vsub.s32 1, %v3023
        %v3025 = vrot.slane %v3010, %v3024
        %v3026 = vlaneseq
        %v3027 = vshrl.u32 %v3026, 7
        %v3028 = vsub.s32 1, %v3027
        %v3029 = vrot.slane %v3011, %v3028
        %v3030 = vmul.f32 %v1801, %v3025
        %v3031 = vmul.f32 %v1801, %v3029
        %v3032 = vadd.f32 %v3020, %v3030
        %v3033 = vadd.f32 %v3021, %v3031
        %v3034 = vlaneseq
        %v3035 = vshrl.u32 %v3034, 7
        %v3036 = vsub.s32 2, %v3035
        %v3037 = vrot.slane %v3010, %v3036
        %v3038 = vlaneseq
        %v3039 = vshrl.u32 %v3038, 7
        %v3040 = vsub.s32 2, %v3039
        %v3041 = vrot.slane %v3011, %v3040
        %v3042 = vmul.f32 %v1817, %v3037
        %v3043 = vmul.f32 %v1817, %v3041
        %v3044 = vadd.f32 %v3032, %v3042
        %v3045 = vadd.f32 %v3033, %v3043
        %v3046 = vlaneseq
        %v3047 = vshrl.u32 %v3046, 7
        %v3048 = vsub.s32 3, %v3047
        %v3049 = vrot.slane %v3010, %v3048
        %v3050 = vlaneseq
        %v3051 = vshrl.u32 %v3050, 7
        %v3052 = vsub.s32 3, %v3051
        %v3053 = vrot.slane %v3011, %v3052
        %v3054 = vmul.f32 %v1833, %v3049
        %v3055 = vmul.f32 %v1833, %v3053
        %v3056 = vadd.f32 %v3044, %v3054
        %v3057 = vadd.f32 %v3045, %v3055
        %v3058 = vlaneseq
        %v3059 = vshrl.u32 %v3058, 7
        %v3060 = vsub.s32 4, %v3059
        %v3061 = vrot.slane %v3010, %v3060
        %v3062 = vlaneseq
        %v3063 = vshrl.u32 %v3062, 7
        %v3064 = vsub.s32 4, %v3063
        %v3065 = vrot.slane %v3011, %v3064
        %v3066 = vmul.f32 %v1849, %v3061
        %v3067 = vmul.f32 %v1849, %v3065
        %v3068 = vadd.f32 %v3056, %v3066
        %v3069 = vadd.f32 %v3057, %v3067
        %v3070 = vlaneseq
        %v3071 = vshrl.u32 %v3070, 7
        %v3072 = vsub.s32 5, %v3071
        %v3073 = vrot.slane %v3010, %v3072
        %v3074 = vlaneseq
        %v3075 = vshrl.u32 %v3074, 7
        %v3076 = vsub.s32 5, %v3075
        %v3077 = vrot.slane %v3011, %v3076
        %v3078 = vmul.f32 %v1865, %v3073
        %v3079 = vmul.f32 %v1865, %v3077
        %v3080 = vadd.f32 %v3068, %v3078
        %v3081 = vadd.f32 %v3069, %v3079
        %v3082 = vlaneseq
        %v3083 = vshrl.u32 %v3082, 7
        %v3084 = vsub.s32 6, %v3083
        %v3085 = vrot.slane %v3010, %v3084
        %v3086 = vlaneseq
        %v3087 = vshrl.u32 %v3086, 7
        %v3088 = vsub.s32 6, %v3087
        %v3089 = vrot.slane %v3011, %v3088
        %v3090 = vmul.f32 %v1881, %v3085
        %v3091 = vmul.f32 %v1881, %v3089
        %v3092 = vadd.f32 %v3080, %v3090
        %v3093 = vadd.f32 %v3081, %v3091
        %v3094 = vlaneseq
        %v3095 = vshrl.u32 %v3094, 7
        %v3096 = vsub.s32 7, %v3095
        %v3097 = vrot.slane %v3010, %v3096
        %v3098 = vlaneseq
        %v3099 = vshrl.u32 %v3098, 7
        %v3100 = vsub.s32 7, %v3099
        %v3101 = vrot.slane %v3011, %v3100
        %v3102 = vmul.f32 %v1897, %v3097
        %v3103 = vmul.f32 %v1897, %v3101
        %v3104 = vadd.f32 %v3092, %v3102
        %v3105 = vadd.f32 %v3093, %v3103
        %v3106 = vadd.f32 %v3104, %v1914
        %v3107 = vadd.f32 %v3105, %v1914
        %v3110 = vcombine.low %v3106, %v3107
        %s3112 = scalar_lea.vmem %s288, 8 [#allocation8]
        %3113 = vst [vmem:[%s3112] sm:$0xff] %v3110
        %s3114 = scalar_lea.vmem %s260, 16 [#allocation5]
        %v3115 = vld [vmem:[%s3114] sm:$0xff]
        %v3116 = vld [vmem:[#allocation2] sm:$0xff]
        %v3117 = vsub.f32 %v3115, %v3116
        %v3118 = vmul.f32 %v3117, 0.5
        %v3119 = vadd.f32 %v3116, %v3118
        %vm3120 = vcmp.ge.f32.partialorder %v3119, 1.0
        %v3121 = vsel %vm3120, 0.0, %v3119
        %3122 = vst [vmem:[#allocation2] sm:$0xff] %v3121
        %v3123 = vsel %vm3120, 1, 0
        %v3124 = vcvt.s32.f32 %v3123
        %v3126 = vlaneseq
        %v3127 = vshrl.u32 %v3126, 7
        %v3128 = vsub.s32 0, %v3127
        %v3129 = vrot.slane %v3124, %v3128
        %v3130 = vlaneseq
        %v3131 = vshrl.u32 %v3130, 7
        %v3132 = vsub.s32 4, %v3131
        %v3133 = vrot.slane %v3124, %v3132
        %v3136 = vlaneseq
        %v3137 = vshrl.u32 %v3136, 7
        %v3138 = vsub.s32 0, %v3137
        %v3139 = vrot.slane %v3129, %v3138
        %v3140 = vlaneseq
        %v3141 = vshrl.u32 %v3140, 7
        %v3142 = vsub.s32 0, %v3141
        %v3143 = vrot.slane %v3133, %v3142
        %v3144 = vmul.f32 %v419, %v3139
        %v3145 = vmul.f32 %v419, %v3143
        %v3146 = vlaneseq
        %v3147 = vshrl.u32 %v3146, 7
        %v3148 = vsub.s32 1, %v3147
        %v3149 = vrot.slane %v3124, %v3148
        %v3150 = vlaneseq
        %v3151 = vshrl.u32 %v3150, 7
        %v3152 = vsub.s32 5, %v3151
        %v3153 = vrot.slane %v3124, %v3152
        %v3156 = vlaneseq
        %v3157 = vshrl.u32 %v3156, 7
        %v3158 = vsub.s32 1, %v3157
        %v3159 = vrot.slane %v3149, %v3158
        %v3160 = vlaneseq
        %v3161 = vshrl.u32 %v3160, 7
        %v3162 = vsub.s32 1, %v3161
        %v3163 = vrot.slane %v3153, %v3162
        %v3164 = vmul.f32 %v444, %v3159
        %v3165 = vmul.f32 %v444, %v3163
        %v3166 = vadd.f32 %v3144, %v3164
        %v3167 = vadd.f32 %v3145, %v3165
        %v3168 = vlaneseq
        %v3169 = vshrl.u32 %v3168, 7
        %v3170 = vsub.s32 2, %v3169
        %v3171 = vrot.slane %v3124, %v3170
        %v3172 = vlaneseq
        %v3173 = vshrl.u32 %v3172, 7
        %v3174 = vsub.s32 6, %v3173
        %v3175 = vrot.slane %v3124, %v3174
        %v3178 = vlaneseq
        %v3179 = vshrl.u32 %v3178, 7
        %v3180 = vsub.s32 2, %v3179
        %v3181 = vrot.slane %v3171, %v3180
        %v3182 = vlaneseq
        %v3183 = vshrl.u32 %v3182, 7
        %v3184 = vsub.s32 2, %v3183
        %v3185 = vrot.slane %v3175, %v3184
        %v3186 = vmul.f32 %v470, %v3181
        %v3187 = vmul.f32 %v470, %v3185
        %v3188 = vadd.f32 %v3166, %v3186
        %v3189 = vadd.f32 %v3167, %v3187
        %v3190 = vlaneseq
        %v3191 = vshrl.u32 %v3190, 7
        %v3192 = vsub.s32 3, %v3191
        %v3193 = vrot.slane %v3124, %v3192
        %v3194 = vlaneseq
        %v3195 = vshrl.u32 %v3194, 7
        %v3196 = vsub.s32 7, %v3195
        %v3197 = vrot.slane %v3124, %v3196
        %v3200 = vlaneseq
        %v3201 = vshrl.u32 %v3200, 7
        %v3202 = vsub.s32 3, %v3201
        %v3203 = vrot.slane %v3193, %v3202
        %v3204 = vlaneseq
        %v3205 = vshrl.u32 %v3204, 7
        %v3206 = vsub.s32 3, %v3205
        %v3207 = vrot.slane %v3197, %v3206
        %v3208 = vmul.f32 %v496, %v3203
        %v3209 = vmul.f32 %v496, %v3207
        %v3210 = vadd.f32 %v3188, %v3208
        %v3211 = vadd.f32 %v3189, %v3209
        %v3212 = vadd.f32 %v3210, %v523
        %v3213 = vadd.f32 %v3211, %v523
        %v3214 = vld [vmem:[#allocation3] sm:$0xff]
        %v3215 = vld [vmem:[#allocation3 + $0x8] sm:$0xff]
        %v3216 = vsub.f32 %v3212, %v3214
        %v3217 = vsub.f32 %v3213, %v3215
        %v3218 = vmul.f32 %v3216, 0.5
        %v3219 = vmul.f32 %v3217, 0.5
        %v3220 = vadd.f32 %v3214, %v3218
        %v3221 = vadd.f32 %v3215, %v3219
        %vm3222 = vcmp.ge.f32.partialorder %v3220, 1.0
        %vm3223 = vcmp.ge.f32.partialorder %v3221, 1.0
        %v3224 = vsel %vm3222, 0.0, %v3220
        %v3225 = vsel %vm3223, 0.0, %v3221
        %3226 = vst [vmem:[#allocation3] sm:$0xff] %v3224
        %3227 = vst [vmem:[#allocation3 + $0x8] sm:$0xff] %v3225
        %v3228 = vsel %vm3222, 1, 0
        %v3229 = vsel %vm3223, 1, 0
        %v3230 = vcvt.s32.f32 %v3228
        %v3231 = vcvt.s32.f32 %v3229
        %3234 = vrot.lane.b32.xlu0 %v3230, 51
        %v3235 = vpop.permute.xlu0 %3234
        %3236 = vrot.lane.b32.xlu0 %v3231, 51
        %v3237 = vpop.permute.xlu0 %3236
        %v3238 = vsel %vm551, %v3235, %v3237
        %3242 = vst.msk [vmem:[#allocation4] sm:$0xff] %vm556, %v3235
        %3243 = vst [vmem:[#allocation4 + $0x8] sm:$0xff] %v3238
        %3244 = vst.msk [vmem:[#allocation4 + $0x10] sm:$0xff] %vm551, %v3237
        %v3245 = vld [vmem:[#allocation4] sm:$0xff]
        %v3246 = vld [vmem:[#allocation4 + $0x8] sm:$0xff]
        %v3247 = vmul.f32 %v3245, %v565
        %v3248 = vmul.f32 %v3246, %v565
        %v3249 = vld [vmem:[#allocation4 + $0x10] sm:$0xff]
        %v3250 = vmul.f32 %v3245, %v574
        %v3251 = vmul.f32 %v3246, %v574
        %v3252 = vmul.f32 %v3249, %v574
        %3256 = vrot.lane.b32.xlu0 %v3250, 112
        %v3257 = vpop.permute.xlu0 %3256
        %3258 = vrot.lane.b32.xlu0 %v3251, 112
        %v3259 = vpop.permute.xlu0 %3258
        %3260 = vrot.lane.b32.xlu0 %v3252, 112
        %v3261 = vpop.permute.xlu0 %3260
        %v3262 = vsel %vm588, %v3257, %v3259
        %v3263 = vsel %vm588, %v3259, %v3261
        %v3266 = vadd.f32 %v3247, %v3262
        %v3267 = vadd.f32 %v3248, %v3263
        %v3268 = vmul.f32 %v3245, %v597
        %v3269 = vmul.f32 %v3246, %v597
        %v3270 = vmul.f32 %v3249, %v597
        %3274 = vrot.lane.b32.xlu0 %v3268, 96
        %v3275 = vpop.permute.xlu0 %3274
        %3276 = vrot.lane.b32.xlu0 %v3269, 96
        %v3277 = vpop.permute.xlu0 %3276
        %3278 = vrot.lane.b32.xlu0 %v3270, 96
        %v3279 = vpop.permute.xlu0 %3278
        %v3280 = vsel %vm611, %v3275, %v3277
        %v3281 = vsel %vm611, %v3277, %v3279
        %v3284 = vadd.f32 %v3266, %v3280
        %v3285 = vadd.f32 %v3267, %v3281
        %v3286 = vmul.f32 %v3245, %v620
        %v3287 = vmul.f32 %v3246, %v620
        %v3288 = vmul.f32 %v3249, %v620
        %3292 = vrot.lane.b32.xlu0 %v3286, 80
        %v3293 = vpop.permute.xlu0 %3292
        %3294 = vrot.lane.b32.xlu0 %v3287, 80
        %v3295 = vpop.permute.xlu0 %3294
        %3296 = vrot.lane.b32.xlu0 %v3288, 80
        %v3297 = vpop.permute.xlu0 %3296
        %v3298 = vsel %vm634, %v3293, %v3295
        %v3299 = vsel %vm634, %v3295, %v3297
        %v3302 = vadd.f32 %v3284, %v3298
        %v3303 = vadd.f32 %v3285, %v3299
        %v3304 = vmul.f32 %v3245, %v643
        %v3305 = vmul.f32 %v3246, %v643
        %v3306 = vmul.f32 %v3249, %v643
        %3310 = vrot.lane.b32.xlu0 %v3304, 64
        %v3311 = vpop.permute.xlu0 %3310
        %3312 = vrot.lane.b32.xlu0 %v3305, 64
        %v3313 = vpop.permute.xlu0 %3312
        %3314 = vrot.lane.b32.xlu0 %v3306, 64
        %v3315 = vpop.permute.xlu0 %3314
        %v3316 = vsel %vm657, %v3311, %v3313
        %v3317 = vsel %vm657, %v3313, %v3315
        %v3320 = vadd.f32 %v3302, %v3316
        %v3321 = vadd.f32 %v3303, %v3317
        %v3322 = vmul.f32 %v3245, %v666
        %v3323 = vmul.f32 %v3246, %v666
        %v3324 = vmul.f32 %v3249, %v666
        %3328 = vrot.lane.b32.xlu0 %v3322, 48
        %v3329 = vpop.permute.xlu0 %3328
        %3330 = vrot.lane.b32.xlu0 %v3323, 48
        %v3331 = vpop.permute.xlu0 %3330
        %3332 = vrot.lane.b32.xlu0 %v3324, 48
        %v3333 = vpop.permute.xlu0 %3332
        %v3334 = vsel %vm680, %v3329, %v3331
        %v3335 = vsel %vm680, %v3331, %v3333
        %v3338 = vadd.f32 %v3320, %v3334
        %v3339 = vadd.f32 %v3321, %v3335
        %v3340 = vmul.f32 %v3245, %v689
        %v3341 = vmul.f32 %v3246, %v689
        %v3342 = vmul.f32 %v3249, %v689
        %3346 = vrot.lane.b32.xlu0 %v3340, 32
        %v3347 = vpop.permute.xlu0 %3346
        %3348 = vrot.lane.b32.xlu0 %v3341, 32
        %v3349 = vpop.permute.xlu0 %3348
        %3350 = vrot.lane.b32.xlu0 %v3342, 32
        %v3351 = vpop.permute.xlu0 %3350
        %v3352 = vsel %vm703, %v3347, %v3349
        %v3353 = vsel %vm703, %v3349, %v3351
        %v3356 = vadd.f32 %v3338, %v3352
        %v3357 = vadd.f32 %v3339, %v3353
        %v3358 = vmul.f32 %v3356, %v344
        %v3359 = vmul.f32 %v3357, %v345
        %v3360 = vmul.f32 %v3245, %v714
        %v3361 = vmul.f32 %v3246, %v714
        %v3362 = vmul.f32 %v3249, %v714
        %v3363 = vmul.f32 %v3245, %v721
        %v3364 = vmul.f32 %v3246, %v721
        %v3365 = vmul.f32 %v3249, %v721
        %3369 = vrot.lane.b32.xlu0 %v3363, 112
        %v3370 = vpop.permute.xlu0 %3369
        %3371 = vrot.lane.b32.xlu0 %v3364, 112
        %v3372 = vpop.permute.xlu0 %3371
        %3373 = vrot.lane.b32.xlu0 %v3365, 112
        %v3374 = vpop.permute.xlu0 %3373
        %v3375 = vsel %vm588, %v3370, %v3372
        %v3376 = vsel %vm588, %v3372, %v3374
        %v3380 = vadd.f32 %v3360, %v3375
        %v3381 = vadd.f32 %v3361, %v3376
        %v3382 = vadd.f32 %v3362, %v3374
        %v3383 = vmul.f32 %v3245, %v745
        %v3384 = vmul.f32 %v3246, %v745
        %v3385 = vmul.f32 %v3249, %v745
        %3389 = vrot.lane.b32.xlu0 %v3383, 96
        %v3390 = vpop.permute.xlu0 %3389
        %3391 = vrot.lane.b32.xlu0 %v3384, 96
        %v3392 = vpop.permute.xlu0 %3391
        %3393 = vrot.lane.b32.xlu0 %v3385, 96
        %v3394 = vpop.permute.xlu0 %3393
        %v3395 = vsel %vm611, %v3390, %v3392
        %v3396 = vsel %vm611, %v3392, %v3394
        %v3400 = vadd.f32 %v3380, %v3395
        %v3401 = vadd.f32 %v3381, %v3396
        %v3402 = vadd.f32 %v3382, %v3394
        %v3403 = vmul.f32 %v3245, %v769
        %v3404 = vmul.f32 %v3246, %v769
        %v3405 = vmul.f32 %v3249, %v769
        %3409 = vrot.lane.b32.xlu0 %v3403, 80
        %v3410 = vpop.permute.xlu0 %3409
        %3411 = vrot.lane.b32.xlu0 %v3404, 80
        %v3412 = vpop.permute.xlu0 %3411
        %3413 = vrot.lane.b32.xlu0 %v3405, 80
        %v3414 = vpop.permute.xlu0 %3413
        %v3415 = vsel %vm634, %v3410, %v3412
        %v3416 = vsel %vm634, %v3412, %v3414
        %v3420 = vadd.f32 %v3400, %v3415
        %v3421 = vadd.f32 %v3401, %v3416
        %v3422 = vadd.f32 %v3402, %v3414
        %v3423 = vmul.f32 %v3245, %v793
        %v3424 = vmul.f32 %v3246, %v793
        %v3425 = vmul.f32 %v3249, %v793
        %3429 = vrot.lane.b32.xlu0 %v3423, 64
        %v3430 = vpop.permute.xlu0 %3429
        %3431 = vrot.lane.b32.xlu0 %v3424, 64
        %v3432 = vpop.permute.xlu0 %3431
        %3433 = vrot.lane.b32.xlu0 %v3425, 64
        %v3434 = vpop.permute.xlu0 %3433
        %v3435 = vsel %vm657, %v3430, %v3432
        %v3436 = vsel %vm657, %v3432, %v3434
        %v3440 = vadd.f32 %v3420, %v3435
        %v3441 = vadd.f32 %v3421, %v3436
        %v3442 = vadd.f32 %v3422, %v3434
        %v3443 = vmul.f32 %v3245, %v817
        %v3444 = vmul.f32 %v3246, %v817
        %v3445 = vmul.f32 %v3249, %v817
        %3449 = vrot.lane.b32.xlu0 %v3443, 48
        %v3450 = vpop.permute.xlu0 %3449
        %3451 = vrot.lane.b32.xlu0 %v3444, 48
        %v3452 = vpop.permute.xlu0 %3451
        %3453 = vrot.lane.b32.xlu0 %v3445, 48
        %v3454 = vpop.permute.xlu0 %3453
        %v3455 = vsel %vm680, %v3450, %v3452
        %v3456 = vsel %vm680, %v3452, %v3454
        %v3460 = vadd.f32 %v3440, %v3455
        %v3461 = vadd.f32 %v3441, %v3456
        %v3462 = vadd.f32 %v3442, %v3454
        %v3463 = vmul.f32 %v3245, %v841
        %v3464 = vmul.f32 %v3246, %v841
        %v3465 = vmul.f32 %v3249, %v841
        %3469 = vrot.lane.b32.xlu0 %v3463, 32
        %v3470 = vpop.permute.xlu0 %3469
        %3471 = vrot.lane.b32.xlu0 %v3464, 32
        %v3472 = vpop.permute.xlu0 %3471
        %3473 = vrot.lane.b32.xlu0 %v3465, 32
        %v3474 = vpop.permute.xlu0 %3473
        %v3475 = vsel %vm703, %v3470, %v3472
        %v3476 = vsel %vm703, %v3472, %v3474
        %v3480 = vadd.f32 %v3460, %v3475
        %v3481 = vadd.f32 %v3461, %v3476
        %v3482 = vadd.f32 %v3462, %v3474
        %v3483 = vmul.f32 %v3480, %v866
        %v3484 = vmul.f32 %v3481, %v870
        %v3485 = vmul.f32 %v3482, %v868
        %3489 = vrot.lane.b32.xlu0 %v3483, 127
        %v3490 = vpop.permute.xlu0 %3489
        %3491 = vrot.lane.b32.xlu0 %v3484, 127
        %v3492 = vpop.permute.xlu0 %3491
        %3493 = vrot.lane.b32.xlu0 %v3485, 127
        %v3494 = vpop.permute.xlu0 %3493
        %v3495 = vsel %vm886, %v3490, %v3492
        %v3496 = vsel %vm886, %v3492, %v3494
        %v3499 = vadd.f32 %v3358, %v3495
        %v3500 = vadd.f32 %v3359, %v3496
        %v3501 = vmul.f32 %v3245, %v895
        %v3502 = vmul.f32 %v3246, %v895
        %v3503 = vmul.f32 %v3249, %v895
        %v3504 = vmul.f32 %v3245, %v902
        %v3505 = vmul.f32 %v3246, %v902
        %v3506 = vmul.f32 %v3249, %v902
        %3510 = vrot.lane.b32.xlu0 %v3504, 112
        %v3511 = vpop.permute.xlu0 %3510
        %3512 = vrot.lane.b32.xlu0 %v3505, 112
        %v3513 = vpop.permute.xlu0 %3512
        %3514 = vrot.lane.b32.xlu0 %v3506, 112
        %v3515 = vpop.permute.xlu0 %3514
        %v3516 = vsel %vm588, %v3511, %v3513
        %v3517 = vsel %vm588, %v3513, %v3515
        %v3521 = vadd.f32 %v3501, %v3516
        %v3522 = vadd.f32 %v3502, %v3517
        %v3523 = vadd.f32 %v3503, %v3515
        %v3524 = vmul.f32 %v3245, %v926
        %v3525 = vmul.f32 %v3246, %v926
        %v3526 = vmul.f32 %v3249, %v926
        %3530 = vrot.lane.b32.xlu0 %v3524, 96
        %v3531 = vpop.permute.xlu0 %3530
        %3532 = vrot.lane.b32.xlu0 %v3525, 96
        %v3533 = vpop.permute.xlu0 %3532
        %3534 = vrot.lane.b32.xlu0 %v3526, 96
        %v3535 = vpop.permute.xlu0 %3534
        %v3536 = vsel %vm611, %v3531, %v3533
        %v3537 = vsel %vm611, %v3533, %v3535
        %v3541 = vadd.f32 %v3521, %v3536
        %v3542 = vadd.f32 %v3522, %v3537
        %v3543 = vadd.f32 %v3523, %v3535
        %v3544 = vmul.f32 %v3245, %v950
        %v3545 = vmul.f32 %v3246, %v950
        %v3546 = vmul.f32 %v3249, %v950
        %3550 = vrot.lane.b32.xlu0 %v3544, 80
        %v3551 = vpop.permute.xlu0 %3550
        %3552 = vrot.lane.b32.xlu0 %v3545, 80
        %v3553 = vpop.permute.xlu0 %3552
        %3554 = vrot.lane.b32.xlu0 %v3546, 80
        %v3555 = vpop.permute.xlu0 %3554
        %v3556 = vsel %vm634, %v3551, %v3553
        %v3557 = vsel %vm634, %v3553, %v3555
        %v3561 = vadd.f32 %v3541, %v3556
        %v3562 = vadd.f32 %v3542, %v3557
        %v3563 = vadd.f32 %v3543, %v3555
        %v3564 = vmul.f32 %v3245, %v974
        %v3565 = vmul.f32 %v3246, %v974
        %v3566 = vmul.f32 %v3249, %v974
        %3570 = vrot.lane.b32.xlu0 %v3564, 64
        %v3571 = vpop.permute.xlu0 %3570
        %3572 = vrot.lane.b32.xlu0 %v3565, 64
        %v3573 = vpop.permute.xlu0 %3572
        %3574 = vrot.lane.b32.xlu0 %v3566, 64
        %v3575 = vpop.permute.xlu0 %3574
        %v3576 = vsel %vm657, %v3571, %v3573
        %v3577 = vsel %vm657, %v3573, %v3575
        %v3581 = vadd.f32 %v3561, %v3576
        %v3582 = vadd.f32 %v3562, %v3577
        %v3583 = vadd.f32 %v3563, %v3575
        %v3584 = vmul.f32 %v3245, %v998
        %v3585 = vmul.f32 %v3246, %v998
        %v3586 = vmul.f32 %v3249, %v998
        %3590 = vrot.lane.b32.xlu0 %v3584, 48
        %v3591 = vpop.permute.xlu0 %3590
        %3592 = vrot.lane.b32.xlu0 %v3585, 48
        %v3593 = vpop.permute.xlu0 %3592
        %3594 = vrot.lane.b32.xlu0 %v3586, 48
        %v3595 = vpop.permute.xlu0 %3594
        %v3596 = vsel %vm680, %v3591, %v3593
        %v3597 = vsel %vm680, %v3593, %v3595
        %v3601 = vadd.f32 %v3581, %v3596
        %v3602 = vadd.f32 %v3582, %v3597
        %v3603 = vadd.f32 %v3583, %v3595
        %v3604 = vmul.f32 %v3245, %v1022
        %v3605 = vmul.f32 %v3246, %v1022
        %v3606 = vmul.f32 %v3249, %v1022
        %3610 = vrot.lane.b32.xlu0 %v3604, 32
        %v3611 = vpop.permute.xlu0 %3610
        %3612 = vrot.lane.b32.xlu0 %v3605, 32
        %v3613 = vpop.permute.xlu0 %3612
        %3614 = vrot.lane.b32.xlu0 %v3606, 32
        %v3615 = vpop.permute.xlu0 %3614
        %v3616 = vsel %vm703, %v3611, %v3613
        %v3617 = vsel %vm703, %v3613, %v3615
        %v3621 = vadd.f32 %v3601, %v3616
        %v3622 = vadd.f32 %v3602, %v3617
        %v3623 = vadd.f32 %v3603, %v3615
        %v3624 = vmul.f32 %v3621, %v1047
        %v3625 = vmul.f32 %v3622, %v1051
        %v3626 = vmul.f32 %v3623, %v1049
        %3630 = vrot.lane.b32.xlu0 %v3624, 126
        %v3631 = vpop.permute.xlu0 %3630
        %3632 = vrot.lane.b32.xlu0 %v3625, 126
        %v3633 = vpop.permute.xlu0 %3632
        %3634 = vrot.lane.b32.xlu0 %v3626, 126
        %v3635 = vpop.permute.xlu0 %3634
        %v3636 = vsel %vm1067, %v3631, %v3633
        %v3637 = vsel %vm1067, %v3633, %v3635
        %v3640 = vadd.f32 %v3499, %v3636
        %v3641 = vadd.f32 %v3500, %v3637
        %v3642 = vmul.f32 %v3245, %v1076
        %v3643 = vmul.f32 %v3246, %v1076
        %v3644 = vmul.f32 %v3249, %v1076
        %v3645 = vmul.f32 %v3245, %v1083
        %v3646 = vmul.f32 %v3246, %v1083
        %v3647 = vmul.f32 %v3249, %v1083
        %3651 = vrot.lane.b32.xlu0 %v3645, 112
        %v3652 = vpop.permute.xlu0 %3651
        %3653 = vrot.lane.b32.xlu0 %v3646, 112
        %v3654 = vpop.permute.xlu0 %3653
        %3655 = vrot.lane.b32.xlu0 %v3647, 112
        %v3656 = vpop.permute.xlu0 %3655
        %v3657 = vsel %vm588, %v3652, %v3654
        %v3658 = vsel %vm588, %v3654, %v3656
        %v3662 = vadd.f32 %v3642, %v3657
        %v3663 = vadd.f32 %v3643, %v3658
        %v3664 = vadd.f32 %v3644, %v3656
        %v3665 = vmul.f32 %v3245, %v1107
        %v3666 = vmul.f32 %v3246, %v1107
        %v3667 = vmul.f32 %v3249, %v1107
        %3671 = vrot.lane.b32.xlu0 %v3665, 96
        %v3672 = vpop.permute.xlu0 %3671
        %3673 = vrot.lane.b32.xlu0 %v3666, 96
        %v3674 = vpop.permute.xlu0 %3673
        %3675 = vrot.lane.b32.xlu0 %v3667, 96
        %v3676 = vpop.permute.xlu0 %3675
        %v3677 = vsel %vm611, %v3672, %v3674
        %v3678 = vsel %vm611, %v3674, %v3676
        %v3682 = vadd.f32 %v3662, %v3677
        %v3683 = vadd.f32 %v3663, %v3678
        %v3684 = vadd.f32 %v3664, %v3676
        %v3685 = vmul.f32 %v3245, %v1131
        %v3686 = vmul.f32 %v3246, %v1131
        %v3687 = vmul.f32 %v3249, %v1131
        %3691 = vrot.lane.b32.xlu0 %v3685, 80
        %v3692 = vpop.permute.xlu0 %3691
        %3693 = vrot.lane.b32.xlu0 %v3686, 80
        %v3694 = vpop.permute.xlu0 %3693
        %3695 = vrot.lane.b32.xlu0 %v3687, 80
        %v3696 = vpop.permute.xlu0 %3695
        %v3697 = vsel %vm634, %v3692, %v3694
        %v3698 = vsel %vm634, %v3694, %v3696
        %v3702 = vadd.f32 %v3682, %v3697
        %v3703 = vadd.f32 %v3683, %v3698
        %v3704 = vadd.f32 %v3684, %v3696
        %v3705 = vmul.f32 %v3245, %v1155
        %v3706 = vmul.f32 %v3246, %v1155
        %v3707 = vmul.f32 %v3249, %v1155
        %3711 = vrot.lane.b32.xlu0 %v3705, 64
        %v3712 = vpop.permute.xlu0 %3711
        %3713 = vrot.lane.b32.xlu0 %v3706, 64
        %v3714 = vpop.permute.xlu0 %3713
        %3715 = vrot.lane.b32.xlu0 %v3707, 64
        %v3716 = vpop.permute.xlu0 %3715
        %v3717 = vsel %vm657, %v3712, %v3714
        %v3718 = vsel %vm657, %v3714, %v3716
        %v3722 = vadd.f32 %v3702, %v3717
        %v3723 = vadd.f32 %v3703, %v3718
        %v3724 = vadd.f32 %v3704, %v3716
        %v3725 = vmul.f32 %v3245, %v1179
        %v3726 = vmul.f32 %v3246, %v1179
        %v3727 = vmul.f32 %v3249, %v1179
        %3731 = vrot.lane.b32.xlu0 %v3725, 48
        %v3732 = vpop.permute.xlu0 %3731
        %3733 = vrot.lane.b32.xlu0 %v3726, 48
        %v3734 = vpop.permute.xlu0 %3733
        %3735 = vrot.lane.b32.xlu0 %v3727, 48
        %v3736 = vpop.permute.xlu0 %3735
        %v3737 = vsel %vm680, %v3732, %v3734
        %v3738 = vsel %vm680, %v3734, %v3736
        %v3742 = vadd.f32 %v3722, %v3737
        %v3743 = vadd.f32 %v3723, %v3738
        %v3744 = vadd.f32 %v3724, %v3736
        %v3745 = vmul.f32 %v3245, %v1203
        %v3746 = vmul.f32 %v3246, %v1203
        %v3747 = vmul.f32 %v3249, %v1203
        %3751 = vrot.lane.b32.xlu0 %v3745, 32
        %v3752 = vpop.permute.xlu0 %3751
        %3753 = vrot.lane.b32.xlu0 %v3746, 32
        %v3754 = vpop.permute.xlu0 %3753
        %3755 = vrot.lane.b32.xlu0 %v3747, 32
        %v3756 = vpop.permute.xlu0 %3755
        %v3757 = vsel %vm703, %v3752, %v3754
        %v3758 = vsel %vm703, %v3754, %v3756
        %v3762 = vadd.f32 %v3742, %v3757
        %v3763 = vadd.f32 %v3743, %v3758
        %v3764 = vadd.f32 %v3744, %v3756
        %3768 = vrot.lane.b32.xlu0 %v3762, 125
        %v3769 = vpop.permute.xlu0 %3768
        %3770 = vrot.lane.b32.xlu0 %v3763, 125
        %v3771 = vpop.permute.xlu0 %3770
        %3772 = vrot.lane.b32.xlu0 %v3764, 125
        %v3773 = vpop.permute.xlu0 %3772
        %v3774 = vsel %vm1234, %v3769, %v3771
        %v3775 = vsel %vm1234, %v3771, %v3773
        %v3778 = vadd.f32 %v3640, %v3774
        %v3779 = vadd.f32 %v3641, %v3775
        %v3780 = vmul.f32 %v3245, %v1243
        %v3781 = vmul.f32 %v3246, %v1243
        %v3782 = vmul.f32 %v3249, %v1243
        %v3783 = vmul.f32 %v3245, %v1250
        %v3784 = vmul.f32 %v3246, %v1250
        %v3785 = vmul.f32 %v3249, %v1250
        %3789 = vrot.lane.b32.xlu0 %v3783, 112
        %v3790 = vpop.permute.xlu0 %3789
        %3791 = vrot.lane.b32.xlu0 %v3784, 112
        %v3792 = vpop.permute.xlu0 %3791
        %3793 = vrot.lane.b32.xlu0 %v3785, 112
        %v3794 = vpop.permute.xlu0 %3793
        %v3795 = vsel %vm588, %v3790, %v3792
        %v3796 = vsel %vm588, %v3792, %v3794
        %v3800 = vadd.f32 %v3780, %v3795
        %v3801 = vadd.f32 %v3781, %v3796
        %v3802 = vadd.f32 %v3782, %v3794
        %v3803 = vmul.f32 %v3245, %v1274
        %v3804 = vmul.f32 %v3246, %v1274
        %v3805 = vmul.f32 %v3249, %v1274
        %3809 = vrot.lane.b32.xlu0 %v3803, 96
        %v3810 = vpop.permute.xlu0 %3809
        %3811 = vrot.lane.b32.xlu0 %v3804, 96
        %v3812 = vpop.permute.xlu0 %3811
        %3813 = vrot.lane.b32.xlu0 %v3805, 96
        %v3814 = vpop.permute.xlu0 %3813
        %v3815 = vsel %vm611, %v3810, %v3812
        %v3816 = vsel %vm611, %v3812, %v3814
        %v3820 = vadd.f32 %v3800, %v3815
        %v3821 = vadd.f32 %v3801, %v3816
        %v3822 = vadd.f32 %v3802, %v3814
        %v3823 = vmul.f32 %v3245, %v1298
        %v3824 = vmul.f32 %v3246, %v1298
        %v3825 = vmul.f32 %v3249, %v1298
        %3829 = vrot.lane.b32.xlu0 %v3823, 80
        %v3830 = vpop.permute.xlu0 %3829
        %3831 = vrot.lane.b32.xlu0 %v3824, 80
        %v3832 = vpop.permute.xlu0 %3831
        %3833 = vrot.lane.b32.xlu0 %v3825, 80
        %v3834 = vpop.permute.xlu0 %3833
        %v3835 = vsel %vm634, %v3830, %v3832
        %v3836 = vsel %vm634, %v3832, %v3834
        %v3840 = vadd.f32 %v3820, %v3835
        %v3841 = vadd.f32 %v3821, %v3836
        %v3842 = vadd.f32 %v3822, %v3834
        %v3843 = vmul.f32 %v3245, %v1322
        %v3844 = vmul.f32 %v3246, %v1322
        %v3845 = vmul.f32 %v3249, %v1322
        %3849 = vrot.lane.b32.xlu0 %v3843, 64
        %v3850 = vpop.permute.xlu0 %3849
        %3851 = vrot.lane.b32.xlu0 %v3844, 64
        %v3852 = vpop.permute.xlu0 %3851
        %3853 = vrot.lane.b32.xlu0 %v3845, 64
        %v3854 = vpop.permute.xlu0 %3853
        %v3855 = vsel %vm657, %v3850, %v3852
        %v3856 = vsel %vm657, %v3852, %v3854
        %v3860 = vadd.f32 %v3840, %v3855
        %v3861 = vadd.f32 %v3841, %v3856
        %v3862 = vadd.f32 %v3842, %v3854
        %v3863 = vmul.f32 %v3245, %v1346
        %v3864 = vmul.f32 %v3246, %v1346
        %v3865 = vmul.f32 %v3249, %v1346
        %3869 = vrot.lane.b32.xlu0 %v3863, 48
        %v3870 = vpop.permute.xlu0 %3869
        %3871 = vrot.lane.b32.xlu0 %v3864, 48
        %v3872 = vpop.permute.xlu0 %3871
        %3873 = vrot.lane.b32.xlu0 %v3865, 48
        %v3874 = vpop.permute.xlu0 %3873
        %v3875 = vsel %vm680, %v3870, %v3872
        %v3876 = vsel %vm680, %v3872, %v3874
        %v3880 = vadd.f32 %v3860, %v3875
        %v3881 = vadd.f32 %v3861, %v3876
        %v3882 = vadd.f32 %v3862, %v3874
        %v3883 = vmul.f32 %v3245, %v1370
        %v3884 = vmul.f32 %v3246, %v1370
        %v3885 = vmul.f32 %v3249, %v1370
        %3889 = vrot.lane.b32.xlu0 %v3883, 32
        %v3890 = vpop.permute.xlu0 %3889
        %3891 = vrot.lane.b32.xlu0 %v3884, 32
        %v3892 = vpop.permute.xlu0 %3891
        %3893 = vrot.lane.b32.xlu0 %v3885, 32
        %v3894 = vpop.permute.xlu0 %3893
        %v3895 = vsel %vm703, %v3890, %v3892
        %v3896 = vsel %vm703, %v3892, %v3894
        %v3900 = vadd.f32 %v3880, %v3895
        %v3901 = vadd.f32 %v3881, %v3896
        %v3902 = vadd.f32 %v3882, %v3894
        %v3903 = vmul.f32 %v3900, %v1395
        %v3904 = vmul.f32 %v3901, %v1399
        %v3905 = vmul.f32 %v3902, %v1397
        %3909 = vrot.lane.b32.xlu0 %v3903, 124
        %v3910 = vpop.permute.xlu0 %3909
        %3911 = vrot.lane.b32.xlu0 %v3904, 124
        %v3912 = vpop.permute.xlu0 %3911
        %3913 = vrot.lane.b32.xlu0 %v3905, 124
        %v3914 = vpop.permute.xlu0 %3913
        %v3915 = vsel %vm1415, %v3910, %v3912
        %v3916 = vsel %vm1415, %v3912, %v3914
        %v3919 = vadd.f32 %v3778, %v3915
        %v3920 = vadd.f32 %v3779, %v3916
        %v3921 = vmul.f32 %v3245, %v1424
        %v3922 = vmul.f32 %v3246, %v1424
        %v3923 = vmul.f32 %v3249, %v1424
        %v3924 = vmul.f32 %v3245, %v1431
        %v3925 = vmul.f32 %v3246, %v1431
        %v3926 = vmul.f32 %v3249, %v1431
        %3930 = vrot.lane.b32.xlu0 %v3924, 112
        %v3931 = vpop.permute.xlu0 %3930
        %3932 = vrot.lane.b32.xlu0 %v3925, 112
        %v3933 = vpop.permute.xlu0 %3932
        %3934 = vrot.lane.b32.xlu0 %v3926, 112
        %v3935 = vpop.permute.xlu0 %3934
        %v3936 = vsel %vm588, %v3931, %v3933
        %v3937 = vsel %vm588, %v3933, %v3935
        %v3941 = vadd.f32 %v3921, %v3936
        %v3942 = vadd.f32 %v3922, %v3937
        %v3943 = vadd.f32 %v3923, %v3935
        %v3944 = vmul.f32 %v3245, %v1455
        %v3945 = vmul.f32 %v3246, %v1455
        %v3946 = vmul.f32 %v3249, %v1455
        %3950 = vrot.lane.b32.xlu0 %v3944, 96
        %v3951 = vpop.permute.xlu0 %3950
        %3952 = vrot.lane.b32.xlu0 %v3945, 96
        %v3953 = vpop.permute.xlu0 %3952
        %3954 = vrot.lane.b32.xlu0 %v3946, 96
        %v3955 = vpop.permute.xlu0 %3954
        %v3956 = vsel %vm611, %v3951, %v3953
        %v3957 = vsel %vm611, %v3953, %v3955
        %v3961 = vadd.f32 %v3941, %v3956
        %v3962 = vadd.f32 %v3942, %v3957
        %v3963 = vadd.f32 %v3943, %v3955
        %v3964 = vmul.f32 %v3245, %v1479
        %v3965 = vmul.f32 %v3246, %v1479
        %v3966 = vmul.f32 %v3249, %v1479
        %3970 = vrot.lane.b32.xlu0 %v3964, 80
        %v3971 = vpop.permute.xlu0 %3970
        %3972 = vrot.lane.b32.xlu0 %v3965, 80
        %v3973 = vpop.permute.xlu0 %3972
        %3974 = vrot.lane.b32.xlu0 %v3966, 80
        %v3975 = vpop.permute.xlu0 %3974
        %v3976 = vsel %vm634, %v3971, %v3973
        %v3977 = vsel %vm634, %v3973, %v3975
        %v3981 = vadd.f32 %v3961, %v3976
        %v3982 = vadd.f32 %v3962, %v3977
        %v3983 = vadd.f32 %v3963, %v3975
        %v3984 = vmul.f32 %v3245, %v1503
        %v3985 = vmul.f32 %v3246, %v1503
        %v3986 = vmul.f32 %v3249, %v1503
        %3990 = vrot.lane.b32.xlu0 %v3984, 64
        %v3991 = vpop.permute.xlu0 %3990
        %3992 = vrot.lane.b32.xlu0 %v3985, 64
        %v3993 = vpop.permute.xlu0 %3992
        %3994 = vrot.lane.b32.xlu0 %v3986, 64
        %v3995 = vpop.permute.xlu0 %3994
        %v3996 = vsel %vm657, %v3991, %v3993
        %v3997 = vsel %vm657, %v3993, %v3995
        %v4001 = vadd.f32 %v3981, %v3996
        %v4002 = vadd.f32 %v3982, %v3997
        %v4003 = vadd.f32 %v3983, %v3995
        %v4004 = vmul.f32 %v3245, %v1527
        %v4005 = vmul.f32 %v3246, %v1527
        %v4006 = vmul.f32 %v3249, %v1527
        %4010 = vrot.lane.b32.xlu0 %v4004, 48
        %v4011 = vpop.permute.xlu0 %4010
        %4012 = vrot.lane.b32.xlu0 %v4005, 48
        %v4013 = vpop.permute.xlu0 %4012
        %4014 = vrot.lane.b32.xlu0 %v4006, 48
        %v4015 = vpop.permute.xlu0 %4014
        %v4016 = vsel %vm680, %v4011, %v4013
        %v4017 = vsel %vm680, %v4013, %v4015
        %v4021 = vadd.f32 %v4001, %v4016
        %v4022 = vadd.f32 %v4002, %v4017
        %v4023 = vadd.f32 %v4003, %v4015
        %v4024 = vmul.f32 %v3245, %v1551
        %v4025 = vmul.f32 %v3246, %v1551
        %v4026 = vmul.f32 %v3249, %v1551
        %4030 = vrot.lane.b32.xlu0 %v4024, 32
        %v4031 = vpop.permute.xlu0 %4030
        %4032 = vrot.lane.b32.xlu0 %v4025, 32
        %v4033 = vpop.permute.xlu0 %4032
        %4034 = vrot.lane.b32.xlu0 %v4026, 32
        %v4035 = vpop.permute.xlu0 %4034
        %v4036 = vsel %vm703, %v4031, %v4033
        %v4037 = vsel %vm703, %v4033, %v4035
        %v4041 = vadd.f32 %v4021, %v4036
        %v4042 = vadd.f32 %v4022, %v4037
        %v4043 = vadd.f32 %v4023, %v4035
        %v4044 = vmul.f32 %v4041, %v1576
        %v4045 = vmul.f32 %v4042, %v1580
        %v4046 = vmul.f32 %v4043, %v1578
        %4050 = vrot.lane.b32.xlu0 %v4044, 123
        %v4051 = vpop.permute.xlu0 %4050
        %4052 = vrot.lane.b32.xlu0 %v4045, 123
        %v4053 = vpop.permute.xlu0 %4052
        %4054 = vrot.lane.b32.xlu0 %v4046, 123
        %v4055 = vpop.permute.xlu0 %4054
        %v4056 = vsel %vm1596, %v4051, %v4053
        %v4057 = vsel %vm1596, %v4053, %v4055
        %v4060 = vadd.f32 %v3919, %v4056
        %v4061 = vadd.f32 %v3920, %v4057
        %v4062 = vmul.f32 %v3245, %v1605
        %v4063 = vmul.f32 %v3246, %v1605
        %v4064 = vmul.f32 %v3249, %v1605
        %v4065 = vmul.f32 %v3245, %v1612
        %v4066 = vmul.f32 %v3246, %v1612
        %v4067 = vmul.f32 %v3249, %v1612
        %4071 = vrot.lane.b32.xlu0 %v4065, 112
        %v4072 = vpop.permute.xlu0 %4071
        %4073 = vrot.lane.b32.xlu0 %v4066, 112
        %v4074 = vpop.permute.xlu0 %4073
        %4075 = vrot.lane.b32.xlu0 %v4067, 112
        %v4076 = vpop.permute.xlu0 %4075
        %v4077 = vsel %vm588, %v4072, %v4074
        %v4078 = vsel %vm588, %v4074, %v4076
        %v4082 = vadd.f32 %v4062, %v4077
        %v4083 = vadd.f32 %v4063, %v4078
        %v4084 = vadd.f32 %v4064, %v4076
        %v4085 = vmul.f32 %v3245, %v1636
        %v4086 = vmul.f32 %v3246, %v1636
        %v4087 = vmul.f32 %v3249, %v1636
        %4091 = vrot.lane.b32.xlu0 %v4085, 96
        %v4092 = vpop.permute.xlu0 %4091
        %4093 = vrot.lane.b32.xlu0 %v4086, 96
        %v4094 = vpop.permute.xlu0 %4093
        %4095 = vrot.lane.b32.xlu0 %v4087, 96
        %v4096 = vpop.permute.xlu0 %4095
        %v4097 = vsel %vm611, %v4092, %v4094
        %v4098 = vsel %vm611, %v4094, %v4096
        %v4102 = vadd.f32 %v4082, %v4097
        %v4103 = vadd.f32 %v4083, %v4098
        %v4104 = vadd.f32 %v4084, %v4096
        %v4105 = vmul.f32 %v3245, %v1660
        %v4106 = vmul.f32 %v3246, %v1660
        %v4107 = vmul.f32 %v3249, %v1660
        %4111 = vrot.lane.b32.xlu0 %v4105, 80
        %v4112 = vpop.permute.xlu0 %4111
        %4113 = vrot.lane.b32.xlu0 %v4106, 80
        %v4114 = vpop.permute.xlu0 %4113
        %4115 = vrot.lane.b32.xlu0 %v4107, 80
        %v4116 = vpop.permute.xlu0 %4115
        %v4117 = vsel %vm634, %v4112, %v4114
        %v4118 = vsel %vm634, %v4114, %v4116
        %v4122 = vadd.f32 %v4102, %v4117
        %v4123 = vadd.f32 %v4103, %v4118
        %v4124 = vadd.f32 %v4104, %v4116
        %v4125 = vmul.f32 %v3245, %v1684
        %v4126 = vmul.f32 %v3246, %v1684
        %v4127 = vmul.f32 %v3249, %v1684
        %4131 = vrot.lane.b32.xlu0 %v4125, 64
        %v4132 = vpop.permute.xlu0 %4131
        %4133 = vrot.lane.b32.xlu0 %v4126, 64
        %v4134 = vpop.permute.xlu0 %4133
        %4135 = vrot.lane.b32.xlu0 %v4127, 64
        %v4136 = vpop.permute.xlu0 %4135
        %v4137 = vsel %vm657, %v4132, %v4134
        %v4138 = vsel %vm657, %v4134, %v4136
        %v4142 = vadd.f32 %v4122, %v4137
        %v4143 = vadd.f32 %v4123, %v4138
        %v4144 = vadd.f32 %v4124, %v4136
        %v4145 = vmul.f32 %v3245, %v1708
        %v4146 = vmul.f32 %v3246, %v1708
        %v4147 = vmul.f32 %v3249, %v1708
        %4151 = vrot.lane.b32.xlu0 %v4145, 48
        %v4152 = vpop.permute.xlu0 %4151
        %4153 = vrot.lane.b32.xlu0 %v4146, 48
        %v4154 = vpop.permute.xlu0 %4153
        %4155 = vrot.lane.b32.xlu0 %v4147, 48
        %v4156 = vpop.permute.xlu0 %4155
        %v4157 = vsel %vm680, %v4152, %v4154
        %v4158 = vsel %vm680, %v4154, %v4156
        %v4162 = vadd.f32 %v4142, %v4157
        %v4163 = vadd.f32 %v4143, %v4158
        %v4164 = vadd.f32 %v4144, %v4156
        %v4165 = vmul.f32 %v3245, %v1732
        %v4166 = vmul.f32 %v3246, %v1732
        %v4167 = vmul.f32 %v3249, %v1732
        %4171 = vrot.lane.b32.xlu0 %v4165, 32
        %v4172 = vpop.permute.xlu0 %4171
        %4173 = vrot.lane.b32.xlu0 %v4166, 32
        %v4174 = vpop.permute.xlu0 %4173
        %4175 = vrot.lane.b32.xlu0 %v4167, 32
        %v4176 = vpop.permute.xlu0 %4175
        %v4177 = vsel %vm703, %v4172, %v4174
        %v4178 = vsel %vm703, %v4174, %v4176
        %v4182 = vadd.f32 %v4162, %v4177
        %v4183 = vadd.f32 %v4163, %v4178
        %v4184 = vadd.f32 %v4164, %v4176
        %v4185 = vmul.f32 %v4182, %v1757
        %v4186 = vmul.f32 %v4183, %v1761
        %v4187 = vmul.f32 %v4184, %v1759
        %4191 = vrot.lane.b32.xlu0 %v4185, 122
        %v4192 = vpop.permute.xlu0 %4191
        %4193 = vrot.lane.b32.xlu0 %v4186, 122
        %v4194 = vpop.permute.xlu0 %4193
        %4195 = vrot.lane.b32.xlu0 %v4187, 122
        %v4196 = vpop.permute.xlu0 %4195
        %v4197 = vsel %vm1777, %v4192, %v4194
        %v4198 = vsel %vm1777, %v4194, %v4196
        %v4201 = vadd.f32 %v4060, %v4197
        %v4202 = vadd.f32 %v4061, %v4198
        %v4203 = vlaneseq
        %v4204 = vshrl.u32 %v4203, 7
        %v4205 = vsub.s32 0, %v4204
        %v4206 = vrot.slane %v4201, %v4205
        %v4207 = vlaneseq
        %v4208 = vshrl.u32 %v4207, 7
        %v4209 = vsub.s32 0, %v4208
        %v4210 = vrot.slane %v4202, %v4209
        %v4211 = vmul.f32 %v1787, %v4206
        %v4212 = vmul.f32 %v1787, %v4210
        %v4213 = vlaneseq
        %v4214 = vshrl.u32 %v4213, 7
        %v4215 = vsub.s32 1, %v4214
        %v4216 = vrot.slane %v4201, %v4215
        %v4217 = vlaneseq
        %v4218 = vshrl.u32 %v4217, 7
        %v4219 = vsub.s32 1, %v4218
        %v4220 = vrot.slane %v4202, %v4219
        %v4221 = vmul.f32 %v1801, %v4216
        %v4222 = vmul.f32 %v1801, %v4220
        %v4223 = vadd.f32 %v4211, %v4221
        %v4224 = vadd.f32 %v4212, %v4222
        %v4225 = vlaneseq
        %v4226 = vshrl.u32 %v4225, 7
        %v4227 = vsub.s32 2, %v4226
        %v4228 = vrot.slane %v4201, %v4227
        %v4229 = vlaneseq
        %v4230 = vshrl.u32 %v4229, 7
        %v4231 = vsub.s32 2, %v4230
        %v4232 = vrot.slane %v4202, %v4231
        %v4233 = vmul.f32 %v1817, %v4228
        %v4234 = vmul.f32 %v1817, %v4232
        %v4235 = vadd.f32 %v4223, %v4233
        %v4236 = vadd.f32 %v4224, %v4234
        %v4237 = vlaneseq
        %v4238 = vshrl.u32 %v4237, 7
        %v4239 = vsub.s32 3, %v4238
        %v4240 = vrot.slane %v4201, %v4239
        %v4241 = vlaneseq
        %v4242 = vshrl.u32 %v4241, 7
        %v4243 = vsub.s32 3, %v4242
        %v4244 = vrot.slane %v4202, %v4243
        %v4245 = vmul.f32 %v1833, %v4240
        %v4246 = vmul.f32 %v1833, %v4244
        %v4247 = vadd.f32 %v4235, %v4245
        %v4248 = vadd.f32 %v4236, %v4246
        %v4249 = vlaneseq
        %v4250 = vshrl.u32 %v4249, 7
        %v4251 = vsub.s32 4, %v4250
        %v4252 = vrot.slane %v4201, %v4251
        %v4253 = vlaneseq
        %v4254 = vshrl.u32 %v4253, 7
        %v4255 = vsub.s32 4, %v4254
        %v4256 = vrot.slane %v4202, %v4255
        %v4257 = vmul.f32 %v1849, %v4252
        %v4258 = vmul.f32 %v1849, %v4256
        %v4259 = vadd.f32 %v4247, %v4257
        %v4260 = vadd.f32 %v4248, %v4258
        %v4261 = vlaneseq
        %v4262 = vshrl.u32 %v4261, 7
        %v4263 = vsub.s32 5, %v4262
        %v4264 = vrot.slane %v4201, %v4263
        %v4265 = vlaneseq
        %v4266 = vshrl.u32 %v4265, 7
        %v4267 = vsub.s32 5, %v4266
        %v4268 = vrot.slane %v4202, %v4267
        %v4269 = vmul.f32 %v1865, %v4264
        %v4270 = vmul.f32 %v1865, %v4268
        %v4271 = vadd.f32 %v4259, %v4269
        %v4272 = vadd.f32 %v4260, %v4270
        %v4273 = vlaneseq
        %v4274 = vshrl.u32 %v4273, 7
        %v4275 = vsub.s32 6, %v4274
        %v4276 = vrot.slane %v4201, %v4275
        %v4277 = vlaneseq
        %v4278 = vshrl.u32 %v4277, 7
        %v4279 = vsub.s32 6, %v4278
        %v4280 = vrot.slane %v4202, %v4279
        %v4281 = vmul.f32 %v1881, %v4276
        %v4282 = vmul.f32 %v1881, %v4280
        %v4283 = vadd.f32 %v4271, %v4281
        %v4284 = vadd.f32 %v4272, %v4282
        %v4285 = vlaneseq
        %v4286 = vshrl.u32 %v4285, 7
        %v4287 = vsub.s32 7, %v4286
        %v4288 = vrot.slane %v4201, %v4287
        %v4289 = vlaneseq
        %v4290 = vshrl.u32 %v4289, 7
        %v4291 = vsub.s32 7, %v4290
        %v4292 = vrot.slane %v4202, %v4291
        %v4293 = vmul.f32 %v1897, %v4288
        %v4294 = vmul.f32 %v1897, %v4292
        %v4295 = vadd.f32 %v4283, %v4293
        %v4296 = vadd.f32 %v4284, %v4294
        %v4297 = vadd.f32 %v4295, %v1914
        %v4298 = vadd.f32 %v4296, %v1914
        %v4301 = vcombine.low %v4297, %v4298
        %s4303 = scalar_lea.vmem %s288, 16 [#allocation8]
        %4304 = vst [vmem:[%s4303] sm:$0xff] %v4301
        %s4305 = scalar_lea.vmem %s260, 24 [#allocation5]
        %v4306 = vld [vmem:[%s4305] sm:$0xff]
        %v4307 = vld [vmem:[#allocation2] sm:$0xff]
        %v4308 = vsub.f32 %v4306, %v4307
        %v4309 = vmul.f32 %v4308, 0.5
        %v4310 = vadd.f32 %v4307, %v4309
        %vm4311 = vcmp.ge.f32.partialorder %v4310, 1.0
        %v4312 = vsel %vm4311, 0.0, %v4310
        %4313 = vst [vmem:[#allocation2] sm:$0xff] %v4312
        %v4314 = vsel %vm4311, 1, 0
        %v4315 = vcvt.s32.f32 %v4314
        %v4317 = vlaneseq
        %v4318 = vshrl.u32 %v4317, 7
        %v4319 = vsub.s32 0, %v4318
        %v4320 = vrot.slane %v4315, %v4319
        %v4321 = vlaneseq
        %v4322 = vshrl.u32 %v4321, 7
        %v4323 = vsub.s32 4, %v4322
        %v4324 = vrot.slane %v4315, %v4323
        %v4327 = vlaneseq
        %v4328 = vshrl.u32 %v4327, 7
        %v4329 = vsub.s32 0, %v4328
        %v4330 = vrot.slane %v4320, %v4329
        %v4331 = vlaneseq
        %v4332 = vshrl.u32 %v4331, 7
        %v4333 = vsub.s32 0, %v4332
        %v4334 = vrot.slane %v4324, %v4333
        %v4335 = vmul.f32 %v419, %v4330
        %v4336 = vmul.f32 %v419, %v4334
        %v4337 = vlaneseq
        %v4338 = vshrl.u32 %v4337, 7
        %v4339 = vsub.s32 1, %v4338
        %v4340 = vrot.slane %v4315, %v4339
        %v4341 = vlaneseq
        %v4342 = vshrl.u32 %v4341, 7
        %v4343 = vsub.s32 5, %v4342
        %v4344 = vrot.slane %v4315, %v4343
        %v4347 = vlaneseq
        %v4348 = vshrl.u32 %v4347, 7
        %v4349 = vsub.s32 1, %v4348
        %v4350 = vrot.slane %v4340, %v4349
        %v4351 = vlaneseq
        %v4352 = vshrl.u32 %v4351, 7
        %v4353 = vsub.s32 1, %v4352
        %v4354 = vrot.slane %v4344, %v4353
        %v4355 = vmul.f32 %v444, %v4350
        %v4356 = vmul.f32 %v444, %v4354
        %v4357 = vadd.f32 %v4335, %v4355
        %v4358 = vadd.f32 %v4336, %v4356
        %v4359 = vlaneseq
        %v4360 = vshrl.u32 %v4359, 7
        %v4361 = vsub.s32 2, %v4360
        %v4362 = vrot.slane %v4315, %v4361
        %v4363 = vlaneseq
        %v4364 = vshrl.u32 %v4363, 7
        %v4365 = vsub.s32 6, %v4364
        %v4366 = vrot.slane %v4315, %v4365
        %v4369 = vlaneseq
        %v4370 = vshrl.u32 %v4369, 7
        %v4371 = vsub.s32 2, %v4370
        %v4372 = vrot.slane %v4362, %v4371
        %v4373 = vlaneseq
        %v4374 = vshrl.u32 %v4373, 7
        %v4375 = vsub.s32 2, %v4374
        %v4376 = vrot.slane %v4366, %v4375
        %v4377 = vmul.f32 %v470, %v4372
        %v4378 = vmul.f32 %v470, %v4376
        %v4379 = vadd.f32 %v4357, %v4377
        %v4380 = vadd.f32 %v4358, %v4378
        %v4381 = vlaneseq
        %v4382 = vshrl.u32 %v4381, 7
        %v4383 = vsub.s32 3, %v4382
        %v4384 = vrot.slane %v4315, %v4383
        %v4385 = vlaneseq
        %v4386 = vshrl.u32 %v4385, 7
        %v4387 = vsub.s32 7, %v4386
        %v4388 = vrot.slane %v4315, %v4387
        %v4391 = vlaneseq
        %v4392 = vshrl.u32 %v4391, 7
        %v4393 = vsub.s32 3, %v4392
        %v4394 = vrot.slane %v4384, %v4393
        %v4395 = vlaneseq
        %v4396 = vshrl.u32 %v4395, 7
        %v4397 = vsub.s32 3, %v4396
        %v4398 = vrot.slane %v4388, %v4397
        %v4399 = vmul.f32 %v496, %v4394
        %v4400 = vmul.f32 %v496, %v4398
        %v4401 = vadd.f32 %v4379, %v4399
        %v4402 = vadd.f32 %v4380, %v4400
        %v4403 = vadd.f32 %v4401, %v523
        %v4404 = vadd.f32 %v4402, %v523
        %v4405 = vld [vmem:[#allocation3] sm:$0xff]
        %v4406 = vld [vmem:[#allocation3 + $0x8] sm:$0xff]
        %v4407 = vsub.f32 %v4403, %v4405
        %v4408 = vsub.f32 %v4404, %v4406
        %v4409 = vmul.f32 %v4407, 0.5
        %v4410 = vmul.f32 %v4408, 0.5
        %v4411 = vadd.f32 %v4405, %v4409
        %v4412 = vadd.f32 %v4406, %v4410
        %vm4413 = vcmp.ge.f32.partialorder %v4411, 1.0
        %vm4414 = vcmp.ge.f32.partialorder %v4412, 1.0
        %v4415 = vsel %vm4413, 0.0, %v4411
        %v4416 = vsel %vm4414, 0.0, %v4412
        %4417 = vst [vmem:[#allocation3] sm:$0xff] %v4415
        %4418 = vst [vmem:[#allocation3 + $0x8] sm:$0xff] %v4416
        %v4419 = vsel %vm4413, 1, 0
        %v4420 = vsel %vm4414, 1, 0
        %v4421 = vcvt.s32.f32 %v4419
        %v4422 = vcvt.s32.f32 %v4420
        %4425 = vrot.lane.b32.xlu0 %v4421, 51
        %v4426 = vpop.permute.xlu0 %4425
        %4427 = vrot.lane.b32.xlu0 %v4422, 51
        %v4428 = vpop.permute.xlu0 %4427
        %v4429 = vsel %vm551, %v4426, %v4428
        %4433 = vst.msk [vmem:[#allocation4] sm:$0xff] %vm556, %v4426
        %4434 = vst [vmem:[#allocation4 + $0x8] sm:$0xff] %v4429
        %4435 = vst.msk [vmem:[#allocation4 + $0x10] sm:$0xff] %vm551, %v4428
        %v4436 = vld [vmem:[#allocation4] sm:$0xff]
        %v4437 = vld [vmem:[#allocation4 + $0x8] sm:$0xff]
        %v4438 = vmul.f32 %v4436, %v565
        %v4439 = vmul.f32 %v4437, %v565
        %v4440 = vld [vmem:[#allocation4 + $0x10] sm:$0xff]
        %v4441 = vmul.f32 %v4436, %v574
        %v4442 = vmul.f32 %v4437, %v574
        %v4443 = vmul.f32 %v4440, %v574
        %4447 = vrot.lane.b32.xlu0 %v4441, 112
        %v4448 = vpop.permute.xlu0 %4447
        %4449 = vrot.lane.b32.xlu0 %v4442, 112
        %v4450 = vpop.permute.xlu0 %4449
        %4451 = vrot.lane.b32.xlu0 %v4443, 112
        %v4452 = vpop.permute.xlu0 %4451
        %v4453 = vsel %vm588, %v4448, %v4450
        %v4454 = vsel %vm588, %v4450, %v4452
        %v4457 = vadd.f32 %v4438, %v4453
        %v4458 = vadd.f32 %v4439, %v4454
        %v4459 = vmul.f32 %v4436, %v597
        %v4460 = vmul.f32 %v4437, %v597
        %v4461 = vmul.f32 %v4440, %v597
        %4465 = vrot.lane.b32.xlu0 %v4459, 96
        %v4466 = vpop.permute.xlu0 %4465
        %4467 = vrot.lane.b32.xlu0 %v4460, 96
        %v4468 = vpop.permute.xlu0 %4467
        %4469 = vrot.lane.b32.xlu0 %v4461, 96
        %v4470 = vpop.permute.xlu0 %4469
        %v4471 = vsel %vm611, %v4466, %v4468
        %v4472 = vsel %vm611, %v4468, %v4470
        %v4475 = vadd.f32 %v4457, %v4471
        %v4476 = vadd.f32 %v4458, %v4472
        %v4477 = vmul.f32 %v4436, %v620
        %v4478 = vmul.f32 %v4437, %v620
        %v4479 = vmul.f32 %v4440, %v620
        %4483 = vrot.lane.b32.xlu0 %v4477, 80
        %v4484 = vpop.permute.xlu0 %4483
        %4485 = vrot.lane.b32.xlu0 %v4478, 80
        %v4486 = vpop.permute.xlu0 %4485
        %4487 = vrot.lane.b32.xlu0 %v4479, 80
        %v4488 = vpop.permute.xlu0 %4487
        %v4489 = vsel %vm634, %v4484, %v4486
        %v4490 = vsel %vm634, %v4486, %v4488
        %v4493 = vadd.f32 %v4475, %v4489
        %v4494 = vadd.f32 %v4476, %v4490
        %v4495 = vmul.f32 %v4436, %v643
        %v4496 = vmul.f32 %v4437, %v643
        %v4497 = vmul.f32 %v4440, %v643
        %4501 = vrot.lane.b32.xlu0 %v4495, 64
        %v4502 = vpop.permute.xlu0 %4501
        %4503 = vrot.lane.b32.xlu0 %v4496, 64
        %v4504 = vpop.permute.xlu0 %4503
        %4505 = vrot.lane.b32.xlu0 %v4497, 64
        %v4506 = vpop.permute.xlu0 %4505
        %v4507 = vsel %vm657, %v4502, %v4504
        %v4508 = vsel %vm657, %v4504, %v4506
        %v4511 = vadd.f32 %v4493, %v4507
        %v4512 = vadd.f32 %v4494, %v4508
        %v4513 = vmul.f32 %v4436, %v666
        %v4514 = vmul.f32 %v4437, %v666
        %v4515 = vmul.f32 %v4440, %v666
        %4519 = vrot.lane.b32.xlu0 %v4513, 48
        %v4520 = vpop.permute.xlu0 %4519
        %4521 = vrot.lane.b32.xlu0 %v4514, 48
        %v4522 = vpop.permute.xlu0 %4521
        %4523 = vrot.lane.b32.xlu0 %v4515, 48
        %v4524 = vpop.permute.xlu0 %4523
        %v4525 = vsel %vm680, %v4520, %v4522
        %v4526 = vsel %vm680, %v4522, %v4524
        %v4529 = vadd.f32 %v4511, %v4525
        %v4530 = vadd.f32 %v4512, %v4526
        %v4531 = vmul.f32 %v4436, %v689
        %v4532 = vmul.f32 %v4437, %v689
        %v4533 = vmul.f32 %v4440, %v689
        %4537 = vrot.lane.b32.xlu0 %v4531, 32
        %v4538 = vpop.permute.xlu0 %4537
        %4539 = vrot.lane.b32.xlu0 %v4532, 32
        %v4540 = vpop.permute.xlu0 %4539
        %4541 = vrot.lane.b32.xlu0 %v4533, 32
        %v4542 = vpop.permute.xlu0 %4541
        %v4543 = vsel %vm703, %v4538, %v4540
        %v4544 = vsel %vm703, %v4540, %v4542
        %v4547 = vadd.f32 %v4529, %v4543
        %v4548 = vadd.f32 %v4530, %v4544
        %v4549 = vmul.f32 %v4547, %v344
        %v4550 = vmul.f32 %v4548, %v345
        %v4551 = vmul.f32 %v4436, %v714
        %v4552 = vmul.f32 %v4437, %v714
        %v4553 = vmul.f32 %v4440, %v714
        %v4554 = vmul.f32 %v4436, %v721
        %v4555 = vmul.f32 %v4437, %v721
        %v4556 = vmul.f32 %v4440, %v721
        %4560 = vrot.lane.b32.xlu0 %v4554, 112
        %v4561 = vpop.permute.xlu0 %4560
        %4562 = vrot.lane.b32.xlu0 %v4555, 112
        %v4563 = vpop.permute.xlu0 %4562
        %4564 = vrot.lane.b32.xlu0 %v4556, 112
        %v4565 = vpop.permute.xlu0 %4564
        %v4566 = vsel %vm588, %v4561, %v4563
        %v4567 = vsel %vm588, %v4563, %v4565
        %v4571 = vadd.f32 %v4551, %v4566
        %v4572 = vadd.f32 %v4552, %v4567
        %v4573 = vadd.f32 %v4553, %v4565
        %v4574 = vmul.f32 %v4436, %v745
        %v4575 = vmul.f32 %v4437, %v745
        %v4576 = vmul.f32 %v4440, %v745
        %4580 = vrot.lane.b32.xlu0 %v4574, 96
        %v4581 = vpop.permute.xlu0 %4580
        %4582 = vrot.lane.b32.xlu0 %v4575, 96
        %v4583 = vpop.permute.xlu0 %4582
        %4584 = vrot.lane.b32.xlu0 %v4576, 96
        %v4585 = vpop.permute.xlu0 %4584
        %v4586 = vsel %vm611, %v4581, %v4583
        %v4587 = vsel %vm611, %v4583, %v4585
        %v4591 = vadd.f32 %v4571, %v4586
        %v4592 = vadd.f32 %v4572, %v4587
        %v4593 = vadd.f32 %v4573, %v4585
        %v4594 = vmul.f32 %v4436, %v769
        %v4595 = vmul.f32 %v4437, %v769
        %v4596 = vmul.f32 %v4440, %v769
        %4600 = vrot.lane.b32.xlu0 %v4594, 80
        %v4601 = vpop.permute.xlu0 %4600
        %4602 = vrot.lane.b32.xlu0 %v4595, 80
        %v4603 = vpop.permute.xlu0 %4602
        %4604 = vrot.lane.b32.xlu0 %v4596, 80
        %v4605 = vpop.permute.xlu0 %4604
        %v4606 = vsel %vm634, %v4601, %v4603
        %v4607 = vsel %vm634, %v4603, %v4605
        %v4611 = vadd.f32 %v4591, %v4606
        %v4612 = vadd.f32 %v4592, %v4607
        %v4613 = vadd.f32 %v4593, %v4605
        %v4614 = vmul.f32 %v4436, %v793
        %v4615 = vmul.f32 %v4437, %v793
        %v4616 = vmul.f32 %v4440, %v793
        %4620 = vrot.lane.b32.xlu0 %v4614, 64
        %v4621 = vpop.permute.xlu0 %4620
        %4622 = vrot.lane.b32.xlu0 %v4615, 64
        %v4623 = vpop.permute.xlu0 %4622
        %4624 = vrot.lane.b32.xlu0 %v4616, 64
        %v4625 = vpop.permute.xlu0 %4624
        %v4626 = vsel %vm657, %v4621, %v4623
        %v4627 = vsel %vm657, %v4623, %v4625
        %v4631 = vadd.f32 %v4611, %v4626
        %v4632 = vadd.f32 %v4612, %v4627
        %v4633 = vadd.f32 %v4613, %v4625
        %v4634 = vmul.f32 %v4436, %v817
        %v4635 = vmul.f32 %v4437, %v817
        %v4636 = vmul.f32 %v4440, %v817
        %4640 = vrot.lane.b32.xlu0 %v4634, 48
        %v4641 = vpop.permute.xlu0 %4640
        %4642 = vrot.lane.b32.xlu0 %v4635, 48
        %v4643 = vpop.permute.xlu0 %4642
        %4644 = vrot.lane.b32.xlu0 %v4636, 48
        %v4645 = vpop.permute.xlu0 %4644
        %v4646 = vsel %vm680, %v4641, %v4643
        %v4647 = vsel %vm680, %v4643, %v4645
        %v4651 = vadd.f32 %v4631, %v4646
        %v4652 = vadd.f32 %v4632, %v4647
        %v4653 = vadd.f32 %v4633, %v4645
        %v4654 = vmul.f32 %v4436, %v841
        %v4655 = vmul.f32 %v4437, %v841
        %v4656 = vmul.f32 %v4440, %v841
        %4660 = vrot.lane.b32.xlu0 %v4654, 32
        %v4661 = vpop.permute.xlu0 %4660
        %4662 = vrot.lane.b32.xlu0 %v4655, 32
        %v4663 = vpop.permute.xlu0 %4662
        %4664 = vrot.lane.b32.xlu0 %v4656, 32
        %v4665 = vpop.permute.xlu0 %4664
        %v4666 = vsel %vm703, %v4661, %v4663
        %v4667 = vsel %vm703, %v4663, %v4665
        %v4671 = vadd.f32 %v4651, %v4666
        %v4672 = vadd.f32 %v4652, %v4667
        %v4673 = vadd.f32 %v4653, %v4665
        %v4674 = vmul.f32 %v4671, %v866
        %v4675 = vmul.f32 %v4672, %v870
        %v4676 = vmul.f32 %v4673, %v868
        %4680 = vrot.lane.b32.xlu0 %v4674, 127
        %v4681 = vpop.permute.xlu0 %4680
        %4682 = vrot.lane.b32.xlu0 %v4675, 127
        %v4683 = vpop.permute.xlu0 %4682
        %4684 = vrot.lane.b32.xlu0 %v4676, 127
        %v4685 = vpop.permute.xlu0 %4684
        %v4686 = vsel %vm886, %v4681, %v4683
        %v4687 = vsel %vm886, %v4683, %v4685
        %v4690 = vadd.f32 %v4549, %v4686
        %v4691 = vadd.f32 %v4550, %v4687
        %v4692 = vmul.f32 %v4436, %v895
        %v4693 = vmul.f32 %v4437, %v895
        %v4694 = vmul.f32 %v4440, %v895
        %v4695 = vmul.f32 %v4436, %v902
        %v4696 = vmul.f32 %v4437, %v902
        %v4697 = vmul.f32 %v4440, %v902
        %4701 = vrot.lane.b32.xlu0 %v4695, 112
        %v4702 = vpop.permute.xlu0 %4701
        %4703 = vrot.lane.b32.xlu0 %v4696, 112
        %v4704 = vpop.permute.xlu0 %4703
        %4705 = vrot.lane.b32.xlu0 %v4697, 112
        %v4706 = vpop.permute.xlu0 %4705
        %v4707 = vsel %vm588, %v4702, %v4704
        %v4708 = vsel %vm588, %v4704, %v4706
        %v4712 = vadd.f32 %v4692, %v4707
        %v4713 = vadd.f32 %v4693, %v4708
        %v4714 = vadd.f32 %v4694, %v4706
        %v4715 = vmul.f32 %v4436, %v926
        %v4716 = vmul.f32 %v4437, %v926
        %v4717 = vmul.f32 %v4440, %v926
        %4721 = vrot.lane.b32.xlu0 %v4715, 96
        %v4722 = vpop.permute.xlu0 %4721
        %4723 = vrot.lane.b32.xlu0 %v4716, 96
        %v4724 = vpop.permute.xlu0 %4723
        %4725 = vrot.lane.b32.xlu0 %v4717, 96
        %v4726 = vpop.permute.xlu0 %4725
        %v4727 = vsel %vm611, %v4722, %v4724
        %v4728 = vsel %vm611, %v4724, %v4726
        %v4732 = vadd.f32 %v4712, %v4727
        %v4733 = vadd.f32 %v4713, %v4728
        %v4734 = vadd.f32 %v4714, %v4726
        %v4735 = vmul.f32 %v4436, %v950
        %v4736 = vmul.f32 %v4437, %v950
        %v4737 = vmul.f32 %v4440, %v950
        %4741 = vrot.lane.b32.xlu0 %v4735, 80
        %v4742 = vpop.permute.xlu0 %4741
        %4743 = vrot.lane.b32.xlu0 %v4736, 80
        %v4744 = vpop.permute.xlu0 %4743
        %4745 = vrot.lane.b32.xlu0 %v4737, 80
        %v4746 = vpop.permute.xlu0 %4745
        %v4747 = vsel %vm634, %v4742, %v4744
        %v4748 = vsel %vm634, %v4744, %v4746
        %v4752 = vadd.f32 %v4732, %v4747
        %v4753 = vadd.f32 %v4733, %v4748
        %v4754 = vadd.f32 %v4734, %v4746
        %v4755 = vmul.f32 %v4436, %v974
        %v4756 = vmul.f32 %v4437, %v974
        %v4757 = vmul.f32 %v4440, %v974
        %4761 = vrot.lane.b32.xlu0 %v4755, 64
        %v4762 = vpop.permute.xlu0 %4761
        %4763 = vrot.lane.b32.xlu0 %v4756, 64
        %v4764 = vpop.permute.xlu0 %4763
        %4765 = vrot.lane.b32.xlu0 %v4757, 64
        %v4766 = vpop.permute.xlu0 %4765
        %v4767 = vsel %vm657, %v4762, %v4764
        %v4768 = vsel %vm657, %v4764, %v4766
        %v4772 = vadd.f32 %v4752, %v4767
        %v4773 = vadd.f32 %v4753, %v4768
        %v4774 = vadd.f32 %v4754, %v4766
        %v4775 = vmul.f32 %v4436, %v998
        %v4776 = vmul.f32 %v4437, %v998
        %v4777 = vmul.f32 %v4440, %v998
        %4781 = vrot.lane.b32.xlu0 %v4775, 48
        %v4782 = vpop.permute.xlu0 %4781
        %4783 = vrot.lane.b32.xlu0 %v4776, 48
        %v4784 = vpop.permute.xlu0 %4783
        %4785 = vrot.lane.b32.xlu0 %v4777, 48
        %v4786 = vpop.permute.xlu0 %4785
        %v4787 = vsel %vm680, %v4782, %v4784
        %v4788 = vsel %vm680, %v4784, %v4786
        %v4792 = vadd.f32 %v4772, %v4787
        %v4793 = vadd.f32 %v4773, %v4788
        %v4794 = vadd.f32 %v4774, %v4786
        %v4795 = vmul.f32 %v4436, %v1022
        %v4796 = vmul.f32 %v4437, %v1022
        %v4797 = vmul.f32 %v4440, %v1022
        %4801 = vrot.lane.b32.xlu0 %v4795, 32
        %v4802 = vpop.permute.xlu0 %4801
        %4803 = vrot.lane.b32.xlu0 %v4796, 32
        %v4804 = vpop.permute.xlu0 %4803
        %4805 = vrot.lane.b32.xlu0 %v4797, 32
        %v4806 = vpop.permute.xlu0 %4805
        %v4807 = vsel %vm703, %v4802, %v4804
        %v4808 = vsel %vm703, %v4804, %v4806
        %v4812 = vadd.f32 %v4792, %v4807
        %v4813 = vadd.f32 %v4793, %v4808
        %v4814 = vadd.f32 %v4794, %v4806
        %v4815 = vmul.f32 %v4812, %v1047
        %v4816 = vmul.f32 %v4813, %v1051
        %v4817 = vmul.f32 %v4814, %v1049
        %4821 = vrot.lane.b32.xlu0 %v4815, 126
        %v4822 = vpop.permute.xlu0 %4821
        %4823 = vrot.lane.b32.xlu0 %v4816, 126
        %v4824 = vpop.permute.xlu0 %4823
        %4825 = vrot.lane.b32.xlu0 %v4817, 126
        %v4826 = vpop.permute.xlu0 %4825
        %v4827 = vsel %vm1067, %v4822, %v4824
        %v4828 = vsel %vm1067, %v4824, %v4826
        %v4831 = vadd.f32 %v4690, %v4827
        %v4832 = vadd.f32 %v4691, %v4828
        %v4833 = vmul.f32 %v4436, %v1076
        %v4834 = vmul.f32 %v4437, %v1076
        %v4835 = vmul.f32 %v4440, %v1076
        %v4836 = vmul.f32 %v4436, %v1083
        %v4837 = vmul.f32 %v4437, %v1083
        %v4838 = vmul.f32 %v4440, %v1083
        %4842 = vrot.lane.b32.xlu0 %v4836, 112
        %v4843 = vpop.permute.xlu0 %4842
        %4844 = vrot.lane.b32.xlu0 %v4837, 112
        %v4845 = vpop.permute.xlu0 %4844
        %4846 = vrot.lane.b32.xlu0 %v4838, 112
        %v4847 = vpop.permute.xlu0 %4846
        %v4848 = vsel %vm588, %v4843, %v4845
        %v4849 = vsel %vm588, %v4845, %v4847
        %v4853 = vadd.f32 %v4833, %v4848
        %v4854 = vadd.f32 %v4834, %v4849
        %v4855 = vadd.f32 %v4835, %v4847
        %v4856 = vmul.f32 %v4436, %v1107
        %v4857 = vmul.f32 %v4437, %v1107
        %v4858 = vmul.f32 %v4440, %v1107
        %4862 = vrot.lane.b32.xlu0 %v4856, 96
        %v4863 = vpop.permute.xlu0 %4862
        %4864 = vrot.lane.b32.xlu0 %v4857, 96
        %v4865 = vpop.permute.xlu0 %4864
        %4866 = vrot.lane.b32.xlu0 %v4858, 96
        %v4867 = vpop.permute.xlu0 %4866
        %v4868 = vsel %vm611, %v4863, %v4865
        %v4869 = vsel %vm611, %v4865, %v4867
        %v4873 = vadd.f32 %v4853, %v4868
        %v4874 = vadd.f32 %v4854, %v4869
        %v4875 = vadd.f32 %v4855, %v4867
        %v4876 = vmul.f32 %v4436, %v1131
        %v4877 = vmul.f32 %v4437, %v1131
        %v4878 = vmul.f32 %v4440, %v1131
        %4882 = vrot.lane.b32.xlu0 %v4876, 80
        %v4883 = vpop.permute.xlu0 %4882
        %4884 = vrot.lane.b32.xlu0 %v4877, 80
        %v4885 = vpop.permute.xlu0 %4884
        %4886 = vrot.lane.b32.xlu0 %v4878, 80
        %v4887 = vpop.permute.xlu0 %4886
        %v4888 = vsel %vm634, %v4883, %v4885
        %v4889 = vsel %vm634, %v4885, %v4887
        %v4893 = vadd.f32 %v4873, %v4888
        %v4894 = vadd.f32 %v4874, %v4889
        %v4895 = vadd.f32 %v4875, %v4887
        %v4896 = vmul.f32 %v4436, %v1155
        %v4897 = vmul.f32 %v4437, %v1155
        %v4898 = vmul.f32 %v4440, %v1155
        %4902 = vrot.lane.b32.xlu0 %v4896, 64
        %v4903 = vpop.permute.xlu0 %4902
        %4904 = vrot.lane.b32.xlu0 %v4897, 64
        %v4905 = vpop.permute.xlu0 %4904
        %4906 = vrot.lane.b32.xlu0 %v4898, 64
        %v4907 = vpop.permute.xlu0 %4906
        %v4908 = vsel %vm657, %v4903, %v4905
        %v4909 = vsel %vm657, %v4905, %v4907
        %v4913 = vadd.f32 %v4893, %v4908
        %v4914 = vadd.f32 %v4894, %v4909
        %v4915 = vadd.f32 %v4895, %v4907
        %v4916 = vmul.f32 %v4436, %v1179
        %v4917 = vmul.f32 %v4437, %v1179
        %v4918 = vmul.f32 %v4440, %v1179
        %4922 = vrot.lane.b32.xlu0 %v4916, 48
        %v4923 = vpop.permute.xlu0 %4922
        %4924 = vrot.lane.b32.xlu0 %v4917, 48
        %v4925 = vpop.permute.xlu0 %4924
        %4926 = vrot.lane.b32.xlu0 %v4918, 48
        %v4927 = vpop.permute.xlu0 %4926
        %v4928 = vsel %vm680, %v4923, %v4925
        %v4929 = vsel %vm680, %v4925, %v4927
        %v4933 = vadd.f32 %v4913, %v4928
        %v4934 = vadd.f32 %v4914, %v4929
        %v4935 = vadd.f32 %v4915, %v4927
        %v4936 = vmul.f32 %v4436, %v1203
        %v4937 = vmul.f32 %v4437, %v1203
        %v4938 = vmul.f32 %v4440, %v1203
        %4942 = vrot.lane.b32.xlu0 %v4936, 32
        %v4943 = vpop.permute.xlu0 %4942
        %4944 = vrot.lane.b32.xlu0 %v4937, 32
        %v4945 = vpop.permute.xlu0 %4944
        %4946 = vrot.lane.b32.xlu0 %v4938, 32
        %v4947 = vpop.permute.xlu0 %4946
        %v4948 = vsel %vm703, %v4943, %v4945
        %v4949 = vsel %vm703, %v4945, %v4947
        %v4953 = vadd.f32 %v4933, %v4948
        %v4954 = vadd.f32 %v4934, %v4949
        %v4955 = vadd.f32 %v4935, %v4947
        %4959 = vrot.lane.b32.xlu0 %v4953, 125
        %v4960 = vpop.permute.xlu0 %4959
        %4961 = vrot.lane.b32.xlu0 %v4954, 125
        %v4962 = vpop.permute.xlu0 %4961
        %4963 = vrot.lane.b32.xlu0 %v4955, 125
        %v4964 = vpop.permute.xlu0 %4963
        %v4965 = vsel %vm1234, %v4960, %v4962
        %v4966 = vsel %vm1234, %v4962, %v4964
        %v4969 = vadd.f32 %v4831, %v4965
        %v4970 = vadd.f32 %v4832, %v4966
        %v4971 = vmul.f32 %v4436, %v1243
        %v4972 = vmul.f32 %v4437, %v1243
        %v4973 = vmul.f32 %v4440, %v1243
        %v4974 = vmul.f32 %v4436, %v1250
        %v4975 = vmul.f32 %v4437, %v1250
        %v4976 = vmul.f32 %v4440, %v1250
        %4980 = vrot.lane.b32.xlu0 %v4974, 112
        %v4981 = vpop.permute.xlu0 %4980
        %4982 = vrot.lane.b32.xlu0 %v4975, 112
        %v4983 = vpop.permute.xlu0 %4982
        %4984 = vrot.lane.b32.xlu0 %v4976, 112
        %v4985 = vpop.permute.xlu0 %4984
        %v4986 = vsel %vm588, %v4981, %v4983
        %v4987 = vsel %vm588, %v4983, %v4985
        %v4991 = vadd.f32 %v4971, %v4986
        %v4992 = vadd.f32 %v4972, %v4987
        %v4993 = vadd.f32 %v4973, %v4985
        %v4994 = vmul.f32 %v4436, %v1274
        %v4995 = vmul.f32 %v4437, %v1274
        %v4996 = vmul.f32 %v4440, %v1274
        %5000 = vrot.lane.b32.xlu0 %v4994, 96
        %v5001 = vpop.permute.xlu0 %5000
        %5002 = vrot.lane.b32.xlu0 %v4995, 96
        %v5003 = vpop.permute.xlu0 %5002
        %5004 = vrot.lane.b32.xlu0 %v4996, 96
        %v5005 = vpop.permute.xlu0 %5004
        %v5006 = vsel %vm611, %v5001, %v5003
        %v5007 = vsel %vm611, %v5003, %v5005
        %v5011 = vadd.f32 %v4991, %v5006
        %v5012 = vadd.f32 %v4992, %v5007
        %v5013 = vadd.f32 %v4993, %v5005
        %v5014 = vmul.f32 %v4436, %v1298
        %v5015 = vmul.f32 %v4437, %v1298
        %v5016 = vmul.f32 %v4440, %v1298
        %5020 = vrot.lane.b32.xlu0 %v5014, 80
        %v5021 = vpop.permute.xlu0 %5020
        %5022 = vrot.lane.b32.xlu0 %v5015, 80
        %v5023 = vpop.permute.xlu0 %5022
        %5024 = vrot.lane.b32.xlu0 %v5016, 80
        %v5025 = vpop.permute.xlu0 %5024
        %v5026 = vsel %vm634, %v5021, %v5023
        %v5027 = vsel %vm634, %v5023, %v5025
        %v5031 = vadd.f32 %v5011, %v5026
        %v5032 = vadd.f32 %v5012, %v5027
        %v5033 = vadd.f32 %v5013, %v5025
        %v5034 = vmul.f32 %v4436, %v1322
        %v5035 = vmul.f32 %v4437, %v1322
        %v5036 = vmul.f32 %v4440, %v1322
        %5040 = vrot.lane.b32.xlu0 %v5034, 64
        %v5041 = vpop.permute.xlu0 %5040
        %5042 = vrot.lane.b32.xlu0 %v5035, 64
        %v5043 = vpop.permute.xlu0 %5042
        %5044 = vrot.lane.b32.xlu0 %v5036, 64
        %v5045 = vpop.permute.xlu0 %5044
        %v5046 = vsel %vm657, %v5041, %v5043
        %v5047 = vsel %vm657, %v5043, %v5045
        %v5051 = vadd.f32 %v5031, %v5046
        %v5052 = vadd.f32 %v5032, %v5047
        %v5053 = vadd.f32 %v5033, %v5045
        %v5054 = vmul.f32 %v4436, %v1346
        %v5055 = vmul.f32 %v4437, %v1346
        %v5056 = vmul.f32 %v4440, %v1346
        %5060 = vrot.lane.b32.xlu0 %v5054, 48
        %v5061 = vpop.permute.xlu0 %5060
        %5062 = vrot.lane.b32.xlu0 %v5055, 48
        %v5063 = vpop.permute.xlu0 %5062
        %5064 = vrot.lane.b32.xlu0 %v5056, 48
        %v5065 = vpop.permute.xlu0 %5064
        %v5066 = vsel %vm680, %v5061, %v5063
        %v5067 = vsel %vm680, %v5063, %v5065
        %v5071 = vadd.f32 %v5051, %v5066
        %v5072 = vadd.f32 %v5052, %v5067
        %v5073 = vadd.f32 %v5053, %v5065
        %v5074 = vmul.f32 %v4436, %v1370
        %v5075 = vmul.f32 %v4437, %v1370
        %v5076 = vmul.f32 %v4440, %v1370
        %5080 = vrot.lane.b32.xlu0 %v5074, 32
        %v5081 = vpop.permute.xlu0 %5080
        %5082 = vrot.lane.b32.xlu0 %v5075, 32
        %v5083 = vpop.permute.xlu0 %5082
        %5084 = vrot.lane.b32.xlu0 %v5076, 32
        %v5085 = vpop.permute.xlu0 %5084
        %v5086 = vsel %vm703, %v5081, %v5083
        %v5087 = vsel %vm703, %v5083, %v5085
        %v5091 = vadd.f32 %v5071, %v5086
        %v5092 = vadd.f32 %v5072, %v5087
        %v5093 = vadd.f32 %v5073, %v5085
        %v5094 = vmul.f32 %v5091, %v1395
        %v5095 = vmul.f32 %v5092, %v1399
        %v5096 = vmul.f32 %v5093, %v1397
        %5100 = vrot.lane.b32.xlu0 %v5094, 124
        %v5101 = vpop.permute.xlu0 %5100
        %5102 = vrot.lane.b32.xlu0 %v5095, 124
        %v5103 = vpop.permute.xlu0 %5102
        %5104 = vrot.lane.b32.xlu0 %v5096, 124
        %v5105 = vpop.permute.xlu0 %5104
        %v5106 = vsel %vm1415, %v5101, %v5103
        %v5107 = vsel %vm1415, %v5103, %v5105
        %v5110 = vadd.f32 %v4969, %v5106
        %v5111 = vadd.f32 %v4970, %v5107
        %v5112 = vmul.f32 %v4436, %v1424
        %v5113 = vmul.f32 %v4437, %v1424
        %v5114 = vmul.f32 %v4440, %v1424
        %v5115 = vmul.f32 %v4436, %v1431
        %v5116 = vmul.f32 %v4437, %v1431
        %v5117 = vmul.f32 %v4440, %v1431
        %5121 = vrot.lane.b32.xlu0 %v5115, 112
        %v5122 = vpop.permute.xlu0 %5121
        %5123 = vrot.lane.b32.xlu0 %v5116, 112
        %v5124 = vpop.permute.xlu0 %5123
        %5125 = vrot.lane.b32.xlu0 %v5117, 112
        %v5126 = vpop.permute.xlu0 %5125
        %v5127 = vsel %vm588, %v5122, %v5124
        %v5128 = vsel %vm588, %v5124, %v5126
        %v5132 = vadd.f32 %v5112, %v5127
        %v5133 = vadd.f32 %v5113, %v5128
        %v5134 = vadd.f32 %v5114, %v5126
        %v5135 = vmul.f32 %v4436, %v1455
        %v5136 = vmul.f32 %v4437, %v1455
        %v5137 = vmul.f32 %v4440, %v1455
        %5141 = vrot.lane.b32.xlu0 %v5135, 96
        %v5142 = vpop.permute.xlu0 %5141
        %5143 = vrot.lane.b32.xlu0 %v5136, 96
        %v5144 = vpop.permute.xlu0 %5143
        %5145 = vrot.lane.b32.xlu0 %v5137, 96
        %v5146 = vpop.permute.xlu0 %5145
        %v5147 = vsel %vm611, %v5142, %v5144
        %v5148 = vsel %vm611, %v5144, %v5146
        %v5152 = vadd.f32 %v5132, %v5147
        %v5153 = vadd.f32 %v5133, %v5148
        %v5154 = vadd.f32 %v5134, %v5146
        %v5155 = vmul.f32 %v4436, %v1479
        %v5156 = vmul.f32 %v4437, %v1479
        %v5157 = vmul.f32 %v4440, %v1479
        %5161 = vrot.lane.b32.xlu0 %v5155, 80
        %v5162 = vpop.permute.xlu0 %5161
        %5163 = vrot.lane.b32.xlu0 %v5156, 80
        %v5164 = vpop.permute.xlu0 %5163
        %5165 = vrot.lane.b32.xlu0 %v5157, 80
        %v5166 = vpop.permute.xlu0 %5165
        %v5167 = vsel %vm634, %v5162, %v5164
        %v5168 = vsel %vm634, %v5164, %v5166
        %v5172 = vadd.f32 %v5152, %v5167
        %v5173 = vadd.f32 %v5153, %v5168
        %v5174 = vadd.f32 %v5154, %v5166
        %v5175 = vmul.f32 %v4436, %v1503
        %v5176 = vmul.f32 %v4437, %v1503
        %v5177 = vmul.f32 %v4440, %v1503
        %5181 = vrot.lane.b32.xlu0 %v5175, 64
        %v5182 = vpop.permute.xlu0 %5181
        %5183 = vrot.lane.b32.xlu0 %v5176, 64
        %v5184 = vpop.permute.xlu0 %5183
        %5185 = vrot.lane.b32.xlu0 %v5177, 64
        %v5186 = vpop.permute.xlu0 %5185
        %v5187 = vsel %vm657, %v5182, %v5184
        %v5188 = vsel %vm657, %v5184, %v5186
        %v5192 = vadd.f32 %v5172, %v5187
        %v5193 = vadd.f32 %v5173, %v5188
        %v5194 = vadd.f32 %v5174, %v5186
        %v5195 = vmul.f32 %v4436, %v1527
        %v5196 = vmul.f32 %v4437, %v1527
        %v5197 = vmul.f32 %v4440, %v1527
        %5201 = vrot.lane.b32.xlu0 %v5195, 48
        %v5202 = vpop.permute.xlu0 %5201
        %5203 = vrot.lane.b32.xlu0 %v5196, 48
        %v5204 = vpop.permute.xlu0 %5203
        %5205 = vrot.lane.b32.xlu0 %v5197, 48
        %v5206 = vpop.permute.xlu0 %5205
        %v5207 = vsel %vm680, %v5202, %v5204
        %v5208 = vsel %vm680, %v5204, %v5206
        %v5212 = vadd.f32 %v5192, %v5207
        %v5213 = vadd.f32 %v5193, %v5208
        %v5214 = vadd.f32 %v5194, %v5206
        %v5215 = vmul.f32 %v4436, %v1551
        %v5216 = vmul.f32 %v4437, %v1551
        %v5217 = vmul.f32 %v4440, %v1551
        %5221 = vrot.lane.b32.xlu0 %v5215, 32
        %v5222 = vpop.permute.xlu0 %5221
        %5223 = vrot.lane.b32.xlu0 %v5216, 32
        %v5224 = vpop.permute.xlu0 %5223
        %5225 = vrot.lane.b32.xlu0 %v5217, 32
        %v5226 = vpop.permute.xlu0 %5225
        %v5227 = vsel %vm703, %v5222, %v5224
        %v5228 = vsel %vm703, %v5224, %v5226
        %v5232 = vadd.f32 %v5212, %v5227
        %v5233 = vadd.f32 %v5213, %v5228
        %v5234 = vadd.f32 %v5214, %v5226
        %v5235 = vmul.f32 %v5232, %v1576
        %v5236 = vmul.f32 %v5233, %v1580
        %v5237 = vmul.f32 %v5234, %v1578
        %5241 = vrot.lane.b32.xlu0 %v5235, 123
        %v5242 = vpop.permute.xlu0 %5241
        %5243 = vrot.lane.b32.xlu0 %v5236, 123
        %v5244 = vpop.permute.xlu0 %5243
        %5245 = vrot.lane.b32.xlu0 %v5237, 123
        %v5246 = vpop.permute.xlu0 %5245
        %v5247 = vsel %vm1596, %v5242, %v5244
        %v5248 = vsel %vm1596, %v5244, %v5246
        %v5251 = vadd.f32 %v5110, %v5247
        %v5252 = vadd.f32 %v5111, %v5248
        %v5253 = vmul.f32 %v4436, %v1605
        %v5254 = vmul.f32 %v4437, %v1605
        %v5255 = vmul.f32 %v4440, %v1605
        %v5256 = vmul.f32 %v4436, %v1612
        %v5257 = vmul.f32 %v4437, %v1612
        %v5258 = vmul.f32 %v4440, %v1612
        %5262 = vrot.lane.b32.xlu0 %v5256, 112
        %v5263 = vpop.permute.xlu0 %5262
        %5264 = vrot.lane.b32.xlu0 %v5257, 112
        %v5265 = vpop.permute.xlu0 %5264
        %5266 = vrot.lane.b32.xlu0 %v5258, 112
        %v5267 = vpop.permute.xlu0 %5266
        %v5268 = vsel %vm588, %v5263, %v5265
        %v5269 = vsel %vm588, %v5265, %v5267
        %v5273 = vadd.f32 %v5253, %v5268
        %v5274 = vadd.f32 %v5254, %v5269
        %v5275 = vadd.f32 %v5255, %v5267
        %v5276 = vmul.f32 %v4436, %v1636
        %v5277 = vmul.f32 %v4437, %v1636
        %v5278 = vmul.f32 %v4440, %v1636
        %5282 = vrot.lane.b32.xlu0 %v5276, 96
        %v5283 = vpop.permute.xlu0 %5282
        %5284 = vrot.lane.b32.xlu0 %v5277, 96
        %v5285 = vpop.permute.xlu0 %5284
        %5286 = vrot.lane.b32.xlu0 %v5278, 96
        %v5287 = vpop.permute.xlu0 %5286
        %v5288 = vsel %vm611, %v5283, %v5285
        %v5289 = vsel %vm611, %v5285, %v5287
        %v5293 = vadd.f32 %v5273, %v5288
        %v5294 = vadd.f32 %v5274, %v5289
        %v5295 = vadd.f32 %v5275, %v5287
        %v5296 = vmul.f32 %v4436, %v1660
        %v5297 = vmul.f32 %v4437, %v1660
        %v5298 = vmul.f32 %v4440, %v1660
        %5302 = vrot.lane.b32.xlu0 %v5296, 80
        %v5303 = vpop.permute.xlu0 %5302
        %5304 = vrot.lane.b32.xlu0 %v5297, 80
        %v5305 = vpop.permute.xlu0 %5304
        %5306 = vrot.lane.b32.xlu0 %v5298, 80
        %v5307 = vpop.permute.xlu0 %5306
        %v5308 = vsel %vm634, %v5303, %v5305
        %v5309 = vsel %vm634, %v5305, %v5307
        %v5313 = vadd.f32 %v5293, %v5308
        %v5314 = vadd.f32 %v5294, %v5309
        %v5315 = vadd.f32 %v5295, %v5307
        %v5316 = vmul.f32 %v4436, %v1684
        %v5317 = vmul.f32 %v4437, %v1684
        %v5318 = vmul.f32 %v4440, %v1684
        %5322 = vrot.lane.b32.xlu0 %v5316, 64
        %v5323 = vpop.permute.xlu0 %5322
        %5324 = vrot.lane.b32.xlu0 %v5317, 64
        %v5325 = vpop.permute.xlu0 %5324
        %5326 = vrot.lane.b32.xlu0 %v5318, 64
        %v5327 = vpop.permute.xlu0 %5326
        %v5328 = vsel %vm657, %v5323, %v5325
        %v5329 = vsel %vm657, %v5325, %v5327
        %v5333 = vadd.f32 %v5313, %v5328
        %v5334 = vadd.f32 %v5314, %v5329
        %v5335 = vadd.f32 %v5315, %v5327
        %v5336 = vmul.f32 %v4436, %v1708
        %v5337 = vmul.f32 %v4437, %v1708
        %v5338 = vmul.f32 %v4440, %v1708
        %5342 = vrot.lane.b32.xlu0 %v5336, 48
        %v5343 = vpop.permute.xlu0 %5342
        %5344 = vrot.lane.b32.xlu0 %v5337, 48
        %v5345 = vpop.permute.xlu0 %5344
        %5346 = vrot.lane.b32.xlu0 %v5338, 48
        %v5347 = vpop.permute.xlu0 %5346
        %v5348 = vsel %vm680, %v5343, %v5345
        %v5349 = vsel %vm680, %v5345, %v5347
        %v5353 = vadd.f32 %v5333, %v5348
        %v5354 = vadd.f32 %v5334, %v5349
        %v5355 = vadd.f32 %v5335, %v5347
        %v5356 = vmul.f32 %v4436, %v1732
        %v5357 = vmul.f32 %v4437, %v1732
        %v5358 = vmul.f32 %v4440, %v1732
        %5362 = vrot.lane.b32.xlu0 %v5356, 32
        %v5363 = vpop.permute.xlu0 %5362
        %5364 = vrot.lane.b32.xlu0 %v5357, 32
        %v5365 = vpop.permute.xlu0 %5364
        %5366 = vrot.lane.b32.xlu0 %v5358, 32
        %v5367 = vpop.permute.xlu0 %5366
        %v5368 = vsel %vm703, %v5363, %v5365
        %v5369 = vsel %vm703, %v5365, %v5367
        %v5373 = vadd.f32 %v5353, %v5368
        %v5374 = vadd.f32 %v5354, %v5369
        %v5375 = vadd.f32 %v5355, %v5367
        %v5376 = vmul.f32 %v5373, %v1757
        %v5377 = vmul.f32 %v5374, %v1761
        %v5378 = vmul.f32 %v5375, %v1759
        %5382 = vrot.lane.b32.xlu0 %v5376, 122
        %v5383 = vpop.permute.xlu0 %5382
        %5384 = vrot.lane.b32.xlu0 %v5377, 122
        %v5385 = vpop.permute.xlu0 %5384
        %5386 = vrot.lane.b32.xlu0 %v5378, 122
        %v5387 = vpop.permute.xlu0 %5386
        %v5388 = vsel %vm1777, %v5383, %v5385
        %v5389 = vsel %vm1777, %v5385, %v5387
        %v5392 = vadd.f32 %v5251, %v5388
        %v5393 = vadd.f32 %v5252, %v5389
        %v5394 = vlaneseq
        %v5395 = vshrl.u32 %v5394, 7
        %v5396 = vsub.s32 0, %v5395
        %v5397 = vrot.slane %v5392, %v5396
        %v5398 = vlaneseq
        %v5399 = vshrl.u32 %v5398, 7
        %v5400 = vsub.s32 0, %v5399
        %v5401 = vrot.slane %v5393, %v5400
        %v5402 = vmul.f32 %v1787, %v5397
        %v5403 = vmul.f32 %v1787, %v5401
        %v5404 = vlaneseq
        %v5405 = vshrl.u32 %v5404, 7
        %v5406 = vsub.s32 1, %v5405
        %v5407 = vrot.slane %v5392, %v5406
        %v5408 = vlaneseq
        %v5409 = vshrl.u32 %v5408, 7
        %v5410 = vsub.s32 1, %v5409
        %v5411 = vrot.slane %v5393, %v5410
        %v5412 = vmul.f32 %v1801, %v5407
        %v5413 = vmul.f32 %v1801, %v5411
        %v5414 = vadd.f32 %v5402, %v5412
        %v5415 = vadd.f32 %v5403, %v5413
        %v5416 = vlaneseq
        %v5417 = vshrl.u32 %v5416, 7
        %v5418 = vsub.s32 2, %v5417
        %v5419 = vrot.slane %v5392, %v5418
        %v5420 = vlaneseq
        %v5421 = vshrl.u32 %v5420, 7
        %v5422 = vsub.s32 2, %v5421
        %v5423 = vrot.slane %v5393, %v5422
        %v5424 = vmul.f32 %v1817, %v5419
        %v5425 = vmul.f32 %v1817, %v5423
        %v5426 = vadd.f32 %v5414, %v5424
        %v5427 = vadd.f32 %v5415, %v5425
        %v5428 = vlaneseq
        %v5429 = vshrl.u32 %v5428, 7
        %v5430 = vsub.s32 3, %v5429
        %v5431 = vrot.slane %v5392, %v5430
        %v5432 = vlaneseq
        %v5433 = vshrl.u32 %v5432, 7
        %v5434 = vsub.s32 3, %v5433
        %v5435 = vrot.slane %v5393, %v5434
        %v5436 = vmul.f32 %v1833, %v5431
        %v5437 = vmul.f32 %v1833, %v5435
        %v5438 = vadd.f32 %v5426, %v5436
        %v5439 = vadd.f32 %v5427, %v5437
        %v5440 = vlaneseq
        %v5441 = vshrl.u32 %v5440, 7
        %v5442 = vsub.s32 4, %v5441
        %v5443 = vrot.slane %v5392, %v5442
        %v5444 = vlaneseq
        %v5445 = vshrl.u32 %v5444, 7
        %v5446 = vsub.s32 4, %v5445
        %v5447 = vrot.slane %v5393, %v5446
        %v5448 = vmul.f32 %v1849, %v5443
        %v5449 = vmul.f32 %v1849, %v5447
        %v5450 = vadd.f32 %v5438, %v5448
        %v5451 = vadd.f32 %v5439, %v5449
        %v5452 = vlaneseq
        %v5453 = vshrl.u32 %v5452, 7
        %v5454 = vsub.s32 5, %v5453
        %v5455 = vrot.slane %v5392, %v5454
        %v5456 = vlaneseq
        %v5457 = vshrl.u32 %v5456, 7
        %v5458 = vsub.s32 5, %v5457
        %v5459 = vrot.slane %v5393, %v5458
        %v5460 = vmul.f32 %v1865, %v5455
        %v5461 = vmul.f32 %v1865, %v5459
        %v5462 = vadd.f32 %v5450, %v5460
        %v5463 = vadd.f32 %v5451, %v5461
        %v5464 = vlaneseq
        %v5465 = vshrl.u32 %v5464, 7
        %v5466 = vsub.s32 6, %v5465
        %v5467 = vrot.slane %v5392, %v5466
        %v5468 = vlaneseq
        %v5469 = vshrl.u32 %v5468, 7
        %v5470 = vsub.s32 6, %v5469
        %v5471 = vrot.slane %v5393, %v5470
        %v5472 = vmul.f32 %v1881, %v5467
        %v5473 = vmul.f32 %v1881, %v5471
        %v5474 = vadd.f32 %v5462, %v5472
        %v5475 = vadd.f32 %v5463, %v5473
        %v5476 = vlaneseq
        %v5477 = vshrl.u32 %v5476, 7
        %v5478 = vsub.s32 7, %v5477
        %v5479 = vrot.slane %v5392, %v5478
        %v5480 = vlaneseq
        %v5481 = vshrl.u32 %v5480, 7
        %v5482 = vsub.s32 7, %v5481
        %v5483 = vrot.slane %v5393, %v5482
        %v5484 = vmul.f32 %v1897, %v5479
        %v5485 = vmul.f32 %v1897, %v5483
        %v5486 = vadd.f32 %v5474, %v5484
        %v5487 = vadd.f32 %v5475, %v5485
        %v5488 = vadd.f32 %v5486, %v1914
        %v5489 = vadd.f32 %v5487, %v1914
        %v5492 = vcombine.low %v5488, %v5489
        %s5494 = scalar_lea.vmem %s288, 24 [#allocation8]
        %5495 = vst [vmem:[%s5494] sm:$0xff] %v5492
        %s5496 = sand.u32 %s178, 1
        %s5497 = scalar_lea.sflag [#allocation7], %s5496
        %s5498 = sand.u32 %s178, 1
        %s5499 = smul.addr %s5498, 32
        %s5500 = scalar_lea.vmem [#allocation8], %s5499
        // Predicated region
        $region53: #{tpu_custom_call.1} parent=43 // pred_check
          %p5501 = pneg %p188
        $region54: #{tpu_custom_call.1} parent=43 // pred_check_branch
          %5503 = sbr.rel (%p5501) target = $region56
        $region55: #{tpu_custom_call.1} parent=43 // pred_region
          %s5504 = smul.u32 4, %s28
          %s5506 = ssub.s32 512, 512
          %5507 = vsyncadd %s5497, %s5506
          %s5508 = smul.addr %s27, 2
          %s5509 = smul.addr %s5504, 4
          %s5510 = sadd.s32 %s5508, %s5509
          %s5511 = smul.addr %s5510, 64
          %s5512 = scalar_lea.hbm %s6, %s5511
          %s5513 = sshll.u32 %s5500, 4
          %s5514 = int_to_ptr.vmem [resolvable:$true] %s5513
          %5519 = dma.vmem_to_hbm [thread:$0]  %s5514, 512, %s5512, %s5497, 128, 256, 8
        $region56: #{tpu_custom_call.1} parent=43 // pred_fallthru
          _
      $region44: #{tpu_custom_call.1} parent=5 // pred_fallthru
        _
      %p5520 = scmp.le.s32.totalorder 2, %s18
      // Predicated region
      $region57: #{tpu_custom_call.1} parent=5 // pred_check
        %p5521 = pneg %p5520
      $region58: #{tpu_custom_call.1} parent=5 // pred_check_branch
        %5523 = sbr.rel (%p5521) target = $region60
      $region59: #{tpu_custom_call.1} parent=5 // pred_region
        %s5524 = ssub.s32 %s18, 2
        // Predicated region
        $region61: #{tpu_custom_call.1} parent=59 // pred_check
          %p5525 = pneg %p194
        $region62: #{tpu_custom_call.1} parent=59 // pred_check_branch
          %5527 = sbr.rel (%p5525) target = $region64
        $region63: #{tpu_custom_call.1} parent=59 // pred_region
          %s5528 = sand.u32 %s179, 1
          %s5529 = scalar_lea.sflag [#allocation7], %s5528
          %s5530 = sand.u32 %s179, 1
          %s5531 = smul.addr %s5530, 32
          %s5532 = scalar_lea.vmem [#allocation8], %s5531
          %5533 = dma.done %s5529, 512
        $region64: #{tpu_custom_call.1} parent=59 // pred_fallthru
          _
      $region60: #{tpu_custom_call.1} parent=5 // pred_fallthru
        _
    $region6: #{tpu_custom_call.1} parent=1 // loop_footer
      %s22 = sadd.s32 1, %s18
    $region7: #{tpu_custom_call.1} parent=1 // loop_footer_branch
      %17 = sbr.rel target = $region3
    $region8: #{tpu_custom_call.1} parent=1 // loop_exit
      _
    %5534 = vsyncpa [#allocation6], 1
    %s5535 = scalar_lea.sflag [#allocation6], 1
    %5536 = vsyncpa %s5535, 1
    %5537 = vsyncpa [#allocation7], 1
    %s5538 = scalar_lea.sflag [#allocation7], 1
    %5539 = vsyncpa %s5538, 1

</llo_original>
